<compile_context>
chip_gen: v6e
topology: v6e:2x2x1
jax: 0.10.0
libtpu: 0.0.40
codegen_flags: <defaults>
</compile_context>

<pallas_src>
import numpy as np

import jax
import jax.numpy as jnp
from jax.experimental import pallas as pl
from jax.experimental.pallas import tpu as pltpu


_VMEM_LIMIT = 40 * 1024 * 1024  # safe on v7x (64 MiB VMEM), plenty everywhere


def _row_tile(m, cap=256):
    """Row-tile: whole array if tiny; otherwise a multiple of 8 giving at least
    2 grid steps (so both v7x TensorCores get work), capped at `cap`."""
    if m < 16:
        return m
    t = min(cap, (((m + 1) // 2) + 7) // 8 * 8)  # ceil(m/2), rounded up to 8
    return max(t, 8)


# ----------------------------------------------------------------------------
# Kernel 1: fused 3x3 conv (banded matmul) + bias + ReLU + 2x2/2 max-pool.
#
# Inputs per grid step (one image):
#   xe_ref/xo_ref : (R+1, K)  even/odd rows of the zero-padded input in
#                   (row, width*Cin) layout; R = pooled output height.
#   w0/w1/w2_ref  : (K, 2*PB) banded weights for kernel rows dy = 0, 1, 2.
#                   Output column = parity*PB + w2*Cout + o, conv col = 2*w2+parity.
#   b_ref         : (1, PB)   bias in pooled (w2, Cout) column order.
# Output:
#   o_ref         : (R, PB)   pooled activations, bf16, lane-dense (PB = 512).
# ----------------------------------------------------------------------------
def _conv3x3_pool_kernel(xe_ref, xo_ref, w0_ref, w1_ref, w2_ref, b_ref, o_ref):
    R = o_ref.shape[0]
    xe = xe_ref[...]
    xo = xo_ref[...]
    w0, w1, w2 = w0_ref[...], w1_ref[...], w2_ref[...]

    a_e0, a_o0 = xe[0:R, :], xo[0:R, :]          # padded input rows 2r, 2r+1
    a_e1, a_o1 = xe[1:R + 1, :], xo[1:R + 1, :]  # padded input rows 2r+2, 2r+3

    f32 = jnp.float32
    # even conv output rows (h = 2r): padded rows 2r, 2r+1, 2r+2
    y_even = (jnp.dot(a_e0, w0, preferred_element_type=f32)
              + jnp.dot(a_o0, w1, preferred_element_type=f32)
              + jnp.dot(a_e1, w2, preferred_element_type=f32))
    # odd conv output rows (h = 2r+1): padded rows 2r+1, 2r+2, 2r+3
    y_odd = (jnp.dot(a_o0, w0, preferred_element_type=f32)
             + jnp.dot(a_e1, w1, preferred_element_type=f32)
             + jnp.dot(a_o1, w2, preferred_element_type=f32))

    y = jnp.maximum(y_even, y_odd)               # pool over row pairs (f32)
    pb = y.shape[1] // 2
    pooled = jnp.maximum(y[:, :pb], y[:, pb:])   # pool over column pairs (128-aligned)
    # bias after max is valid (bias constant over the window), ReLU after max
    # is valid (ReLU monotone); all epilogue math stays in f32 registers.
    o_ref[...] = jnp.maximum(pooled + b_ref[...], 0.0).astype(o_ref.dtype)


def conv3x3_relu_pool(x_even, x_odd, w_dy, b_pool):
    """Fused 3x3/stride-1/pad-1 conv + ReLU + 2x2/2 max-pool over a batch grid."""
    assert x_even.shape == x_odd.shape
    B, rp1, K = x_even.shape
    R = rp1 - 1
    w0, w1, w2 = w_dy
    n2 = w0.shape[1]
    PB = n2 // 2
    assert w0.shape == (K, n2) and b_pool.shape == (1, PB)
    return pl.pallas_call(
        _conv3x3_pool_kernel,
        out_shape=jax.ShapeDtypeStruct((B, R, PB), jnp.bfloat16),
        grid=(B,),
        in_specs=[
            pl.BlockSpec((None, rp1, K), lambda b: (b, 0, 0)),
            pl.BlockSpec((None, rp1, K), lambda b: (b, 0, 0)),
            pl.BlockSpec((K, n2), lambda b: (0, 0)),
            pl.BlockSpec((K, n2), lambda b: (0, 0)),
            pl.BlockSpec((K, n2), lambda b: (0, 0)),
            pl.BlockSpec((1, PB), lambda b: (0, 0)),
        ],
        out_specs=pl.BlockSpec((None, R, PB), lambda b: (b, 0, 0)),
        compiler_params=pltpu.CompilerParams(
            dimension_semantics=("parallel",),
            vmem_limit_bytes=_VMEM_LIMIT,
        ),
    )(x_even, x_odd, w0, w1, w2, b_pool)


# ----------------------------------------------------------------------------
# Kernel 2: fused fc1 (+ReLU) + fc2; hidden activation never leaves VMEM,
#           fc2 output padded to 128 lanes (real logits sliced in the wrapper).
# ----------------------------------------------------------------------------
def _fc_fused_kernel(x_ref, w3_ref, b3_ref, w4_ref, b4_ref, o_ref):
    h = jnp.dot(x_ref[...], w3_ref[...], preferred_element_type=jnp.float32)
    h = jnp.maximum(h + b3_ref[...], 0.0)
    logits = jnp.dot(h.astype(jnp.bfloat16), w4_ref[...],
                     preferred_element_type=jnp.float32)
    o_ref[...] = (logits + b4_ref[...]).astype(o_ref.dtype)


def fc_fused(x, w3, b3, w4p, b4p):
    B, K = x.shape
    K2, H = w3.shape
    H2, NP = w4p.shape
    assert K == K2 and H == H2 and b3.shape == (1, H) and b4p.shape == (1, NP)
    tb = _row_tile(B, cap=256)
    return pl.pallas_call(
        _fc_fused_kernel,
        out_shape=jax.ShapeDtypeStruct((B, NP), jnp.float32),
        grid=(pl.cdiv(B, tb),),
        in_specs=[
            pl.BlockSpec((tb, K), lambda i: (i, 0)),
            pl.BlockSpec((K, H), lambda i: (0, 0)),
            pl.BlockSpec((1, H), lambda i: (0, 0)),
            pl.BlockSpec((H, NP), lambda i: (0, 0)),
            pl.BlockSpec((1, NP), lambda i: (0, 0)),
        ],
        out_specs=pl.BlockSpec((tb, NP), lambda i: (i, 0)),
        compiler_params=pltpu.CompilerParams(
            dimension_semantics=("parallel",),
            vmem_limit_bytes=_VMEM_LIMIT,
        ),
    )(x, w3, b3, w4p, b4p)


# ----------------------------------------------------------------------------
# One-time weight preparation (banded conv weights, permuted/padded fc weights)
# ----------------------------------------------------------------------------
def _banded_conv3x3(w_oihw, b, w_out, pb):
    """Banded matmul weights for a 3x3/stride-1/pad-1 conv fused with 2x2 pool.

    w_oihw : (Cout, Cin, 3, 3) PyTorch conv weight.
    w_out  : pooled output width W2 (conv output width is 2*W2).
    pb     : parity block width (>= W2*Cout, multiple of 128).
    Returns ([W_dy0, W_dy1, W_dy2] each (W_pad*Cin, 2*pb), bias (1, pb)) in f32.
    """
    w = np.asarray(w_oihw, np.float32)
    cout, cin, _, _ = w.shape
    w_pad = 2 * w_out + 2
    k = w_pad * cin
    mats = []
    for dy in range(3):
        m = np.zeros((k, 2 * pb), np.float32)
        for dx in range(3):
            blk = w[:, :, dy, dx].T                       # (Cin, Cout)
            for parity in range(2):
                for w2 in range(w_out):
                    wp = 2 * w2 + parity + dx             # padded input column
                    r0 = wp * cin
                    c0 = parity * pb + w2 * cout
                    m[r0:r0 + cin, c0:c0 + cout] = blk
        mats.append(m)
    bias = np.zeros((1, pb), np.float32)
    bias[0, :w_out * cout] = np.tile(np.asarray(b, np.float32), w_out)
    return mats, bias


def prepare_params(params):
    # Fused conv+pool banded weights (conv1: Cin=1, W2=14; conv2: Cin=32, W2=7).
    w1_mats, b1p = _banded_conv3x3(params["w1"], params["b1"], w_out=14, pb=512)
    w2_mats, b2p = _banded_conv3x3(params["w2"], params["b2"], w_out=7, pb=512)

    # fc1: permute rows from PyTorch's (c, h2, w2) flatten order to the
    # kernel's (h2, [w2, c] padded to 512) pooled layout -> no flatten transpose.
    w3 = np.asarray(params["w3"], np.float32).reshape(128, 64, 7, 7)
    w3 = np.transpose(w3, (2, 3, 1, 0)).reshape(7, 7 * 64, 128)   # (h2, w2*c, out)
    w3p = np.zeros((7, 512, 128), np.float32)
    w3p[:, :7 * 64, :] = w3
    w3p = w3p.reshape(7 * 512, 128)
    b3 = np.asarray(params["b3"], np.float32).reshape(1, 128)

    # fc2: zero-pad N=10 -> 128 so the final store is lane-dense.
    w4p = np.zeros((128, 128), np.float32)
    w4p[:, :10] = np.asarray(params["w4"], np.float32).T
    b4p = np.zeros((1, 128), np.float32)
    b4p[0, :10] = np.asarray(params["b4"], np.float32)

    bf16 = jnp.bfloat16
    return {
        "w1b": tuple(jnp.asarray(m, bf16) for m in w1_mats),
        "b1p": jnp.asarray(b1p, jnp.float32),
        "w2b": tuple(jnp.asarray(m, bf16) for m in w2_mats),
        "b2p": jnp.asarray(b2p, jnp.float32),
        "w3p": jnp.asarray(w3p, bf16),
        "b3": jnp.asarray(b3, jnp.float32),
        "w4p": jnp.asarray(w4p, bf16),
        "b4p": jnp.asarray(b4p, jnp.float32),
    }


# ----------------------------------------------------------------------------
# SimpleNet forward
# ----------------------------------------------------------------------------
def simplenet_forward(x_nchw, p):
    B = x_nchw.shape[0]
    # conv1 input: (row, W*Cin) layout (Cin=1), zero-padded, split even/odd rows.
    x = x_nchw[:, 0, :, :].astype(jnp.bfloat16)                       # (B,28,28)
    x_pad = jnp.pad(x, ((0, 0), (1, 1), (1, 1)))                      # (B,30,30)
    xe, xo = x_pad[:, 0::2, :], x_pad[:, 1::2, :]                     # (B,15,30)

    # conv1 + ReLU + pool1 fused -> (B, 14, 512) bf16, cols = (w2, c), pad 448:.
    pooled1 = conv3x3_relu_pool(xe, xo, p["w1b"], p["b1p"])

    # conv2 input: shift one channel-group (32 lanes) for the width padding and
    # add the top/bottom padding rows -> (B, 16, 512), layout (row, W*Cin).
    x2 = jnp.pad(pooled1[:, :, :14 * 32], ((0, 0), (1, 1), (32, 32)))
    x2e, x2o = x2[:, 0::2, :], x2[:, 1::2, :]                         # (B,8,512)

    # conv2 + ReLU + pool2 fused -> (B, 7, 512) bf16.
    pooled2 = conv3x3_relu_pool(x2e, x2o, p["w2b"], p["b2p"])

    # flatten is a free contiguous reshape (w3 rows were permuted/padded once).
    flat = pooled2.reshape(B, 7 * 512)                                # (B,3584) bf16

    # fc1 + ReLU + fc2 fused; logits padded to 128 lanes, slice back to 10.
    logits_p = fc_fused(flat, p["w3p"], p["b3"], p["w4p"], p["b4p"])  # (B,128) f32
    return logits_p[:, :10]


# ----------------------------------------------------------------------------
# Pure-JAX reference (mirrors the PyTorch module) + init
# ----------------------------------------------------------------------------
def _maxpool2x2_ref(y):  # NCHW
    return jnp.maximum(jnp.maximum(y[:, :, 0::2, 0::2], y[:, :, 0::2, 1::2]),
                       jnp.maximum(y[:, :, 1::2, 0::2], y[:, :, 1::2, 1::2]))


def reference_forward(x_nchw, params):
    dn = ("NCHW", "OIHW", "NCHW")
    y = jax.lax.conv_general_dilated(x_nchw, params["w1"], (1, 1),
                                     ((1, 1), (1, 1)), dimension_numbers=dn)
    y = jnp.maximum(y + params["b1"].reshape(1, -1, 1, 1), 0.0)
    y = _maxpool2x2_ref(y)
    y = jax.lax.conv_general_dilated(y, params["w2"], (1, 1),
                                     ((1, 1), (1, 1)), dimension_numbers=dn)
    y = jnp.maximum(y + params["b2"].reshape(1, -1, 1, 1), 0.0)
    y = _maxpool2x2_ref(y)
    f = y.reshape(y.shape[0], -1)                    # PyTorch view(-1, 64*7*7)
    h = jnp.maximum(f @ params["w3"].T + params["b3"], 0.0)
    return h @ params["w4"].T + params["b4"]


def init_params(key):
    ks = jax.random.split(key, 8)

    def u(k, shape, fan_in):
        bound = 1.0 / jnp.sqrt(fan_in)
        return jax.random.uniform(k, shape, jnp.float32, -bound, bound)

    return {
        "w1": u(ks[0], (32, 1, 3, 3), 1 * 9),
        "b1": u(ks[1], (32,), 1 * 9),
        "w2": u(ks[2], (64, 32, 3, 3), 32 * 9),
        "b2": u(ks[3], (64,), 32 * 9),
        "w3": u(ks[4], (128, 64 * 7 * 7), 64 * 7 * 7),
        "b3": u(ks[5], (128,), 64 * 7 * 7),
        "w4": u(ks[6], (10, 128), 128),
        "b4": u(ks[7], (10,), 128),
    }


if __name__ == "__main__":
    key = jax.random.PRNGKey(0)
    k_in, k_par = jax.random.split(key)
    # fc1 expects 64*7*7 features => input spatial must be 28x28 (MNIST-like).
    x = jax.random.normal(k_in, (2, 1, 28, 28), jnp.float32)   # NCHW like PyTorch
    params = init_params(k_par)
    prepared = prepare_params(params)   # one-time weight layout prep (hoisted)

    fwd = jax.jit(simplenet_forward)
    out = jax.block_until_ready(fwd(x, prepared))
    assert out.shape == (2, 10)
    assert bool(jnp.all(jnp.isfinite(out)))

    # Structural-correctness check against the f32 XLA reference (bf16 storage
    # of intermediates => loose tolerance).
    ref = reference_forward(x, params)
    max_err = float(jnp.max(jnp.abs(out - ref)))
    assert max_err < 5e-2, f"max |pallas - reference| = {max_err}"
    print("KERNEL_OK")
</pallas_src>

<mosaic_0001>
module attributes {stable_mosaic.version = 11 : i64} {
  func.func @_conv3x3_pool_kernel(%arg0: i32, %arg1: memref<1x15x30xbf16, #tpu.memory_space<vmem>>, %arg2: memref<1x15x30xbf16, #tpu.memory_space<vmem>>, %arg3: memref<30x1024xbf16, #tpu.memory_space<vmem>>, %arg4: memref<30x1024xbf16, #tpu.memory_space<vmem>>, %arg5: memref<30x1024xbf16, #tpu.memory_space<vmem>>, %arg6: memref<1x512xf32, #tpu.memory_space<vmem>>, %arg7: memref<1x14x512xbf16, #tpu.memory_space<vmem>>) attributes {dimension_semantics = [#tpu.dimension_semantics<parallel>], iteration_bounds = array<i64: 2>, scalar_prefetch = 0 : i64, scratch_operands = 0 : i64, tpu.core_type = #tpu.core_type<tc>, window_params = [{transform_indices = @transform_0, window_bounds = array<i64: 1, 15, 30>}, {transform_indices = @transform_1, window_bounds = array<i64: 1, 15, 30>}, {pipeline_mode = #tpu.pipeline_mode<synchronous>, transform_indices = @transform_2, window_bounds = array<i64: 30, 1024>}, {pipeline_mode = #tpu.pipeline_mode<synchronous>, transform_indices = @transform_3, window_bounds = array<i64: 30, 1024>}, {pipeline_mode = #tpu.pipeline_mode<synchronous>, transform_indices = @transform_4, window_bounds = array<i64: 30, 1024>}, {pipeline_mode = #tpu.pipeline_mode<synchronous>, transform_indices = @transform_5, window_bounds = array<i64: 1, 512>}, {transform_indices = @transform_6, window_bounds = array<i64: 1, 14, 512>}]} {
    %c0 = arith.constant 0 : index
    %c0_0 = arith.constant 0 : index
    %c0_1 = arith.constant 0 : index
    %0 = vector.load %arg1[%c0, %c0_0, %c0_1] : memref<1x15x30xbf16, #tpu.memory_space<vmem>>, vector<1x15x30xbf16>
    %1 = vector.shape_cast %0 : vector<1x15x30xbf16> to vector<15x30xbf16>
    %c0_2 = arith.constant 0 : index
    %c0_3 = arith.constant 0 : index
    %c0_4 = arith.constant 0 : index
    %2 = vector.load %arg2[%c0_2, %c0_3, %c0_4] : memref<1x15x30xbf16, #tpu.memory_space<vmem>>, vector<1x15x30xbf16>
    %3 = vector.shape_cast %2 : vector<1x15x30xbf16> to vector<15x30xbf16>
    %c0_5 = arith.constant 0 : index
    %c0_6 = arith.constant 0 : index
    %4 = vector.load %arg3[%c0_5, %c0_6] : memref<30x1024xbf16, #tpu.memory_space<vmem>>, vector<30x1024xbf16>
    %c0_7 = arith.constant 0 : index
    %c0_8 = arith.constant 0 : index
    %5 = vector.load %arg4[%c0_7, %c0_8] : memref<30x1024xbf16, #tpu.memory_space<vmem>>, vector<30x1024xbf16>
    %c0_9 = arith.constant 0 : index
    %c0_10 = arith.constant 0 : index
    %6 = vector.load %arg5[%c0_9, %c0_10] : memref<30x1024xbf16, #tpu.memory_space<vmem>>, vector<30x1024xbf16>
    %7 = vector.extract_strided_slice %1 {offsets = [0, 0], sizes = [14, 30], strides = [1, 1]} : vector<15x30xbf16> to vector<14x30xbf16>
    %8 = vector.extract_strided_slice %3 {offsets = [0, 0], sizes = [14, 30], strides = [1, 1]} : vector<15x30xbf16> to vector<14x30xbf16>
    %9 = vector.extract_strided_slice %1 {offsets = [1, 0], sizes = [14, 30], strides = [1, 1]} : vector<15x30xbf16> to vector<14x30xbf16>
    %10 = vector.extract_strided_slice %3 {offsets = [1, 0], sizes = [14, 30], strides = [1, 1]} : vector<15x30xbf16> to vector<14x30xbf16>
    %cst = arith.constant dense<0.000000e+00> : vector<14x1024xf32>
    %11 = tpu.matmul %7, %4, %cst {dimension_numbers = #tpu.dot_dimension_numbers<[1], [0], [0], [1], [0, 0, 1, 1], [], []>} : vector<14x30xbf16>, vector<30x1024xbf16>, vector<14x1024xf32> -> vector<14x1024xf32>
    %cst_11 = arith.constant dense<0.000000e+00> : vector<14x1024xf32>
    %12 = tpu.matmul %8, %5, %cst_11 {dimension_numbers = #tpu.dot_dimension_numbers<[1], [0], [0], [1], [0, 0, 1, 1], [], []>} : vector<14x30xbf16>, vector<30x1024xbf16>, vector<14x1024xf32> -> vector<14x1024xf32>
    %13 = arith.addf %11, %12 : vector<14x1024xf32>
    %cst_12 = arith.constant dense<0.000000e+00> : vector<14x1024xf32>
    %14 = tpu.matmul %9, %6, %cst_12 {dimension_numbers = #tpu.dot_dimension_numbers<[1], [0], [0], [1], [0, 0, 1, 1], [], []>} : vector<14x30xbf16>, vector<30x1024xbf16>, vector<14x1024xf32> -> vector<14x1024xf32>
    %15 = arith.addf %13, %14 : vector<14x1024xf32>
    %cst_13 = arith.constant dense<0.000000e+00> : vector<14x1024xf32>
    %16 = tpu.matmul %8, %4, %cst_13 {dimension_numbers = #tpu.dot_dimension_numbers<[1], [0], [0], [1], [0, 0, 1, 1], [], []>} : vector<14x30xbf16>, vector<30x1024xbf16>, vector<14x1024xf32> -> vector<14x1024xf32>
    %cst_14 = arith.constant dense<0.000000e+00> : vector<14x1024xf32>
    %17 = tpu.matmul %9, %5, %cst_14 {dimension_numbers = #tpu.dot_dimension_numbers<[1], [0], [0], [1], [0, 0, 1, 1], [], []>} : vector<14x30xbf16>, vector<30x1024xbf16>, vector<14x1024xf32> -> vector<14x1024xf32>
    %18 = arith.addf %16, %17 : vector<14x1024xf32>
    %cst_15 = arith.constant dense<0.000000e+00> : vector<14x1024xf32>
    %19 = tpu.matmul %10, %6, %cst_15 {dimension_numbers = #tpu.dot_dimension_numbers<[1], [0], [0], [1], [0, 0, 1, 1], [], []>} : vector<14x30xbf16>, vector<30x1024xbf16>, vector<14x1024xf32> -> vector<14x1024xf32>
    %20 = arith.addf %18, %19 : vector<14x1024xf32>
    %21 = arith.maximumf %15, %20 : vector<14x1024xf32>
    %22 = vector.extract_strided_slice %21 {offsets = [0, 0], sizes = [14, 512], strides = [1, 1]} : vector<14x1024xf32> to vector<14x512xf32>
    %23 = vector.extract_strided_slice %21 {offsets = [0, 512], sizes = [14, 512], strides = [1, 1]} : vector<14x1024xf32> to vector<14x512xf32>
    %24 = arith.maximumf %22, %23 : vector<14x512xf32>
    %c0_16 = arith.constant 0 : index
    %c0_17 = arith.constant 0 : index
    %25 = vector.load %arg6[%c0_16, %c0_17] : memref<1x512xf32, #tpu.memory_space<vmem>>, vector<1x512xf32>
    %26 = vector.broadcast %25 : vector<1x512xf32> to vector<14x512xf32>
    %27 = arith.addf %24, %26 : vector<14x512xf32>
    %cst_18 = arith.constant 0.000000e+00 : f32
    %28 = vector.broadcast %cst_18 : f32 to vector<14x512xf32>
    %29 = arith.maximumf %27, %28 : vector<14x512xf32>
    %30 = arith.truncf %29 : vector<14x512xf32> to vector<14x512xbf16>
    %c0_19 = arith.constant 0 : index
    %c0_20 = arith.constant 0 : index
    %c0_21 = arith.constant 0 : index
    %31 = vector.load %arg7[%c0_19, %c0_20, %c0_21] : memref<1x14x512xbf16, #tpu.memory_space<vmem>>, vector<1x14x512xbf16>
    %32 = vector.shape_cast %31 : vector<1x14x512xbf16> to vector<14x512xbf16>
    %33 = vector.shape_cast %30 : vector<14x512xbf16> to vector<1x14x512xbf16>
    tpu.vector_store %arg7[%c0_19, %c0_20, %c0_21], %33 {strides = array<i32>} : memref<1x14x512xbf16, #tpu.memory_space<vmem>>, vector<1x14x512xbf16>,
    return
  }
  func.func @transform_0(%arg0: i32) -> (i32, i32, i32) {
    %c0_i32 = arith.constant 0 : i32
    %c0_i32_0 = arith.constant 0 : i32
    %c0_i32_1 = arith.constant 0 : i32
    return %arg0, %c0_i32, %c0_i32_0 : i32, i32, i32
  }
  func.func @transform_1(%arg0: i32) -> (i32, i32, i32) {
    %c0_i32 = arith.constant 0 : i32
    %c0_i32_0 = arith.constant 0 : i32
    %c0_i32_1 = arith.constant 0 : i32
    return %arg0, %c0_i32, %c0_i32_0 : i32, i32, i32
  }
  func.func @transform_2(%arg0: i32) -> (i32, i32) {
    %c0_i32 = arith.constant 0 : i32
    %c0_i32_0 = arith.constant 0 : i32
    %c0_i32_1 = arith.constant 0 : i32
    return %c0_i32, %c0_i32_0 : i32, i32
  }
  func.func @transform_3(%arg0: i32) -> (i32, i32) {
    %c0_i32 = arith.constant 0 : i32
    %c0_i32_0 = arith.constant 0 : i32
    %c0_i32_1 = arith.constant 0 : i32
    return %c0_i32, %c0_i32_0 : i32, i32
  }
  func.func @transform_4(%arg0: i32) -> (i32, i32) {
    %c0_i32 = arith.constant 0 : i32
    %c0_i32_0 = arith.constant 0 : i32
    %c0_i32_1 = arith.constant 0 : i32
    return %c0_i32, %c0_i32_0 : i32, i32
  }
  func.func @transform_5(%arg0: i32) -> (i32, i32) {
    %c0_i32 = arith.constant 0 : i32
    %c0_i32_0 = arith.constant 0 : i32
    %c0_i32_1 = arith.constant 0 : i32
    return %c0_i32, %c0_i32_0 : i32, i32
  }
  func.func @transform_6(%arg0: i32) -> (i32, i32, i32) {
    %c0_i32 = arith.constant 0 : i32
    %c0_i32_0 = arith.constant 0 : i32
    %c0_i32_1 = arith.constant 0 : i32
    return %arg0, %c0_i32, %c0_i32_0 : i32, i32, i32
  }
}

module attributes {stable_mosaic.version = 11 : i64} {
  func.func @_conv3x3_pool_kernel(%arg0: i32, %arg1: memref<1x8x512xbf16, #tpu.memory_space<vmem>>, %arg2: memref<1x8x512xbf16, #tpu.memory_space<vmem>>, %arg3: memref<512x1024xbf16, #tpu.memory_space<vmem>>, %arg4: memref<512x1024xbf16, #tpu.memory_space<vmem>>, %arg5: memref<512x1024xbf16, #tpu.memory_space<vmem>>, %arg6: memref<1x512xf32, #tpu.memory_space<vmem>>, %arg7: memref<1x7x512xbf16, #tpu.memory_space<vmem>>) attributes {dimension_semantics = [#tpu.dimension_semantics<parallel>], iteration_bounds = array<i64: 2>, scalar_prefetch = 0 : i64, scratch_operands = 0 : i64, tpu.core_type = #tpu.core_type<tc>, window_params = [{transform_indices = @transform_0, window_bounds = array<i64: 1, 8, 512>}, {transform_indices = @transform_1, window_bounds = array<i64: 1, 8, 512>}, {pipeline_mode = #tpu.pipeline_mode<synchronous>, transform_indices = @transform_2, window_bounds = array<i64: 512, 1024>}, {pipeline_mode = #tpu.pipeline_mode<synchronous>, transform_indices = @transform_3, window_bounds = array<i64: 512, 1024>}, {pipeline_mode = #tpu.pipeline_mode<synchronous>, transform_indices = @transform_4, window_bounds = array<i64: 512, 1024>}, {pipeline_mode = #tpu.pipeline_mode<synchronous>, transform_indices = @transform_5, window_bounds = array<i64: 1, 512>}, {transform_indices = @transform_6, window_bounds = array<i64: 1, 7, 512>}]} {
    %c0 = arith.constant 0 : index
    %c0_0 = arith.constant 0 : index
    %c0_1 = arith.constant 0 : index
    %0 = vector.load %arg1[%c0, %c0_0, %c0_1] : memref<1x8x512xbf16, #tpu.memory_space<vmem>>, vector<1x8x512xbf16>
    %1 = vector.shape_cast %0 : vector<1x8x512xbf16> to vector<8x512xbf16>
    %c0_2 = arith.constant 0 : index
    %c0_3 = arith.constant 0 : index
    %c0_4 = arith.constant 0 : index
    %2 = vector.load %arg2[%c0_2, %c0_3, %c0_4] : memref<1x8x512xbf16, #tpu.memory_space<vmem>>, vector<1x8x512xbf16>
    %3 = vector.shape_cast %2 : vector<1x8x512xbf16> to vector<8x512xbf16>
    %c0_5 = arith.constant 0 : index
    %c0_6 = arith.constant 0 : index
    %4 = vector.load %arg3[%c0_5, %c0_6] : memref<512x1024xbf16, #tpu.memory_space<vmem>>, vector<512x1024xbf16>
    %c0_7 = arith.constant 0 : index
    %c0_8 = arith.constant 0 : index
    %5 = vector.load %arg4[%c0_7, %c0_8] : memref<512x1024xbf16, #tpu.memory_space<vmem>>, vector<512x1024xbf16>
    %c0_9 = arith.constant 0 : index
    %c0_10 = arith.constant 0 : index
    %6 = vector.load %arg5[%c0_9, %c0_10] : memref<512x1024xbf16, #tpu.memory_space<vmem>>, vector<512x1024xbf16>
    %7 = vector.extract_strided_slice %1 {offsets = [0, 0], sizes = [7, 512], strides = [1, 1]} : vector<8x512xbf16> to vector<7x512xbf16>
    %8 = vector.extract_strided_slice %3 {offsets = [0, 0], sizes = [7, 512], strides = [1, 1]} : vector<8x512xbf16> to vector<7x512xbf16>
    %9 = vector.extract_strided_slice %1 {offsets = [1, 0], sizes = [7, 512], strides = [1, 1]} : vector<8x512xbf16> to vector<7x512xbf16>
    %10 = vector.extract_strided_slice %3 {offsets = [1, 0], sizes = [7, 512], strides = [1, 1]} : vector<8x512xbf16> to vector<7x512xbf16>
    %cst = arith.constant dense<0.000000e+00> : vector<7x1024xf32>
    %11 = tpu.matmul %7, %4, %cst {dimension_numbers = #tpu.dot_dimension_numbers<[1], [0], [0], [1], [0, 0, 1, 1], [], []>} : vector<7x512xbf16>, vector<512x1024xbf16>, vector<7x1024xf32> -> vector<7x1024xf32>
    %cst_11 = arith.constant dense<0.000000e+00> : vector<7x1024xf32>
    %12 = tpu.matmul %8, %5, %cst_11 {dimension_numbers = #tpu.dot_dimension_numbers<[1], [0], [0], [1], [0, 0, 1, 1], [], []>} : vector<7x512xbf16>, vector<512x1024xbf16>, vector<7x1024xf32> -> vector<7x1024xf32>
    %13 = arith.addf %11, %12 : vector<7x1024xf32>
    %cst_12 = arith.constant dense<0.000000e+00> : vector<7x1024xf32>
    %14 = tpu.matmul %9, %6, %cst_12 {dimension_numbers = #tpu.dot_dimension_numbers<[1], [0], [0], [1], [0, 0, 1, 1], [], []>} : vector<7x512xbf16>, vector<512x1024xbf16>, vector<7x1024xf32> -> vector<7x1024xf32>
    %15 = arith.addf %13, %14 : vector<7x1024xf32>
    %cst_13 = arith.constant dense<0.000000e+00> : vector<7x1024xf32>
    %16 = tpu.matmul %8, %4, %cst_13 {dimension_numbers = #tpu.dot_dimension_numbers<[1], [0], [0], [1], [0, 0, 1, 1], [], []>} : vector<7x512xbf16>, vector<512x1024xbf16>, vector<7x1024xf32> -> vector<7x1024xf32>
    %cst_14 = arith.constant dense<0.000000e+00> : vector<7x1024xf32>
    %17 = tpu.matmul %9, %5, %cst_14 {dimension_numbers = #tpu.dot_dimension_numbers<[1], [0], [0], [1], [0, 0, 1, 1], [], []>} : vector<7x512xbf16>, vector<512x1024xbf16>, vector<7x1024xf32> -> vector<7x1024xf32>
    %18 = arith.addf %16, %17 : vector<7x1024xf32>
    %cst_15 = arith.constant dense<0.000000e+00> : vector<7x1024xf32>
    %19 = tpu.matmul %10, %6, %cst_15 {dimension_numbers = #tpu.dot_dimension_numbers<[1], [0], [0], [1], [0, 0, 1, 1], [], []>} : vector<7x512xbf16>, vector<512x1024xbf16>, vector<7x1024xf32> -> vector<7x1024xf32>
    %20 = arith.addf %18, %19 : vector<7x1024xf32>
    %21 = arith.maximumf %15, %20 : vector<7x1024xf32>
    %22 = vector.extract_strided_slice %21 {offsets = [0, 0], sizes = [7, 512], strides = [1, 1]} : vector<7x1024xf32> to vector<7x512xf32>
    %23 = vector.extract_strided_slice %21 {offsets = [0, 512], sizes = [7, 512], strides = [1, 1]} : vector<7x1024xf32> to vector<7x512xf32>
    %24 = arith.maximumf %22, %23 : vector<7x512xf32>
    %c0_16 = arith.constant 0 : index
    %c0_17 = arith.constant 0 : index
    %25 = vector.load %arg6[%c0_16, %c0_17] : memref<1x512xf32, #tpu.memory_space<vmem>>, vector<1x512xf32>
    %26 = vector.broadcast %25 : vector<1x512xf32> to vector<7x512xf32>
    %27 = arith.addf %24, %26 : vector<7x512xf32>
    %cst_18 = arith.constant 0.000000e+00 : f32
    %28 = vector.broadcast %cst_18 : f32 to vector<7x512xf32>
    %29 = arith.maximumf %27, %28 : vector<7x512xf32>
    %30 = arith.truncf %29 : vector<7x512xf32> to vector<7x512xbf16>
    %c0_19 = arith.constant 0 : index
    %c0_20 = arith.constant 0 : index
    %c0_21 = arith.constant 0 : index
    %31 = vector.load %arg7[%c0_19, %c0_20, %c0_21] : memref<1x7x512xbf16, #tpu.memory_space<vmem>>, vector<1x7x512xbf16>
    %32 = vector.shape_cast %31 : vector<1x7x512xbf16> to vector<7x512xbf16>
    %33 = vector.shape_cast %30 : vector<7x512xbf16> to vector<1x7x512xbf16>
    tpu.vector_store %arg7[%c0_19, %c0_20, %c0_21], %33 {strides = array<i32>} : memref<1x7x512xbf16, #tpu.memory_space<vmem>>, vector<1x7x512xbf16>,
    return
  }
  func.func @transform_0(%arg0: i32) -> (i32, i32, i32) {
    %c0_i32 = arith.constant 0 : i32
    %c0_i32_0 = arith.constant 0 : i32
    %c0_i32_1 = arith.constant 0 : i32
    return %arg0, %c0_i32, %c0_i32_0 : i32, i32, i32
  }
  func.func @transform_1(%arg0: i32) -> (i32, i32, i32) {
    %c0_i32 = arith.constant 0 : i32
    %c0_i32_0 = arith.constant 0 : i32
    %c0_i32_1 = arith.constant 0 : i32
    return %arg0, %c0_i32, %c0_i32_0 : i32, i32, i32
  }
  func.func @transform_2(%arg0: i32) -> (i32, i32) {
    %c0_i32 = arith.constant 0 : i32
    %c0_i32_0 = arith.constant 0 : i32
    %c0_i32_1 = arith.constant 0 : i32
    return %c0_i32, %c0_i32_0 : i32, i32
  }
  func.func @transform_3(%arg0: i32) -> (i32, i32) {
    %c0_i32 = arith.constant 0 : i32
    %c0_i32_0 = arith.constant 0 : i32
    %c0_i32_1 = arith.constant 0 : i32
    return %c0_i32, %c0_i32_0 : i32, i32
  }
  func.func @transform_4(%arg0: i32) -> (i32, i32) {
    %c0_i32 = arith.constant 0 : i32
    %c0_i32_0 = arith.constant 0 : i32
    %c0_i32_1 = arith.constant 0 : i32
    return %c0_i32, %c0_i32_0 : i32, i32
  }
  func.func @transform_5(%arg0: i32) -> (i32, i32) {
    %c0_i32 = arith.constant 0 : i32
    %c0_i32_0 = arith.constant 0 : i32
    %c0_i32_1 = arith.constant 0 : i32
    return %c0_i32, %c0_i32_0 : i32, i32
  }
  func.func @transform_6(%arg0: i32) -> (i32, i32, i32) {
    %c0_i32 = arith.constant 0 : i32
    %c0_i32_0 = arith.constant 0 : i32
    %c0_i32_1 = arith.constant 0 : i32
    return %arg0, %c0_i32, %c0_i32_0 : i32, i32, i32
  }
}

module attributes {stable_mosaic.version = 11 : i64} {
  func.func @_fc_fused_kernel(%arg0: i32, %arg1: memref<2x3584xbf16, #tpu.memory_space<vmem>>, %arg2: memref<3584x128xbf16, #tpu.memory_space<vmem>>, %arg3: memref<1x128xf32, #tpu.memory_space<vmem>>, %arg4: memref<128x128xbf16, #tpu.memory_space<vmem>>, %arg5: memref<1x128xf32, #tpu.memory_space<vmem>>, %arg6: memref<2x128xf32, #tpu.memory_space<vmem>>) attributes {dimension_semantics = [#tpu.dimension_semantics<parallel>], iteration_bounds = array<i64: 1>, scalar_prefetch = 0 : i64, scratch_operands = 0 : i64, tpu.core_type = #tpu.core_type<tc>, window_params = [{transform_indices = @transform_0, window_bounds = array<i64: 2, 3584>}, {pipeline_mode = #tpu.pipeline_mode<synchronous>, transform_indices = @transform_1, window_bounds = array<i64: 3584, 128>}, {pipeline_mode = #tpu.pipeline_mode<synchronous>, transform_indices = @transform_2, window_bounds = array<i64: 1, 128>}, {pipeline_mode = #tpu.pipeline_mode<synchronous>, transform_indices = @transform_3, window_bounds = array<i64: 128, 128>}, {pipeline_mode = #tpu.pipeline_mode<synchronous>, transform_indices = @transform_4, window_bounds = array<i64: 1, 128>}, {transform_indices = @transform_5, window_bounds = array<i64: 2, 128>}]} {
    %c0 = arith.constant 0 : index
    %c0_0 = arith.constant 0 : index
    %0 = vector.load %arg1[%c0, %c0_0] : memref<2x3584xbf16, #tpu.memory_space<vmem>>, vector<2x3584xbf16>
    %c0_1 = arith.constant 0 : index
    %c0_2 = arith.constant 0 : index
    %1 = vector.load %arg2[%c0_1, %c0_2] : memref<3584x128xbf16, #tpu.memory_space<vmem>>, vector<3584x128xbf16>
    %cst = arith.constant dense<0.000000e+00> : vector<2x128xf32>
    %2 = tpu.matmul %0, %1, %cst {dimension_numbers = #tpu.dot_dimension_numbers<[1], [0], [0], [1], [0, 0, 1, 1], [], []>} : vector<2x3584xbf16>, vector<3584x128xbf16>, vector<2x128xf32> -> vector<2x128xf32>
    %c0_3 = arith.constant 0 : index
    %c0_4 = arith.constant 0 : index
    %3 = vector.load %arg3[%c0_3, %c0_4] : memref<1x128xf32, #tpu.memory_space<vmem>>, vector<1x128xf32>
    %4 = vector.broadcast %3 : vector<1x128xf32> to vector<2x128xf32>
    %5 = arith.addf %2, %4 : vector<2x128xf32>
    %cst_5 = arith.constant 0.000000e+00 : f32
    %6 = vector.broadcast %cst_5 : f32 to vector<2x128xf32>
    %7 = arith.maximumf %5, %6 : vector<2x128xf32>
    %8 = arith.truncf %7 : vector<2x128xf32> to vector<2x128xbf16>
    %c0_6 = arith.constant 0 : index
    %c0_7 = arith.constant 0 : index
    %9 = vector.load %arg4[%c0_6, %c0_7] : memref<128x128xbf16, #tpu.memory_space<vmem>>, vector<128x128xbf16>
    %cst_8 = arith.constant dense<0.000000e+00> : vector<2x128xf32>
    %10 = tpu.matmul %8, %9, %cst_8 {dimension_numbers = #tpu.dot_dimension_numbers<[1], [0], [0], [1], [0, 0, 1, 1], [], []>} : vector<2x128xbf16>, vector<128x128xbf16>, vector<2x128xf32> -> vector<2x128xf32>
    %c0_9 = arith.constant 0 : index
    %c0_10 = arith.constant 0 : index
    %11 = vector.load %arg5[%c0_9, %c0_10] : memref<1x128xf32, #tpu.memory_space<vmem>>, vector<1x128xf32>
    %12 = vector.broadcast %11 : vector<1x128xf32> to vector<2x128xf32>
    %13 = arith.addf %10, %12 : vector<2x128xf32>
    %c0_11 = arith.constant 0 : index
    %c0_12 = arith.constant 0 : index
    %14 = vector.load %arg6[%c0_11, %c0_12] : memref<2x128xf32, #tpu.memory_space<vmem>>, vector<2x128xf32>
    tpu.vector_store %arg6[%c0_11, %c0_12], %13 {strides = array<i32>} : memref<2x128xf32, #tpu.memory_space<vmem>>, vector<2x128xf32>,
    return
  }
  func.func @transform_0(%arg0: i32) -> (i32, i32) {
    %c0_i32 = arith.constant 0 : i32
    %c0_i32_0 = arith.constant 0 : i32
    return %arg0, %c0_i32 : i32, i32
  }
  func.func @transform_1(%arg0: i32) -> (i32, i32) {
    %c0_i32 = arith.constant 0 : i32
    %c0_i32_0 = arith.constant 0 : i32
    %c0_i32_1 = arith.constant 0 : i32
    return %c0_i32, %c0_i32_0 : i32, i32
  }
  func.func @transform_2(%arg0: i32) -> (i32, i32) {
    %c0_i32 = arith.constant 0 : i32
    %c0_i32_0 = arith.constant 0 : i32
    %c0_i32_1 = arith.constant 0 : i32
    return %c0_i32, %c0_i32_0 : i32, i32
  }
  func.func @transform_3(%arg0: i32) -> (i32, i32) {
    %c0_i32 = arith.constant 0 : i32
    %c0_i32_0 = arith.constant 0 : i32
    %c0_i32_1 = arith.constant 0 : i32
    return %c0_i32, %c0_i32_0 : i32, i32
  }
  func.func @transform_4(%arg0: i32) -> (i32, i32) {
    %c0_i32 = arith.constant 0 : i32
    %c0_i32_0 = arith.constant 0 : i32
    %c0_i32_1 = arith.constant 0 : i32
    return %c0_i32, %c0_i32_0 : i32, i32
  }
  func.func @transform_5(%arg0: i32) -> (i32, i32) {
    %c0_i32 = arith.constant 0 : i32
    %c0_i32_0 = arith.constant 0 : i32
    return %arg0, %c0_i32 : i32, i32
  }
}

</mosaic_0001>

<llo_original>
// kernel: simplenet_forward.3
$region0: #{simplenet_forward.3}
  #allocation0 [shape = 'u32[]', space=smem, size = 0x4, offset = 0x4, fixed_abs, tag = 'smem constant byte address 0x4 - core index']
  #allocation1 [shape = 'u32[144,128]{1,0:T(1,128)}', space=vmem, size = 0x12000, scoped, tag = 'internal scratch']
  %s0 = inlined_call_operand.vmem [shape: bf16[2,15,30], index: 0, kind: input, shape index: {}]
  %s1 = inlined_call_operand.vmem [shape: bf16[2,15,30], index: 1, kind: input, shape index: {}]
  %s2 = inlined_call_operand.vmem [shape: bf16[30,1024], index: 2, kind: input, shape index: {}]
  %s3 = inlined_call_operand.hbm [shape: bf16[30,1024], index: 3, kind: input, shape index: {}]
  %s4 = inlined_call_operand.hbm [shape: bf16[30,1024], index: 4, kind: input, shape index: {}]
  %s5 = inlined_call_operand.vmem [shape: f32[1,512], index: 5, kind: input, shape index: {}]
  %s6 = inlined_call_operand.vmem [shape: bf16[2,14,512], index: 6, kind: output, shape index: {}]
  %s7 = sld [smem:[#allocation0]]
  $region65: #{simplenet_forward.3} parent=0
    _
  %s9 = ssub.s32 1, %s7
  %s10 = scalar_select 0, %s9, %s7
  $region1: #{simplenet_forward.3} parent=0
    #allocation2 [shape = 'u8[65536]{0}', space=vmem, size = 0x10000, scoped, tag = 'input window, operand 3, single buffered']
    #allocation3 [shape = 's32[2]{0}', space=sflag, size = 0x8, scoped, tag = 'scoped memory for simplenet_forward.3']
    #allocation4 [shape = 'u8[65536]{0}', space=vmem, size = 0x10000, scoped, tag = 'input window, operand 4, single buffered']
    #allocation5 [shape = 's32[1]{0}', space=sflag, size = 0x4, scoped, tag = 'scoped memory for simplenet_forward.3']
    %11 = vsyncpa [#allocation3], 0
    %12 = vsyncpa [#allocation5], 0
    loop: start=0, step=1, limit=4
    $region2: #{simplenet_forward.3} parent=1 // loop_pre_header
      _
    $region3: #{simplenet_forward.3} parent=1 // loop_header
      %s14 = sphi 0, %s18
      %p15 = scmp.ge.s32.totalorder %s14, 4
      %s24 = sphi 0, %s26
      %s27 = sphi 0, %s24
      %s28 = sphi 0, %s27
      %s44 = sphi 0, %s28
      %s50 = sphi 0, %s52
      %s53 = sphi 0, %s50
      %s54 = sphi 0, %s53
      %s70 = sphi 0, %s54
      %s74 = sphi 0, %s74
      %s76 = sphi 0, %s74
      %s77 = sphi 0, %s76
      %s91 = sphi 0, %s77
      %s95 = sphi 0, %s95
      %s97 = sphi 0, %s95
      %s98 = sphi 0, %s97
      %s112 = sphi 0, %s98
      %s116 = sphi 0, %s116
      %s118 = sphi 0, %s116
      %s119 = sphi 0, %s118
      %s133 = sphi 0, %s119
      %s137 = sphi 0, %s137
      %s139 = sphi 0, %s137
      %s140 = sphi 0, %s139
      %s154 = sphi 0, %s140
      %s160 = sphi 0, %s162
      %s163 = sphi 0, %s160
      %s164 = sphi 0, %s163
      %s180 = sphi 0, %s164
    $region4: #{simplenet_forward.3} parent=1 // loop_header_branch
      %17 = sbr.rel (%p15) target = $region8
    $region5: #{simplenet_forward.3} parent=1 // loop_body
      %s19 = ssub.s32 %s14, 1
      %s20 = ssub.s32 %s14, 2
      %s21 = sadd.s32 %s14, 1
      %s22 = ssub.s32 %s14, %s21
      %p23 = scmp.eq.s32.totalorder %s22, 0
      %s25 = sadd.s32 %s24, 1
      %s26 = scalar_select %p23, %s24, %s25
      %p29 = pneg %p23
      %p30 = scmp.eq.s32.totalorder %s14, 1
      %p31 = por %p29, %p30
      %p32 = scmp.ne.s32.totalorder %s24, %s27
      %p33 = scmp.eq.s32.totalorder %s14, 0
      %p34 = por %p32, %p33
      %p35 = scmp.ne.s32.totalorder %s24, %s27
      %p36 = scmp.eq.s32.totalorder %s19, 1
      %p37 = por %p35, %p36
      %p38 = scmp.ne.s32.totalorder %s27, %s28
      %p39 = scmp.eq.s32.totalorder %s19, 0
      %p40 = por %p38, %p39
      %p41 = scmp.ne.s32.totalorder %s27, %s28
      %p42 = scmp.eq.s32.totalorder %s20, 1
      %p43 = por %p41, %p42
      %p45 = scmp.ne.s32.totalorder %s28, %s44
      %p46 = scmp.eq.s32.totalorder %s20, 0
      %p47 = por %p45, %p46
      %s48 = ssub.s32 %s14, %s21
      %p49 = scmp.eq.s32.totalorder %s48, 0
      %s51 = sadd.s32 %s50, 1
      %s52 = scalar_select %p49, %s50, %s51
      %p55 = pneg %p49
      %p56 = scmp.eq.s32.totalorder %s14, 1
      %p57 = por %p55, %p56
      %p58 = scmp.ne.s32.totalorder %s50, %s53
      %p59 = scmp.eq.s32.totalorder %s14, 0
      %p60 = por %p58, %p59
      %p61 = scmp.ne.s32.totalorder %s50, %s53
      %p62 = scmp.eq.s32.totalorder %s19, 1
      %p63 = por %p61, %p62
      %p64 = scmp.ne.s32.totalorder %s53, %s54
      %p65 = scmp.eq.s32.totalorder %s19, 0
      %p66 = por %p64, %p65
      %p67 = scmp.ne.s32.totalorder %s53, %s54
      %p68 = scmp.eq.s32.totalorder %s20, 1
      %p69 = por %p67, %p68
      %p71 = scmp.ne.s32.totalorder %s54, %s70
      %p72 = scmp.eq.s32.totalorder %s20, 0
      %p73 = por %p71, %p72
      %s75 = sadd.s32 %s74, 1
      %p78 = scmp.eq.s32.totalorder %s14, 1
      %p79 = scmp.ne.s32.totalorder %s74, %s76
      %p80 = scmp.eq.s32.totalorder %s14, 0
      %p81 = por %p79, %p80
      %p82 = scmp.ne.s32.totalorder %s74, %s76
      %p83 = scmp.eq.s32.totalorder %s19, 1
      %p84 = por %p82, %p83
      %p85 = scmp.ne.s32.totalorder %s76, %s77
      %p86 = scmp.eq.s32.totalorder %s19, 0
      %p87 = por %p85, %p86
      %p88 = scmp.ne.s32.totalorder %s76, %s77
      %p89 = scmp.eq.s32.totalorder %s20, 1
      %p90 = por %p88, %p89
      %p92 = scmp.ne.s32.totalorder %s77, %s91
      %p93 = scmp.eq.s32.totalorder %s20, 0
      %p94 = por %p92, %p93
      %s96 = sadd.s32 %s95, 1
      %p99 = scmp.eq.s32.totalorder %s14, 1
      %p100 = scmp.ne.s32.totalorder %s95, %s97
      %p101 = scmp.eq.s32.totalorder %s14, 0
      %p102 = por %p100, %p101
      %p103 = scmp.ne.s32.totalorder %s95, %s97
      %p104 = scmp.eq.s32.totalorder %s19, 1
      %p105 = por %p103, %p104
      %p106 = scmp.ne.s32.totalorder %s97, %s98
      %p107 = scmp.eq.s32.totalorder %s19, 0
      %p108 = por %p106, %p107
      %p109 = scmp.ne.s32.totalorder %s97, %s98
      %p110 = scmp.eq.s32.totalorder %s20, 1
      %p111 = por %p109, %p110
      %p113 = scmp.ne.s32.totalorder %s98, %s112
      %p114 = scmp.eq.s32.totalorder %s20, 0
      %p115 = por %p113, %p114
      %s117 = sadd.s32 %s116, 1
      %p120 = scmp.eq.s32.totalorder %s14, 1
      %p121 = scmp.ne.s32.totalorder %s116, %s118
      %p122 = scmp.eq.s32.totalorder %s14, 0
      %p123 = por %p121, %p122
      %p124 = scmp.ne.s32.totalorder %s116, %s118
      %p125 = scmp.eq.s32.totalorder %s19, 1
      %p126 = por %p124, %p125
      %p127 = scmp.ne.s32.totalorder %s118, %s119
      %p128 = scmp.eq.s32.totalorder %s19, 0
      %p129 = por %p127, %p128
      %p130 = scmp.ne.s32.totalorder %s118, %s119
      %p131 = scmp.eq.s32.totalorder %s20, 1
      %p132 = por %p130, %p131
      %p134 = scmp.ne.s32.totalorder %s119, %s133
      %p135 = scmp.eq.s32.totalorder %s20, 0
      %p136 = por %p134, %p135
      %s138 = sadd.s32 %s137, 1
      %p141 = scmp.eq.s32.totalorder %s14, 1
      %p142 = scmp.ne.s32.totalorder %s137, %s139
      %p143 = scmp.eq.s32.totalorder %s14, 0
      %p144 = por %p142, %p143
      %p145 = scmp.ne.s32.totalorder %s137, %s139
      %p146 = scmp.eq.s32.totalorder %s19, 1
      %p147 = por %p145, %p146
      %p148 = scmp.ne.s32.totalorder %s139, %s140
      %p149 = scmp.eq.s32.totalorder %s19, 0
      %p150 = por %p148, %p149
      %p151 = scmp.ne.s32.totalorder %s139, %s140
      %p152 = scmp.eq.s32.totalorder %s20, 1
      %p153 = por %p151, %p152
      %p155 = scmp.ne.s32.totalorder %s140, %s154
      %p156 = scmp.eq.s32.totalorder %s20, 0
      %p157 = por %p155, %p156
      %s158 = ssub.s32 %s14, %s21
      %p159 = scmp.eq.s32.totalorder %s158, 0
      %s161 = sadd.s32 %s160, 1
      %s162 = scalar_select %p159, %s160, %s161
      %p165 = pneg %p159
      %p166 = scmp.eq.s32.totalorder %s14, 1
      %p167 = por %p165, %p166
      %p168 = scmp.ne.s32.totalorder %s160, %s163
      %p169 = scmp.eq.s32.totalorder %s14, 0
      %p170 = por %p168, %p169
      %p171 = scmp.ne.s32.totalorder %s160, %s163
      %p172 = scmp.eq.s32.totalorder %s19, 1
      %p173 = por %p171, %p172
      %p174 = scmp.ne.s32.totalorder %s163, %s164
      %p175 = scmp.eq.s32.totalorder %s19, 0
      %p176 = por %p174, %p175
      %p177 = scmp.ne.s32.totalorder %s163, %s164
      %p178 = scmp.eq.s32.totalorder %s20, 1
      %p179 = por %p177, %p178
      %p181 = scmp.ne.s32.totalorder %s164, %s180
      %p182 = scmp.eq.s32.totalorder %s20, 0
      %p183 = por %p181, %p182
      %p184 = scmp.le.s32.totalorder 1, %s14
      %p185 = scmp.lt.s32.totalorder %s14, 3
      %p186 = pnand %p184, %p185
      %p187 = pneg %p186
      // Predicated region
      $region9: #{simplenet_forward.3} parent=5 // pred_check
        _
      $region10: #{simplenet_forward.3} parent=5 // pred_check_branch
        %189 = sbr.rel (%p186) target = $region12
      $region11: #{simplenet_forward.3} parent=5 // pred_region
        %s190 = ssub.s32 %s14, 1
        // Predicated region
        $region13: #{simplenet_forward.3} parent=11 // pred_check
          %p191 = pneg %p87
        $region14: #{simplenet_forward.3} parent=11 // pred_check_branch
          %193 = sbr.rel (%p191) target = $region16
        $region15: #{simplenet_forward.3} parent=11 // pred_region
          _
        $region16: #{simplenet_forward.3} parent=11 // pred_fallthru
          _
        // Predicated region
        $region17: #{simplenet_forward.3} parent=11 // pred_check
          %p194 = pneg %p108
        $region18: #{simplenet_forward.3} parent=11 // pred_check_branch
          %196 = sbr.rel (%p194) target = $region20
        $region19: #{simplenet_forward.3} parent=11 // pred_region
          %s198 = ssub.s32 2048, 2048
          %199 = vsyncadd [#allocation3], %s198
          %s200 = sshll.u32 [#allocation2], 4
          %s201 = int_to_ptr.vmem [resolvable:$true] %s200
          %206 = dma.hbm_to_vmem [thread:$0]  %s3, 2048, %s201, [#allocation3], 512, 512, 32
        $region20: #{simplenet_forward.3} parent=11 // pred_fallthru
          _
        // Predicated region
        $region21: #{simplenet_forward.3} parent=11 // pred_check
          %p207 = pneg %p129
        $region22: #{simplenet_forward.3} parent=11 // pred_check_branch
          %209 = sbr.rel (%p207) target = $region24
        $region23: #{simplenet_forward.3} parent=11 // pred_region
          %s211 = ssub.s32 2048, 2048
          %212 = vsyncadd [#allocation5], %s211
          %s213 = sshll.u32 [#allocation4], 4
          %s214 = int_to_ptr.vmem [resolvable:$true] %s213
          %219 = dma.hbm_to_vmem [thread:$0]  %s4, 2048, %s214, [#allocation5], 512, 512, 32
        $region24: #{simplenet_forward.3} parent=11 // pred_fallthru
          _
        // Predicated region
        $region25: #{simplenet_forward.3} parent=11 // pred_check
          %p220 = pneg %p150
        $region26: #{simplenet_forward.3} parent=11 // pred_check_branch
          %222 = sbr.rel (%p220) target = $region28
        $region27: #{simplenet_forward.3} parent=11 // pred_region
          _
        $region28: #{simplenet_forward.3} parent=11 // pred_fallthru
          _
      $region12: #{simplenet_forward.3} parent=5 // pred_fallthru
        _
      %p223 = scmp.lt.s32.totalorder %s14, 2
      // Predicated region
      $region29: #{simplenet_forward.3} parent=5 // pred_check
        %p224 = pneg %p223
      $region30: #{simplenet_forward.3} parent=5 // pred_check_branch
        %226 = sbr.rel (%p224) target = $region32
      $region31: #{simplenet_forward.3} parent=5 // pred_region
        // Predicated region
        $region33: #{simplenet_forward.3} parent=31 // pred_check
          %p227 = pneg %p34
        $region34: #{simplenet_forward.3} parent=31 // pred_check_branch
          %229 = sbr.rel (%p227) target = $region36
        $region35: #{simplenet_forward.3} parent=31 // pred_region
          %p230 = scmp.lt.s32.totalorder %s14, 1
          %s231 = scalar_select %p230, %s14, 1
          %s232 = smul.addr %s231, 2
          %s233 = smul.addr %s232, 4
          %s234 = scalar_lea.vmem %s0, %s233
        $region36: #{simplenet_forward.3} parent=31 // pred_fallthru
          _
        // Predicated region
        $region37: #{simplenet_forward.3} parent=31 // pred_check
          %p235 = pneg %p60
        $region38: #{simplenet_forward.3} parent=31 // pred_check_branch
          %237 = sbr.rel (%p235) target = $region40
        $region39: #{simplenet_forward.3} parent=31 // pred_region
          %p238 = scmp.lt.s32.totalorder %s14, 1
          %s239 = scalar_select %p238, %s14, 1
          %s240 = smul.addr %s239, 2
          %s241 = smul.addr %s240, 4
          %s242 = scalar_lea.vmem %s1, %s241
        $region40: #{simplenet_forward.3} parent=31 // pred_fallthru
          _
      $region32: #{simplenet_forward.3} parent=5 // pred_fallthru
        _
      %p243 = scmp.le.s32.totalorder 1, %s14
      %p244 = scmp.lt.s32.totalorder %s14, 3
      %p245 = pnand %p243, %p244
      %p246 = pneg %p245
      // Predicated region
      $region41: #{simplenet_forward.3} parent=5 // pred_check
        _
      $region42: #{simplenet_forward.3} parent=5 // pred_check_branch
        %248 = sbr.rel (%p245) target = $region44
      $region43: #{simplenet_forward.3} parent=5 // pred_region
        %s249 = ssub.s32 %s14, 1
        // Predicated region
        $region45: #{simplenet_forward.3} parent=43 // pred_check
          %p250 = pneg %p108
        $region46: #{simplenet_forward.3} parent=43 // pred_check_branch
          %252 = sbr.rel (%p250) target = $region48
        $region47: #{simplenet_forward.3} parent=43 // pred_region
          %253 = dma.done [#allocation3], 2048
        $region48: #{simplenet_forward.3} parent=43 // pred_fallthru
          _
        // Predicated region
        $region49: #{simplenet_forward.3} parent=43 // pred_check
          %p254 = pneg %p129
        $region50: #{simplenet_forward.3} parent=43 // pred_check_branch
          %256 = sbr.rel (%p254) target = $region52
        $region51: #{simplenet_forward.3} parent=43 // pred_region
          %257 = dma.done [#allocation5], 2048
        $region52: #{simplenet_forward.3} parent=43 // pred_fallthru
          _
        %p258 = scmp.lt.s32.totalorder %s19, 1
        %s259 = scalar_select %p258, %s19, 1
        %s260 = smul.addr %s259, 2
        %s261 = smul.addr %s260, 4
        %s262 = scalar_lea.vmem %s0, %s261
        %p263 = pneg %p40
        %p264 = pneg %p37
        %p265 = scmp.lt.s32.totalorder %s19, 1
        %s266 = scalar_select %p265, %s19, 1
        %s267 = smul.addr %s266, 2
        %s268 = smul.addr %s267, 4
        %s269 = scalar_lea.vmem %s1, %s268
        %p270 = pneg %p66
        %p271 = pneg %p63
        %p272 = pneg %p87
        %p273 = pneg %p84
        %p274 = pneg %p108
        %p275 = pneg %p105
        %p276 = pneg %p129
        %p277 = pneg %p126
        %p278 = pneg %p150
        %p279 = pneg %p147
        %p280 = pneg %p176
        %p281 = pneg %p173
        %p282 = scmp.lt.s32.totalorder %s19, 1
        %s283 = scalar_select %p282, %s19, 1
        %s284 = smul.addr %s283, 8
        %s285 = smul.addr %s284, 4
        %s286 = scalar_lea.vmem %s6, %s285
        %p287 = scmp.lt.s32.totalorder %s19, 1
        %s288 = scalar_select %p287, %s19, 1
        %s289 = smul.addr %s288, 2
        %s290 = smul.addr %s289, 4
        %s291 = scalar_lea.vmem %s0, %s290
        %p292 = scmp.lt.s32.totalorder %s19, 1
        %s293 = scalar_select %p292, %s19, 1
        %s294 = smul.addr %s293, 2
        %s295 = smul.addr %s294, 4
        %s296 = scalar_lea.vmem %s1, %s295
        %p297 = scmp.lt.s32.totalorder %s19, 1
        %s298 = scalar_select %p297, %s19, 1
        %s299 = smul.addr %s298, 8
        %s300 = smul.addr %s299, 4
        %s301 = scalar_lea.vmem %s6, %s300
        %v303 = vld [vmem:[%s291] sm:$0xf]
        %v304 = vld [vmem:[%s291 + $0x4] sm:$0xf]
        %v305 = vld [vmem:[%s296] sm:$0xf]
        %v306 = vld [vmem:[%s296 + $0x4] sm:$0xf]
        %v307 = vld [vmem:[%s2] sm:$0xff]
        %v308 = vld [vmem:[%s2 + $0x8] sm:$0xff]
        %v309 = vld [vmem:[%s2 + $0x10] sm:$0xff]
        %v310 = vld [vmem:[%s2 + $0x18] sm:$0xff]
        %v311 = vld [vmem:[%s2 + $0x20] sm:$0xff]
        %v312 = vld [vmem:[%s2 + $0x28] sm:$0xff]
        %v313 = vld [vmem:[%s2 + $0x30] sm:$0xff]
        %v314 = vld [vmem:[%s2 + $0x38] sm:$0xff]
        %v315 = vld [vmem:[%s2 + $0x40] sm:$0xff]
        %v316 = vld [vmem:[%s2 + $0x48] sm:$0xff]
        %v317 = vld [vmem:[%s2 + $0x50] sm:$0xff]
        %v318 = vld [vmem:[%s2 + $0x58] sm:$0xff]
        %v319 = vld [vmem:[%s2 + $0x60] sm:$0x77]
        %v320 = vld [vmem:[%s2 + $0x68] sm:$0x77]
        %v321 = vld [vmem:[%s2 + $0x70] sm:$0x77]
        %v322 = vld [vmem:[%s2 + $0x78] sm:$0x77]
        %v323 = vld [vmem:[#allocation2] sm:$0xff]
        %v324 = vld [vmem:[#allocation2 + $0x8] sm:$0xff]
        %v325 = vld [vmem:[#allocation2 + $0x10] sm:$0xff]
        %v326 = vld [vmem:[#allocation2 + $0x18] sm:$0xff]
        %v327 = vld [vmem:[#allocation2 + $0x20] sm:$0xff]
        %v328 = vld [vmem:[#allocation2 + $0x28] sm:$0xff]
        %v329 = vld [vmem:[#allocation2 + $0x30] sm:$0xff]
        %v330 = vld [vmem:[#allocation2 + $0x38] sm:$0xff]
        %v331 = vld [vmem:[#allocation2 + $0x40] sm:$0xff]
        %v332 = vld [vmem:[#allocation2 + $0x48] sm:$0xff]
        %v333 = vld [vmem:[#allocation2 + $0x50] sm:$0xff]
        %v334 = vld [vmem:[#allocation2 + $0x58] sm:$0xff]
        %v335 = vld [vmem:[#allocation2 + $0x60] sm:$0x77]
        %v336 = vld [vmem:[#allocation2 + $0x68] sm:$0x77]
        %v337 = vld [vmem:[#allocation2 + $0x70] sm:$0x77]
        %v338 = vld [vmem:[#allocation2 + $0x78] sm:$0x77]
        %v339 = vld [vmem:[#allocation4] sm:$0xff]
        %v340 = vld [vmem:[#allocation4 + $0x8] sm:$0xff]
        %v341 = vld [vmem:[#allocation4 + $0x10] sm:$0xff]
        %v342 = vld [vmem:[#allocation4 + $0x18] sm:$0xff]
        %v343 = vld [vmem:[#allocation4 + $0x20] sm:$0xff]
        %v344 = vld [vmem:[#allocation4 + $0x28] sm:$0xff]
        %v345 = vld [vmem:[#allocation4 + $0x30] sm:$0xff]
        %v346 = vld [vmem:[#allocation4 + $0x38] sm:$0xff]
        %v347 = vld [vmem:[#allocation4 + $0x40] sm:$0xff]
        %v348 = vld [vmem:[#allocation4 + $0x48] sm:$0xff]
        %v349 = vld [vmem:[#allocation4 + $0x50] sm:$0xff]
        %v350 = vld [vmem:[#allocation4 + $0x58] sm:$0xff]
        %v351 = vld [vmem:[#allocation4 + $0x60] sm:$0x77]
        %v352 = vld [vmem:[#allocation4 + $0x68] sm:$0x77]
        %v353 = vld [vmem:[#allocation4 + $0x70] sm:$0x77]
        %v354 = vld [vmem:[#allocation4 + $0x78] sm:$0x77]
        %v357 = vunpack.c.l.b16 %v305
        %v358 = vunpack.c.l.b16 %v306
        %v359 = vpack.c.b16 %v358, %v357
        %v376 = vunpack.c.l.b16 %v323
        %v377 = vunpack.c.h.b16 %v323
        %v378 = vunpack.c.l.b16 %v324
        %v379 = vunpack.c.h.b16 %v324
        %v380 = vunpack.c.l.b16 %v325
        %v381 = vunpack.c.h.b16 %v325
        %v382 = vunpack.c.l.b16 %v326
        %v383 = vunpack.c.h.b16 %v326
        %v384 = vunpack.c.l.b16 %v327
        %v385 = vunpack.c.h.b16 %v327
        %v386 = vunpack.c.l.b16 %v328
        %v387 = vunpack.c.h.b16 %v328
        %v388 = vunpack.c.l.b16 %v329
        %v389 = vunpack.c.h.b16 %v329
        %v390 = vunpack.c.l.b16 %v330
        %v391 = vunpack.c.h.b16 %v330
        %v392 = vunpack.c.l.b16 %v331
        %v393 = vunpack.c.h.b16 %v331
        %v394 = vunpack.c.l.b16 %v332
        %v395 = vunpack.c.h.b16 %v332
        %v396 = vunpack.c.l.b16 %v333
        %v397 = vunpack.c.h.b16 %v333
        %v398 = vunpack.c.l.b16 %v334
        %v399 = vunpack.c.h.b16 %v334
        %v400 = vunpack.c.l.b16 %v335
        %v401 = vunpack.c.h.b16 %v335
        %v402 = vunpack.c.l.b16 %v336
        %v403 = vunpack.c.h.b16 %v336
        %v404 = vunpack.c.l.b16 %v337
        %v405 = vunpack.c.h.b16 %v337
        %v406 = vunpack.c.l.b16 %v338
        %v407 = vunpack.c.h.b16 %v338
        %v408 = vpack.c.b16 %v384, %v376
        %v409 = vpack.c.b16 %v385, %v377
        %v410 = vpack.c.b16 %v386, %v378
        %v411 = vpack.c.b16 %v387, %v379
        %v412 = vpack.c.b16 %v388, %v380
        %v413 = vpack.c.b16 %v389, %v381
        %v414 = vpack.c.b16 %v390, %v382
        %v415 = vpack.c.b16 %v391, %v383
        %v416 = vpack.c.b16 %v400, %v392
        %v417 = vpack.c.b16 %v401, %v393
        %v418 = vpack.c.b16 %v402, %v394
        %v419 = vpack.c.b16 %v403, %v395
        %v420 = vpack.c.b16 %v404, %v396
        %v421 = vpack.c.b16 %v405, %v397
        %v422 = vpack.c.b16 %v406, %v398
        %v423 = vpack.c.b16 %v407, %v399
        %vm432 = vcmask 244736
        %v434 = vsel %vm432, %v359, 0
        %vm436 = vcmask 1046528
        %v438 = vsel %vm436, %v416, 0
        %v441 = vsel %vm436, %v417, 0
        %v444 = vsel %vm436, %v418, 0
        %v447 = vsel %vm436, %v419, 0
        %v450 = vsel %vm436, %v420, 0
        %v453 = vsel %vm436, %v421, 0
        %v456 = vsel %vm436, %v422, 0
        %v459 = vsel %vm436, %v423, 0
        %461 = vmatprep.subr.bf16.mxu0 0
        %462 = vmatpush1.bf16.msra.mxu0 0
        %463 = vmatprep.subr.bf16.mxu0 0
        %464 = vmatpush1.bf16.msra.mxu0 0
        %465 = vmatprep.subr.bf16.mxu0 0
        %466 = vmatpush1.bf16.msra.mxu0 0
        %467 = vmatprep.subr.bf16.mxu0 0
        %468 = vmatpush1.bf16.msra.mxu0 0
        %469 = vmatprep.subr.bf16.mxu0 0
        %470 = vmatpush1.bf16.msra.mxu0 0
        %471 = vmatprep.subr.bf16.mxu0 0
        %472 = vmatpush1.bf16.msra.mxu0 0
        %473 = vmatprep.subr.bf16.mxu0 %v441
        %474 = vmatpush1.bf16.msra.mxu0 %v438
        %475 = vmatprep.subr.bf16.mxu0 %v409
        %476 = vmatpush1.bf16.msra.mxu0 %v408
        %477 = vmatprep.subr.bf16.mxu0 0
        %478 = vmatpush2.bf16.msra.mxu0 0
        %479 = vmatprep.subr.bf16.mxu0 0
        %480 = vmatpush2.bf16.msra.mxu0 0
        %481 = vmatprep.subr.bf16.mxu0 0
        %482 = vmatpush2.bf16.msra.mxu0 0
        %483 = vmatprep.subr.bf16.mxu0 0
        %484 = vmatpush2.bf16.msra.mxu0 0
        %485 = vmatprep.subr.bf16.mxu0 0
        %486 = vmatpush2.bf16.msra.mxu0 0
        %487 = vmatprep.subr.bf16.mxu0 0
        %488 = vmatpush2.bf16.msra.mxu0 0
        %489 = vmatprep.subr.bf16.mxu0 0
        %490 = vmatpush2.bf16.msra.mxu0 0
        %491 = vmatprep.subr.bf16.mxu0 0
        %492 = vmatpush2.bf16.msra.mxu0 0
        %493 = vmatprep.mubr.bf16.mxu0 0
        %494 = vmatmul.mubr.bf16.gmra.mxu0 %v434
        %v495 = vpop.f32.mrf.mxu0
        %v496 = vadd.f32 0.0, %v495
        %v497 = vpop.f32.mrf.mxu0
        %v498 = vadd.f32 0.0, %v497
        %v499 = vpop.f32.mrf.mxu0
        %v500 = vadd.f32 0.0, %v499
        %v501 = vpop.f32.mrf.mxu0
        %v502 = vadd.f32 0.0, %v501
        %503 = vdwg.mxu0
        %504 = vmatprep.subr.bf16.mxu0 0
        %505 = vmatpush1.bf16.msra.mxu0 0
        %506 = vmatprep.subr.bf16.mxu0 0
        %507 = vmatpush1.bf16.msra.mxu0 0
        %508 = vmatprep.subr.bf16.mxu0 0
        %509 = vmatpush1.bf16.msra.mxu0 0
        %510 = vmatprep.subr.bf16.mxu0 0
        %511 = vmatpush1.bf16.msra.mxu0 0
        %512 = vmatprep.subr.bf16.mxu0 0
        %513 = vmatpush1.bf16.msra.mxu0 0
        %514 = vmatprep.subr.bf16.mxu0 0
        %515 = vmatpush1.bf16.msra.mxu0 0
        %516 = vmatprep.subr.bf16.mxu0 %v447
        %517 = vmatpush1.bf16.msra.mxu0 %v444
        %518 = vmatprep.subr.bf16.mxu0 %v411
        %519 = vmatpush1.bf16.msra.mxu0 %v410
        %520 = vmatprep.subr.bf16.mxu0 0
        %521 = vmatpush2.bf16.msra.mxu0 0
        %522 = vmatprep.subr.bf16.mxu0 0
        %523 = vmatpush2.bf16.msra.mxu0 0
        %524 = vmatprep.subr.bf16.mxu0 0
        %525 = vmatpush2.bf16.msra.mxu0 0
        %526 = vmatprep.subr.bf16.mxu0 0
        %527 = vmatpush2.bf16.msra.mxu0 0
        %528 = vmatprep.subr.bf16.mxu0 0
        %529 = vmatpush2.bf16.msra.mxu0 0
        %530 = vmatprep.subr.bf16.mxu0 0
        %531 = vmatpush2.bf16.msra.mxu0 0
        %532 = vmatprep.subr.bf16.mxu0 0
        %533 = vmatpush2.bf16.msra.mxu0 0
        %534 = vmatprep.subr.bf16.mxu0 0
        %535 = vmatpush2.bf16.msra.mxu0 0
        %536 = vmatprep.mubr.bf16.mxu0 0
        %537 = vmatmul.mubr.bf16.gmra.mxu0 %v434
        %v538 = vpop.f32.mrf.mxu0
        %v539 = vadd.f32 0.0, %v538
        %v540 = vpop.f32.mrf.mxu0
        %v541 = vadd.f32 0.0, %v540
        %v542 = vpop.f32.mrf.mxu0
        %v543 = vadd.f32 0.0, %v542
        %v544 = vpop.f32.mrf.mxu0
        %v545 = vadd.f32 0.0, %v544
        %546 = vdwg.mxu0
        %547 = vmatprep.subr.bf16.mxu0 0
        %548 = vmatpush1.bf16.msra.mxu0 0
        %549 = vmatprep.subr.bf16.mxu0 0
        %550 = vmatpush1.bf16.msra.mxu0 0
        %551 = vmatprep.subr.bf16.mxu0 0
        %552 = vmatpush1.bf16.msra.mxu0 0
        %553 = vmatprep.subr.bf16.mxu0 0
        %554 = vmatpush1.bf16.msra.mxu0 0
        %555 = vmatprep.subr.bf16.mxu0 0
        %556 = vmatpush1.bf16.msra.mxu0 0
        %557 = vmatprep.subr.bf16.mxu0 0
        %558 = vmatpush1.bf16.msra.mxu0 0
        %559 = vmatprep.subr.bf16.mxu0 %v453
        %560 = vmatpush1.bf16.msra.mxu0 %v450
        %561 = vmatprep.subr.bf16.mxu0 %v413
        %562 = vmatpush1.bf16.msra.mxu0 %v412
        %563 = vmatprep.subr.bf16.mxu0 0
        %564 = vmatpush2.bf16.msra.mxu0 0
        %565 = vmatprep.subr.bf16.mxu0 0
        %566 = vmatpush2.bf16.msra.mxu0 0
        %567 = vmatprep.subr.bf16.mxu0 0
        %568 = vmatpush2.bf16.msra.mxu0 0
        %569 = vmatprep.subr.bf16.mxu0 0
        %570 = vmatpush2.bf16.msra.mxu0 0
        %571 = vmatprep.subr.bf16.mxu0 0
        %572 = vmatpush2.bf16.msra.mxu0 0
        %573 = vmatprep.subr.bf16.mxu0 0
        %574 = vmatpush2.bf16.msra.mxu0 0
        %575 = vmatprep.subr.bf16.mxu0 0
        %576 = vmatpush2.bf16.msra.mxu0 0
        %577 = vmatprep.subr.bf16.mxu0 0
        %578 = vmatpush2.bf16.msra.mxu0 0
        %579 = vmatprep.mubr.bf16.mxu0 0
        %580 = vmatmul.mubr.bf16.gmra.mxu0 %v434
        %v581 = vpop.f32.mrf.mxu0
        %v582 = vadd.f32 0.0, %v581
        %v583 = vpop.f32.mrf.mxu0
        %v584 = vadd.f32 0.0, %v583
        %v585 = vpop.f32.mrf.mxu0
        %v586 = vadd.f32 0.0, %v585
        %v587 = vpop.f32.mrf.mxu0
        %v588 = vadd.f32 0.0, %v587
        %589 = vdwg.mxu0
        %590 = vmatprep.subr.bf16.mxu0 0
        %591 = vmatpush1.bf16.msra.mxu0 0
        %592 = vmatprep.subr.bf16.mxu0 0
        %593 = vmatpush1.bf16.msra.mxu0 0
        %594 = vmatprep.subr.bf16.mxu0 0
        %595 = vmatpush1.bf16.msra.mxu0 0
        %596 = vmatprep.subr.bf16.mxu0 0
        %597 = vmatpush1.bf16.msra.mxu0 0
        %598 = vmatprep.subr.bf16.mxu0 0
        %599 = vmatpush1.bf16.msra.mxu0 0
        %600 = vmatprep.subr.bf16.mxu0 0
        %601 = vmatpush1.bf16.msra.mxu0 0
        %602 = vmatprep.subr.bf16.mxu0 %v459
        %603 = vmatpush1.bf16.msra.mxu0 %v456
        %604 = vmatprep.subr.bf16.mxu0 %v415
        %605 = vmatpush1.bf16.msra.mxu0 %v414
        %606 = vmatprep.subr.bf16.mxu0 0
        %607 = vmatpush2.bf16.msra.mxu0 0
        %608 = vmatprep.subr.bf16.mxu0 0
        %609 = vmatpush2.bf16.msra.mxu0 0
        %610 = vmatprep.subr.bf16.mxu0 0
        %611 = vmatpush2.bf16.msra.mxu0 0
        %612 = vmatprep.subr.bf16.mxu0 0
        %613 = vmatpush2.bf16.msra.mxu0 0
        %614 = vmatprep.subr.bf16.mxu0 0
        %615 = vmatpush2.bf16.msra.mxu0 0
        %616 = vmatprep.subr.bf16.mxu0 0
        %617 = vmatpush2.bf16.msra.mxu0 0
        %618 = vmatprep.subr.bf16.mxu0 0
        %619 = vmatpush2.bf16.msra.mxu0 0
        %620 = vmatprep.subr.bf16.mxu0 0
        %621 = vmatpush2.bf16.msra.mxu0 0
        %622 = vmatprep.mubr.bf16.mxu0 0
        %623 = vmatmul.mubr.bf16.gmra.mxu0 %v434
        %v624 = vpop.f32.mrf.mxu0
        %v625 = vadd.f32 0.0, %v624
        %v626 = vpop.f32.mrf.mxu0
        %v627 = vadd.f32 0.0, %v626
        %v628 = vpop.f32.mrf.mxu0
        %v629 = vadd.f32 0.0, %v628
        %v630 = vpop.f32.mrf.mxu0
        %v631 = vadd.f32 0.0, %v630
        %632 = vdwg.mxu0
        %v635 = vunpack.c.l.b16 %v303
        %v636 = vunpack.c.l.b16 %v304
        %v637 = vpack.c.b16 %v636, %v635
        %v654 = vunpack.c.l.b16 %v307
        %v655 = vunpack.c.h.b16 %v307
        %v656 = vunpack.c.l.b16 %v308
        %v657 = vunpack.c.h.b16 %v308
        %v658 = vunpack.c.l.b16 %v309
        %v659 = vunpack.c.h.b16 %v309
        %v660 = vunpack.c.l.b16 %v310
        %v661 = vunpack.c.h.b16 %v310
        %v662 = vunpack.c.l.b16 %v311
        %v663 = vunpack.c.h.b16 %v311
        %v664 = vunpack.c.l.b16 %v312
        %v665 = vunpack.c.h.b16 %v312
        %v666 = vunpack.c.l.b16 %v313
        %v667 = vunpack.c.h.b16 %v313
        %v668 = vunpack.c.l.b16 %v314
        %v669 = vunpack.c.h.b16 %v314
        %v670 = vunpack.c.l.b16 %v315
        %v671 = vunpack.c.h.b16 %v315
        %v672 = vunpack.c.l.b16 %v316
        %v673 = vunpack.c.h.b16 %v316
        %v674 = vunpack.c.l.b16 %v317
        %v675 = vunpack.c.h.b16 %v317
        %v676 = vunpack.c.l.b16 %v318
        %v677 = vunpack.c.h.b16 %v318
        %v678 = vunpack.c.l.b16 %v319
        %v679 = vunpack.c.h.b16 %v319
        %v680 = vunpack.c.l.b16 %v320
        %v681 = vunpack.c.h.b16 %v320
        %v682 = vunpack.c.l.b16 %v321
        %v683 = vunpack.c.h.b16 %v321
        %v684 = vunpack.c.l.b16 %v322
        %v685 = vunpack.c.h.b16 %v322
        %v686 = vpack.c.b16 %v662, %v654
        %v687 = vpack.c.b16 %v663, %v655
        %v688 = vpack.c.b16 %v664, %v656
        %v689 = vpack.c.b16 %v665, %v657
        %v690 = vpack.c.b16 %v666, %v658
        %v691 = vpack.c.b16 %v667, %v659
        %v692 = vpack.c.b16 %v668, %v660
        %v693 = vpack.c.b16 %v669, %v661
        %v694 = vpack.c.b16 %v678, %v670
        %v695 = vpack.c.b16 %v679, %v671
        %v696 = vpack.c.b16 %v680, %v672
        %v697 = vpack.c.b16 %v681, %v673
        %v698 = vpack.c.b16 %v682, %v674
        %v699 = vpack.c.b16 %v683, %v675
        %v700 = vpack.c.b16 %v684, %v676
        %v701 = vpack.c.b16 %v685, %v677
        %v711 = vsel %vm432, %v637, 0
        %v714 = vsel %vm436, %v694, 0
        %v717 = vsel %vm436, %v695, 0
        %v720 = vsel %vm436, %v696, 0
        %v723 = vsel %vm436, %v697, 0
        %v726 = vsel %vm436, %v698, 0
        %v729 = vsel %vm436, %v699, 0
        %v732 = vsel %vm436, %v700, 0
        %v735 = vsel %vm436, %v701, 0
        %737 = vmatprep.subr.bf16.mxu0 0
        %738 = vmatpush1.bf16.msra.mxu0 0
        %739 = vmatprep.subr.bf16.mxu0 0
        %740 = vmatpush1.bf16.msra.mxu0 0
        %741 = vmatprep.subr.bf16.mxu0 0
        %742 = vmatpush1.bf16.msra.mxu0 0
        %743 = vmatprep.subr.bf16.mxu0 0
        %744 = vmatpush1.bf16.msra.mxu0 0
        %745 = vmatprep.subr.bf16.mxu0 0
        %746 = vmatpush1.bf16.msra.mxu0 0
        %747 = vmatprep.subr.bf16.mxu0 0
        %748 = vmatpush1.bf16.msra.mxu0 0
        %749 = vmatprep.subr.bf16.mxu0 %v717
        %750 = vmatpush1.bf16.msra.mxu0 %v714
        %751 = vmatprep.subr.bf16.mxu0 %v687
        %752 = vmatpush1.bf16.msra.mxu0 %v686
        %753 = vmatprep.subr.bf16.mxu0 0
        %754 = vmatpush2.bf16.msra.mxu0 0
        %755 = vmatprep.subr.bf16.mxu0 0
        %756 = vmatpush2.bf16.msra.mxu0 0
        %757 = vmatprep.subr.bf16.mxu0 0
        %758 = vmatpush2.bf16.msra.mxu0 0
        %759 = vmatprep.subr.bf16.mxu0 0
        %760 = vmatpush2.bf16.msra.mxu0 0
        %761 = vmatprep.subr.bf16.mxu0 0
        %762 = vmatpush2.bf16.msra.mxu0 0
        %763 = vmatprep.subr.bf16.mxu0 0
        %764 = vmatpush2.bf16.msra.mxu0 0
        %765 = vmatprep.subr.bf16.mxu0 0
        %766 = vmatpush2.bf16.msra.mxu0 0
        %767 = vmatprep.subr.bf16.mxu0 0
        %768 = vmatpush2.bf16.msra.mxu0 0
        %769 = vmatprep.mubr.bf16.mxu0 0
        %770 = vmatmul.mubr.bf16.gmra.mxu0 %v711
        %v771 = vpop.f32.mrf.mxu0
        %v772 = vadd.f32 %v496, %v771
        %v773 = vpop.f32.mrf.mxu0
        %v774 = vadd.f32 %v498, %v773
        %v775 = vpop.f32.mrf.mxu0
        %v776 = vadd.f32 %v500, %v775
        %v777 = vpop.f32.mrf.mxu0
        %v778 = vadd.f32 %v502, %v777
        %779 = vdwg.mxu0
        %780 = vmatprep.subr.bf16.mxu0 0
        %781 = vmatpush1.bf16.msra.mxu0 0
        %782 = vmatprep.subr.bf16.mxu0 0
        %783 = vmatpush1.bf16.msra.mxu0 0
        %784 = vmatprep.subr.bf16.mxu0 0
        %785 = vmatpush1.bf16.msra.mxu0 0
        %786 = vmatprep.subr.bf16.mxu0 0
        %787 = vmatpush1.bf16.msra.mxu0 0
        %788 = vmatprep.subr.bf16.mxu0 0
        %789 = vmatpush1.bf16.msra.mxu0 0
        %790 = vmatprep.subr.bf16.mxu0 0
        %791 = vmatpush1.bf16.msra.mxu0 0
        %792 = vmatprep.subr.bf16.mxu0 %v723
        %793 = vmatpush1.bf16.msra.mxu0 %v720
        %794 = vmatprep.subr.bf16.mxu0 %v689
        %795 = vmatpush1.bf16.msra.mxu0 %v688
        %796 = vmatprep.subr.bf16.mxu0 0
        %797 = vmatpush2.bf16.msra.mxu0 0
        %798 = vmatprep.subr.bf16.mxu0 0
        %799 = vmatpush2.bf16.msra.mxu0 0
        %800 = vmatprep.subr.bf16.mxu0 0
        %801 = vmatpush2.bf16.msra.mxu0 0
        %802 = vmatprep.subr.bf16.mxu0 0
        %803 = vmatpush2.bf16.msra.mxu0 0
        %804 = vmatprep.subr.bf16.mxu0 0
        %805 = vmatpush2.bf16.msra.mxu0 0
        %806 = vmatprep.subr.bf16.mxu0 0
        %807 = vmatpush2.bf16.msra.mxu0 0
        %808 = vmatprep.subr.bf16.mxu0 0
        %809 = vmatpush2.bf16.msra.mxu0 0
        %810 = vmatprep.subr.bf16.mxu0 0
        %811 = vmatpush2.bf16.msra.mxu0 0
        %812 = vmatprep.mubr.bf16.mxu0 0
        %813 = vmatmul.mubr.bf16.gmra.mxu0 %v711
        %v814 = vpop.f32.mrf.mxu0
        %v815 = vadd.f32 %v539, %v814
        %v816 = vpop.f32.mrf.mxu0
        %v817 = vadd.f32 %v541, %v816
        %v818 = vpop.f32.mrf.mxu0
        %v819 = vadd.f32 %v543, %v818
        %v820 = vpop.f32.mrf.mxu0
        %v821 = vadd.f32 %v545, %v820
        %822 = vdwg.mxu0
        %823 = vmatprep.subr.bf16.mxu0 0
        %824 = vmatpush1.bf16.msra.mxu0 0
        %825 = vmatprep.subr.bf16.mxu0 0
        %826 = vmatpush1.bf16.msra.mxu0 0
        %827 = vmatprep.subr.bf16.mxu0 0
        %828 = vmatpush1.bf16.msra.mxu0 0
        %829 = vmatprep.subr.bf16.mxu0 0
        %830 = vmatpush1.bf16.msra.mxu0 0
        %831 = vmatprep.subr.bf16.mxu0 0
        %832 = vmatpush1.bf16.msra.mxu0 0
        %833 = vmatprep.subr.bf16.mxu0 0
        %834 = vmatpush1.bf16.msra.mxu0 0
        %835 = vmatprep.subr.bf16.mxu0 %v729
        %836 = vmatpush1.bf16.msra.mxu0 %v726
        %837 = vmatprep.subr.bf16.mxu0 %v691
        %838 = vmatpush1.bf16.msra.mxu0 %v690
        %839 = vmatprep.subr.bf16.mxu0 0
        %840 = vmatpush2.bf16.msra.mxu0 0
        %841 = vmatprep.subr.bf16.mxu0 0
        %842 = vmatpush2.bf16.msra.mxu0 0
        %843 = vmatprep.subr.bf16.mxu0 0
        %844 = vmatpush2.bf16.msra.mxu0 0
        %845 = vmatprep.subr.bf16.mxu0 0
        %846 = vmatpush2.bf16.msra.mxu0 0
        %847 = vmatprep.subr.bf16.mxu0 0
        %848 = vmatpush2.bf16.msra.mxu0 0
        %849 = vmatprep.subr.bf16.mxu0 0
        %850 = vmatpush2.bf16.msra.mxu0 0
        %851 = vmatprep.subr.bf16.mxu0 0
        %852 = vmatpush2.bf16.msra.mxu0 0
        %853 = vmatprep.subr.bf16.mxu0 0
        %854 = vmatpush2.bf16.msra.mxu0 0
        %855 = vmatprep.mubr.bf16.mxu0 0
        %856 = vmatmul.mubr.bf16.gmra.mxu0 %v711
        %v857 = vpop.f32.mrf.mxu0
        %v858 = vadd.f32 %v582, %v857
        %v859 = vpop.f32.mrf.mxu0
        %v860 = vadd.f32 %v584, %v859
        %v861 = vpop.f32.mrf.mxu0
        %v862 = vadd.f32 %v586, %v861
        %v863 = vpop.f32.mrf.mxu0
        %v864 = vadd.f32 %v588, %v863
        %865 = vdwg.mxu0
        %866 = vmatprep.subr.bf16.mxu0 0
        %867 = vmatpush1.bf16.msra.mxu0 0
        %868 = vmatprep.subr.bf16.mxu0 0
        %869 = vmatpush1.bf16.msra.mxu0 0
        %870 = vmatprep.subr.bf16.mxu0 0
        %871 = vmatpush1.bf16.msra.mxu0 0
        %872 = vmatprep.subr.bf16.mxu0 0
        %873 = vmatpush1.bf16.msra.mxu0 0
        %874 = vmatprep.subr.bf16.mxu0 0
        %875 = vmatpush1.bf16.msra.mxu0 0
        %876 = vmatprep.subr.bf16.mxu0 0
        %877 = vmatpush1.bf16.msra.mxu0 0
        %878 = vmatprep.subr.bf16.mxu0 %v735
        %879 = vmatpush1.bf16.msra.mxu0 %v732
        %880 = vmatprep.subr.bf16.mxu0 %v693
        %881 = vmatpush1.bf16.msra.mxu0 %v692
        %882 = vmatprep.subr.bf16.mxu0 0
        %883 = vmatpush2.bf16.msra.mxu0 0
        %884 = vmatprep.subr.bf16.mxu0 0
        %885 = vmatpush2.bf16.msra.mxu0 0
        %886 = vmatprep.subr.bf16.mxu0 0
        %887 = vmatpush2.bf16.msra.mxu0 0
        %888 = vmatprep.subr.bf16.mxu0 0
        %889 = vmatpush2.bf16.msra.mxu0 0
        %890 = vmatprep.subr.bf16.mxu0 0
        %891 = vmatpush2.bf16.msra.mxu0 0
        %892 = vmatprep.subr.bf16.mxu0 0
        %893 = vmatpush2.bf16.msra.mxu0 0
        %894 = vmatprep.subr.bf16.mxu0 0
        %895 = vmatpush2.bf16.msra.mxu0 0
        %896 = vmatprep.subr.bf16.mxu0 0
        %897 = vmatpush2.bf16.msra.mxu0 0
        %898 = vmatprep.mubr.bf16.mxu0 0
        %899 = vmatmul.mubr.bf16.gmra.mxu0 %v711
        %v900 = vpop.f32.mrf.mxu0
        %v901 = vadd.f32 %v625, %v900
        %v902 = vpop.f32.mrf.mxu0
        %v903 = vadd.f32 %v627, %v902
        %v904 = vpop.f32.mrf.mxu0
        %v905 = vadd.f32 %v629, %v904
        %v906 = vpop.f32.mrf.mxu0
        %v907 = vadd.f32 %v631, %v906
        %908 = vdwg.mxu0
        %v909 = vshrl.u32 %v637, 16
        %v911 = vshll.u32 %v637, 16
        %v913 = vrot.slane %v911, 1
        %v914 = vor.u32 %v909, %v913
        %v931 = vunpack.c.l.b16 %v339
        %v932 = vunpack.c.h.b16 %v339
        %v933 = vunpack.c.l.b16 %v340
        %v934 = vunpack.c.h.b16 %v340
        %v935 = vunpack.c.l.b16 %v341
        %v936 = vunpack.c.h.b16 %v341
        %v937 = vunpack.c.l.b16 %v342
        %v938 = vunpack.c.h.b16 %v342
        %v939 = vunpack.c.l.b16 %v343
        %v940 = vunpack.c.h.b16 %v343
        %v941 = vunpack.c.l.b16 %v344
        %v942 = vunpack.c.h.b16 %v344
        %v943 = vunpack.c.l.b16 %v345
        %v944 = vunpack.c.h.b16 %v345
        %v945 = vunpack.c.l.b16 %v346
        %v946 = vunpack.c.h.b16 %v346
        %v947 = vunpack.c.l.b16 %v347
        %v948 = vunpack.c.h.b16 %v347
        %v949 = vunpack.c.l.b16 %v348
        %v950 = vunpack.c.h.b16 %v348
        %v951 = vunpack.c.l.b16 %v349
        %v952 = vunpack.c.h.b16 %v349
        %v953 = vunpack.c.l.b16 %v350
        %v954 = vunpack.c.h.b16 %v350
        %v955 = vunpack.c.l.b16 %v351
        %v956 = vunpack.c.h.b16 %v351
        %v957 = vunpack.c.l.b16 %v352
        %v958 = vunpack.c.h.b16 %v352
        %v959 = vunpack.c.l.b16 %v353
        %v960 = vunpack.c.h.b16 %v353
        %v961 = vunpack.c.l.b16 %v354
        %v962 = vunpack.c.h.b16 %v354
        %v963 = vpack.c.b16 %v939, %v931
        %v964 = vpack.c.b16 %v940, %v932
        %v965 = vpack.c.b16 %v941, %v933
        %v966 = vpack.c.b16 %v942, %v934
        %v967 = vpack.c.b16 %v943, %v935
        %v968 = vpack.c.b16 %v944, %v936
        %v969 = vpack.c.b16 %v945, %v937
        %v970 = vpack.c.b16 %v946, %v938
        %v971 = vpack.c.b16 %v955, %v947
        %v972 = vpack.c.b16 %v956, %v948
        %v973 = vpack.c.b16 %v957, %v949
        %v974 = vpack.c.b16 %v958, %v950
        %v975 = vpack.c.b16 %v959, %v951
        %v976 = vpack.c.b16 %v960, %v952
        %v977 = vpack.c.b16 %v961, %v953
        %v978 = vpack.c.b16 %v962, %v954
        %v988 = vsel %vm432, %v914, 0
        %v991 = vsel %vm436, %v971, 0
        %v994 = vsel %vm436, %v972, 0
        %v997 = vsel %vm436, %v973, 0
        %v1000 = vsel %vm436, %v974, 0
        %v1003 = vsel %vm436, %v975, 0
        %v1006 = vsel %vm436, %v976, 0
        %v1009 = vsel %vm436, %v977, 0
        %v1012 = vsel %vm436, %v978, 0
        %1014 = vmatprep.subr.bf16.mxu0 0
        %1015 = vmatpush1.bf16.msra.mxu0 0
        %1016 = vmatprep.subr.bf16.mxu0 0
        %1017 = vmatpush1.bf16.msra.mxu0 0
        %1018 = vmatprep.subr.bf16.mxu0 0
        %1019 = vmatpush1.bf16.msra.mxu0 0
        %1020 = vmatprep.subr.bf16.mxu0 0
        %1021 = vmatpush1.bf16.msra.mxu0 0
        %1022 = vmatprep.subr.bf16.mxu0 0
        %1023 = vmatpush1.bf16.msra.mxu0 0
        %1024 = vmatprep.subr.bf16.mxu0 0
        %1025 = vmatpush1.bf16.msra.mxu0 0
        %1026 = vmatprep.subr.bf16.mxu0 %v994
        %1027 = vmatpush1.bf16.msra.mxu0 %v991
        %1028 = vmatprep.subr.bf16.mxu0 %v964
        %1029 = vmatpush1.bf16.msra.mxu0 %v963
        %1030 = vmatprep.subr.bf16.mxu0 0
        %1031 = vmatpush2.bf16.msra.mxu0 0
        %1032 = vmatprep.subr.bf16.mxu0 0
        %1033 = vmatpush2.bf16.msra.mxu0 0
        %1034 = vmatprep.subr.bf16.mxu0 0
        %1035 = vmatpush2.bf16.msra.mxu0 0
        %1036 = vmatprep.subr.bf16.mxu0 0
        %1037 = vmatpush2.bf16.msra.mxu0 0
        %1038 = vmatprep.subr.bf16.mxu0 0
        %1039 = vmatpush2.bf16.msra.mxu0 0
        %1040 = vmatprep.subr.bf16.mxu0 0
        %1041 = vmatpush2.bf16.msra.mxu0 0
        %1042 = vmatprep.subr.bf16.mxu0 0
        %1043 = vmatpush2.bf16.msra.mxu0 0
        %1044 = vmatprep.subr.bf16.mxu0 0
        %1045 = vmatpush2.bf16.msra.mxu0 0
        %1046 = vmatprep.mubr.bf16.mxu0 0
        %1047 = vmatmul.mubr.bf16.gmra.mxu0 %v988
        %v1048 = vpop.f32.mrf.mxu0
        %v1049 = vadd.f32 0.0, %v1048
        %v1050 = vpop.f32.mrf.mxu0
        %v1051 = vadd.f32 0.0, %v1050
        %v1052 = vpop.f32.mrf.mxu0
        %v1053 = vadd.f32 0.0, %v1052
        %v1054 = vpop.f32.mrf.mxu0
        %v1055 = vadd.f32 0.0, %v1054
        %1056 = vdwg.mxu0
        %1057 = vmatprep.subr.bf16.mxu0 0
        %1058 = vmatpush1.bf16.msra.mxu0 0
        %1059 = vmatprep.subr.bf16.mxu0 0
        %1060 = vmatpush1.bf16.msra.mxu0 0
        %1061 = vmatprep.subr.bf16.mxu0 0
        %1062 = vmatpush1.bf16.msra.mxu0 0
        %1063 = vmatprep.subr.bf16.mxu0 0
        %1064 = vmatpush1.bf16.msra.mxu0 0
        %1065 = vmatprep.subr.bf16.mxu0 0
        %1066 = vmatpush1.bf16.msra.mxu0 0
        %1067 = vmatprep.subr.bf16.mxu0 0
        %1068 = vmatpush1.bf16.msra.mxu0 0
        %1069 = vmatprep.subr.bf16.mxu0 %v1000
        %1070 = vmatpush1.bf16.msra.mxu0 %v997
        %1071 = vmatprep.subr.bf16.mxu0 %v966
        %1072 = vmatpush1.bf16.msra.mxu0 %v965
        %1073 = vmatprep.subr.bf16.mxu0 0
        %1074 = vmatpush2.bf16.msra.mxu0 0
        %1075 = vmatprep.subr.bf16.mxu0 0
        %1076 = vmatpush2.bf16.msra.mxu0 0
        %1077 = vmatprep.subr.bf16.mxu0 0
        %1078 = vmatpush2.bf16.msra.mxu0 0
        %1079 = vmatprep.subr.bf16.mxu0 0
        %1080 = vmatpush2.bf16.msra.mxu0 0
        %1081 = vmatprep.subr.bf16.mxu0 0
        %1082 = vmatpush2.bf16.msra.mxu0 0
        %1083 = vmatprep.subr.bf16.mxu0 0
        %1084 = vmatpush2.bf16.msra.mxu0 0
        %1085 = vmatprep.subr.bf16.mxu0 0
        %1086 = vmatpush2.bf16.msra.mxu0 0
        %1087 = vmatprep.subr.bf16.mxu0 0
        %1088 = vmatpush2.bf16.msra.mxu0 0
        %1089 = vmatprep.mubr.bf16.mxu0 0
        %1090 = vmatmul.mubr.bf16.gmra.mxu0 %v988
        %v1091 = vpop.f32.mrf.mxu0
        %v1092 = vadd.f32 0.0, %v1091
        %v1093 = vpop.f32.mrf.mxu0
        %v1094 = vadd.f32 0.0, %v1093
        %v1095 = vpop.f32.mrf.mxu0
        %v1096 = vadd.f32 0.0, %v1095
        %v1097 = vpop.f32.mrf.mxu0
        %v1098 = vadd.f32 0.0, %v1097
        %1099 = vdwg.mxu0
        %1100 = vmatprep.subr.bf16.mxu0 0
        %1101 = vmatpush1.bf16.msra.mxu0 0
        %1102 = vmatprep.subr.bf16.mxu0 0
        %1103 = vmatpush1.bf16.msra.mxu0 0
        %1104 = vmatprep.subr.bf16.mxu0 0
        %1105 = vmatpush1.bf16.msra.mxu0 0
        %1106 = vmatprep.subr.bf16.mxu0 0
        %1107 = vmatpush1.bf16.msra.mxu0 0
        %1108 = vmatprep.subr.bf16.mxu0 0
        %1109 = vmatpush1.bf16.msra.mxu0 0
        %1110 = vmatprep.subr.bf16.mxu0 0
        %1111 = vmatpush1.bf16.msra.mxu0 0
        %1112 = vmatprep.subr.bf16.mxu0 %v1006
        %1113 = vmatpush1.bf16.msra.mxu0 %v1003
        %1114 = vmatprep.subr.bf16.mxu0 %v968
        %1115 = vmatpush1.bf16.msra.mxu0 %v967
        %1116 = vmatprep.subr.bf16.mxu0 0
        %1117 = vmatpush2.bf16.msra.mxu0 0
        %1118 = vmatprep.subr.bf16.mxu0 0
        %1119 = vmatpush2.bf16.msra.mxu0 0
        %1120 = vmatprep.subr.bf16.mxu0 0
        %1121 = vmatpush2.bf16.msra.mxu0 0
        %1122 = vmatprep.subr.bf16.mxu0 0
        %1123 = vmatpush2.bf16.msra.mxu0 0
        %1124 = vmatprep.subr.bf16.mxu0 0
        %1125 = vmatpush2.bf16.msra.mxu0 0
        %1126 = vmatprep.subr.bf16.mxu0 0
        %1127 = vmatpush2.bf16.msra.mxu0 0
        %1128 = vmatprep.subr.bf16.mxu0 0
        %1129 = vmatpush2.bf16.msra.mxu0 0
        %1130 = vmatprep.subr.bf16.mxu0 0
        %1131 = vmatpush2.bf16.msra.mxu0 0
        %1132 = vmatprep.mubr.bf16.mxu0 0
        %1133 = vmatmul.mubr.bf16.gmra.mxu0 %v988
        %v1134 = vpop.f32.mrf.mxu0
        %v1135 = vadd.f32 0.0, %v1134
        %v1136 = vpop.f32.mrf.mxu0
        %v1137 = vadd.f32 0.0, %v1136
        %v1138 = vpop.f32.mrf.mxu0
        %v1139 = vadd.f32 0.0, %v1138
        %v1140 = vpop.f32.mrf.mxu0
        %v1141 = vadd.f32 0.0, %v1140
        %1142 = vdwg.mxu0
        %1143 = vmatprep.subr.bf16.mxu0 0
        %1144 = vmatpush1.bf16.msra.mxu0 0
        %1145 = vmatprep.subr.bf16.mxu0 0
        %1146 = vmatpush1.bf16.msra.mxu0 0
        %1147 = vmatprep.subr.bf16.mxu0 0
        %1148 = vmatpush1.bf16.msra.mxu0 0
        %1149 = vmatprep.subr.bf16.mxu0 0
        %1150 = vmatpush1.bf16.msra.mxu0 0
        %1151 = vmatprep.subr.bf16.mxu0 0
        %1152 = vmatpush1.bf16.msra.mxu0 0
        %1153 = vmatprep.subr.bf16.mxu0 0
        %1154 = vmatpush1.bf16.msra.mxu0 0
        %1155 = vmatprep.subr.bf16.mxu0 %v1012
        %1156 = vmatpush1.bf16.msra.mxu0 %v1009
        %1157 = vmatprep.subr.bf16.mxu0 %v970
        %1158 = vmatpush1.bf16.msra.mxu0 %v969
        %1159 = vmatprep.subr.bf16.mxu0 0
        %1160 = vmatpush2.bf16.msra.mxu0 0
        %1161 = vmatprep.subr.bf16.mxu0 0
        %1162 = vmatpush2.bf16.msra.mxu0 0
        %1163 = vmatprep.subr.bf16.mxu0 0
        %1164 = vmatpush2.bf16.msra.mxu0 0
        %1165 = vmatprep.subr.bf16.mxu0 0
        %1166 = vmatpush2.bf16.msra.mxu0 0
        %1167 = vmatprep.subr.bf16.mxu0 0
        %1168 = vmatpush2.bf16.msra.mxu0 0
        %1169 = vmatprep.subr.bf16.mxu0 0
        %1170 = vmatpush2.bf16.msra.mxu0 0
        %1171 = vmatprep.subr.bf16.mxu0 0
        %1172 = vmatpush2.bf16.msra.mxu0 0
        %1173 = vmatprep.subr.bf16.mxu0 0
        %1174 = vmatpush2.bf16.msra.mxu0 0
        %1175 = vmatprep.mubr.bf16.mxu0 0
        %1176 = vmatmul.mubr.bf16.gmra.mxu0 %v988
        %v1177 = vpop.f32.mrf.mxu0
        %v1178 = vadd.f32 0.0, %v1177
        %v1179 = vpop.f32.mrf.mxu0
        %v1180 = vadd.f32 0.0, %v1179
        %v1181 = vpop.f32.mrf.mxu0
        %v1182 = vadd.f32 0.0, %v1181
        %v1183 = vpop.f32.mrf.mxu0
        %v1184 = vadd.f32 0.0, %v1183
        %1185 = vdwg.mxu0
        %v1186 = vadd.f32 %v772, %v1049
        %v1187 = vadd.f32 %v774, %v1051
        %v1188 = vadd.f32 %v815, %v1092
        %v1189 = vadd.f32 %v817, %v1094
        %v1190 = vadd.f32 %v858, %v1135
        %v1191 = vadd.f32 %v860, %v1137
        %v1192 = vadd.f32 %v901, %v1178
        %v1193 = vadd.f32 %v903, %v1180
        %v1194 = vadd.f32 %v776, %v1053
        %v1195 = vadd.f32 %v778, %v1055
        %v1196 = vadd.f32 %v819, %v1096
        %v1197 = vadd.f32 %v821, %v1098
        %v1198 = vadd.f32 %v862, %v1139
        %v1199 = vadd.f32 %v864, %v1141
        %v1200 = vadd.f32 %v905, %v1182
        %v1201 = vadd.f32 %v907, %v1184
        %1202 = vmatprep.subr.bf16.mxu0 0
        %1203 = vmatpush1.bf16.msra.mxu0 0
        %1204 = vmatprep.subr.bf16.mxu0 0
        %1205 = vmatpush1.bf16.msra.mxu0 0
        %1206 = vmatprep.subr.bf16.mxu0 0
        %1207 = vmatpush1.bf16.msra.mxu0 0
        %1208 = vmatprep.subr.bf16.mxu0 0
        %1209 = vmatpush1.bf16.msra.mxu0 0
        %1210 = vmatprep.subr.bf16.mxu0 0
        %1211 = vmatpush1.bf16.msra.mxu0 0
        %1212 = vmatprep.subr.bf16.mxu0 0
        %1213 = vmatpush1.bf16.msra.mxu0 0
        %1214 = vmatprep.subr.bf16.mxu0 %v441
        %1215 = vmatpush1.bf16.msra.mxu0 %v438
        %1216 = vmatprep.subr.bf16.mxu0 %v409
        %1217 = vmatpush1.bf16.msra.mxu0 %v408
        %1218 = vmatprep.subr.bf16.mxu0 0
        %1219 = vmatpush2.bf16.msra.mxu0 0
        %1220 = vmatprep.subr.bf16.mxu0 0
        %1221 = vmatpush2.bf16.msra.mxu0 0
        %1222 = vmatprep.subr.bf16.mxu0 0
        %1223 = vmatpush2.bf16.msra.mxu0 0
        %1224 = vmatprep.subr.bf16.mxu0 0
        %1225 = vmatpush2.bf16.msra.mxu0 0
        %1226 = vmatprep.subr.bf16.mxu0 0
        %1227 = vmatpush2.bf16.msra.mxu0 0
        %1228 = vmatprep.subr.bf16.mxu0 0
        %1229 = vmatpush2.bf16.msra.mxu0 0
        %1230 = vmatprep.subr.bf16.mxu0 0
        %1231 = vmatpush2.bf16.msra.mxu0 0
        %1232 = vmatprep.subr.bf16.mxu0 0
        %1233 = vmatpush2.bf16.msra.mxu0 0
        %1234 = vmatprep.mubr.bf16.mxu0 0
        %1235 = vmatmul.mubr.bf16.gmra.mxu0 %v988
        %v1236 = vpop.f32.mrf.mxu0
        %v1237 = vadd.f32 0.0, %v1236
        %v1238 = vpop.f32.mrf.mxu0
        %v1239 = vadd.f32 0.0, %v1238
        %v1240 = vpop.f32.mrf.mxu0
        %v1241 = vadd.f32 0.0, %v1240
        %v1242 = vpop.f32.mrf.mxu0
        %v1243 = vadd.f32 0.0, %v1242
        %1244 = vdwg.mxu0
        %1245 = vmatprep.subr.bf16.mxu0 0
        %1246 = vmatpush1.bf16.msra.mxu0 0
        %1247 = vmatprep.subr.bf16.mxu0 0
        %1248 = vmatpush1.bf16.msra.mxu0 0
        %1249 = vmatprep.subr.bf16.mxu0 0
        %1250 = vmatpush1.bf16.msra.mxu0 0
        %1251 = vmatprep.subr.bf16.mxu0 0
        %1252 = vmatpush1.bf16.msra.mxu0 0
        %1253 = vmatprep.subr.bf16.mxu0 0
        %1254 = vmatpush1.bf16.msra.mxu0 0
        %1255 = vmatprep.subr.bf16.mxu0 0
        %1256 = vmatpush1.bf16.msra.mxu0 0
        %1257 = vmatprep.subr.bf16.mxu0 %v447
        %1258 = vmatpush1.bf16.msra.mxu0 %v444
        %1259 = vmatprep.subr.bf16.mxu0 %v411
        %1260 = vmatpush1.bf16.msra.mxu0 %v410
        %1261 = vmatprep.subr.bf16.mxu0 0
        %1262 = vmatpush2.bf16.msra.mxu0 0
        %1263 = vmatprep.subr.bf16.mxu0 0
        %1264 = vmatpush2.bf16.msra.mxu0 0
        %1265 = vmatprep.subr.bf16.mxu0 0
        %1266 = vmatpush2.bf16.msra.mxu0 0
        %1267 = vmatprep.subr.bf16.mxu0 0
        %1268 = vmatpush2.bf16.msra.mxu0 0
        %1269 = vmatprep.subr.bf16.mxu0 0
        %1270 = vmatpush2.bf16.msra.mxu0 0
        %1271 = vmatprep.subr.bf16.mxu0 0
        %1272 = vmatpush2.bf16.msra.mxu0 0
        %1273 = vmatprep.subr.bf16.mxu0 0
        %1274 = vmatpush2.bf16.msra.mxu0 0
        %1275 = vmatprep.subr.bf16.mxu0 0
        %1276 = vmatpush2.bf16.msra.mxu0 0
        %1277 = vmatprep.mubr.bf16.mxu0 0
        %1278 = vmatmul.mubr.bf16.gmra.mxu0 %v988
        %v1279 = vpop.f32.mrf.mxu0
        %v1280 = vadd.f32 0.0, %v1279
        %v1281 = vpop.f32.mrf.mxu0
        %v1282 = vadd.f32 0.0, %v1281
        %v1283 = vpop.f32.mrf.mxu0
        %v1284 = vadd.f32 0.0, %v1283
        %v1285 = vpop.f32.mrf.mxu0
        %v1286 = vadd.f32 0.0, %v1285
        %1287 = vdwg.mxu0
        %1288 = vmatprep.subr.bf16.mxu0 0
        %1289 = vmatpush1.bf16.msra.mxu0 0
        %1290 = vmatprep.subr.bf16.mxu0 0
        %1291 = vmatpush1.bf16.msra.mxu0 0
        %1292 = vmatprep.subr.bf16.mxu0 0
        %1293 = vmatpush1.bf16.msra.mxu0 0
        %1294 = vmatprep.subr.bf16.mxu0 0
        %1295 = vmatpush1.bf16.msra.mxu0 0
        %1296 = vmatprep.subr.bf16.mxu0 0
        %1297 = vmatpush1.bf16.msra.mxu0 0
        %1298 = vmatprep.subr.bf16.mxu0 0
        %1299 = vmatpush1.bf16.msra.mxu0 0
        %1300 = vmatprep.subr.bf16.mxu0 %v453
        %1301 = vmatpush1.bf16.msra.mxu0 %v450
        %1302 = vmatprep.subr.bf16.mxu0 %v413
        %1303 = vmatpush1.bf16.msra.mxu0 %v412
        %1304 = vmatprep.subr.bf16.mxu0 0
        %1305 = vmatpush2.bf16.msra.mxu0 0
        %1306 = vmatprep.subr.bf16.mxu0 0
        %1307 = vmatpush2.bf16.msra.mxu0 0
        %1308 = vmatprep.subr.bf16.mxu0 0
        %1309 = vmatpush2.bf16.msra.mxu0 0
        %1310 = vmatprep.subr.bf16.mxu0 0
        %1311 = vmatpush2.bf16.msra.mxu0 0
        %1312 = vmatprep.subr.bf16.mxu0 0
        %1313 = vmatpush2.bf16.msra.mxu0 0
        %1314 = vmatprep.subr.bf16.mxu0 0
        %1315 = vmatpush2.bf16.msra.mxu0 0
        %1316 = vmatprep.subr.bf16.mxu0 0
        %1317 = vmatpush2.bf16.msra.mxu0 0
        %1318 = vmatprep.subr.bf16.mxu0 0
        %1319 = vmatpush2.bf16.msra.mxu0 0
        %1320 = vmatprep.mubr.bf16.mxu0 0
        %1321 = vmatmul.mubr.bf16.gmra.mxu0 %v988
        %v1322 = vpop.f32.mrf.mxu0
        %v1323 = vadd.f32 0.0, %v1322
        %v1324 = vpop.f32.mrf.mxu0
        %v1325 = vadd.f32 0.0, %v1324
        %v1326 = vpop.f32.mrf.mxu0
        %v1327 = vadd.f32 0.0, %v1326
        %v1328 = vpop.f32.mrf.mxu0
        %v1329 = vadd.f32 0.0, %v1328
        %1330 = vdwg.mxu0
        %1331 = vmatprep.subr.bf16.mxu0 0
        %1332 = vmatpush1.bf16.msra.mxu0 0
        %1333 = vmatprep.subr.bf16.mxu0 0
        %1334 = vmatpush1.bf16.msra.mxu0 0
        %1335 = vmatprep.subr.bf16.mxu0 0
        %1336 = vmatpush1.bf16.msra.mxu0 0
        %1337 = vmatprep.subr.bf16.mxu0 0
        %1338 = vmatpush1.bf16.msra.mxu0 0
        %1339 = vmatprep.subr.bf16.mxu0 0
        %1340 = vmatpush1.bf16.msra.mxu0 0
        %1341 = vmatprep.subr.bf16.mxu0 0
        %1342 = vmatpush1.bf16.msra.mxu0 0
        %1343 = vmatprep.subr.bf16.mxu0 %v459
        %1344 = vmatpush1.bf16.msra.mxu0 %v456
        %1345 = vmatprep.subr.bf16.mxu0 %v415
        %1346 = vmatpush1.bf16.msra.mxu0 %v414
        %1347 = vmatprep.subr.bf16.mxu0 0
        %1348 = vmatpush2.bf16.msra.mxu0 0
        %1349 = vmatprep.subr.bf16.mxu0 0
        %1350 = vmatpush2.bf16.msra.mxu0 0
        %1351 = vmatprep.subr.bf16.mxu0 0
        %1352 = vmatpush2.bf16.msra.mxu0 0
        %1353 = vmatprep.subr.bf16.mxu0 0
        %1354 = vmatpush2.bf16.msra.mxu0 0
        %1355 = vmatprep.subr.bf16.mxu0 0
        %1356 = vmatpush2.bf16.msra.mxu0 0
        %1357 = vmatprep.subr.bf16.mxu0 0
        %1358 = vmatpush2.bf16.msra.mxu0 0
        %1359 = vmatprep.subr.bf16.mxu0 0
        %1360 = vmatpush2.bf16.msra.mxu0 0
        %1361 = vmatprep.subr.bf16.mxu0 0
        %1362 = vmatpush2.bf16.msra.mxu0 0
        %1363 = vmatprep.mubr.bf16.mxu0 0
        %1364 = vmatmul.mubr.bf16.gmra.mxu0 %v988
        %v1365 = vpop.f32.mrf.mxu0
        %v1366 = vadd.f32 0.0, %v1365
        %v1367 = vpop.f32.mrf.mxu0
        %v1368 = vadd.f32 0.0, %v1367
        %v1369 = vpop.f32.mrf.mxu0
        %v1370 = vadd.f32 0.0, %v1369
        %v1371 = vpop.f32.mrf.mxu0
        %v1372 = vadd.f32 0.0, %v1371
        %1373 = vdwg.mxu0
        %1374 = vmatprep.subr.bf16.mxu0 0
        %1375 = vmatpush1.bf16.msra.mxu0 0
        %1376 = vmatprep.subr.bf16.mxu0 0
        %1377 = vmatpush1.bf16.msra.mxu0 0
        %1378 = vmatprep.subr.bf16.mxu0 0
        %1379 = vmatpush1.bf16.msra.mxu0 0
        %1380 = vmatprep.subr.bf16.mxu0 0
        %1381 = vmatpush1.bf16.msra.mxu0 0
        %1382 = vmatprep.subr.bf16.mxu0 0
        %1383 = vmatpush1.bf16.msra.mxu0 0
        %1384 = vmatprep.subr.bf16.mxu0 0
        %1385 = vmatpush1.bf16.msra.mxu0 0
        %1386 = vmatprep.subr.bf16.mxu0 %v717
        %1387 = vmatpush1.bf16.msra.mxu0 %v714
        %1388 = vmatprep.subr.bf16.mxu0 %v687
        %1389 = vmatpush1.bf16.msra.mxu0 %v686
        %1390 = vmatprep.subr.bf16.mxu0 0
        %1391 = vmatpush2.bf16.msra.mxu0 0
        %1392 = vmatprep.subr.bf16.mxu0 0
        %1393 = vmatpush2.bf16.msra.mxu0 0
        %1394 = vmatprep.subr.bf16.mxu0 0
        %1395 = vmatpush2.bf16.msra.mxu0 0
        %1396 = vmatprep.subr.bf16.mxu0 0
        %1397 = vmatpush2.bf16.msra.mxu0 0
        %1398 = vmatprep.subr.bf16.mxu0 0
        %1399 = vmatpush2.bf16.msra.mxu0 0
        %1400 = vmatprep.subr.bf16.mxu0 0
        %1401 = vmatpush2.bf16.msra.mxu0 0
        %1402 = vmatprep.subr.bf16.mxu0 0
        %1403 = vmatpush2.bf16.msra.mxu0 0
        %1404 = vmatprep.subr.bf16.mxu0 0
        %1405 = vmatpush2.bf16.msra.mxu0 0
        %1406 = vmatprep.mubr.bf16.mxu0 0
        %1407 = vmatmul.mubr.bf16.gmra.mxu0 %v434
        %v1408 = vpop.f32.mrf.mxu0
        %v1409 = vadd.f32 %v1237, %v1408
        %v1410 = vpop.f32.mrf.mxu0
        %v1411 = vadd.f32 %v1239, %v1410
        %v1412 = vpop.f32.mrf.mxu0
        %v1413 = vadd.f32 %v1241, %v1412
        %v1414 = vpop.f32.mrf.mxu0
        %v1415 = vadd.f32 %v1243, %v1414
        %1416 = vdwg.mxu0
        %1417 = vmatprep.subr.bf16.mxu0 0
        %1418 = vmatpush1.bf16.msra.mxu0 0
        %1419 = vmatprep.subr.bf16.mxu0 0
        %1420 = vmatpush1.bf16.msra.mxu0 0
        %1421 = vmatprep.subr.bf16.mxu0 0
        %1422 = vmatpush1.bf16.msra.mxu0 0
        %1423 = vmatprep.subr.bf16.mxu0 0
        %1424 = vmatpush1.bf16.msra.mxu0 0
        %1425 = vmatprep.subr.bf16.mxu0 0
        %1426 = vmatpush1.bf16.msra.mxu0 0
        %1427 = vmatprep.subr.bf16.mxu0 0
        %1428 = vmatpush1.bf16.msra.mxu0 0
        %1429 = vmatprep.subr.bf16.mxu0 %v723
        %1430 = vmatpush1.bf16.msra.mxu0 %v720
        %1431 = vmatprep.subr.bf16.mxu0 %v689
        %1432 = vmatpush1.bf16.msra.mxu0 %v688
        %1433 = vmatprep.subr.bf16.mxu0 0
        %1434 = vmatpush2.bf16.msra.mxu0 0
        %1435 = vmatprep.subr.bf16.mxu0 0
        %1436 = vmatpush2.bf16.msra.mxu0 0
        %1437 = vmatprep.subr.bf16.mxu0 0
        %1438 = vmatpush2.bf16.msra.mxu0 0
        %1439 = vmatprep.subr.bf16.mxu0 0
        %1440 = vmatpush2.bf16.msra.mxu0 0
        %1441 = vmatprep.subr.bf16.mxu0 0
        %1442 = vmatpush2.bf16.msra.mxu0 0
        %1443 = vmatprep.subr.bf16.mxu0 0
        %1444 = vmatpush2.bf16.msra.mxu0 0
        %1445 = vmatprep.subr.bf16.mxu0 0
        %1446 = vmatpush2.bf16.msra.mxu0 0
        %1447 = vmatprep.subr.bf16.mxu0 0
        %1448 = vmatpush2.bf16.msra.mxu0 0
        %1449 = vmatprep.mubr.bf16.mxu0 0
        %1450 = vmatmul.mubr.bf16.gmra.mxu0 %v434
        %v1451 = vpop.f32.mrf.mxu0
        %v1452 = vadd.f32 %v1280, %v1451
        %v1453 = vpop.f32.mrf.mxu0
        %v1454 = vadd.f32 %v1282, %v1453
        %v1455 = vpop.f32.mrf.mxu0
        %v1456 = vadd.f32 %v1284, %v1455
        %v1457 = vpop.f32.mrf.mxu0
        %v1458 = vadd.f32 %v1286, %v1457
        %1459 = vdwg.mxu0
        %1460 = vmatprep.subr.bf16.mxu0 0
        %1461 = vmatpush1.bf16.msra.mxu0 0
        %1462 = vmatprep.subr.bf16.mxu0 0
        %1463 = vmatpush1.bf16.msra.mxu0 0
        %1464 = vmatprep.subr.bf16.mxu0 0
        %1465 = vmatpush1.bf16.msra.mxu0 0
        %1466 = vmatprep.subr.bf16.mxu0 0
        %1467 = vmatpush1.bf16.msra.mxu0 0
        %1468 = vmatprep.subr.bf16.mxu0 0
        %1469 = vmatpush1.bf16.msra.mxu0 0
        %1470 = vmatprep.subr.bf16.mxu0 0
        %1471 = vmatpush1.bf16.msra.mxu0 0
        %1472 = vmatprep.subr.bf16.mxu0 %v729
        %1473 = vmatpush1.bf16.msra.mxu0 %v726
        %1474 = vmatprep.subr.bf16.mxu0 %v691
        %1475 = vmatpush1.bf16.msra.mxu0 %v690
        %1476 = vmatprep.subr.bf16.mxu0 0
        %1477 = vmatpush2.bf16.msra.mxu0 0
        %1478 = vmatprep.subr.bf16.mxu0 0
        %1479 = vmatpush2.bf16.msra.mxu0 0
        %1480 = vmatprep.subr.bf16.mxu0 0
        %1481 = vmatpush2.bf16.msra.mxu0 0
        %1482 = vmatprep.subr.bf16.mxu0 0
        %1483 = vmatpush2.bf16.msra.mxu0 0
        %1484 = vmatprep.subr.bf16.mxu0 0
        %1485 = vmatpush2.bf16.msra.mxu0 0
        %1486 = vmatprep.subr.bf16.mxu0 0
        %1487 = vmatpush2.bf16.msra.mxu0 0
        %1488 = vmatprep.subr.bf16.mxu0 0
        %1489 = vmatpush2.bf16.msra.mxu0 0
        %1490 = vmatprep.subr.bf16.mxu0 0
        %1491 = vmatpush2.bf16.msra.mxu0 0
        %1492 = vmatprep.mubr.bf16.mxu0 0
        %1493 = vmatmul.mubr.bf16.gmra.mxu0 %v434
        %v1494 = vpop.f32.mrf.mxu0
        %v1495 = vadd.f32 %v1323, %v1494
        %v1496 = vpop.f32.mrf.mxu0
        %v1497 = vadd.f32 %v1325, %v1496
        %v1498 = vpop.f32.mrf.mxu0
        %v1499 = vadd.f32 %v1327, %v1498
        %v1500 = vpop.f32.mrf.mxu0
        %v1501 = vadd.f32 %v1329, %v1500
        %1502 = vdwg.mxu0
        %1503 = vmatprep.subr.bf16.mxu0 0
        %1504 = vmatpush1.bf16.msra.mxu0 0
        %1505 = vmatprep.subr.bf16.mxu0 0
        %1506 = vmatpush1.bf16.msra.mxu0 0
        %1507 = vmatprep.subr.bf16.mxu0 0
        %1508 = vmatpush1.bf16.msra.mxu0 0
        %1509 = vmatprep.subr.bf16.mxu0 0
        %1510 = vmatpush1.bf16.msra.mxu0 0
        %1511 = vmatprep.subr.bf16.mxu0 0
        %1512 = vmatpush1.bf16.msra.mxu0 0
        %1513 = vmatprep.subr.bf16.mxu0 0
        %1514 = vmatpush1.bf16.msra.mxu0 0
        %1515 = vmatprep.subr.bf16.mxu0 %v735
        %1516 = vmatpush1.bf16.msra.mxu0 %v732
        %1517 = vmatprep.subr.bf16.mxu0 %v693
        %1518 = vmatpush1.bf16.msra.mxu0 %v692
        %1519 = vmatprep.subr.bf16.mxu0 0
        %1520 = vmatpush2.bf16.msra.mxu0 0
        %1521 = vmatprep.subr.bf16.mxu0 0
        %1522 = vmatpush2.bf16.msra.mxu0 0
        %1523 = vmatprep.subr.bf16.mxu0 0
        %1524 = vmatpush2.bf16.msra.mxu0 0
        %1525 = vmatprep.subr.bf16.mxu0 0
        %1526 = vmatpush2.bf16.msra.mxu0 0
        %1527 = vmatprep.subr.bf16.mxu0 0
        %1528 = vmatpush2.bf16.msra.mxu0 0
        %1529 = vmatprep.subr.bf16.mxu0 0
        %1530 = vmatpush2.bf16.msra.mxu0 0
        %1531 = vmatprep.subr.bf16.mxu0 0
        %1532 = vmatpush2.bf16.msra.mxu0 0
        %1533 = vmatprep.subr.bf16.mxu0 0
        %1534 = vmatpush2.bf16.msra.mxu0 0
        %1535 = vmatprep.mubr.bf16.mxu0 0
        %1536 = vmatmul.mubr.bf16.gmra.mxu0 %v434
        %v1537 = vpop.f32.mrf.mxu0
        %v1538 = vadd.f32 %v1366, %v1537
        %v1539 = vpop.f32.mrf.mxu0
        %v1540 = vadd.f32 %v1368, %v1539
        %v1541 = vpop.f32.mrf.mxu0
        %v1542 = vadd.f32 %v1370, %v1541
        %v1543 = vpop.f32.mrf.mxu0
        %v1544 = vadd.f32 %v1372, %v1543
        %1545 = vdwg.mxu0
        %v1546 = vshrl.u32 %v359, 16
        %v1548 = vshll.u32 %v359, 16
        %v1550 = vrot.slane %v1548, 1
        %v1551 = vor.u32 %v1546, %v1550
        %v1553 = vsel %vm432, %v1551, 0
        %1555 = vmatprep.subr.bf16.mxu0 0
        %1556 = vmatpush1.bf16.msra.mxu0 0
        %1557 = vmatprep.subr.bf16.mxu0 0
        %1558 = vmatpush1.bf16.msra.mxu0 0
        %1559 = vmatprep.subr.bf16.mxu0 0
        %1560 = vmatpush1.bf16.msra.mxu0 0
        %1561 = vmatprep.subr.bf16.mxu0 0
        %1562 = vmatpush1.bf16.msra.mxu0 0
        %1563 = vmatprep.subr.bf16.mxu0 0
        %1564 = vmatpush1.bf16.msra.mxu0 0
        %1565 = vmatprep.subr.bf16.mxu0 0
        %1566 = vmatpush1.bf16.msra.mxu0 0
        %1567 = vmatprep.subr.bf16.mxu0 %v994
        %1568 = vmatpush1.bf16.msra.mxu0 %v991
        %1569 = vmatprep.subr.bf16.mxu0 %v964
        %1570 = vmatpush1.bf16.msra.mxu0 %v963
        %1571 = vmatprep.subr.bf16.mxu0 0
        %1572 = vmatpush2.bf16.msra.mxu0 0
        %1573 = vmatprep.subr.bf16.mxu0 0
        %1574 = vmatpush2.bf16.msra.mxu0 0
        %1575 = vmatprep.subr.bf16.mxu0 0
        %1576 = vmatpush2.bf16.msra.mxu0 0
        %1577 = vmatprep.subr.bf16.mxu0 0
        %1578 = vmatpush2.bf16.msra.mxu0 0
        %1579 = vmatprep.subr.bf16.mxu0 0
        %1580 = vmatpush2.bf16.msra.mxu0 0
        %1581 = vmatprep.subr.bf16.mxu0 0
        %1582 = vmatpush2.bf16.msra.mxu0 0
        %1583 = vmatprep.subr.bf16.mxu0 0
        %1584 = vmatpush2.bf16.msra.mxu0 0
        %1585 = vmatprep.subr.bf16.mxu0 0
        %1586 = vmatpush2.bf16.msra.mxu0 0
        %1587 = vmatprep.mubr.bf16.mxu0 0
        %1588 = vmatmul.mubr.bf16.gmra.mxu0 %v1553
        %v1589 = vpop.f32.mrf.mxu0
        %v1590 = vadd.f32 0.0, %v1589
        %v1591 = vpop.f32.mrf.mxu0
        %v1592 = vadd.f32 0.0, %v1591
        %v1593 = vpop.f32.mrf.mxu0
        %v1594 = vadd.f32 0.0, %v1593
        %v1595 = vpop.f32.mrf.mxu0
        %v1596 = vadd.f32 0.0, %v1595
        %1597 = vdwg.mxu0
        %1598 = vmatprep.subr.bf16.mxu0 0
        %1599 = vmatpush1.bf16.msra.mxu0 0
        %1600 = vmatprep.subr.bf16.mxu0 0
        %1601 = vmatpush1.bf16.msra.mxu0 0
        %1602 = vmatprep.subr.bf16.mxu0 0
        %1603 = vmatpush1.bf16.msra.mxu0 0
        %1604 = vmatprep.subr.bf16.mxu0 0
        %1605 = vmatpush1.bf16.msra.mxu0 0
        %1606 = vmatprep.subr.bf16.mxu0 0
        %1607 = vmatpush1.bf16.msra.mxu0 0
        %1608 = vmatprep.subr.bf16.mxu0 0
        %1609 = vmatpush1.bf16.msra.mxu0 0
        %1610 = vmatprep.subr.bf16.mxu0 %v1000
        %1611 = vmatpush1.bf16.msra.mxu0 %v997
        %1612 = vmatprep.subr.bf16.mxu0 %v966
        %1613 = vmatpush1.bf16.msra.mxu0 %v965
        %1614 = vmatprep.subr.bf16.mxu0 0
        %1615 = vmatpush2.bf16.msra.mxu0 0
        %1616 = vmatprep.subr.bf16.mxu0 0
        %1617 = vmatpush2.bf16.msra.mxu0 0
        %1618 = vmatprep.subr.bf16.mxu0 0
        %1619 = vmatpush2.bf16.msra.mxu0 0
        %1620 = vmatprep.subr.bf16.mxu0 0
        %1621 = vmatpush2.bf16.msra.mxu0 0
        %1622 = vmatprep.subr.bf16.mxu0 0
        %1623 = vmatpush2.bf16.msra.mxu0 0
        %1624 = vmatprep.subr.bf16.mxu0 0
        %1625 = vmatpush2.bf16.msra.mxu0 0
        %1626 = vmatprep.subr.bf16.mxu0 0
        %1627 = vmatpush2.bf16.msra.mxu0 0
        %1628 = vmatprep.subr.bf16.mxu0 0
        %1629 = vmatpush2.bf16.msra.mxu0 0
        %1630 = vmatprep.mubr.bf16.mxu0 0
        %1631 = vmatmul.mubr.bf16.gmra.mxu0 %v1553
        %v1632 = vpop.f32.mrf.mxu0
        %v1633 = vadd.f32 0.0, %v1632
        %v1634 = vpop.f32.mrf.mxu0
        %v1635 = vadd.f32 0.0, %v1634
        %v1636 = vpop.f32.mrf.mxu0
        %v1637 = vadd.f32 0.0, %v1636
        %v1638 = vpop.f32.mrf.mxu0
        %v1639 = vadd.f32 0.0, %v1638
        %1640 = vdwg.mxu0
        %1641 = vmatprep.subr.bf16.mxu0 0
        %1642 = vmatpush1.bf16.msra.mxu0 0
        %1643 = vmatprep.subr.bf16.mxu0 0
        %1644 = vmatpush1.bf16.msra.mxu0 0
        %1645 = vmatprep.subr.bf16.mxu0 0
        %1646 = vmatpush1.bf16.msra.mxu0 0
        %1647 = vmatprep.subr.bf16.mxu0 0
        %1648 = vmatpush1.bf16.msra.mxu0 0
        %1649 = vmatprep.subr.bf16.mxu0 0
        %1650 = vmatpush1.bf16.msra.mxu0 0
        %1651 = vmatprep.subr.bf16.mxu0 0
        %1652 = vmatpush1.bf16.msra.mxu0 0
        %1653 = vmatprep.subr.bf16.mxu0 %v1006
        %1654 = vmatpush1.bf16.msra.mxu0 %v1003
        %1655 = vmatprep.subr.bf16.mxu0 %v968
        %1656 = vmatpush1.bf16.msra.mxu0 %v967
        %1657 = vmatprep.subr.bf16.mxu0 0
        %1658 = vmatpush2.bf16.msra.mxu0 0
        %1659 = vmatprep.subr.bf16.mxu0 0
        %1660 = vmatpush2.bf16.msra.mxu0 0
        %1661 = vmatprep.subr.bf16.mxu0 0
        %1662 = vmatpush2.bf16.msra.mxu0 0
        %1663 = vmatprep.subr.bf16.mxu0 0
        %1664 = vmatpush2.bf16.msra.mxu0 0
        %1665 = vmatprep.subr.bf16.mxu0 0
        %1666 = vmatpush2.bf16.msra.mxu0 0
        %1667 = vmatprep.subr.bf16.mxu0 0
        %1668 = vmatpush2.bf16.msra.mxu0 0
        %1669 = vmatprep.subr.bf16.mxu0 0
        %1670 = vmatpush2.bf16.msra.mxu0 0
        %1671 = vmatprep.subr.bf16.mxu0 0
        %1672 = vmatpush2.bf16.msra.mxu0 0
        %1673 = vmatprep.mubr.bf16.mxu0 0
        %1674 = vmatmul.mubr.bf16.gmra.mxu0 %v1553
        %v1675 = vpop.f32.mrf.mxu0
        %v1676 = vadd.f32 0.0, %v1675
        %v1677 = vpop.f32.mrf.mxu0
        %v1678 = vadd.f32 0.0, %v1677
        %v1679 = vpop.f32.mrf.mxu0
        %v1680 = vadd.f32 0.0, %v1679
        %v1681 = vpop.f32.mrf.mxu0
        %v1682 = vadd.f32 0.0, %v1681
        %1683 = vdwg.mxu0
        %1684 = vmatprep.subr.bf16.mxu0 0
        %1685 = vmatpush1.bf16.msra.mxu0 0
        %1686 = vmatprep.subr.bf16.mxu0 0
        %1687 = vmatpush1.bf16.msra.mxu0 0
        %1688 = vmatprep.subr.bf16.mxu0 0
        %1689 = vmatpush1.bf16.msra.mxu0 0
        %1690 = vmatprep.subr.bf16.mxu0 0
        %1691 = vmatpush1.bf16.msra.mxu0 0
        %1692 = vmatprep.subr.bf16.mxu0 0
        %1693 = vmatpush1.bf16.msra.mxu0 0
        %1694 = vmatprep.subr.bf16.mxu0 0
        %1695 = vmatpush1.bf16.msra.mxu0 0
        %1696 = vmatprep.subr.bf16.mxu0 %v1012
        %1697 = vmatpush1.bf16.msra.mxu0 %v1009
        %1698 = vmatprep.subr.bf16.mxu0 %v970
        %1699 = vmatpush1.bf16.msra.mxu0 %v969
        %1700 = vmatprep.subr.bf16.mxu0 0
        %1701 = vmatpush2.bf16.msra.mxu0 0
        %1702 = vmatprep.subr.bf16.mxu0 0
        %1703 = vmatpush2.bf16.msra.mxu0 0
        %1704 = vmatprep.subr.bf16.mxu0 0
        %1705 = vmatpush2.bf16.msra.mxu0 0
        %1706 = vmatprep.subr.bf16.mxu0 0
        %1707 = vmatpush2.bf16.msra.mxu0 0
        %1708 = vmatprep.subr.bf16.mxu0 0
        %1709 = vmatpush2.bf16.msra.mxu0 0
        %1710 = vmatprep.subr.bf16.mxu0 0
        %1711 = vmatpush2.bf16.msra.mxu0 0
        %1712 = vmatprep.subr.bf16.mxu0 0
        %1713 = vmatpush2.bf16.msra.mxu0 0
        %1714 = vmatprep.subr.bf16.mxu0 0
        %1715 = vmatpush2.bf16.msra.mxu0 0
        %1716 = vmatprep.mubr.bf16.mxu0 0
        %1717 = vmatmul.mubr.bf16.gmra.mxu0 %v1553
        %v1718 = vpop.f32.mrf.mxu0
        %v1719 = vadd.f32 0.0, %v1718
        %v1720 = vpop.f32.mrf.mxu0
        %v1721 = vadd.f32 0.0, %v1720
        %v1722 = vpop.f32.mrf.mxu0
        %v1723 = vadd.f32 0.0, %v1722
        %v1724 = vpop.f32.mrf.mxu0
        %v1725 = vadd.f32 0.0, %v1724
        %1726 = vdwg.mxu0
        %v1727 = vadd.f32 %v1409, %v1590
        %v1728 = vadd.f32 %v1411, %v1592
        %v1729 = vadd.f32 %v1452, %v1633
        %v1730 = vadd.f32 %v1454, %v1635
        %v1731 = vadd.f32 %v1495, %v1676
        %v1732 = vadd.f32 %v1497, %v1678
        %v1733 = vadd.f32 %v1538, %v1719
        %v1734 = vadd.f32 %v1540, %v1721
        %v1735 = vadd.f32 %v1413, %v1594
        %v1736 = vadd.f32 %v1415, %v1596
        %v1737 = vadd.f32 %v1456, %v1637
        %v1738 = vadd.f32 %v1458, %v1639
        %v1739 = vadd.f32 %v1499, %v1680
        %v1740 = vadd.f32 %v1501, %v1682
        %v1741 = vadd.f32 %v1542, %v1723
        %v1742 = vadd.f32 %v1544, %v1725
        %v1743 = vmax.f32 %v1186, %v1727
        %v1744 = vmax.f32 %v1187, %v1728
        %v1745 = vmax.f32 %v1188, %v1729
        %v1746 = vmax.f32 %v1189, %v1730
        %v1747 = vmax.f32 %v1190, %v1731
        %v1748 = vmax.f32 %v1191, %v1732
        %v1749 = vmax.f32 %v1192, %v1733
        %v1750 = vmax.f32 %v1193, %v1734
        %v1751 = vmax.f32 %v1194, %v1735
        %v1752 = vmax.f32 %v1195, %v1736
        %v1753 = vmax.f32 %v1196, %v1737
        %v1754 = vmax.f32 %v1197, %v1738
        %v1755 = vmax.f32 %v1198, %v1739
        %v1756 = vmax.f32 %v1199, %v1740
        %v1757 = vmax.f32 %v1200, %v1741
        %v1758 = vmax.f32 %v1201, %v1742
        %v1759 = vmax.f32 %v1743, %v1747
        %v1760 = vmax.f32 %v1744, %v1748
        %v1761 = vmax.f32 %v1745, %v1749
        %v1762 = vmax.f32 %v1746, %v1750
        %v1763 = vmax.f32 %v1751, %v1755
        %v1764 = vmax.f32 %v1752, %v1756
        %v1765 = vmax.f32 %v1753, %v1757
        %v1766 = vmax.f32 %v1754, %v1758
        %v1767 = vld [vmem:[%s5] sm:$0xf]
        %v1769 = vlaneseq
        %v1770 = vshrl.u32 %v1769, 7
        %v1771 = vsub.s32 0, %v1770
        %v1772 = vrot.slane %v1767, %v1771
        %v1773 = vlaneseq
        %v1774 = vshrl.u32 %v1773, 7
        %v1775 = vsub.s32 1, %v1774
        %v1776 = vrot.slane %v1767, %v1775
        %v1777 = vlaneseq
        %v1778 = vshrl.u32 %v1777, 7
        %v1779 = vsub.s32 2, %v1778
        %v1780 = vrot.slane %v1767, %v1779
        %v1781 = vlaneseq
        %v1782 = vshrl.u32 %v1781, 7
        %v1783 = vsub.s32 3, %v1782
        %v1784 = vrot.slane %v1767, %v1783
        %v1789 = vadd.f32 %v1759, %v1772
        %v1790 = vadd.f32 %v1760, %v1776
        %v1791 = vadd.f32 %v1761, %v1780
        %v1792 = vadd.f32 %v1762, %v1784
        %v1793 = vadd.f32 %v1763, %v1772
        %v1794 = vadd.f32 %v1764, %v1776
        %v1795 = vadd.f32 %v1765, %v1780
        %v1796 = vadd.f32 %v1766, %v1784
        %v1797 = vmax.f32 %v1789, 0.0
        %v1798 = vmax.f32 %v1790, 0.0
        %v1799 = vmax.f32 %v1791, 0.0
        %v1800 = vmax.f32 %v1792, 0.0
        %v1801 = vmax.f32 %v1793, 0.0
        %v1802 = vmax.f32 %v1794, 0.0
        %v1803 = vmax.f32 %v1795, 0.0
        %v1804 = vmax.f32 %v1796, 0.0
        %v1805 = vpack.c.bf16 %v1801, %v1797
        %v1806 = vpack.c.bf16 %v1802, %v1798
        %v1807 = vpack.c.bf16 %v1803, %v1799
        %v1808 = vpack.c.bf16 %v1804, %v1800
        %v1813 = vunpack.c.l.b16 %v1805
        %v1814 = vunpack.c.l.b16 %v1806
        %v1815 = vunpack.c.l.b16 %v1807
        %v1816 = vunpack.c.l.b16 %v1808
        %v1817 = vunpack.c.h.b16 %v1805
        %v1818 = vunpack.c.h.b16 %v1806
        %v1819 = vunpack.c.h.b16 %v1807
        %v1820 = vunpack.c.h.b16 %v1808
        %v1821 = vpack.c.b16 %v1814, %v1813
        %v1822 = vpack.c.b16 %v1816, %v1815
        %v1823 = vpack.c.b16 %v1818, %v1817
        %v1824 = vpack.c.b16 %v1820, %v1819
        %1829 = vst [vmem:[%s301] sm:$0xff] %v1821
        %1830 = vst [vmem:[%s301 + $0x8] sm:$0xff] %v1822
        %1831 = vst [vmem:[%s301 + $0x10] sm:$0x77] %v1823
        %1832 = vst [vmem:[%s301 + $0x18] sm:$0x77] %v1824
        %p1833 = scmp.lt.s32.totalorder %s19, 1
        %s1834 = scalar_select %p1833, %s19, 1
        %s1835 = smul.addr %s1834, 8
        %s1836 = smul.addr %s1835, 4
        %s1837 = scalar_lea.vmem %s6, %s1836
        // Predicated region
        $region53: #{simplenet_forward.3} parent=43 // pred_check
          %p1838 = pneg %p173
        $region54: #{simplenet_forward.3} parent=43 // pred_check_branch
          %1840 = sbr.rel (%p1838) target = $region56
        $region55: #{simplenet_forward.3} parent=43 // pred_region
          _
        $region56: #{simplenet_forward.3} parent=43 // pred_fallthru
          _
      $region44: #{simplenet_forward.3} parent=5 // pred_fallthru
        _
      %p1841 = scmp.le.s32.totalorder 2, %s14
      // Predicated region
      $region57: #{simplenet_forward.3} parent=5 // pred_check
        %p1842 = pneg %p1841
      $region58: #{simplenet_forward.3} parent=5 // pred_check_branch
        %1844 = sbr.rel (%p1842) target = $region60
      $region59: #{simplenet_forward.3} parent=5 // pred_region
        %s1845 = ssub.s32 %s14, 2
        // Predicated region
        $region61: #{simplenet_forward.3} parent=59 // pred_check
          %p1846 = pneg %p179
        $region62: #{simplenet_forward.3} parent=59 // pred_check_branch
          %1848 = sbr.rel (%p1846) target = $region64
        $region63: #{simplenet_forward.3} parent=59 // pred_region
          %p1849 = scmp.lt.s32.totalorder %s20, 1
          %s1850 = scalar_select %p1849, %s20, 1
          %s1851 = smul.addr %s1850, 8
          %s1852 = smul.addr %s1851, 4
          %s1853 = scalar_lea.vmem %s6, %s1852
        $region64: #{simplenet_forward.3} parent=59 // pred_fallthru
          _
      $region60: #{simplenet_forward.3} parent=5 // pred_fallthru
        _
    $region6: #{simplenet_forward.3} parent=1 // loop_footer
      %s18 = sadd.s32 1, %s14
    $region7: #{simplenet_forward.3} parent=1 // loop_footer_branch
      %13 = sbr.rel target = $region3
    $region8: #{simplenet_forward.3} parent=1 // loop_exit
      _
    %1854 = vsyncpa [#allocation3], 1
    %s1855 = scalar_lea.sflag [#allocation3], 1
    %1856 = vsyncpa %s1855, 1
    %1857 = vsyncpa [#allocation5], 1

// kernel: simplenet_forward.5
$region0: #{simplenet_forward.5}
  #allocation0 [shape = 'u32[]', space=smem, size = 0x4, offset = 0x4, fixed_abs, tag = 'smem constant byte address 0x4 - core index']
  #allocation1 [shape = 'u32[144,128]{1,0:T(1,128)}', space=vmem, size = 0x12000, scoped, tag = 'internal scratch']
  %s0 = inlined_call_operand.vmem [shape: bf16[2,3584], index: 0, kind: input, shape index: {}]
  %s1 = inlined_call_operand.vmem [shape: bf16[3584,128], index: 1, kind: input, shape index: {}]
  %s2 = inlined_call_operand.vmem [shape: f32[1,128], index: 2, kind: input, shape index: {}]
  %s3 = inlined_call_operand.vmem [shape: bf16[128,128], index: 3, kind: input, shape index: {}]
  %s4 = inlined_call_operand.vmem [shape: f32[1,128], index: 4, kind: input, shape index: {}]
  %s5 = inlined_call_operand.hbm [shape: f32[2,128], index: 5, kind: output, shape index: {}]
  %s6 = sld [smem:[#allocation0]]
  $region30: #{simplenet_forward.5} parent=0
    _
  %s8 = ssub.s32 1, %s6
  %s9 = scalar_select 0, %s8, %s6
  $region1: #{simplenet_forward.5} parent=0
    #allocation2 [shape = 'u8[1024]{0}', space=vmem, size = 0x400, scoped, tag = 'output window, operand 0, single buffered']
    #allocation3 [shape = 's32[1]{0}', space=sflag, size = 0x4, scoped, tag = 'scoped memory for simplenet_forward.5']
    %10 = vsyncpa [#allocation3], 0
    // Predicated region
    $region2: #{simplenet_forward.5} parent=1 // pred_check
      _
    $region3: #{simplenet_forward.5} parent=1 // pred_check_branch
      %12 = sbr.rel (0) target = $region5
    $region4: #{simplenet_forward.5} parent=1 // pred_region
      _
    $region5: #{simplenet_forward.5} parent=1 // pred_fallthru
      _
    // Predicated region
    $region6: #{simplenet_forward.5} parent=1 // pred_check
      _
    $region7: #{simplenet_forward.5} parent=1 // pred_check_branch
      %14 = sbr.rel (0) target = $region9
    $region8: #{simplenet_forward.5} parent=1 // pred_region
      _
    $region9: #{simplenet_forward.5} parent=1 // pred_fallthru
      _
    // Predicated region
    $region10: #{simplenet_forward.5} parent=1 // pred_check
      _
    $region11: #{simplenet_forward.5} parent=1 // pred_check_branch
      %16 = sbr.rel (0) target = $region13
    $region12: #{simplenet_forward.5} parent=1 // pred_region
      _
    $region13: #{simplenet_forward.5} parent=1 // pred_fallthru
      _
    // Predicated region
    $region14: #{simplenet_forward.5} parent=1 // pred_check
      _
    $region15: #{simplenet_forward.5} parent=1 // pred_check_branch
      %18 = sbr.rel (0) target = $region17
    $region16: #{simplenet_forward.5} parent=1 // pred_region
      _
    $region17: #{simplenet_forward.5} parent=1 // pred_fallthru
      _
    // Predicated region
    $region18: #{simplenet_forward.5} parent=1 // pred_check
      _
    $region19: #{simplenet_forward.5} parent=1 // pred_check_branch
      %20 = sbr.rel (0) target = $region21
    $region20: #{simplenet_forward.5} parent=1 // pred_region
      _
    $region21: #{simplenet_forward.5} parent=1 // pred_fallthru
      _
    %v22 = vld [vmem:[%s0] sm:$0xff]
    %v23 = vld [vmem:[%s0 + $0x8] sm:$0xff]
    %v24 = vld [vmem:[%s0 + $0x10] sm:$0xff]
    %v25 = vld [vmem:[%s0 + $0x18] sm:$0xf]
    %v26 = vld [vmem:[%s1] sm:$0xf]
    %v27 = vld [vmem:[%s1 + $0x4] sm:$0xf]
    %v28 = vld [vmem:[%s1 + $0x8] sm:$0xf]
    %v29 = vld [vmem:[%s1 + $0xc] sm:$0xf]
    %v30 = vld [vmem:[%s1 + $0x10] sm:$0xf]
    %v31 = vld [vmem:[%s1 + $0x14] sm:$0xf]
    %v32 = vld [vmem:[%s1 + $0x18] sm:$0xf]
    %v33 = vld [vmem:[%s1 + $0x1c] sm:$0xf]
    %v34 = vld [vmem:[%s1 + $0x20] sm:$0xf]
    %v35 = vld [vmem:[%s1 + $0x24] sm:$0xf]
    %v36 = vld [vmem:[%s1 + $0x28] sm:$0xf]
    %v37 = vld [vmem:[%s1 + $0x2c] sm:$0xf]
    %v38 = vld [vmem:[%s1 + $0x30] sm:$0xf]
    %v39 = vld [vmem:[%s1 + $0x34] sm:$0xf]
    %v40 = vld [vmem:[%s1 + $0x38] sm:$0xf]
    %v41 = vld [vmem:[%s1 + $0x3c] sm:$0xf]
    %v42 = vld [vmem:[%s1 + $0x40] sm:$0xf]
    %v43 = vld [vmem:[%s1 + $0x44] sm:$0xf]
    %v44 = vld [vmem:[%s1 + $0x48] sm:$0xf]
    %v45 = vld [vmem:[%s1 + $0x4c] sm:$0xf]
    %v46 = vld [vmem:[%s1 + $0x50] sm:$0xf]
    %v47 = vld [vmem:[%s1 + $0x54] sm:$0xf]
    %v48 = vld [vmem:[%s1 + $0x58] sm:$0xf]
    %v49 = vld [vmem:[%s1 + $0x5c] sm:$0xf]
    %v50 = vld [vmem:[%s1 + $0x60] sm:$0xf]
    %v51 = vld [vmem:[%s1 + $0x64] sm:$0xf]
    %v52 = vld [vmem:[%s1 + $0x68] sm:$0xf]
    %v53 = vld [vmem:[%s1 + $0x6c] sm:$0xf]
    %v54 = vld [vmem:[%s1 + $0x70] sm:$0xf]
    %v55 = vld [vmem:[%s1 + $0x74] sm:$0xf]
    %v56 = vld [vmem:[%s1 + $0x78] sm:$0xf]
    %v57 = vld [vmem:[%s1 + $0x7c] sm:$0xf]
    %v58 = vld [vmem:[%s1 + $0x80] sm:$0xf]
    %v59 = vld [vmem:[%s1 + $0x84] sm:$0xf]
    %v60 = vld [vmem:[%s1 + $0x88] sm:$0xf]
    %v61 = vld [vmem:[%s1 + $0x8c] sm:$0xf]
    %v62 = vld [vmem:[%s1 + $0x90] sm:$0xf]
    %v63 = vld [vmem:[%s1 + $0x94] sm:$0xf]
    %v64 = vld [vmem:[%s1 + $0x98] sm:$0xf]
    %v65 = vld [vmem:[%s1 + $0x9c] sm:$0xf]
    %v66 = vld [vmem:[%s1 + $0xa0] sm:$0xf]
    %v67 = vld [vmem:[%s1 + $0xa4] sm:$0xf]
    %v68 = vld [vmem:[%s1 + $0xa8] sm:$0xf]
    %v69 = vld [vmem:[%s1 + $0xac] sm:$0xf]
    %v70 = vld [vmem:[%s1 + $0xb0] sm:$0xf]
    %v71 = vld [vmem:[%s1 + $0xb4] sm:$0xf]
    %v72 = vld [vmem:[%s1 + $0xb8] sm:$0xf]
    %v73 = vld [vmem:[%s1 + $0xbc] sm:$0xf]
    %v74 = vld [vmem:[%s1 + $0xc0] sm:$0xf]
    %v75 = vld [vmem:[%s1 + $0xc4] sm:$0xf]
    %v76 = vld [vmem:[%s1 + $0xc8] sm:$0xf]
    %v77 = vld [vmem:[%s1 + $0xcc] sm:$0xf]
    %v78 = vld [vmem:[%s1 + $0xd0] sm:$0xf]
    %v79 = vld [vmem:[%s1 + $0xd4] sm:$0xf]
    %v80 = vld [vmem:[%s1 + $0xd8] sm:$0xf]
    %v81 = vld [vmem:[%s1 + $0xdc] sm:$0xf]
    %v82 = vld [vmem:[%s1 + $0xe0] sm:$0xf]
    %v83 = vld [vmem:[%s1 + $0xe4] sm:$0xf]
    %v84 = vld [vmem:[%s1 + $0xe8] sm:$0xf]
    %v85 = vld [vmem:[%s1 + $0xec] sm:$0xf]
    %v86 = vld [vmem:[%s1 + $0xf0] sm:$0xf]
    %v87 = vld [vmem:[%s1 + $0xf4] sm:$0xf]
    %v88 = vld [vmem:[%s1 + $0xf8] sm:$0xf]
    %v89 = vld [vmem:[%s1 + $0xfc] sm:$0xf]
    %v90 = vld [vmem:[%s1 + $0x100] sm:$0xf]
    %v91 = vld [vmem:[%s1 + $0x104] sm:$0xf]
    %v92 = vld [vmem:[%s1 + $0x108] sm:$0xf]
    %v93 = vld [vmem:[%s1 + $0x10c] sm:$0xf]
    %v94 = vld [vmem:[%s1 + $0x110] sm:$0xf]
    %v95 = vld [vmem:[%s1 + $0x114] sm:$0xf]
    %v96 = vld [vmem:[%s1 + $0x118] sm:$0xf]
    %v97 = vld [vmem:[%s1 + $0x11c] sm:$0xf]
    %v98 = vld [vmem:[%s1 + $0x120] sm:$0xf]
    %v99 = vld [vmem:[%s1 + $0x124] sm:$0xf]
    %v100 = vld [vmem:[%s1 + $0x128] sm:$0xf]
    %v101 = vld [vmem:[%s1 + $0x12c] sm:$0xf]
    %v102 = vld [vmem:[%s1 + $0x130] sm:$0xf]
    %v103 = vld [vmem:[%s1 + $0x134] sm:$0xf]
    %v104 = vld [vmem:[%s1 + $0x138] sm:$0xf]
    %v105 = vld [vmem:[%s1 + $0x13c] sm:$0xf]
    %v106 = vld [vmem:[%s1 + $0x140] sm:$0xf]
    %v107 = vld [vmem:[%s1 + $0x144] sm:$0xf]
    %v108 = vld [vmem:[%s1 + $0x148] sm:$0xf]
    %v109 = vld [vmem:[%s1 + $0x14c] sm:$0xf]
    %v110 = vld [vmem:[%s1 + $0x150] sm:$0xf]
    %v111 = vld [vmem:[%s1 + $0x154] sm:$0xf]
    %v112 = vld [vmem:[%s1 + $0x158] sm:$0xf]
    %v113 = vld [vmem:[%s1 + $0x15c] sm:$0xf]
    %v114 = vld [vmem:[%s1 + $0x160] sm:$0xf]
    %v115 = vld [vmem:[%s1 + $0x164] sm:$0xf]
    %v116 = vld [vmem:[%s1 + $0x168] sm:$0xf]
    %v117 = vld [vmem:[%s1 + $0x16c] sm:$0xf]
    %v118 = vld [vmem:[%s1 + $0x170] sm:$0xf]
    %v119 = vld [vmem:[%s1 + $0x174] sm:$0xf]
    %v120 = vld [vmem:[%s1 + $0x178] sm:$0xf]
    %v121 = vld [vmem:[%s1 + $0x17c] sm:$0xf]
    %v122 = vld [vmem:[%s1 + $0x180] sm:$0xf]
    %v123 = vld [vmem:[%s1 + $0x184] sm:$0xf]
    %v124 = vld [vmem:[%s1 + $0x188] sm:$0xf]
    %v125 = vld [vmem:[%s1 + $0x18c] sm:$0xf]
    %v126 = vld [vmem:[%s1 + $0x190] sm:$0xf]
    %v127 = vld [vmem:[%s1 + $0x194] sm:$0xf]
    %v128 = vld [vmem:[%s1 + $0x198] sm:$0xf]
    %v129 = vld [vmem:[%s1 + $0x19c] sm:$0xf]
    %v130 = vld [vmem:[%s1 + $0x1a0] sm:$0xf]
    %v131 = vld [vmem:[%s1 + $0x1a4] sm:$0xf]
    %v132 = vld [vmem:[%s1 + $0x1a8] sm:$0xf]
    %v133 = vld [vmem:[%s1 + $0x1ac] sm:$0xf]
    %v134 = vld [vmem:[%s1 + $0x1b0] sm:$0xf]
    %v135 = vld [vmem:[%s1 + $0x1b4] sm:$0xf]
    %v136 = vld [vmem:[%s1 + $0x1b8] sm:$0xf]
    %v137 = vld [vmem:[%s1 + $0x1bc] sm:$0xf]
    %v138 = vld [vmem:[%s1 + $0x1c0] sm:$0xf]
    %v139 = vld [vmem:[%s1 + $0x1c4] sm:$0xf]
    %v140 = vld [vmem:[%s1 + $0x1c8] sm:$0xf]
    %v141 = vld [vmem:[%s1 + $0x1cc] sm:$0xf]
    %v142 = vld [vmem:[%s1 + $0x1d0] sm:$0xf]
    %v143 = vld [vmem:[%s1 + $0x1d4] sm:$0xf]
    %v144 = vld [vmem:[%s1 + $0x1d8] sm:$0xf]
    %v145 = vld [vmem:[%s1 + $0x1dc] sm:$0xf]
    %v146 = vld [vmem:[%s1 + $0x1e0] sm:$0xf]
    %v147 = vld [vmem:[%s1 + $0x1e4] sm:$0xf]
    %v148 = vld [vmem:[%s1 + $0x1e8] sm:$0xf]
    %v149 = vld [vmem:[%s1 + $0x1ec] sm:$0xf]
    %v150 = vld [vmem:[%s1 + $0x1f0] sm:$0xf]
    %v151 = vld [vmem:[%s1 + $0x1f4] sm:$0xf]
    %v152 = vld [vmem:[%s1 + $0x1f8] sm:$0xf]
    %v153 = vld [vmem:[%s1 + $0x1fc] sm:$0xf]
    %v154 = vld [vmem:[%s1 + $0x200] sm:$0xf]
    %v155 = vld [vmem:[%s1 + $0x204] sm:$0xf]
    %v156 = vld [vmem:[%s1 + $0x208] sm:$0xf]
    %v157 = vld [vmem:[%s1 + $0x20c] sm:$0xf]
    %v158 = vld [vmem:[%s1 + $0x210] sm:$0xf]
    %v159 = vld [vmem:[%s1 + $0x214] sm:$0xf]
    %v160 = vld [vmem:[%s1 + $0x218] sm:$0xf]
    %v161 = vld [vmem:[%s1 + $0x21c] sm:$0xf]
    %v162 = vld [vmem:[%s1 + $0x220] sm:$0xf]
    %v163 = vld [vmem:[%s1 + $0x224] sm:$0xf]
    %v164 = vld [vmem:[%s1 + $0x228] sm:$0xf]
    %v165 = vld [vmem:[%s1 + $0x22c] sm:$0xf]
    %v166 = vld [vmem:[%s1 + $0x230] sm:$0xf]
    %v167 = vld [vmem:[%s1 + $0x234] sm:$0xf]
    %v168 = vld [vmem:[%s1 + $0x238] sm:$0xf]
    %v169 = vld [vmem:[%s1 + $0x23c] sm:$0xf]
    %v170 = vld [vmem:[%s1 + $0x240] sm:$0xf]
    %v171 = vld [vmem:[%s1 + $0x244] sm:$0xf]
    %v172 = vld [vmem:[%s1 + $0x248] sm:$0xf]
    %v173 = vld [vmem:[%s1 + $0x24c] sm:$0xf]
    %v174 = vld [vmem:[%s1 + $0x250] sm:$0xf]
    %v175 = vld [vmem:[%s1 + $0x254] sm:$0xf]
    %v176 = vld [vmem:[%s1 + $0x258] sm:$0xf]
    %v177 = vld [vmem:[%s1 + $0x25c] sm:$0xf]
    %v178 = vld [vmem:[%s1 + $0x260] sm:$0xf]
    %v179 = vld [vmem:[%s1 + $0x264] sm:$0xf]
    %v180 = vld [vmem:[%s1 + $0x268] sm:$0xf]
    %v181 = vld [vmem:[%s1 + $0x26c] sm:$0xf]
    %v182 = vld [vmem:[%s1 + $0x270] sm:$0xf]
    %v183 = vld [vmem:[%s1 + $0x274] sm:$0xf]
    %v184 = vld [vmem:[%s1 + $0x278] sm:$0xf]
    %v185 = vld [vmem:[%s1 + $0x27c] sm:$0xf]
    %v186 = vld [vmem:[%s1 + $0x280] sm:$0xf]
    %v187 = vld [vmem:[%s1 + $0x284] sm:$0xf]
    %v188 = vld [vmem:[%s1 + $0x288] sm:$0xf]
    %v189 = vld [vmem:[%s1 + $0x28c] sm:$0xf]
    %v190 = vld [vmem:[%s1 + $0x290] sm:$0xf]
    %v191 = vld [vmem:[%s1 + $0x294] sm:$0xf]
    %v192 = vld [vmem:[%s1 + $0x298] sm:$0xf]
    %v193 = vld [vmem:[%s1 + $0x29c] sm:$0xf]
    %v194 = vld [vmem:[%s1 + $0x2a0] sm:$0xf]
    %v195 = vld [vmem:[%s1 + $0x2a4] sm:$0xf]
    %v196 = vld [vmem:[%s1 + $0x2a8] sm:$0xf]
    %v197 = vld [vmem:[%s1 + $0x2ac] sm:$0xf]
    %v198 = vld [vmem:[%s1 + $0x2b0] sm:$0xf]
    %v199 = vld [vmem:[%s1 + $0x2b4] sm:$0xf]
    %v200 = vld [vmem:[%s1 + $0x2b8] sm:$0xf]
    %v201 = vld [vmem:[%s1 + $0x2bc] sm:$0xf]
    %v202 = vld [vmem:[%s1 + $0x2c0] sm:$0xf]
    %v203 = vld [vmem:[%s1 + $0x2c4] sm:$0xf]
    %v204 = vld [vmem:[%s1 + $0x2c8] sm:$0xf]
    %v205 = vld [vmem:[%s1 + $0x2cc] sm:$0xf]
    %v206 = vld [vmem:[%s1 + $0x2d0] sm:$0xf]
    %v207 = vld [vmem:[%s1 + $0x2d4] sm:$0xf]
    %v208 = vld [vmem:[%s1 + $0x2d8] sm:$0xf]
    %v209 = vld [vmem:[%s1 + $0x2dc] sm:$0xf]
    %v210 = vld [vmem:[%s1 + $0x2e0] sm:$0xf]
    %v211 = vld [vmem:[%s1 + $0x2e4] sm:$0xf]
    %v212 = vld [vmem:[%s1 + $0x2e8] sm:$0xf]
    %v213 = vld [vmem:[%s1 + $0x2ec] sm:$0xf]
    %v214 = vld [vmem:[%s1 + $0x2f0] sm:$0xf]
    %v215 = vld [vmem:[%s1 + $0x2f4] sm:$0xf]
    %v216 = vld [vmem:[%s1 + $0x2f8] sm:$0xf]
    %v217 = vld [vmem:[%s1 + $0x2fc] sm:$0xf]
    %v218 = vld [vmem:[%s1 + $0x300] sm:$0xf]
    %v219 = vld [vmem:[%s1 + $0x304] sm:$0xf]
    %v220 = vld [vmem:[%s1 + $0x308] sm:$0xf]
    %v221 = vld [vmem:[%s1 + $0x30c] sm:$0xf]
    %v222 = vld [vmem:[%s1 + $0x310] sm:$0xf]
    %v223 = vld [vmem:[%s1 + $0x314] sm:$0xf]
    %v224 = vld [vmem:[%s1 + $0x318] sm:$0xf]
    %v225 = vld [vmem:[%s1 + $0x31c] sm:$0xf]
    %v226 = vld [vmem:[%s1 + $0x320] sm:$0xf]
    %v227 = vld [vmem:[%s1 + $0x324] sm:$0xf]
    %v228 = vld [vmem:[%s1 + $0x328] sm:$0xf]
    %v229 = vld [vmem:[%s1 + $0x32c] sm:$0xf]
    %v230 = vld [vmem:[%s1 + $0x330] sm:$0xf]
    %v231 = vld [vmem:[%s1 + $0x334] sm:$0xf]
    %v232 = vld [vmem:[%s1 + $0x338] sm:$0xf]
    %v233 = vld [vmem:[%s1 + $0x33c] sm:$0xf]
    %v234 = vld [vmem:[%s1 + $0x340] sm:$0xf]
    %v235 = vld [vmem:[%s1 + $0x344] sm:$0xf]
    %v236 = vld [vmem:[%s1 + $0x348] sm:$0xf]
    %v237 = vld [vmem:[%s1 + $0x34c] sm:$0xf]
    %v238 = vld [vmem:[%s1 + $0x350] sm:$0xf]
    %v239 = vld [vmem:[%s1 + $0x354] sm:$0xf]
    %v240 = vld [vmem:[%s1 + $0x358] sm:$0xf]
    %v241 = vld [vmem:[%s1 + $0x35c] sm:$0xf]
    %v242 = vld [vmem:[%s1 + $0x360] sm:$0xf]
    %v243 = vld [vmem:[%s1 + $0x364] sm:$0xf]
    %v244 = vld [vmem:[%s1 + $0x368] sm:$0xf]
    %v245 = vld [vmem:[%s1 + $0x36c] sm:$0xf]
    %v246 = vld [vmem:[%s1 + $0x370] sm:$0xf]
    %v247 = vld [vmem:[%s1 + $0x374] sm:$0xf]
    %v248 = vld [vmem:[%s1 + $0x378] sm:$0xf]
    %v249 = vld [vmem:[%s1 + $0x37c] sm:$0xf]
    %v250 = vld [vmem:[%s1 + $0x380] sm:$0xf]
    %v251 = vld [vmem:[%s1 + $0x384] sm:$0xf]
    %v252 = vld [vmem:[%s1 + $0x388] sm:$0xf]
    %v253 = vld [vmem:[%s1 + $0x38c] sm:$0xf]
    %v254 = vld [vmem:[%s1 + $0x390] sm:$0xf]
    %v255 = vld [vmem:[%s1 + $0x394] sm:$0xf]
    %v256 = vld [vmem:[%s1 + $0x398] sm:$0xf]
    %v257 = vld [vmem:[%s1 + $0x39c] sm:$0xf]
    %v258 = vld [vmem:[%s1 + $0x3a0] sm:$0xf]
    %v259 = vld [vmem:[%s1 + $0x3a4] sm:$0xf]
    %v260 = vld [vmem:[%s1 + $0x3a8] sm:$0xf]
    %v261 = vld [vmem:[%s1 + $0x3ac] sm:$0xf]
    %v262 = vld [vmem:[%s1 + $0x3b0] sm:$0xf]
    %v263 = vld [vmem:[%s1 + $0x3b4] sm:$0xf]
    %v264 = vld [vmem:[%s1 + $0x3b8] sm:$0xf]
    %v265 = vld [vmem:[%s1 + $0x3bc] sm:$0xf]
    %v266 = vld [vmem:[%s1 + $0x3c0] sm:$0xf]
    %v267 = vld [vmem:[%s1 + $0x3c4] sm:$0xf]
    %v268 = vld [vmem:[%s1 + $0x3c8] sm:$0xf]
    %v269 = vld [vmem:[%s1 + $0x3cc] sm:$0xf]
    %v270 = vld [vmem:[%s1 + $0x3d0] sm:$0xf]
    %v271 = vld [vmem:[%s1 + $0x3d4] sm:$0xf]
    %v272 = vld [vmem:[%s1 + $0x3d8] sm:$0xf]
    %v273 = vld [vmem:[%s1 + $0x3dc] sm:$0xf]
    %v274 = vld [vmem:[%s1 + $0x3e0] sm:$0xf]
    %v275 = vld [vmem:[%s1 + $0x3e4] sm:$0xf]
    %v276 = vld [vmem:[%s1 + $0x3e8] sm:$0xf]
    %v277 = vld [vmem:[%s1 + $0x3ec] sm:$0xf]
    %v278 = vld [vmem:[%s1 + $0x3f0] sm:$0xf]
    %v279 = vld [vmem:[%s1 + $0x3f4] sm:$0xf]
    %v280 = vld [vmem:[%s1 + $0x3f8] sm:$0xf]
    %v281 = vld [vmem:[%s1 + $0x3fc] sm:$0xf]
    %v282 = vld [vmem:[%s1 + $0x400] sm:$0xf]
    %v283 = vld [vmem:[%s1 + $0x404] sm:$0xf]
    %v284 = vld [vmem:[%s1 + $0x408] sm:$0xf]
    %v285 = vld [vmem:[%s1 + $0x40c] sm:$0xf]
    %v286 = vld [vmem:[%s1 + $0x410] sm:$0xf]
    %v287 = vld [vmem:[%s1 + $0x414] sm:$0xf]
    %v288 = vld [vmem:[%s1 + $0x418] sm:$0xf]
    %v289 = vld [vmem:[%s1 + $0x41c] sm:$0xf]
    %v290 = vld [vmem:[%s1 + $0x420] sm:$0xf]
    %v291 = vld [vmem:[%s1 + $0x424] sm:$0xf]
    %v292 = vld [vmem:[%s1 + $0x428] sm:$0xf]
    %v293 = vld [vmem:[%s1 + $0x42c] sm:$0xf]
    %v294 = vld [vmem:[%s1 + $0x430] sm:$0xf]
    %v295 = vld [vmem:[%s1 + $0x434] sm:$0xf]
    %v296 = vld [vmem:[%s1 + $0x438] sm:$0xf]
    %v297 = vld [vmem:[%s1 + $0x43c] sm:$0xf]
    %v298 = vld [vmem:[%s1 + $0x440] sm:$0xf]
    %v299 = vld [vmem:[%s1 + $0x444] sm:$0xf]
    %v300 = vld [vmem:[%s1 + $0x448] sm:$0xf]
    %v301 = vld [vmem:[%s1 + $0x44c] sm:$0xf]
    %v302 = vld [vmem:[%s1 + $0x450] sm:$0xf]
    %v303 = vld [vmem:[%s1 + $0x454] sm:$0xf]
    %v304 = vld [vmem:[%s1 + $0x458] sm:$0xf]
    %v305 = vld [vmem:[%s1 + $0x45c] sm:$0xf]
    %v306 = vld [vmem:[%s1 + $0x460] sm:$0xf]
    %v307 = vld [vmem:[%s1 + $0x464] sm:$0xf]
    %v308 = vld [vmem:[%s1 + $0x468] sm:$0xf]
    %v309 = vld [vmem:[%s1 + $0x46c] sm:$0xf]
    %v310 = vld [vmem:[%s1 + $0x470] sm:$0xf]
    %v311 = vld [vmem:[%s1 + $0x474] sm:$0xf]
    %v312 = vld [vmem:[%s1 + $0x478] sm:$0xf]
    %v313 = vld [vmem:[%s1 + $0x47c] sm:$0xf]
    %v314 = vld [vmem:[%s1 + $0x480] sm:$0xf]
    %v315 = vld [vmem:[%s1 + $0x484] sm:$0xf]
    %v316 = vld [vmem:[%s1 + $0x488] sm:$0xf]
    %v317 = vld [vmem:[%s1 + $0x48c] sm:$0xf]
    %v318 = vld [vmem:[%s1 + $0x490] sm:$0xf]
    %v319 = vld [vmem:[%s1 + $0x494] sm:$0xf]
    %v320 = vld [vmem:[%s1 + $0x498] sm:$0xf]
    %v321 = vld [vmem:[%s1 + $0x49c] sm:$0xf]
    %v322 = vld [vmem:[%s1 + $0x4a0] sm:$0xf]
    %v323 = vld [vmem:[%s1 + $0x4a4] sm:$0xf]
    %v324 = vld [vmem:[%s1 + $0x4a8] sm:$0xf]
    %v325 = vld [vmem:[%s1 + $0x4ac] sm:$0xf]
    %v326 = vld [vmem:[%s1 + $0x4b0] sm:$0xf]
    %v327 = vld [vmem:[%s1 + $0x4b4] sm:$0xf]
    %v328 = vld [vmem:[%s1 + $0x4b8] sm:$0xf]
    %v329 = vld [vmem:[%s1 + $0x4bc] sm:$0xf]
    %v330 = vld [vmem:[%s1 + $0x4c0] sm:$0xf]
    %v331 = vld [vmem:[%s1 + $0x4c4] sm:$0xf]
    %v332 = vld [vmem:[%s1 + $0x4c8] sm:$0xf]
    %v333 = vld [vmem:[%s1 + $0x4cc] sm:$0xf]
    %v334 = vld [vmem:[%s1 + $0x4d0] sm:$0xf]
    %v335 = vld [vmem:[%s1 + $0x4d4] sm:$0xf]
    %v336 = vld [vmem:[%s1 + $0x4d8] sm:$0xf]
    %v337 = vld [vmem:[%s1 + $0x4dc] sm:$0xf]
    %v338 = vld [vmem:[%s1 + $0x4e0] sm:$0xf]
    %v339 = vld [vmem:[%s1 + $0x4e4] sm:$0xf]
    %v340 = vld [vmem:[%s1 + $0x4e8] sm:$0xf]
    %v341 = vld [vmem:[%s1 + $0x4ec] sm:$0xf]
    %v342 = vld [vmem:[%s1 + $0x4f0] sm:$0xf]
    %v343 = vld [vmem:[%s1 + $0x4f4] sm:$0xf]
    %v344 = vld [vmem:[%s1 + $0x4f8] sm:$0xf]
    %v345 = vld [vmem:[%s1 + $0x4fc] sm:$0xf]
    %v346 = vld [vmem:[%s1 + $0x500] sm:$0xf]
    %v347 = vld [vmem:[%s1 + $0x504] sm:$0xf]
    %v348 = vld [vmem:[%s1 + $0x508] sm:$0xf]
    %v349 = vld [vmem:[%s1 + $0x50c] sm:$0xf]
    %v350 = vld [vmem:[%s1 + $0x510] sm:$0xf]
    %v351 = vld [vmem:[%s1 + $0x514] sm:$0xf]
    %v352 = vld [vmem:[%s1 + $0x518] sm:$0xf]
    %v353 = vld [vmem:[%s1 + $0x51c] sm:$0xf]
    %v354 = vld [vmem:[%s1 + $0x520] sm:$0xf]
    %v355 = vld [vmem:[%s1 + $0x524] sm:$0xf]
    %v356 = vld [vmem:[%s1 + $0x528] sm:$0xf]
    %v357 = vld [vmem:[%s1 + $0x52c] sm:$0xf]
    %v358 = vld [vmem:[%s1 + $0x530] sm:$0xf]
    %v359 = vld [vmem:[%s1 + $0x534] sm:$0xf]
    %v360 = vld [vmem:[%s1 + $0x538] sm:$0xf]
    %v361 = vld [vmem:[%s1 + $0x53c] sm:$0xf]
    %v362 = vld [vmem:[%s1 + $0x540] sm:$0xf]
    %v363 = vld [vmem:[%s1 + $0x544] sm:$0xf]
    %v364 = vld [vmem:[%s1 + $0x548] sm:$0xf]
    %v365 = vld [vmem:[%s1 + $0x54c] sm:$0xf]
    %v366 = vld [vmem:[%s1 + $0x550] sm:$0xf]
    %v367 = vld [vmem:[%s1 + $0x554] sm:$0xf]
    %v368 = vld [vmem:[%s1 + $0x558] sm:$0xf]
    %v369 = vld [vmem:[%s1 + $0x55c] sm:$0xf]
    %v370 = vld [vmem:[%s1 + $0x560] sm:$0xf]
    %v371 = vld [vmem:[%s1 + $0x564] sm:$0xf]
    %v372 = vld [vmem:[%s1 + $0x568] sm:$0xf]
    %v373 = vld [vmem:[%s1 + $0x56c] sm:$0xf]
    %v374 = vld [vmem:[%s1 + $0x570] sm:$0xf]
    %v375 = vld [vmem:[%s1 + $0x574] sm:$0xf]
    %v376 = vld [vmem:[%s1 + $0x578] sm:$0xf]
    %v377 = vld [vmem:[%s1 + $0x57c] sm:$0xf]
    %v378 = vld [vmem:[%s1 + $0x580] sm:$0xf]
    %v379 = vld [vmem:[%s1 + $0x584] sm:$0xf]
    %v380 = vld [vmem:[%s1 + $0x588] sm:$0xf]
    %v381 = vld [vmem:[%s1 + $0x58c] sm:$0xf]
    %v382 = vld [vmem:[%s1 + $0x590] sm:$0xf]
    %v383 = vld [vmem:[%s1 + $0x594] sm:$0xf]
    %v384 = vld [vmem:[%s1 + $0x598] sm:$0xf]
    %v385 = vld [vmem:[%s1 + $0x59c] sm:$0xf]
    %v386 = vld [vmem:[%s1 + $0x5a0] sm:$0xf]
    %v387 = vld [vmem:[%s1 + $0x5a4] sm:$0xf]
    %v388 = vld [vmem:[%s1 + $0x5a8] sm:$0xf]
    %v389 = vld [vmem:[%s1 + $0x5ac] sm:$0xf]
    %v390 = vld [vmem:[%s1 + $0x5b0] sm:$0xf]
    %v391 = vld [vmem:[%s1 + $0x5b4] sm:$0xf]
    %v392 = vld [vmem:[%s1 + $0x5b8] sm:$0xf]
    %v393 = vld [vmem:[%s1 + $0x5bc] sm:$0xf]
    %v394 = vld [vmem:[%s1 + $0x5c0] sm:$0xf]
    %v395 = vld [vmem:[%s1 + $0x5c4] sm:$0xf]
    %v396 = vld [vmem:[%s1 + $0x5c8] sm:$0xf]
    %v397 = vld [vmem:[%s1 + $0x5cc] sm:$0xf]
    %v398 = vld [vmem:[%s1 + $0x5d0] sm:$0xf]
    %v399 = vld [vmem:[%s1 + $0x5d4] sm:$0xf]
    %v400 = vld [vmem:[%s1 + $0x5d8] sm:$0xf]
    %v401 = vld [vmem:[%s1 + $0x5dc] sm:$0xf]
    %v402 = vld [vmem:[%s1 + $0x5e0] sm:$0xf]
    %v403 = vld [vmem:[%s1 + $0x5e4] sm:$0xf]
    %v404 = vld [vmem:[%s1 + $0x5e8] sm:$0xf]
    %v405 = vld [vmem:[%s1 + $0x5ec] sm:$0xf]
    %v406 = vld [vmem:[%s1 + $0x5f0] sm:$0xf]
    %v407 = vld [vmem:[%s1 + $0x5f4] sm:$0xf]
    %v408 = vld [vmem:[%s1 + $0x5f8] sm:$0xf]
    %v409 = vld [vmem:[%s1 + $0x5fc] sm:$0xf]
    %v410 = vld [vmem:[%s1 + $0x600] sm:$0xf]
    %v411 = vld [vmem:[%s1 + $0x604] sm:$0xf]
    %v412 = vld [vmem:[%s1 + $0x608] sm:$0xf]
    %v413 = vld [vmem:[%s1 + $0x60c] sm:$0xf]
    %v414 = vld [vmem:[%s1 + $0x610] sm:$0xf]
    %v415 = vld [vmem:[%s1 + $0x614] sm:$0xf]
    %v416 = vld [vmem:[%s1 + $0x618] sm:$0xf]
    %v417 = vld [vmem:[%s1 + $0x61c] sm:$0xf]
    %v418 = vld [vmem:[%s1 + $0x620] sm:$0xf]
    %v419 = vld [vmem:[%s1 + $0x624] sm:$0xf]
    %v420 = vld [vmem:[%s1 + $0x628] sm:$0xf]
    %v421 = vld [vmem:[%s1 + $0x62c] sm:$0xf]
    %v422 = vld [vmem:[%s1 + $0x630] sm:$0xf]
    %v423 = vld [vmem:[%s1 + $0x634] sm:$0xf]
    %v424 = vld [vmem:[%s1 + $0x638] sm:$0xf]
    %v425 = vld [vmem:[%s1 + $0x63c] sm:$0xf]
    %v426 = vld [vmem:[%s1 + $0x640] sm:$0xf]
    %v427 = vld [vmem:[%s1 + $0x644] sm:$0xf]
    %v428 = vld [vmem:[%s1 + $0x648] sm:$0xf]
    %v429 = vld [vmem:[%s1 + $0x64c] sm:$0xf]
    %v430 = vld [vmem:[%s1 + $0x650] sm:$0xf]
    %v431 = vld [vmem:[%s1 + $0x654] sm:$0xf]
    %v432 = vld [vmem:[%s1 + $0x658] sm:$0xf]
    %v433 = vld [vmem:[%s1 + $0x65c] sm:$0xf]
    %v434 = vld [vmem:[%s1 + $0x660] sm:$0xf]
    %v435 = vld [vmem:[%s1 + $0x664] sm:$0xf]
    %v436 = vld [vmem:[%s1 + $0x668] sm:$0xf]
    %v437 = vld [vmem:[%s1 + $0x66c] sm:$0xf]
    %v438 = vld [vmem:[%s1 + $0x670] sm:$0xf]
    %v439 = vld [vmem:[%s1 + $0x674] sm:$0xf]
    %v440 = vld [vmem:[%s1 + $0x678] sm:$0xf]
    %v441 = vld [vmem:[%s1 + $0x67c] sm:$0xf]
    %v442 = vld [vmem:[%s1 + $0x680] sm:$0xf]
    %v443 = vld [vmem:[%s1 + $0x684] sm:$0xf]
    %v444 = vld [vmem:[%s1 + $0x688] sm:$0xf]
    %v445 = vld [vmem:[%s1 + $0x68c] sm:$0xf]
    %v446 = vld [vmem:[%s1 + $0x690] sm:$0xf]
    %v447 = vld [vmem:[%s1 + $0x694] sm:$0xf]
    %v448 = vld [vmem:[%s1 + $0x698] sm:$0xf]
    %v449 = vld [vmem:[%s1 + $0x69c] sm:$0xf]
    %v450 = vld [vmem:[%s1 + $0x6a0] sm:$0xf]
    %v451 = vld [vmem:[%s1 + $0x6a4] sm:$0xf]
    %v452 = vld [vmem:[%s1 + $0x6a8] sm:$0xf]
    %v453 = vld [vmem:[%s1 + $0x6ac] sm:$0xf]
    %v454 = vld [vmem:[%s1 + $0x6b0] sm:$0xf]
    %v455 = vld [vmem:[%s1 + $0x6b4] sm:$0xf]
    %v456 = vld [vmem:[%s1 + $0x6b8] sm:$0xf]
    %v457 = vld [vmem:[%s1 + $0x6bc] sm:$0xf]
    %v458 = vld [vmem:[%s1 + $0x6c0] sm:$0xf]
    %v459 = vld [vmem:[%s1 + $0x6c4] sm:$0xf]
    %v460 = vld [vmem:[%s1 + $0x6c8] sm:$0xf]
    %v461 = vld [vmem:[%s1 + $0x6cc] sm:$0xf]
    %v462 = vld [vmem:[%s1 + $0x6d0] sm:$0xf]
    %v463 = vld [vmem:[%s1 + $0x6d4] sm:$0xf]
    %v464 = vld [vmem:[%s1 + $0x6d8] sm:$0xf]
    %v465 = vld [vmem:[%s1 + $0x6dc] sm:$0xf]
    %v466 = vld [vmem:[%s1 + $0x6e0] sm:$0xf]
    %v467 = vld [vmem:[%s1 + $0x6e4] sm:$0xf]
    %v468 = vld [vmem:[%s1 + $0x6e8] sm:$0xf]
    %v469 = vld [vmem:[%s1 + $0x6ec] sm:$0xf]
    %v470 = vld [vmem:[%s1 + $0x6f0] sm:$0xf]
    %v471 = vld [vmem:[%s1 + $0x6f4] sm:$0xf]
    %v472 = vld [vmem:[%s1 + $0x6f8] sm:$0xf]
    %v473 = vld [vmem:[%s1 + $0x6fc] sm:$0xf]
    %v474 = vld [vmem:[%s2] sm:$0x1]
    %v476 = vlaneseq
    %v477 = vshrl.u32 %v476, 7
    %v478 = vsub.s32 0, %v477
    %v479 = vrot.slane %v474, %v478
    %v485 = vcombine.high %v22, %v22
    %v487 = vunpack.c.l.s4 1966171168
    %v488 = vunpack.c.0.s8 %v487
    %v489 = vlaneseq
    %v490 = vshrl.u32 %v489, 7
    %v491 = vsub.s32 %v488, %v490
    %v492 = vrot.slane %v22, %v491
    %v494 = vunpack.c.l.s4 1966171168
    %v495 = vunpack.c.0.s8 %v494
    %v496 = vlaneseq
    %v497 = vshrl.u32 %v496, 7
    %v498 = vsub.s32 %v495, %v497
    %v499 = vrot.slane %v485, %v498
    %v500 = vcombine.high %v492, %v492
    %v501 = vcombine.high %v499, %v499
    %v503 = vunpack.c.l.s4 1966171168
    %v504 = vunpack.c.0.s8 %v503
    %v505 = vlaneseq
    %v506 = vshrl.u32 %v505, 7
    %v507 = vsub.s32 %v504, %v506
    %v508 = vrot.slane %v492, %v507
    %v510 = vunpack.c.l.s4 1966171168
    %v511 = vunpack.c.0.s8 %v510
    %v512 = vlaneseq
    %v513 = vshrl.u32 %v512, 7
    %v514 = vsub.s32 %v511, %v513
    %v515 = vrot.slane %v499, %v514
    %v517 = vunpack.c.l.s4 1966171168
    %v518 = vunpack.c.0.s8 %v517
    %v519 = vlaneseq
    %v520 = vshrl.u32 %v519, 7
    %v521 = vsub.s32 %v518, %v520
    %v522 = vrot.slane %v500, %v521
    %v524 = vunpack.c.l.s4 1966171168
    %v525 = vunpack.c.0.s8 %v524
    %v526 = vlaneseq
    %v527 = vshrl.u32 %v526, 7
    %v528 = vsub.s32 %v525, %v527
    %v529 = vrot.slane %v501, %v528
    %v530 = vcombine.high %v508, %v508
    %v531 = vcombine.high %v515, %v515
    %v532 = vcombine.high %v522, %v522
    %v533 = vcombine.high %v529, %v529
    %v534 = vcombine.high %v23, %v23
    %v536 = vunpack.c.l.s4 1966171168
    %v537 = vunpack.c.0.s8 %v536
    %v538 = vlaneseq
    %v539 = vshrl.u32 %v538, 7
    %v540 = vsub.s32 %v537, %v539
    %v541 = vrot.slane %v23, %v540
    %v543 = vunpack.c.l.s4 1966171168
    %v544 = vunpack.c.0.s8 %v543
    %v545 = vlaneseq
    %v546 = vshrl.u32 %v545, 7
    %v547 = vsub.s32 %v544, %v546
    %v548 = vrot.slane %v534, %v547
    %v549 = vcombine.high %v541, %v541
    %v550 = vcombine.high %v548, %v548
    %v552 = vunpack.c.l.s4 1966171168
    %v553 = vunpack.c.0.s8 %v552
    %v554 = vlaneseq
    %v555 = vshrl.u32 %v554, 7
    %v556 = vsub.s32 %v553, %v555
    %v557 = vrot.slane %v541, %v556
    %v559 = vunpack.c.l.s4 1966171168
    %v560 = vunpack.c.0.s8 %v559
    %v561 = vlaneseq
    %v562 = vshrl.u32 %v561, 7
    %v563 = vsub.s32 %v560, %v562
    %v564 = vrot.slane %v548, %v563
    %v566 = vunpack.c.l.s4 1966171168
    %v567 = vunpack.c.0.s8 %v566
    %v568 = vlaneseq
    %v569 = vshrl.u32 %v568, 7
    %v570 = vsub.s32 %v567, %v569
    %v571 = vrot.slane %v549, %v570
    %v573 = vunpack.c.l.s4 1966171168
    %v574 = vunpack.c.0.s8 %v573
    %v575 = vlaneseq
    %v576 = vshrl.u32 %v575, 7
    %v577 = vsub.s32 %v574, %v576
    %v578 = vrot.slane %v550, %v577
    %v579 = vcombine.high %v557, %v557
    %v580 = vcombine.high %v564, %v564
    %v581 = vcombine.high %v571, %v571
    %v582 = vcombine.high %v578, %v578
    %v583 = vcombine.high %v24, %v24
    %v585 = vunpack.c.l.s4 1966171168
    %v586 = vunpack.c.0.s8 %v585
    %v587 = vlaneseq
    %v588 = vshrl.u32 %v587, 7
    %v589 = vsub.s32 %v586, %v588
    %v590 = vrot.slane %v24, %v589
    %v592 = vunpack.c.l.s4 1966171168
    %v593 = vunpack.c.0.s8 %v592
    %v594 = vlaneseq
    %v595 = vshrl.u32 %v594, 7
    %v596 = vsub.s32 %v593, %v595
    %v597 = vrot.slane %v583, %v596
    %v598 = vcombine.high %v590, %v590
    %v599 = vcombine.high %v597, %v597
    %v601 = vunpack.c.l.s4 1966171168
    %v602 = vunpack.c.0.s8 %v601
    %v603 = vlaneseq
    %v604 = vshrl.u32 %v603, 7
    %v605 = vsub.s32 %v602, %v604
    %v606 = vrot.slane %v590, %v605
    %v608 = vunpack.c.l.s4 1966171168
    %v609 = vunpack.c.0.s8 %v608
    %v610 = vlaneseq
    %v611 = vshrl.u32 %v610, 7
    %v612 = vsub.s32 %v609, %v611
    %v613 = vrot.slane %v597, %v612
    %v615 = vunpack.c.l.s4 1966171168
    %v616 = vunpack.c.0.s8 %v615
    %v617 = vlaneseq
    %v618 = vshrl.u32 %v617, 7
    %v619 = vsub.s32 %v616, %v618
    %v620 = vrot.slane %v598, %v619
    %v622 = vunpack.c.l.s4 1966171168
    %v623 = vunpack.c.0.s8 %v622
    %v624 = vlaneseq
    %v625 = vshrl.u32 %v624, 7
    %v626 = vsub.s32 %v623, %v625
    %v627 = vrot.slane %v599, %v626
    %v628 = vcombine.high %v606, %v606
    %v629 = vcombine.high %v613, %v613
    %v630 = vcombine.high %v620, %v620
    %v631 = vcombine.high %v627, %v627
    %v633 = vunpack.c.l.s4 1966171168
    %v634 = vunpack.c.0.s8 %v633
    %v635 = vlaneseq
    %v636 = vshrl.u32 %v635, 7
    %v637 = vsub.s32 %v634, %v636
    %v638 = vrot.slane %v25, %v637
    %v639 = vcombine.high %v638, %v638
    %v641 = vunpack.c.l.s4 1966171168
    %v642 = vunpack.c.0.s8 %v641
    %v643 = vlaneseq
    %v644 = vshrl.u32 %v643, 7
    %v645 = vsub.s32 %v642, %v644
    %v646 = vrot.slane %v638, %v645
    %v648 = vunpack.c.l.s4 1966171168
    %v649 = vunpack.c.0.s8 %v648
    %v650 = vlaneseq
    %v651 = vshrl.u32 %v650, 7
    %v652 = vsub.s32 %v649, %v651
    %v653 = vrot.slane %v639, %v652
    %v654 = vcombine.high %v646, %v646
    %v655 = vcombine.high %v653, %v653
    %v1132 = vunpack.c.l.b16 %v26
    %v1133 = vunpack.c.l.b16 %v27
    %v1134 = vunpack.c.l.b16 %v28
    %v1135 = vunpack.c.l.b16 %v29
    %v1136 = vunpack.c.l.b16 %v30
    %v1137 = vunpack.c.l.b16 %v31
    %v1138 = vunpack.c.l.b16 %v32
    %v1139 = vunpack.c.l.b16 %v33
    %v1140 = vunpack.c.l.b16 %v34
    %v1141 = vunpack.c.l.b16 %v35
    %v1142 = vunpack.c.l.b16 %v36
    %v1143 = vunpack.c.l.b16 %v37
    %v1144 = vunpack.c.l.b16 %v38
    %v1145 = vunpack.c.l.b16 %v39
    %v1146 = vunpack.c.l.b16 %v40
    %v1147 = vunpack.c.l.b16 %v41
    %v1148 = vunpack.c.l.b16 %v42
    %v1149 = vunpack.c.l.b16 %v43
    %v1150 = vunpack.c.l.b16 %v44
    %v1151 = vunpack.c.l.b16 %v45
    %v1152 = vunpack.c.l.b16 %v46
    %v1153 = vunpack.c.l.b16 %v47
    %v1154 = vunpack.c.l.b16 %v48
    %v1155 = vunpack.c.l.b16 %v49
    %v1156 = vunpack.c.l.b16 %v50
    %v1157 = vunpack.c.l.b16 %v51
    %v1158 = vunpack.c.l.b16 %v52
    %v1159 = vunpack.c.l.b16 %v53
    %v1160 = vunpack.c.l.b16 %v54
    %v1161 = vunpack.c.l.b16 %v55
    %v1162 = vunpack.c.l.b16 %v56
    %v1163 = vunpack.c.l.b16 %v57
    %v1164 = vunpack.c.l.b16 %v58
    %v1165 = vunpack.c.l.b16 %v59
    %v1166 = vunpack.c.l.b16 %v60
    %v1167 = vunpack.c.l.b16 %v61
    %v1168 = vunpack.c.l.b16 %v62
    %v1169 = vunpack.c.l.b16 %v63
    %v1170 = vunpack.c.l.b16 %v64
    %v1171 = vunpack.c.l.b16 %v65
    %v1172 = vunpack.c.l.b16 %v66
    %v1173 = vunpack.c.l.b16 %v67
    %v1174 = vunpack.c.l.b16 %v68
    %v1175 = vunpack.c.l.b16 %v69
    %v1176 = vunpack.c.l.b16 %v70
    %v1177 = vunpack.c.l.b16 %v71
    %v1178 = vunpack.c.l.b16 %v72
    %v1179 = vunpack.c.l.b16 %v73
    %v1180 = vunpack.c.l.b16 %v74
    %v1181 = vunpack.c.l.b16 %v75
    %v1182 = vunpack.c.l.b16 %v76
    %v1183 = vunpack.c.l.b16 %v77
    %v1184 = vunpack.c.l.b16 %v78
    %v1185 = vunpack.c.l.b16 %v79
    %v1186 = vunpack.c.l.b16 %v80
    %v1187 = vunpack.c.l.b16 %v81
    %v1188 = vunpack.c.l.b16 %v82
    %v1189 = vunpack.c.l.b16 %v83
    %v1190 = vunpack.c.l.b16 %v84
    %v1191 = vunpack.c.l.b16 %v85
    %v1192 = vunpack.c.l.b16 %v86
    %v1193 = vunpack.c.l.b16 %v87
    %v1194 = vunpack.c.l.b16 %v88
    %v1195 = vunpack.c.l.b16 %v89
    %v1196 = vunpack.c.l.b16 %v90
    %v1197 = vunpack.c.l.b16 %v91
    %v1198 = vunpack.c.l.b16 %v92
    %v1199 = vunpack.c.l.b16 %v93
    %v1200 = vunpack.c.l.b16 %v94
    %v1201 = vunpack.c.l.b16 %v95
    %v1202 = vunpack.c.l.b16 %v96
    %v1203 = vunpack.c.l.b16 %v97
    %v1204 = vunpack.c.l.b16 %v98
    %v1205 = vunpack.c.l.b16 %v99
    %v1206 = vunpack.c.l.b16 %v100
    %v1207 = vunpack.c.l.b16 %v101
    %v1208 = vunpack.c.l.b16 %v102
    %v1209 = vunpack.c.l.b16 %v103
    %v1210 = vunpack.c.l.b16 %v104
    %v1211 = vunpack.c.l.b16 %v105
    %v1212 = vunpack.c.l.b16 %v106
    %v1213 = vunpack.c.l.b16 %v107
    %v1214 = vunpack.c.l.b16 %v108
    %v1215 = vunpack.c.l.b16 %v109
    %v1216 = vunpack.c.l.b16 %v110
    %v1217 = vunpack.c.l.b16 %v111
    %v1218 = vunpack.c.l.b16 %v112
    %v1219 = vunpack.c.l.b16 %v113
    %v1220 = vunpack.c.l.b16 %v114
    %v1221 = vunpack.c.l.b16 %v115
    %v1222 = vunpack.c.l.b16 %v116
    %v1223 = vunpack.c.l.b16 %v117
    %v1224 = vunpack.c.l.b16 %v118
    %v1225 = vunpack.c.l.b16 %v119
    %v1226 = vunpack.c.l.b16 %v120
    %v1227 = vunpack.c.l.b16 %v121
    %v1228 = vunpack.c.l.b16 %v122
    %v1229 = vunpack.c.l.b16 %v123
    %v1230 = vunpack.c.l.b16 %v124
    %v1231 = vunpack.c.l.b16 %v125
    %v1232 = vunpack.c.l.b16 %v126
    %v1233 = vunpack.c.l.b16 %v127
    %v1234 = vunpack.c.l.b16 %v128
    %v1235 = vunpack.c.l.b16 %v129
    %v1236 = vunpack.c.l.b16 %v130
    %v1237 = vunpack.c.l.b16 %v131
    %v1238 = vunpack.c.l.b16 %v132
    %v1239 = vunpack.c.l.b16 %v133
    %v1240 = vunpack.c.l.b16 %v134
    %v1241 = vunpack.c.l.b16 %v135
    %v1242 = vunpack.c.l.b16 %v136
    %v1243 = vunpack.c.l.b16 %v137
    %v1244 = vunpack.c.l.b16 %v138
    %v1245 = vunpack.c.l.b16 %v139
    %v1246 = vunpack.c.l.b16 %v140
    %v1247 = vunpack.c.l.b16 %v141
    %v1248 = vunpack.c.l.b16 %v142
    %v1249 = vunpack.c.l.b16 %v143
    %v1250 = vunpack.c.l.b16 %v144
    %v1251 = vunpack.c.l.b16 %v145
    %v1252 = vunpack.c.l.b16 %v146
    %v1253 = vunpack.c.l.b16 %v147
    %v1254 = vunpack.c.l.b16 %v148
    %v1255 = vunpack.c.l.b16 %v149
    %v1256 = vunpack.c.l.b16 %v150
    %v1257 = vunpack.c.l.b16 %v151
    %v1258 = vunpack.c.l.b16 %v152
    %v1259 = vunpack.c.l.b16 %v153
    %v1260 = vunpack.c.l.b16 %v154
    %v1261 = vunpack.c.l.b16 %v155
    %v1262 = vunpack.c.l.b16 %v156
    %v1263 = vunpack.c.l.b16 %v157
    %v1264 = vunpack.c.l.b16 %v158
    %v1265 = vunpack.c.l.b16 %v159
    %v1266 = vunpack.c.l.b16 %v160
    %v1267 = vunpack.c.l.b16 %v161
    %v1268 = vunpack.c.l.b16 %v162
    %v1269 = vunpack.c.l.b16 %v163
    %v1270 = vunpack.c.l.b16 %v164
    %v1271 = vunpack.c.l.b16 %v165
    %v1272 = vunpack.c.l.b16 %v166
    %v1273 = vunpack.c.l.b16 %v167
    %v1274 = vunpack.c.l.b16 %v168
    %v1275 = vunpack.c.l.b16 %v169
    %v1276 = vunpack.c.l.b16 %v170
    %v1277 = vunpack.c.l.b16 %v171
    %v1278 = vunpack.c.l.b16 %v172
    %v1279 = vunpack.c.l.b16 %v173
    %v1280 = vunpack.c.l.b16 %v174
    %v1281 = vunpack.c.l.b16 %v175
    %v1282 = vunpack.c.l.b16 %v176
    %v1283 = vunpack.c.l.b16 %v177
    %v1284 = vunpack.c.l.b16 %v178
    %v1285 = vunpack.c.l.b16 %v179
    %v1286 = vunpack.c.l.b16 %v180
    %v1287 = vunpack.c.l.b16 %v181
    %v1288 = vunpack.c.l.b16 %v182
    %v1289 = vunpack.c.l.b16 %v183
    %v1290 = vunpack.c.l.b16 %v184
    %v1291 = vunpack.c.l.b16 %v185
    %v1292 = vunpack.c.l.b16 %v186
    %v1293 = vunpack.c.l.b16 %v187
    %v1294 = vunpack.c.l.b16 %v188
    %v1295 = vunpack.c.l.b16 %v189
    %v1296 = vunpack.c.l.b16 %v190
    %v1297 = vunpack.c.l.b16 %v191
    %v1298 = vunpack.c.l.b16 %v192
    %v1299 = vunpack.c.l.b16 %v193
    %v1300 = vunpack.c.l.b16 %v194
    %v1301 = vunpack.c.l.b16 %v195
    %v1302 = vunpack.c.l.b16 %v196
    %v1303 = vunpack.c.l.b16 %v197
    %v1304 = vunpack.c.l.b16 %v198
    %v1305 = vunpack.c.l.b16 %v199
    %v1306 = vunpack.c.l.b16 %v200
    %v1307 = vunpack.c.l.b16 %v201
    %v1308 = vunpack.c.l.b16 %v202
    %v1309 = vunpack.c.l.b16 %v203
    %v1310 = vunpack.c.l.b16 %v204
    %v1311 = vunpack.c.l.b16 %v205
    %v1312 = vunpack.c.l.b16 %v206
    %v1313 = vunpack.c.l.b16 %v207
    %v1314 = vunpack.c.l.b16 %v208
    %v1315 = vunpack.c.l.b16 %v209
    %v1316 = vunpack.c.l.b16 %v210
    %v1317 = vunpack.c.l.b16 %v211
    %v1318 = vunpack.c.l.b16 %v212
    %v1319 = vunpack.c.l.b16 %v213
    %v1320 = vunpack.c.l.b16 %v214
    %v1321 = vunpack.c.l.b16 %v215
    %v1322 = vunpack.c.l.b16 %v216
    %v1323 = vunpack.c.l.b16 %v217
    %v1324 = vunpack.c.l.b16 %v218
    %v1325 = vunpack.c.l.b16 %v219
    %v1326 = vunpack.c.l.b16 %v220
    %v1327 = vunpack.c.l.b16 %v221
    %v1328 = vunpack.c.l.b16 %v222
    %v1329 = vunpack.c.l.b16 %v223
    %v1330 = vunpack.c.l.b16 %v224
    %v1331 = vunpack.c.l.b16 %v225
    %v1332 = vunpack.c.l.b16 %v226
    %v1333 = vunpack.c.l.b16 %v227
    %v1334 = vunpack.c.l.b16 %v228
    %v1335 = vunpack.c.l.b16 %v229
    %v1336 = vunpack.c.l.b16 %v230
    %v1337 = vunpack.c.l.b16 %v231
    %v1338 = vunpack.c.l.b16 %v232
    %v1339 = vunpack.c.l.b16 %v233
    %v1340 = vunpack.c.l.b16 %v234
    %v1341 = vunpack.c.l.b16 %v235
    %v1342 = vunpack.c.l.b16 %v236
    %v1343 = vunpack.c.l.b16 %v237
    %v1344 = vunpack.c.l.b16 %v238
    %v1345 = vunpack.c.l.b16 %v239
    %v1346 = vunpack.c.l.b16 %v240
    %v1347 = vunpack.c.l.b16 %v241
    %v1348 = vunpack.c.l.b16 %v242
    %v1349 = vunpack.c.l.b16 %v243
    %v1350 = vunpack.c.l.b16 %v244
    %v1351 = vunpack.c.l.b16 %v245
    %v1352 = vunpack.c.l.b16 %v246
    %v1353 = vunpack.c.l.b16 %v247
    %v1354 = vunpack.c.l.b16 %v248
    %v1355 = vunpack.c.l.b16 %v249
    %v1356 = vunpack.c.l.b16 %v250
    %v1357 = vunpack.c.l.b16 %v251
    %v1358 = vunpack.c.l.b16 %v252
    %v1359 = vunpack.c.l.b16 %v253
    %v1360 = vunpack.c.l.b16 %v254
    %v1361 = vunpack.c.l.b16 %v255
    %v1362 = vunpack.c.l.b16 %v256
    %v1363 = vunpack.c.l.b16 %v257
    %v1364 = vunpack.c.l.b16 %v258
    %v1365 = vunpack.c.l.b16 %v259
    %v1366 = vunpack.c.l.b16 %v260
    %v1367 = vunpack.c.l.b16 %v261
    %v1368 = vunpack.c.l.b16 %v262
    %v1369 = vunpack.c.l.b16 %v263
    %v1370 = vunpack.c.l.b16 %v264
    %v1371 = vunpack.c.l.b16 %v265
    %v1372 = vunpack.c.l.b16 %v266
    %v1373 = vunpack.c.l.b16 %v267
    %v1374 = vunpack.c.l.b16 %v268
    %v1375 = vunpack.c.l.b16 %v269
    %v1376 = vunpack.c.l.b16 %v270
    %v1377 = vunpack.c.l.b16 %v271
    %v1378 = vunpack.c.l.b16 %v272
    %v1379 = vunpack.c.l.b16 %v273
    %v1380 = vunpack.c.l.b16 %v274
    %v1381 = vunpack.c.l.b16 %v275
    %v1382 = vunpack.c.l.b16 %v276
    %v1383 = vunpack.c.l.b16 %v277
    %v1384 = vunpack.c.l.b16 %v278
    %v1385 = vunpack.c.l.b16 %v279
    %v1386 = vunpack.c.l.b16 %v280
    %v1387 = vunpack.c.l.b16 %v281
    %v1388 = vunpack.c.l.b16 %v282
    %v1389 = vunpack.c.l.b16 %v283
    %v1390 = vunpack.c.l.b16 %v284
    %v1391 = vunpack.c.l.b16 %v285
    %v1392 = vunpack.c.l.b16 %v286
    %v1393 = vunpack.c.l.b16 %v287
    %v1394 = vunpack.c.l.b16 %v288
    %v1395 = vunpack.c.l.b16 %v289
    %v1396 = vunpack.c.l.b16 %v290
    %v1397 = vunpack.c.l.b16 %v291
    %v1398 = vunpack.c.l.b16 %v292
    %v1399 = vunpack.c.l.b16 %v293
    %v1400 = vunpack.c.l.b16 %v294
    %v1401 = vunpack.c.l.b16 %v295
    %v1402 = vunpack.c.l.b16 %v296
    %v1403 = vunpack.c.l.b16 %v297
    %v1404 = vunpack.c.l.b16 %v298
    %v1405 = vunpack.c.l.b16 %v299
    %v1406 = vunpack.c.l.b16 %v300
    %v1407 = vunpack.c.l.b16 %v301
    %v1408 = vunpack.c.l.b16 %v302
    %v1409 = vunpack.c.l.b16 %v303
    %v1410 = vunpack.c.l.b16 %v304
    %v1411 = vunpack.c.l.b16 %v305
    %v1412 = vunpack.c.l.b16 %v306
    %v1413 = vunpack.c.l.b16 %v307
    %v1414 = vunpack.c.l.b16 %v308
    %v1415 = vunpack.c.l.b16 %v309
    %v1416 = vunpack.c.l.b16 %v310
    %v1417 = vunpack.c.l.b16 %v311
    %v1418 = vunpack.c.l.b16 %v312
    %v1419 = vunpack.c.l.b16 %v313
    %v1420 = vunpack.c.l.b16 %v314
    %v1421 = vunpack.c.l.b16 %v315
    %v1422 = vunpack.c.l.b16 %v316
    %v1423 = vunpack.c.l.b16 %v317
    %v1424 = vunpack.c.l.b16 %v318
    %v1425 = vunpack.c.l.b16 %v319
    %v1426 = vunpack.c.l.b16 %v320
    %v1427 = vunpack.c.l.b16 %v321
    %v1428 = vunpack.c.l.b16 %v322
    %v1429 = vunpack.c.l.b16 %v323
    %v1430 = vunpack.c.l.b16 %v324
    %v1431 = vunpack.c.l.b16 %v325
    %v1432 = vunpack.c.l.b16 %v326
    %v1433 = vunpack.c.l.b16 %v327
    %v1434 = vunpack.c.l.b16 %v328
    %v1435 = vunpack.c.l.b16 %v329
    %v1436 = vunpack.c.l.b16 %v330
    %v1437 = vunpack.c.l.b16 %v331
    %v1438 = vunpack.c.l.b16 %v332
    %v1439 = vunpack.c.l.b16 %v333
    %v1440 = vunpack.c.l.b16 %v334
    %v1441 = vunpack.c.l.b16 %v335
    %v1442 = vunpack.c.l.b16 %v336
    %v1443 = vunpack.c.l.b16 %v337
    %v1444 = vunpack.c.l.b16 %v338
    %v1445 = vunpack.c.l.b16 %v339
    %v1446 = vunpack.c.l.b16 %v340
    %v1447 = vunpack.c.l.b16 %v341
    %v1448 = vunpack.c.l.b16 %v342
    %v1449 = vunpack.c.l.b16 %v343
    %v1450 = vunpack.c.l.b16 %v344
    %v1451 = vunpack.c.l.b16 %v345
    %v1452 = vunpack.c.l.b16 %v346
    %v1453 = vunpack.c.l.b16 %v347
    %v1454 = vunpack.c.l.b16 %v348
    %v1455 = vunpack.c.l.b16 %v349
    %v1456 = vunpack.c.l.b16 %v350
    %v1457 = vunpack.c.l.b16 %v351
    %v1458 = vunpack.c.l.b16 %v352
    %v1459 = vunpack.c.l.b16 %v353
    %v1460 = vunpack.c.l.b16 %v354
    %v1461 = vunpack.c.l.b16 %v355
    %v1462 = vunpack.c.l.b16 %v356
    %v1463 = vunpack.c.l.b16 %v357
    %v1464 = vunpack.c.l.b16 %v358
    %v1465 = vunpack.c.l.b16 %v359
    %v1466 = vunpack.c.l.b16 %v360
    %v1467 = vunpack.c.l.b16 %v361
    %v1468 = vunpack.c.l.b16 %v362
    %v1469 = vunpack.c.l.b16 %v363
    %v1470 = vunpack.c.l.b16 %v364
    %v1471 = vunpack.c.l.b16 %v365
    %v1472 = vunpack.c.l.b16 %v366
    %v1473 = vunpack.c.l.b16 %v367
    %v1474 = vunpack.c.l.b16 %v368
    %v1475 = vunpack.c.l.b16 %v369
    %v1476 = vunpack.c.l.b16 %v370
    %v1477 = vunpack.c.l.b16 %v371
    %v1478 = vunpack.c.l.b16 %v372
    %v1479 = vunpack.c.l.b16 %v373
    %v1480 = vunpack.c.l.b16 %v374
    %v1481 = vunpack.c.l.b16 %v375
    %v1482 = vunpack.c.l.b16 %v376
    %v1483 = vunpack.c.l.b16 %v377
    %v1484 = vunpack.c.l.b16 %v378
    %v1485 = vunpack.c.l.b16 %v379
    %v1486 = vunpack.c.l.b16 %v380
    %v1487 = vunpack.c.l.b16 %v381
    %v1488 = vunpack.c.l.b16 %v382
    %v1489 = vunpack.c.l.b16 %v383
    %v1490 = vunpack.c.l.b16 %v384
    %v1491 = vunpack.c.l.b16 %v385
    %v1492 = vunpack.c.l.b16 %v386
    %v1493 = vunpack.c.l.b16 %v387
    %v1494 = vunpack.c.l.b16 %v388
    %v1495 = vunpack.c.l.b16 %v389
    %v1496 = vunpack.c.l.b16 %v390
    %v1497 = vunpack.c.l.b16 %v391
    %v1498 = vunpack.c.l.b16 %v392
    %v1499 = vunpack.c.l.b16 %v393
    %v1500 = vunpack.c.l.b16 %v394
    %v1501 = vunpack.c.l.b16 %v395
    %v1502 = vunpack.c.l.b16 %v396
    %v1503 = vunpack.c.l.b16 %v397
    %v1504 = vunpack.c.l.b16 %v398
    %v1505 = vunpack.c.l.b16 %v399
    %v1506 = vunpack.c.l.b16 %v400
    %v1507 = vunpack.c.l.b16 %v401
    %v1508 = vunpack.c.l.b16 %v402
    %v1509 = vunpack.c.l.b16 %v403
    %v1510 = vunpack.c.l.b16 %v404
    %v1511 = vunpack.c.l.b16 %v405
    %v1512 = vunpack.c.l.b16 %v406
    %v1513 = vunpack.c.l.b16 %v407
    %v1514 = vunpack.c.l.b16 %v408
    %v1515 = vunpack.c.l.b16 %v409
    %v1516 = vunpack.c.l.b16 %v410
    %v1517 = vunpack.c.l.b16 %v411
    %v1518 = vunpack.c.l.b16 %v412
    %v1519 = vunpack.c.l.b16 %v413
    %v1520 = vunpack.c.l.b16 %v414
    %v1521 = vunpack.c.l.b16 %v415
    %v1522 = vunpack.c.l.b16 %v416
    %v1523 = vunpack.c.l.b16 %v417
    %v1524 = vunpack.c.l.b16 %v418
    %v1525 = vunpack.c.l.b16 %v419
    %v1526 = vunpack.c.l.b16 %v420
    %v1527 = vunpack.c.l.b16 %v421
    %v1528 = vunpack.c.l.b16 %v422
    %v1529 = vunpack.c.l.b16 %v423
    %v1530 = vunpack.c.l.b16 %v424
    %v1531 = vunpack.c.l.b16 %v425
    %v1532 = vunpack.c.l.b16 %v426
    %v1533 = vunpack.c.l.b16 %v427
    %v1534 = vunpack.c.l.b16 %v428
    %v1535 = vunpack.c.l.b16 %v429
    %v1536 = vunpack.c.l.b16 %v430
    %v1537 = vunpack.c.l.b16 %v431
    %v1538 = vunpack.c.l.b16 %v432
    %v1539 = vunpack.c.l.b16 %v433
    %v1540 = vunpack.c.l.b16 %v434
    %v1541 = vunpack.c.l.b16 %v435
    %v1542 = vunpack.c.l.b16 %v436
    %v1543 = vunpack.c.l.b16 %v437
    %v1544 = vunpack.c.l.b16 %v438
    %v1545 = vunpack.c.l.b16 %v439
    %v1546 = vunpack.c.l.b16 %v440
    %v1547 = vunpack.c.l.b16 %v441
    %v1548 = vunpack.c.l.b16 %v442
    %v1549 = vunpack.c.l.b16 %v443
    %v1550 = vunpack.c.l.b16 %v444
    %v1551 = vunpack.c.l.b16 %v445
    %v1552 = vunpack.c.l.b16 %v446
    %v1553 = vunpack.c.l.b16 %v447
    %v1554 = vunpack.c.l.b16 %v448
    %v1555 = vunpack.c.l.b16 %v449
    %v1556 = vunpack.c.l.b16 %v450
    %v1557 = vunpack.c.l.b16 %v451
    %v1558 = vunpack.c.l.b16 %v452
    %v1559 = vunpack.c.l.b16 %v453
    %v1560 = vunpack.c.l.b16 %v454
    %v1561 = vunpack.c.l.b16 %v455
    %v1562 = vunpack.c.l.b16 %v456
    %v1563 = vunpack.c.l.b16 %v457
    %v1564 = vunpack.c.l.b16 %v458
    %v1565 = vunpack.c.l.b16 %v459
    %v1566 = vunpack.c.l.b16 %v460
    %v1567 = vunpack.c.l.b16 %v461
    %v1568 = vunpack.c.l.b16 %v462
    %v1569 = vunpack.c.l.b16 %v463
    %v1570 = vunpack.c.l.b16 %v464
    %v1571 = vunpack.c.l.b16 %v465
    %v1572 = vunpack.c.l.b16 %v466
    %v1573 = vunpack.c.l.b16 %v467
    %v1574 = vunpack.c.l.b16 %v468
    %v1575 = vunpack.c.l.b16 %v469
    %v1576 = vunpack.c.l.b16 %v470
    %v1577 = vunpack.c.l.b16 %v471
    %v1578 = vunpack.c.l.b16 %v472
    %v1579 = vunpack.c.l.b16 %v473
    %v1580 = vpack.c.b16 %v1133, %v1132
    %v1581 = vpack.c.b16 %v1135, %v1134
    %v1582 = vpack.c.b16 %v1137, %v1136
    %v1583 = vpack.c.b16 %v1139, %v1138
    %v1584 = vpack.c.b16 %v1141, %v1140
    %v1585 = vpack.c.b16 %v1143, %v1142
    %v1586 = vpack.c.b16 %v1145, %v1144
    %v1587 = vpack.c.b16 %v1147, %v1146
    %v1588 = vpack.c.b16 %v1149, %v1148
    %v1589 = vpack.c.b16 %v1151, %v1150
    %v1590 = vpack.c.b16 %v1153, %v1152
    %v1591 = vpack.c.b16 %v1155, %v1154
    %v1592 = vpack.c.b16 %v1157, %v1156
    %v1593 = vpack.c.b16 %v1159, %v1158
    %v1594 = vpack.c.b16 %v1161, %v1160
    %v1595 = vpack.c.b16 %v1163, %v1162
    %v1596 = vpack.c.b16 %v1165, %v1164
    %v1597 = vpack.c.b16 %v1167, %v1166
    %v1598 = vpack.c.b16 %v1169, %v1168
    %v1599 = vpack.c.b16 %v1171, %v1170
    %v1600 = vpack.c.b16 %v1173, %v1172
    %v1601 = vpack.c.b16 %v1175, %v1174
    %v1602 = vpack.c.b16 %v1177, %v1176
    %v1603 = vpack.c.b16 %v1179, %v1178
    %v1604 = vpack.c.b16 %v1181, %v1180
    %v1605 = vpack.c.b16 %v1183, %v1182
    %v1606 = vpack.c.b16 %v1185, %v1184
    %v1607 = vpack.c.b16 %v1187, %v1186
    %v1608 = vpack.c.b16 %v1189, %v1188
    %v1609 = vpack.c.b16 %v1191, %v1190
    %v1610 = vpack.c.b16 %v1193, %v1192
    %v1611 = vpack.c.b16 %v1195, %v1194
    %v1612 = vpack.c.b16 %v1197, %v1196
    %v1613 = vpack.c.b16 %v1199, %v1198
    %v1614 = vpack.c.b16 %v1201, %v1200
    %v1615 = vpack.c.b16 %v1203, %v1202
    %v1616 = vpack.c.b16 %v1205, %v1204
    %v1617 = vpack.c.b16 %v1207, %v1206
    %v1618 = vpack.c.b16 %v1209, %v1208
    %v1619 = vpack.c.b16 %v1211, %v1210
    %v1620 = vpack.c.b16 %v1213, %v1212
    %v1621 = vpack.c.b16 %v1215, %v1214
    %v1622 = vpack.c.b16 %v1217, %v1216
    %v1623 = vpack.c.b16 %v1219, %v1218
    %v1624 = vpack.c.b16 %v1221, %v1220
    %v1625 = vpack.c.b16 %v1223, %v1222
    %v1626 = vpack.c.b16 %v1225, %v1224
    %v1627 = vpack.c.b16 %v1227, %v1226
    %v1628 = vpack.c.b16 %v1229, %v1228
    %v1629 = vpack.c.b16 %v1231, %v1230
    %v1630 = vpack.c.b16 %v1233, %v1232
    %v1631 = vpack.c.b16 %v1235, %v1234
    %v1632 = vpack.c.b16 %v1237, %v1236
    %v1633 = vpack.c.b16 %v1239, %v1238
    %v1634 = vpack.c.b16 %v1241, %v1240
    %v1635 = vpack.c.b16 %v1243, %v1242
    %v1636 = vpack.c.b16 %v1245, %v1244
    %v1637 = vpack.c.b16 %v1247, %v1246
    %v1638 = vpack.c.b16 %v1249, %v1248
    %v1639 = vpack.c.b16 %v1251, %v1250
    %v1640 = vpack.c.b16 %v1253, %v1252
    %v1641 = vpack.c.b16 %v1255, %v1254
    %v1642 = vpack.c.b16 %v1257, %v1256
    %v1643 = vpack.c.b16 %v1259, %v1258
    %v1644 = vpack.c.b16 %v1261, %v1260
    %v1645 = vpack.c.b16 %v1263, %v1262
    %v1646 = vpack.c.b16 %v1265, %v1264
    %v1647 = vpack.c.b16 %v1267, %v1266
    %v1648 = vpack.c.b16 %v1269, %v1268
    %v1649 = vpack.c.b16 %v1271, %v1270
    %v1650 = vpack.c.b16 %v1273, %v1272
    %v1651 = vpack.c.b16 %v1275, %v1274
    %v1652 = vpack.c.b16 %v1277, %v1276
    %v1653 = vpack.c.b16 %v1279, %v1278
    %v1654 = vpack.c.b16 %v1281, %v1280
    %v1655 = vpack.c.b16 %v1283, %v1282
    %v1656 = vpack.c.b16 %v1285, %v1284
    %v1657 = vpack.c.b16 %v1287, %v1286
    %v1658 = vpack.c.b16 %v1289, %v1288
    %v1659 = vpack.c.b16 %v1291, %v1290
    %v1660 = vpack.c.b16 %v1293, %v1292
    %v1661 = vpack.c.b16 %v1295, %v1294
    %v1662 = vpack.c.b16 %v1297, %v1296
    %v1663 = vpack.c.b16 %v1299, %v1298
    %v1664 = vpack.c.b16 %v1301, %v1300
    %v1665 = vpack.c.b16 %v1303, %v1302
    %v1666 = vpack.c.b16 %v1305, %v1304
    %v1667 = vpack.c.b16 %v1307, %v1306
    %v1668 = vpack.c.b16 %v1309, %v1308
    %v1669 = vpack.c.b16 %v1311, %v1310
    %v1670 = vpack.c.b16 %v1313, %v1312
    %v1671 = vpack.c.b16 %v1315, %v1314
    %v1672 = vpack.c.b16 %v1317, %v1316
    %v1673 = vpack.c.b16 %v1319, %v1318
    %v1674 = vpack.c.b16 %v1321, %v1320
    %v1675 = vpack.c.b16 %v1323, %v1322
    %v1676 = vpack.c.b16 %v1325, %v1324
    %v1677 = vpack.c.b16 %v1327, %v1326
    %v1678 = vpack.c.b16 %v1329, %v1328
    %v1679 = vpack.c.b16 %v1331, %v1330
    %v1680 = vpack.c.b16 %v1333, %v1332
    %v1681 = vpack.c.b16 %v1335, %v1334
    %v1682 = vpack.c.b16 %v1337, %v1336
    %v1683 = vpack.c.b16 %v1339, %v1338
    %v1684 = vpack.c.b16 %v1341, %v1340
    %v1685 = vpack.c.b16 %v1343, %v1342
    %v1686 = vpack.c.b16 %v1345, %v1344
    %v1687 = vpack.c.b16 %v1347, %v1346
    %v1688 = vpack.c.b16 %v1349, %v1348
    %v1689 = vpack.c.b16 %v1351, %v1350
    %v1690 = vpack.c.b16 %v1353, %v1352
    %v1691 = vpack.c.b16 %v1355, %v1354
    %v1692 = vpack.c.b16 %v1357, %v1356
    %v1693 = vpack.c.b16 %v1359, %v1358
    %v1694 = vpack.c.b16 %v1361, %v1360
    %v1695 = vpack.c.b16 %v1363, %v1362
    %v1696 = vpack.c.b16 %v1365, %v1364
    %v1697 = vpack.c.b16 %v1367, %v1366
    %v1698 = vpack.c.b16 %v1369, %v1368
    %v1699 = vpack.c.b16 %v1371, %v1370
    %v1700 = vpack.c.b16 %v1373, %v1372
    %v1701 = vpack.c.b16 %v1375, %v1374
    %v1702 = vpack.c.b16 %v1377, %v1376
    %v1703 = vpack.c.b16 %v1379, %v1378
    %v1704 = vpack.c.b16 %v1381, %v1380
    %v1705 = vpack.c.b16 %v1383, %v1382
    %v1706 = vpack.c.b16 %v1385, %v1384
    %v1707 = vpack.c.b16 %v1387, %v1386
    %v1708 = vpack.c.b16 %v1389, %v1388
    %v1709 = vpack.c.b16 %v1391, %v1390
    %v1710 = vpack.c.b16 %v1393, %v1392
    %v1711 = vpack.c.b16 %v1395, %v1394
    %v1712 = vpack.c.b16 %v1397, %v1396
    %v1713 = vpack.c.b16 %v1399, %v1398
    %v1714 = vpack.c.b16 %v1401, %v1400
    %v1715 = vpack.c.b16 %v1403, %v1402
    %v1716 = vpack.c.b16 %v1405, %v1404
    %v1717 = vpack.c.b16 %v1407, %v1406
    %v1718 = vpack.c.b16 %v1409, %v1408
    %v1719 = vpack.c.b16 %v1411, %v1410
    %v1720 = vpack.c.b16 %v1413, %v1412
    %v1721 = vpack.c.b16 %v1415, %v1414
    %v1722 = vpack.c.b16 %v1417, %v1416
    %v1723 = vpack.c.b16 %v1419, %v1418
    %v1724 = vpack.c.b16 %v1421, %v1420
    %v1725 = vpack.c.b16 %v1423, %v1422
    %v1726 = vpack.c.b16 %v1425, %v1424
    %v1727 = vpack.c.b16 %v1427, %v1426
    %v1728 = vpack.c.b16 %v1429, %v1428
    %v1729 = vpack.c.b16 %v1431, %v1430
    %v1730 = vpack.c.b16 %v1433, %v1432
    %v1731 = vpack.c.b16 %v1435, %v1434
    %v1732 = vpack.c.b16 %v1437, %v1436
    %v1733 = vpack.c.b16 %v1439, %v1438
    %v1734 = vpack.c.b16 %v1441, %v1440
    %v1735 = vpack.c.b16 %v1443, %v1442
    %v1736 = vpack.c.b16 %v1445, %v1444
    %v1737 = vpack.c.b16 %v1447, %v1446
    %v1738 = vpack.c.b16 %v1449, %v1448
    %v1739 = vpack.c.b16 %v1451, %v1450
    %v1740 = vpack.c.b16 %v1453, %v1452
    %v1741 = vpack.c.b16 %v1455, %v1454
    %v1742 = vpack.c.b16 %v1457, %v1456
    %v1743 = vpack.c.b16 %v1459, %v1458
    %v1744 = vpack.c.b16 %v1461, %v1460
    %v1745 = vpack.c.b16 %v1463, %v1462
    %v1746 = vpack.c.b16 %v1465, %v1464
    %v1747 = vpack.c.b16 %v1467, %v1466
    %v1748 = vpack.c.b16 %v1469, %v1468
    %v1749 = vpack.c.b16 %v1471, %v1470
    %v1750 = vpack.c.b16 %v1473, %v1472
    %v1751 = vpack.c.b16 %v1475, %v1474
    %v1752 = vpack.c.b16 %v1477, %v1476
    %v1753 = vpack.c.b16 %v1479, %v1478
    %v1754 = vpack.c.b16 %v1481, %v1480
    %v1755 = vpack.c.b16 %v1483, %v1482
    %v1756 = vpack.c.b16 %v1485, %v1484
    %v1757 = vpack.c.b16 %v1487, %v1486
    %v1758 = vpack.c.b16 %v1489, %v1488
    %v1759 = vpack.c.b16 %v1491, %v1490
    %v1760 = vpack.c.b16 %v1493, %v1492
    %v1761 = vpack.c.b16 %v1495, %v1494
    %v1762 = vpack.c.b16 %v1497, %v1496
    %v1763 = vpack.c.b16 %v1499, %v1498
    %v1764 = vpack.c.b16 %v1501, %v1500
    %v1765 = vpack.c.b16 %v1503, %v1502
    %v1766 = vpack.c.b16 %v1505, %v1504
    %v1767 = vpack.c.b16 %v1507, %v1506
    %v1768 = vpack.c.b16 %v1509, %v1508
    %v1769 = vpack.c.b16 %v1511, %v1510
    %v1770 = vpack.c.b16 %v1513, %v1512
    %v1771 = vpack.c.b16 %v1515, %v1514
    %v1772 = vpack.c.b16 %v1517, %v1516
    %v1773 = vpack.c.b16 %v1519, %v1518
    %v1774 = vpack.c.b16 %v1521, %v1520
    %v1775 = vpack.c.b16 %v1523, %v1522
    %v1776 = vpack.c.b16 %v1525, %v1524
    %v1777 = vpack.c.b16 %v1527, %v1526
    %v1778 = vpack.c.b16 %v1529, %v1528
    %v1779 = vpack.c.b16 %v1531, %v1530
    %v1780 = vpack.c.b16 %v1533, %v1532
    %v1781 = vpack.c.b16 %v1535, %v1534
    %v1782 = vpack.c.b16 %v1537, %v1536
    %v1783 = vpack.c.b16 %v1539, %v1538
    %v1784 = vpack.c.b16 %v1541, %v1540
    %v1785 = vpack.c.b16 %v1543, %v1542
    %v1786 = vpack.c.b16 %v1545, %v1544
    %v1787 = vpack.c.b16 %v1547, %v1546
    %v1788 = vpack.c.b16 %v1549, %v1548
    %v1789 = vpack.c.b16 %v1551, %v1550
    %v1790 = vpack.c.b16 %v1553, %v1552
    %v1791 = vpack.c.b16 %v1555, %v1554
    %v1792 = vpack.c.b16 %v1557, %v1556
    %v1793 = vpack.c.b16 %v1559, %v1558
    %v1794 = vpack.c.b16 %v1561, %v1560
    %v1795 = vpack.c.b16 %v1563, %v1562
    %v1796 = vpack.c.b16 %v1565, %v1564
    %v1797 = vpack.c.b16 %v1567, %v1566
    %v1798 = vpack.c.b16 %v1569, %v1568
    %v1799 = vpack.c.b16 %v1571, %v1570
    %v1800 = vpack.c.b16 %v1573, %v1572
    %v1801 = vpack.c.b16 %v1575, %v1574
    %v1802 = vpack.c.b16 %v1577, %v1576
    %v1803 = vpack.c.b16 %v1579, %v1578
    %2028 = vmatprep.subr.bf16.mxu0 0
    %2029 = vmatpush1.bf16.msra.mxu0 %v1587
    %2030 = vmatprep.subr.bf16.mxu0 0
    %2031 = vmatpush1.bf16.msra.mxu0 %v1586
    %2032 = vmatprep.subr.bf16.mxu0 0
    %2033 = vmatpush1.bf16.msra.mxu0 %v1585
    %2034 = vmatprep.subr.bf16.mxu0 0
    %2035 = vmatpush1.bf16.msra.mxu0 %v1584
    %2036 = vmatprep.subr.bf16.mxu0 0
    %2037 = vmatpush1.bf16.msra.mxu0 %v1583
    %2038 = vmatprep.subr.bf16.mxu0 0
    %2039 = vmatpush1.bf16.msra.mxu0 %v1582
    %2040 = vmatprep.subr.bf16.mxu0 0
    %2041 = vmatpush1.bf16.msra.mxu0 %v1581
    %2042 = vmatprep.subr.bf16.mxu0 0
    %2043 = vmatpush1.bf16.msra.mxu0 %v1580
    %2044 = vmatprep.subr.bf16.mxu0 0
    %2045 = vmatpush2.bf16.msra.mxu0 %v1595
    %2046 = vmatprep.subr.bf16.mxu0 0
    %2047 = vmatpush2.bf16.msra.mxu0 %v1594
    %2048 = vmatprep.subr.bf16.mxu0 0
    %2049 = vmatpush2.bf16.msra.mxu0 %v1593
    %2050 = vmatprep.subr.bf16.mxu0 0
    %2051 = vmatpush2.bf16.msra.mxu0 %v1592
    %2052 = vmatprep.subr.bf16.mxu0 0
    %2053 = vmatpush2.bf16.msra.mxu0 %v1591
    %2054 = vmatprep.subr.bf16.mxu0 0
    %2055 = vmatpush2.bf16.msra.mxu0 %v1590
    %2056 = vmatprep.subr.bf16.mxu0 0
    %2057 = vmatpush2.bf16.msra.mxu0 %v1589
    %2058 = vmatprep.subr.bf16.mxu0 0
    %2059 = vmatpush2.bf16.msra.mxu0 %v1588
    %2060 = vmatprep.mubr.bf16.mxu0 %v522
    %2061 = vmatmul.mubr.bf16.gmra.mxu0 %v508
    %v2062 = vpop.f32.mrf.mxu0
    %v2063 = vadd.f32 %v479, %v2062
    %v2064 = vpop.f32.mrf.mxu0
    %v2065 = vpop.f32.mrf.mxu0
    %v2066 = vpop.f32.mrf.mxu0
    %2067 = vdwg.mxu0
    %2068 = vmatprep.subr.bf16.mxu0 0
    %2069 = vmatpush1.bf16.msra.mxu0 %v1603
    %2070 = vmatprep.subr.bf16.mxu0 0
    %2071 = vmatpush1.bf16.msra.mxu0 %v1602
    %2072 = vmatprep.subr.bf16.mxu0 0
    %2073 = vmatpush1.bf16.msra.mxu0 %v1601
    %2074 = vmatprep.subr.bf16.mxu0 0
    %2075 = vmatpush1.bf16.msra.mxu0 %v1600
    %2076 = vmatprep.subr.bf16.mxu0 0
    %2077 = vmatpush1.bf16.msra.mxu0 %v1599
    %2078 = vmatprep.subr.bf16.mxu0 0
    %2079 = vmatpush1.bf16.msra.mxu0 %v1598
    %2080 = vmatprep.subr.bf16.mxu0 0
    %2081 = vmatpush1.bf16.msra.mxu0 %v1597
    %2082 = vmatprep.subr.bf16.mxu0 0
    %2083 = vmatpush1.bf16.msra.mxu0 %v1596
    %2084 = vmatprep.subr.bf16.mxu0 0
    %2085 = vmatpush2.bf16.msra.mxu0 %v1611
    %2086 = vmatprep.subr.bf16.mxu0 0
    %2087 = vmatpush2.bf16.msra.mxu0 %v1610
    %2088 = vmatprep.subr.bf16.mxu0 0
    %2089 = vmatpush2.bf16.msra.mxu0 %v1609
    %2090 = vmatprep.subr.bf16.mxu0 0
    %2091 = vmatpush2.bf16.msra.mxu0 %v1608
    %2092 = vmatprep.subr.bf16.mxu0 0
    %2093 = vmatpush2.bf16.msra.mxu0 %v1607
    %2094 = vmatprep.subr.bf16.mxu0 0
    %2095 = vmatpush2.bf16.msra.mxu0 %v1606
    %2096 = vmatprep.subr.bf16.mxu0 0
    %2097 = vmatpush2.bf16.msra.mxu0 %v1605
    %2098 = vmatprep.subr.bf16.mxu0 0
    %2099 = vmatpush2.bf16.msra.mxu0 %v1604
    %2100 = vmatprep.mubr.bf16.mxu0 %v532
    %2101 = vmatmul.mubr.bf16.gmra.mxu0 %v530
    %v2102 = vpop.f32.mrf.mxu0
    %v2103 = vadd.f32 %v2063, %v2102
    %v2104 = vpop.f32.mrf.mxu0
    %v2105 = vpop.f32.mrf.mxu0
    %v2106 = vpop.f32.mrf.mxu0
    %2107 = vdwg.mxu0
    %2108 = vmatprep.subr.bf16.mxu0 0
    %2109 = vmatpush1.bf16.msra.mxu0 %v1619
    %2110 = vmatprep.subr.bf16.mxu0 0
    %2111 = vmatpush1.bf16.msra.mxu0 %v1618
    %2112 = vmatprep.subr.bf16.mxu0 0
    %2113 = vmatpush1.bf16.msra.mxu0 %v1617
    %2114 = vmatprep.subr.bf16.mxu0 0
    %2115 = vmatpush1.bf16.msra.mxu0 %v1616
    %2116 = vmatprep.subr.bf16.mxu0 0
    %2117 = vmatpush1.bf16.msra.mxu0 %v1615
    %2118 = vmatprep.subr.bf16.mxu0 0
    %2119 = vmatpush1.bf16.msra.mxu0 %v1614
    %2120 = vmatprep.subr.bf16.mxu0 0
    %2121 = vmatpush1.bf16.msra.mxu0 %v1613
    %2122 = vmatprep.subr.bf16.mxu0 0
    %2123 = vmatpush1.bf16.msra.mxu0 %v1612
    %2124 = vmatprep.subr.bf16.mxu0 0
    %2125 = vmatpush2.bf16.msra.mxu0 %v1627
    %2126 = vmatprep.subr.bf16.mxu0 0
    %2127 = vmatpush2.bf16.msra.mxu0 %v1626
    %2128 = vmatprep.subr.bf16.mxu0 0
    %2129 = vmatpush2.bf16.msra.mxu0 %v1625
    %2130 = vmatprep.subr.bf16.mxu0 0
    %2131 = vmatpush2.bf16.msra.mxu0 %v1624
    %2132 = vmatprep.subr.bf16.mxu0 0
    %2133 = vmatpush2.bf16.msra.mxu0 %v1623
    %2134 = vmatprep.subr.bf16.mxu0 0
    %2135 = vmatpush2.bf16.msra.mxu0 %v1622
    %2136 = vmatprep.subr.bf16.mxu0 0
    %2137 = vmatpush2.bf16.msra.mxu0 %v1621
    %2138 = vmatprep.subr.bf16.mxu0 0
    %2139 = vmatpush2.bf16.msra.mxu0 %v1620
    %2140 = vmatprep.mubr.bf16.mxu0 %v529
    %2141 = vmatmul.mubr.bf16.gmra.mxu0 %v515
    %v2142 = vpop.f32.mrf.mxu0
    %v2143 = vadd.f32 %v2103, %v2142
    %v2144 = vpop.f32.mrf.mxu0
    %v2145 = vpop.f32.mrf.mxu0
    %v2146 = vpop.f32.mrf.mxu0
    %2147 = vdwg.mxu0
    %2148 = vmatprep.subr.bf16.mxu0 0
    %2149 = vmatpush1.bf16.msra.mxu0 %v1635
    %2150 = vmatprep.subr.bf16.mxu0 0
    %2151 = vmatpush1.bf16.msra.mxu0 %v1634
    %2152 = vmatprep.subr.bf16.mxu0 0
    %2153 = vmatpush1.bf16.msra.mxu0 %v1633
    %2154 = vmatprep.subr.bf16.mxu0 0
    %2155 = vmatpush1.bf16.msra.mxu0 %v1632
    %2156 = vmatprep.subr.bf16.mxu0 0
    %2157 = vmatpush1.bf16.msra.mxu0 %v1631
    %2158 = vmatprep.subr.bf16.mxu0 0
    %2159 = vmatpush1.bf16.msra.mxu0 %v1630
    %2160 = vmatprep.subr.bf16.mxu0 0
    %2161 = vmatpush1.bf16.msra.mxu0 %v1629
    %2162 = vmatprep.subr.bf16.mxu0 0
    %2163 = vmatpush1.bf16.msra.mxu0 %v1628
    %2164 = vmatprep.subr.bf16.mxu0 0
    %2165 = vmatpush2.bf16.msra.mxu0 %v1643
    %2166 = vmatprep.subr.bf16.mxu0 0
    %2167 = vmatpush2.bf16.msra.mxu0 %v1642
    %2168 = vmatprep.subr.bf16.mxu0 0
    %2169 = vmatpush2.bf16.msra.mxu0 %v1641
    %2170 = vmatprep.subr.bf16.mxu0 0
    %2171 = vmatpush2.bf16.msra.mxu0 %v1640
    %2172 = vmatprep.subr.bf16.mxu0 0
    %2173 = vmatpush2.bf16.msra.mxu0 %v1639
    %2174 = vmatprep.subr.bf16.mxu0 0
    %2175 = vmatpush2.bf16.msra.mxu0 %v1638
    %2176 = vmatprep.subr.bf16.mxu0 0
    %2177 = vmatpush2.bf16.msra.mxu0 %v1637
    %2178 = vmatprep.subr.bf16.mxu0 0
    %2179 = vmatpush2.bf16.msra.mxu0 %v1636
    %2180 = vmatprep.mubr.bf16.mxu0 %v533
    %2181 = vmatmul.mubr.bf16.gmra.mxu0 %v531
    %v2182 = vpop.f32.mrf.mxu0
    %v2183 = vadd.f32 %v2143, %v2182
    %v2184 = vpop.f32.mrf.mxu0
    %v2185 = vpop.f32.mrf.mxu0
    %v2186 = vpop.f32.mrf.mxu0
    %2187 = vdwg.mxu0
    %2188 = vmatprep.subr.bf16.mxu0 0
    %2189 = vmatpush1.bf16.msra.mxu0 %v1651
    %2190 = vmatprep.subr.bf16.mxu0 0
    %2191 = vmatpush1.bf16.msra.mxu0 %v1650
    %2192 = vmatprep.subr.bf16.mxu0 0
    %2193 = vmatpush1.bf16.msra.mxu0 %v1649
    %2194 = vmatprep.subr.bf16.mxu0 0
    %2195 = vmatpush1.bf16.msra.mxu0 %v1648
    %2196 = vmatprep.subr.bf16.mxu0 0
    %2197 = vmatpush1.bf16.msra.mxu0 %v1647
    %2198 = vmatprep.subr.bf16.mxu0 0
    %2199 = vmatpush1.bf16.msra.mxu0 %v1646
    %2200 = vmatprep.subr.bf16.mxu0 0
    %2201 = vmatpush1.bf16.msra.mxu0 %v1645
    %2202 = vmatprep.subr.bf16.mxu0 0
    %2203 = vmatpush1.bf16.msra.mxu0 %v1644
    %2204 = vmatprep.subr.bf16.mxu0 0
    %2205 = vmatpush2.bf16.msra.mxu0 %v1659
    %2206 = vmatprep.subr.bf16.mxu0 0
    %2207 = vmatpush2.bf16.msra.mxu0 %v1658
    %2208 = vmatprep.subr.bf16.mxu0 0
    %2209 = vmatpush2.bf16.msra.mxu0 %v1657
    %2210 = vmatprep.subr.bf16.mxu0 0
    %2211 = vmatpush2.bf16.msra.mxu0 %v1656
    %2212 = vmatprep.subr.bf16.mxu0 0
    %2213 = vmatpush2.bf16.msra.mxu0 %v1655
    %2214 = vmatprep.subr.bf16.mxu0 0
    %2215 = vmatpush2.bf16.msra.mxu0 %v1654
    %2216 = vmatprep.subr.bf16.mxu0 0
    %2217 = vmatpush2.bf16.msra.mxu0 %v1653
    %2218 = vmatprep.subr.bf16.mxu0 0
    %2219 = vmatpush2.bf16.msra.mxu0 %v1652
    %2220 = vmatprep.mubr.bf16.mxu0 %v571
    %2221 = vmatmul.mubr.bf16.gmra.mxu0 %v557
    %v2222 = vpop.f32.mrf.mxu0
    %v2223 = vadd.f32 %v2183, %v2222
    %v2224 = vpop.f32.mrf.mxu0
    %v2225 = vpop.f32.mrf.mxu0
    %v2226 = vpop.f32.mrf.mxu0
    %2227 = vdwg.mxu0
    %2228 = vmatprep.subr.bf16.mxu0 0
    %2229 = vmatpush1.bf16.msra.mxu0 %v1667
    %2230 = vmatprep.subr.bf16.mxu0 0
    %2231 = vmatpush1.bf16.msra.mxu0 %v1666
    %2232 = vmatprep.subr.bf16.mxu0 0
    %2233 = vmatpush1.bf16.msra.mxu0 %v1665
    %2234 = vmatprep.subr.bf16.mxu0 0
    %2235 = vmatpush1.bf16.msra.mxu0 %v1664
    %2236 = vmatprep.subr.bf16.mxu0 0
    %2237 = vmatpush1.bf16.msra.mxu0 %v1663
    %2238 = vmatprep.subr.bf16.mxu0 0
    %2239 = vmatpush1.bf16.msra.mxu0 %v1662
    %2240 = vmatprep.subr.bf16.mxu0 0
    %2241 = vmatpush1.bf16.msra.mxu0 %v1661
    %2242 = vmatprep.subr.bf16.mxu0 0
    %2243 = vmatpush1.bf16.msra.mxu0 %v1660
    %2244 = vmatprep.subr.bf16.mxu0 0
    %2245 = vmatpush2.bf16.msra.mxu0 %v1675
    %2246 = vmatprep.subr.bf16.mxu0 0
    %2247 = vmatpush2.bf16.msra.mxu0 %v1674
    %2248 = vmatprep.subr.bf16.mxu0 0
    %2249 = vmatpush2.bf16.msra.mxu0 %v1673
    %2250 = vmatprep.subr.bf16.mxu0 0
    %2251 = vmatpush2.bf16.msra.mxu0 %v1672
    %2252 = vmatprep.subr.bf16.mxu0 0
    %2253 = vmatpush2.bf16.msra.mxu0 %v1671
    %2254 = vmatprep.subr.bf16.mxu0 0
    %2255 = vmatpush2.bf16.msra.mxu0 %v1670
    %2256 = vmatprep.subr.bf16.mxu0 0
    %2257 = vmatpush2.bf16.msra.mxu0 %v1669
    %2258 = vmatprep.subr.bf16.mxu0 0
    %2259 = vmatpush2.bf16.msra.mxu0 %v1668
    %2260 = vmatprep.mubr.bf16.mxu0 %v581
    %2261 = vmatmul.mubr.bf16.gmra.mxu0 %v579
    %v2262 = vpop.f32.mrf.mxu0
    %v2263 = vadd.f32 %v2223, %v2262
    %v2264 = vpop.f32.mrf.mxu0
    %v2265 = vpop.f32.mrf.mxu0
    %v2266 = vpop.f32.mrf.mxu0
    %2267 = vdwg.mxu0
    %2268 = vmatprep.subr.bf16.mxu0 0
    %2269 = vmatpush1.bf16.msra.mxu0 %v1683
    %2270 = vmatprep.subr.bf16.mxu0 0
    %2271 = vmatpush1.bf16.msra.mxu0 %v1682
    %2272 = vmatprep.subr.bf16.mxu0 0
    %2273 = vmatpush1.bf16.msra.mxu0 %v1681
    %2274 = vmatprep.subr.bf16.mxu0 0
    %2275 = vmatpush1.bf16.msra.mxu0 %v1680
    %2276 = vmatprep.subr.bf16.mxu0 0
    %2277 = vmatpush1.bf16.msra.mxu0 %v1679
    %2278 = vmatprep.subr.bf16.mxu0 0
    %2279 = vmatpush1.bf16.msra.mxu0 %v1678
    %2280 = vmatprep.subr.bf16.mxu0 0
    %2281 = vmatpush1.bf16.msra.mxu0 %v1677
    %2282 = vmatprep.subr.bf16.mxu0 0
    %2283 = vmatpush1.bf16.msra.mxu0 %v1676
    %2284 = vmatprep.subr.bf16.mxu0 0
    %2285 = vmatpush2.bf16.msra.mxu0 %v1691
    %2286 = vmatprep.subr.bf16.mxu0 0
    %2287 = vmatpush2.bf16.msra.mxu0 %v1690
    %2288 = vmatprep.subr.bf16.mxu0 0
    %2289 = vmatpush2.bf16.msra.mxu0 %v1689
    %2290 = vmatprep.subr.bf16.mxu0 0
    %2291 = vmatpush2.bf16.msra.mxu0 %v1688
    %2292 = vmatprep.subr.bf16.mxu0 0
    %2293 = vmatpush2.bf16.msra.mxu0 %v1687
    %2294 = vmatprep.subr.bf16.mxu0 0
    %2295 = vmatpush2.bf16.msra.mxu0 %v1686
    %2296 = vmatprep.subr.bf16.mxu0 0
    %2297 = vmatpush2.bf16.msra.mxu0 %v1685
    %2298 = vmatprep.subr.bf16.mxu0 0
    %2299 = vmatpush2.bf16.msra.mxu0 %v1684
    %2300 = vmatprep.mubr.bf16.mxu0 %v578
    %2301 = vmatmul.mubr.bf16.gmra.mxu0 %v564
    %v2302 = vpop.f32.mrf.mxu0
    %v2303 = vadd.f32 %v2263, %v2302
    %v2304 = vpop.f32.mrf.mxu0
    %v2305 = vpop.f32.mrf.mxu0
    %v2306 = vpop.f32.mrf.mxu0
    %2307 = vdwg.mxu0
    %2308 = vmatprep.subr.bf16.mxu0 0
    %2309 = vmatpush1.bf16.msra.mxu0 %v1699
    %2310 = vmatprep.subr.bf16.mxu0 0
    %2311 = vmatpush1.bf16.msra.mxu0 %v1698
    %2312 = vmatprep.subr.bf16.mxu0 0
    %2313 = vmatpush1.bf16.msra.mxu0 %v1697
    %2314 = vmatprep.subr.bf16.mxu0 0
    %2315 = vmatpush1.bf16.msra.mxu0 %v1696
    %2316 = vmatprep.subr.bf16.mxu0 0
    %2317 = vmatpush1.bf16.msra.mxu0 %v1695
    %2318 = vmatprep.subr.bf16.mxu0 0
    %2319 = vmatpush1.bf16.msra.mxu0 %v1694
    %2320 = vmatprep.subr.bf16.mxu0 0
    %2321 = vmatpush1.bf16.msra.mxu0 %v1693
    %2322 = vmatprep.subr.bf16.mxu0 0
    %2323 = vmatpush1.bf16.msra.mxu0 %v1692
    %2324 = vmatprep.subr.bf16.mxu0 0
    %2325 = vmatpush2.bf16.msra.mxu0 %v1707
    %2326 = vmatprep.subr.bf16.mxu0 0
    %2327 = vmatpush2.bf16.msra.mxu0 %v1706
    %2328 = vmatprep.subr.bf16.mxu0 0
    %2329 = vmatpush2.bf16.msra.mxu0 %v1705
    %2330 = vmatprep.subr.bf16.mxu0 0
    %2331 = vmatpush2.bf16.msra.mxu0 %v1704
    %2332 = vmatprep.subr.bf16.mxu0 0
    %2333 = vmatpush2.bf16.msra.mxu0 %v1703
    %2334 = vmatprep.subr.bf16.mxu0 0
    %2335 = vmatpush2.bf16.msra.mxu0 %v1702
    %2336 = vmatprep.subr.bf16.mxu0 0
    %2337 = vmatpush2.bf16.msra.mxu0 %v1701
    %2338 = vmatprep.subr.bf16.mxu0 0
    %2339 = vmatpush2.bf16.msra.mxu0 %v1700
    %2340 = vmatprep.mubr.bf16.mxu0 %v582
    %2341 = vmatmul.mubr.bf16.gmra.mxu0 %v580
    %v2342 = vpop.f32.mrf.mxu0
    %v2343 = vadd.f32 %v2303, %v2342
    %v2344 = vpop.f32.mrf.mxu0
    %v2345 = vpop.f32.mrf.mxu0
    %v2346 = vpop.f32.mrf.mxu0
    %2347 = vdwg.mxu0
    %2348 = vmatprep.subr.bf16.mxu0 0
    %2349 = vmatpush1.bf16.msra.mxu0 %v1715
    %2350 = vmatprep.subr.bf16.mxu0 0
    %2351 = vmatpush1.bf16.msra.mxu0 %v1714
    %2352 = vmatprep.subr.bf16.mxu0 0
    %2353 = vmatpush1.bf16.msra.mxu0 %v1713
    %2354 = vmatprep.subr.bf16.mxu0 0
    %2355 = vmatpush1.bf16.msra.mxu0 %v1712
    %2356 = vmatprep.subr.bf16.mxu0 0
    %2357 = vmatpush1.bf16.msra.mxu0 %v1711
    %2358 = vmatprep.subr.bf16.mxu0 0
    %2359 = vmatpush1.bf16.msra.mxu0 %v1710
    %2360 = vmatprep.subr.bf16.mxu0 0
    %2361 = vmatpush1.bf16.msra.mxu0 %v1709
    %2362 = vmatprep.subr.bf16.mxu0 0
    %2363 = vmatpush1.bf16.msra.mxu0 %v1708
    %2364 = vmatprep.subr.bf16.mxu0 0
    %2365 = vmatpush2.bf16.msra.mxu0 %v1723
    %2366 = vmatprep.subr.bf16.mxu0 0
    %2367 = vmatpush2.bf16.msra.mxu0 %v1722
    %2368 = vmatprep.subr.bf16.mxu0 0
    %2369 = vmatpush2.bf16.msra.mxu0 %v1721
    %2370 = vmatprep.subr.bf16.mxu0 0
    %2371 = vmatpush2.bf16.msra.mxu0 %v1720
    %2372 = vmatprep.subr.bf16.mxu0 0
    %2373 = vmatpush2.bf16.msra.mxu0 %v1719
    %2374 = vmatprep.subr.bf16.mxu0 0
    %2375 = vmatpush2.bf16.msra.mxu0 %v1718
    %2376 = vmatprep.subr.bf16.mxu0 0
    %2377 = vmatpush2.bf16.msra.mxu0 %v1717
    %2378 = vmatprep.subr.bf16.mxu0 0
    %2379 = vmatpush2.bf16.msra.mxu0 %v1716
    %2380 = vmatprep.mubr.bf16.mxu0 %v620
    %2381 = vmatmul.mubr.bf16.gmra.mxu0 %v606
    %v2382 = vpop.f32.mrf.mxu0
    %v2383 = vadd.f32 %v2343, %v2382
    %v2384 = vpop.f32.mrf.mxu0
    %v2385 = vpop.f32.mrf.mxu0
    %v2386 = vpop.f32.mrf.mxu0
    %2387 = vdwg.mxu0
    %2388 = vmatprep.subr.bf16.mxu0 0
    %2389 = vmatpush1.bf16.msra.mxu0 %v1731
    %2390 = vmatprep.subr.bf16.mxu0 0
    %2391 = vmatpush1.bf16.msra.mxu0 %v1730
    %2392 = vmatprep.subr.bf16.mxu0 0
    %2393 = vmatpush1.bf16.msra.mxu0 %v1729
    %2394 = vmatprep.subr.bf16.mxu0 0
    %2395 = vmatpush1.bf16.msra.mxu0 %v1728
    %2396 = vmatprep.subr.bf16.mxu0 0
    %2397 = vmatpush1.bf16.msra.mxu0 %v1727
    %2398 = vmatprep.subr.bf16.mxu0 0
    %2399 = vmatpush1.bf16.msra.mxu0 %v1726
    %2400 = vmatprep.subr.bf16.mxu0 0
    %2401 = vmatpush1.bf16.msra.mxu0 %v1725
    %2402 = vmatprep.subr.bf16.mxu0 0
    %2403 = vmatpush1.bf16.msra.mxu0 %v1724
    %2404 = vmatprep.subr.bf16.mxu0 0
    %2405 = vmatpush2.bf16.msra.mxu0 %v1739
    %2406 = vmatprep.subr.bf16.mxu0 0
    %2407 = vmatpush2.bf16.msra.mxu0 %v1738
    %2408 = vmatprep.subr.bf16.mxu0 0
    %2409 = vmatpush2.bf16.msra.mxu0 %v1737
    %2410 = vmatprep.subr.bf16.mxu0 0
    %2411 = vmatpush2.bf16.msra.mxu0 %v1736
    %2412 = vmatprep.subr.bf16.mxu0 0
    %2413 = vmatpush2.bf16.msra.mxu0 %v1735
    %2414 = vmatprep.subr.bf16.mxu0 0
    %2415 = vmatpush2.bf16.msra.mxu0 %v1734
    %2416 = vmatprep.subr.bf16.mxu0 0
    %2417 = vmatpush2.bf16.msra.mxu0 %v1733
    %2418 = vmatprep.subr.bf16.mxu0 0
    %2419 = vmatpush2.bf16.msra.mxu0 %v1732
    %2420 = vmatprep.mubr.bf16.mxu0 %v630
    %2421 = vmatmul.mubr.bf16.gmra.mxu0 %v628
    %v2422 = vpop.f32.mrf.mxu0
    %v2423 = vadd.f32 %v2383, %v2422
    %v2424 = vpop.f32.mrf.mxu0
    %v2425 = vpop.f32.mrf.mxu0
    %v2426 = vpop.f32.mrf.mxu0
    %2427 = vdwg.mxu0
    %2428 = vmatprep.subr.bf16.mxu0 0
    %2429 = vmatpush1.bf16.msra.mxu0 %v1747
    %2430 = vmatprep.subr.bf16.mxu0 0
    %2431 = vmatpush1.bf16.msra.mxu0 %v1746
    %2432 = vmatprep.subr.bf16.mxu0 0
    %2433 = vmatpush1.bf16.msra.mxu0 %v1745
    %2434 = vmatprep.subr.bf16.mxu0 0
    %2435 = vmatpush1.bf16.msra.mxu0 %v1744
    %2436 = vmatprep.subr.bf16.mxu0 0
    %2437 = vmatpush1.bf16.msra.mxu0 %v1743
    %2438 = vmatprep.subr.bf16.mxu0 0
    %2439 = vmatpush1.bf16.msra.mxu0 %v1742
    %2440 = vmatprep.subr.bf16.mxu0 0
    %2441 = vmatpush1.bf16.msra.mxu0 %v1741
    %2442 = vmatprep.subr.bf16.mxu0 0
    %2443 = vmatpush1.bf16.msra.mxu0 %v1740
    %2444 = vmatprep.subr.bf16.mxu0 0
    %2445 = vmatpush2.bf16.msra.mxu0 %v1755
    %2446 = vmatprep.subr.bf16.mxu0 0
    %2447 = vmatpush2.bf16.msra.mxu0 %v1754
    %2448 = vmatprep.subr.bf16.mxu0 0
    %2449 = vmatpush2.bf16.msra.mxu0 %v1753
    %2450 = vmatprep.subr.bf16.mxu0 0
    %2451 = vmatpush2.bf16.msra.mxu0 %v1752
    %2452 = vmatprep.subr.bf16.mxu0 0
    %2453 = vmatpush2.bf16.msra.mxu0 %v1751
    %2454 = vmatprep.subr.bf16.mxu0 0
    %2455 = vmatpush2.bf16.msra.mxu0 %v1750
    %2456 = vmatprep.subr.bf16.mxu0 0
    %2457 = vmatpush2.bf16.msra.mxu0 %v1749
    %2458 = vmatprep.subr.bf16.mxu0 0
    %2459 = vmatpush2.bf16.msra.mxu0 %v1748
    %2460 = vmatprep.mubr.bf16.mxu0 %v627
    %2461 = vmatmul.mubr.bf16.gmra.mxu0 %v613
    %v2462 = vpop.f32.mrf.mxu0
    %v2463 = vadd.f32 %v2423, %v2462
    %v2464 = vpop.f32.mrf.mxu0
    %v2465 = vpop.f32.mrf.mxu0
    %v2466 = vpop.f32.mrf.mxu0
    %2467 = vdwg.mxu0
    %2468 = vmatprep.subr.bf16.mxu0 0
    %2469 = vmatpush1.bf16.msra.mxu0 %v1763
    %2470 = vmatprep.subr.bf16.mxu0 0
    %2471 = vmatpush1.bf16.msra.mxu0 %v1762
    %2472 = vmatprep.subr.bf16.mxu0 0
    %2473 = vmatpush1.bf16.msra.mxu0 %v1761
    %2474 = vmatprep.subr.bf16.mxu0 0
    %2475 = vmatpush1.bf16.msra.mxu0 %v1760
    %2476 = vmatprep.subr.bf16.mxu0 0
    %2477 = vmatpush1.bf16.msra.mxu0 %v1759
    %2478 = vmatprep.subr.bf16.mxu0 0
    %2479 = vmatpush1.bf16.msra.mxu0 %v1758
    %2480 = vmatprep.subr.bf16.mxu0 0
    %2481 = vmatpush1.bf16.msra.mxu0 %v1757
    %2482 = vmatprep.subr.bf16.mxu0 0
    %2483 = vmatpush1.bf16.msra.mxu0 %v1756
    %2484 = vmatprep.subr.bf16.mxu0 0
    %2485 = vmatpush2.bf16.msra.mxu0 %v1771
    %2486 = vmatprep.subr.bf16.mxu0 0
    %2487 = vmatpush2.bf16.msra.mxu0 %v1770
    %2488 = vmatprep.subr.bf16.mxu0 0
    %2489 = vmatpush2.bf16.msra.mxu0 %v1769
    %2490 = vmatprep.subr.bf16.mxu0 0
    %2491 = vmatpush2.bf16.msra.mxu0 %v1768
    %2492 = vmatprep.subr.bf16.mxu0 0
    %2493 = vmatpush2.bf16.msra.mxu0 %v1767
    %2494 = vmatprep.subr.bf16.mxu0 0
    %2495 = vmatpush2.bf16.msra.mxu0 %v1766
    %2496 = vmatprep.subr.bf16.mxu0 0
    %2497 = vmatpush2.bf16.msra.mxu0 %v1765
    %2498 = vmatprep.subr.bf16.mxu0 0
    %2499 = vmatpush2.bf16.msra.mxu0 %v1764
    %2500 = vmatprep.mubr.bf16.mxu0 %v631
    %2501 = vmatmul.mubr.bf16.gmra.mxu0 %v629
    %v2502 = vpop.f32.mrf.mxu0
    %v2503 = vadd.f32 %v2463, %v2502
    %v2504 = vpop.f32.mrf.mxu0
    %v2505 = vpop.f32.mrf.mxu0
    %v2506 = vpop.f32.mrf.mxu0
    %2507 = vdwg.mxu0
    %2508 = vmatprep.subr.bf16.mxu0 0
    %2509 = vmatpush1.bf16.msra.mxu0 %v1779
    %2510 = vmatprep.subr.bf16.mxu0 0
    %2511 = vmatpush1.bf16.msra.mxu0 %v1778
    %2512 = vmatprep.subr.bf16.mxu0 0
    %2513 = vmatpush1.bf16.msra.mxu0 %v1777
    %2514 = vmatprep.subr.bf16.mxu0 0
    %2515 = vmatpush1.bf16.msra.mxu0 %v1776
    %2516 = vmatprep.subr.bf16.mxu0 0
    %2517 = vmatpush1.bf16.msra.mxu0 %v1775
    %2518 = vmatprep.subr.bf16.mxu0 0
    %2519 = vmatpush1.bf16.msra.mxu0 %v1774
    %2520 = vmatprep.subr.bf16.mxu0 0
    %2521 = vmatpush1.bf16.msra.mxu0 %v1773
    %2522 = vmatprep.subr.bf16.mxu0 0
    %2523 = vmatpush1.bf16.msra.mxu0 %v1772
    %2524 = vmatprep.subr.bf16.mxu0 0
    %2525 = vmatpush2.bf16.msra.mxu0 %v1787
    %2526 = vmatprep.subr.bf16.mxu0 0
    %2527 = vmatpush2.bf16.msra.mxu0 %v1786
    %2528 = vmatprep.subr.bf16.mxu0 0
    %2529 = vmatpush2.bf16.msra.mxu0 %v1785
    %2530 = vmatprep.subr.bf16.mxu0 0
    %2531 = vmatpush2.bf16.msra.mxu0 %v1784
    %2532 = vmatprep.subr.bf16.mxu0 0
    %2533 = vmatpush2.bf16.msra.mxu0 %v1783
    %2534 = vmatprep.subr.bf16.mxu0 0
    %2535 = vmatpush2.bf16.msra.mxu0 %v1782
    %2536 = vmatprep.subr.bf16.mxu0 0
    %2537 = vmatpush2.bf16.msra.mxu0 %v1781
    %2538 = vmatprep.subr.bf16.mxu0 0
    %2539 = vmatpush2.bf16.msra.mxu0 %v1780
    %2540 = vmatprep.mubr.bf16.mxu0 %v653
    %2541 = vmatmul.mubr.bf16.gmra.mxu0 %v646
    %v2542 = vpop.f32.mrf.mxu0
    %v2543 = vadd.f32 %v2503, %v2542
    %v2544 = vpop.f32.mrf.mxu0
    %v2545 = vpop.f32.mrf.mxu0
    %v2546 = vpop.f32.mrf.mxu0
    %2547 = vdwg.mxu0
    %2548 = vmatprep.subr.bf16.mxu0 0
    %2549 = vmatpush1.bf16.msra.mxu0 %v1795
    %2550 = vmatprep.subr.bf16.mxu0 0
    %2551 = vmatpush1.bf16.msra.mxu0 %v1794
    %2552 = vmatprep.subr.bf16.mxu0 0
    %2553 = vmatpush1.bf16.msra.mxu0 %v1793
    %2554 = vmatprep.subr.bf16.mxu0 0
    %2555 = vmatpush1.bf16.msra.mxu0 %v1792
    %2556 = vmatprep.subr.bf16.mxu0 0
    %2557 = vmatpush1.bf16.msra.mxu0 %v1791
    %2558 = vmatprep.subr.bf16.mxu0 0
    %2559 = vmatpush1.bf16.msra.mxu0 %v1790
    %2560 = vmatprep.subr.bf16.mxu0 0
    %2561 = vmatpush1.bf16.msra.mxu0 %v1789
    %2562 = vmatprep.subr.bf16.mxu0 0
    %2563 = vmatpush1.bf16.msra.mxu0 %v1788
    %2564 = vmatprep.subr.bf16.mxu0 0
    %2565 = vmatpush2.bf16.msra.mxu0 %v1803
    %2566 = vmatprep.subr.bf16.mxu0 0
    %2567 = vmatpush2.bf16.msra.mxu0 %v1802
    %2568 = vmatprep.subr.bf16.mxu0 0
    %2569 = vmatpush2.bf16.msra.mxu0 %v1801
    %2570 = vmatprep.subr.bf16.mxu0 0
    %2571 = vmatpush2.bf16.msra.mxu0 %v1800
    %2572 = vmatprep.subr.bf16.mxu0 0
    %2573 = vmatpush2.bf16.msra.mxu0 %v1799
    %2574 = vmatprep.subr.bf16.mxu0 0
    %2575 = vmatpush2.bf16.msra.mxu0 %v1798
    %2576 = vmatprep.subr.bf16.mxu0 0
    %2577 = vmatpush2.bf16.msra.mxu0 %v1797
    %2578 = vmatprep.subr.bf16.mxu0 0
    %2579 = vmatpush2.bf16.msra.mxu0 %v1796
    %2580 = vmatprep.mubr.bf16.mxu0 %v655
    %2581 = vmatmul.mubr.bf16.gmra.mxu0 %v654
    %v2582 = vpop.f32.mrf.mxu0
    %v2583 = vadd.f32 %v2543, %v2582
    %v2584 = vpop.f32.mrf.mxu0
    %v2585 = vpop.f32.mrf.mxu0
    %v2586 = vpop.f32.mrf.mxu0
    %2587 = vdwg.mxu0
    %v2588 = vmax.f32 %v2583, 0.0
    %v2589 = vpack.c.bf16 %v2588, %v2588
    %v2590 = vld [vmem:[%s3] sm:$0xf]
    %v2591 = vld [vmem:[%s3 + $0x4] sm:$0xf]
    %v2592 = vld [vmem:[%s3 + $0x8] sm:$0xf]
    %v2593 = vld [vmem:[%s3 + $0xc] sm:$0xf]
    %v2594 = vld [vmem:[%s3 + $0x10] sm:$0xf]
    %v2595 = vld [vmem:[%s3 + $0x14] sm:$0xf]
    %v2596 = vld [vmem:[%s3 + $0x18] sm:$0xf]
    %v2597 = vld [vmem:[%s3 + $0x1c] sm:$0xf]
    %v2598 = vld [vmem:[%s3 + $0x20] sm:$0xf]
    %v2599 = vld [vmem:[%s3 + $0x24] sm:$0xf]
    %v2600 = vld [vmem:[%s3 + $0x28] sm:$0xf]
    %v2601 = vld [vmem:[%s3 + $0x2c] sm:$0xf]
    %v2602 = vld [vmem:[%s3 + $0x30] sm:$0xf]
    %v2603 = vld [vmem:[%s3 + $0x34] sm:$0xf]
    %v2604 = vld [vmem:[%s3 + $0x38] sm:$0xf]
    %v2605 = vld [vmem:[%s3 + $0x3c] sm:$0xf]
    %v2606 = vld [vmem:[%s4] sm:$0x1]
    %v2608 = vlaneseq
    %v2609 = vshrl.u32 %v2608, 7
    %v2610 = vsub.s32 0, %v2609
    %v2611 = vrot.slane %v2606, %v2610
    %v2629 = vunpack.c.l.b16 %v2590
    %v2630 = vunpack.c.l.b16 %v2591
    %v2631 = vunpack.c.l.b16 %v2592
    %v2632 = vunpack.c.l.b16 %v2593
    %v2633 = vunpack.c.l.b16 %v2594
    %v2634 = vunpack.c.l.b16 %v2595
    %v2635 = vunpack.c.l.b16 %v2596
    %v2636 = vunpack.c.l.b16 %v2597
    %v2637 = vunpack.c.l.b16 %v2598
    %v2638 = vunpack.c.l.b16 %v2599
    %v2639 = vunpack.c.l.b16 %v2600
    %v2640 = vunpack.c.l.b16 %v2601
    %v2641 = vunpack.c.l.b16 %v2602
    %v2642 = vunpack.c.l.b16 %v2603
    %v2643 = vunpack.c.l.b16 %v2604
    %v2644 = vunpack.c.l.b16 %v2605
    %v2645 = vpack.c.b16 %v2630, %v2629
    %v2646 = vpack.c.b16 %v2632, %v2631
    %v2647 = vpack.c.b16 %v2634, %v2633
    %v2648 = vpack.c.b16 %v2636, %v2635
    %v2649 = vpack.c.b16 %v2638, %v2637
    %v2650 = vpack.c.b16 %v2640, %v2639
    %v2651 = vpack.c.b16 %v2642, %v2641
    %v2652 = vpack.c.b16 %v2644, %v2643
    %2661 = vmatprep.subr.bf16.mxu0 0
    %2662 = vmatpush1.bf16.msra.mxu0 %v2652
    %2663 = vmatprep.subr.bf16.mxu0 0
    %2664 = vmatpush1.bf16.msra.mxu0 %v2651
    %2665 = vmatprep.subr.bf16.mxu0 0
    %2666 = vmatpush1.bf16.msra.mxu0 %v2650
    %2667 = vmatprep.subr.bf16.mxu0 0
    %2668 = vmatpush1.bf16.msra.mxu0 %v2649
    %2669 = vmatprep.subr.bf16.mxu0 0
    %2670 = vmatpush1.bf16.msra.mxu0 %v2648
    %2671 = vmatprep.subr.bf16.mxu0 0
    %2672 = vmatpush1.bf16.msra.mxu0 %v2647
    %2673 = vmatprep.subr.bf16.mxu0 0
    %2674 = vmatpush1.bf16.msra.mxu0 %v2646
    %2675 = vmatprep.subr.bf16.mxu0 0
    %2676 = vmatpush1.bf16.msra.mxu0 %v2645
    %2677 = vmatprep.subr.bf16.mxu0 0
    %2678 = vmatpush2.bf16.msra.mxu0 0
    %2679 = vmatprep.subr.bf16.mxu0 0
    %2680 = vmatpush2.bf16.msra.mxu0 0
    %2681 = vmatprep.subr.bf16.mxu0 0
    %2682 = vmatpush2.bf16.msra.mxu0 0
    %2683 = vmatprep.subr.bf16.mxu0 0
    %2684 = vmatpush2.bf16.msra.mxu0 0
    %2685 = vmatprep.subr.bf16.mxu0 0
    %2686 = vmatpush2.bf16.msra.mxu0 0
    %2687 = vmatprep.subr.bf16.mxu0 0
    %2688 = vmatpush2.bf16.msra.mxu0 0
    %2689 = vmatprep.subr.bf16.mxu0 0
    %2690 = vmatpush2.bf16.msra.mxu0 0
    %2691 = vmatprep.subr.bf16.mxu0 0
    %2692 = vmatpush2.bf16.msra.mxu0 0
    %2693 = vmatprep.mubr.bf16.mxu0 0
    %2694 = vmatmul.mubr.bf16.gmra.mxu0 %v2589
    %v2695 = vpop.f32.mrf.mxu0
    %v2696 = vadd.f32 %v2611, %v2695
    %v2697 = vpop.f32.mrf.mxu0
    %v2698 = vpop.f32.mrf.mxu0
    %v2699 = vpop.f32.mrf.mxu0
    %2700 = vdwg.mxu0
    %2701 = vst [vmem:[#allocation2] sm:$0x3] %v2696
    // Predicated region
    $region22: #{simplenet_forward.5} parent=1 // pred_check
      _
    $region23: #{simplenet_forward.5} parent=1 // pred_check_branch
      %2703 = sbr.rel (0) target = $region25
    $region24: #{simplenet_forward.5} parent=1 // pred_region
      %s2705 = ssub.s32 32, 32
      %2706 = vsyncadd [#allocation3], %s2705
      %s2708 = sshll.u32 [#allocation2], 4
      %s2709 = int_to_ptr.vmem [resolvable:$true] %s2708
      %2711 = dma.vmem_to_hbm [thread:$0]  %s2709, 32, %s5, [#allocation3]
    $region25: #{simplenet_forward.5} parent=1 // pred_fallthru
      _
    // Predicated region
    $region26: #{simplenet_forward.5} parent=1 // pred_check
      _
    $region27: #{simplenet_forward.5} parent=1 // pred_check_branch
      %2713 = sbr.rel (0) target = $region29
    $region28: #{simplenet_forward.5} parent=1 // pred_region
      %2714 = dma.done [#allocation3], 32
    $region29: #{simplenet_forward.5} parent=1 // pred_fallthru
      _
    %2715 = vsyncpa [#allocation3], 1

// kernel: simplenet_forward.4
$region0: #{simplenet_forward.4}
  #allocation0 [shape = 'u32[]', space=smem, size = 0x4, offset = 0x4, fixed_abs, tag = 'smem constant byte address 0x4 - core index']
  #allocation1 [shape = 'u32[144,128]{1,0:T(1,128)}', space=vmem, size = 0x12000, scoped, tag = 'internal scratch']
  %s0 = inlined_call_operand.vmem [shape: bf16[2,8,512], index: 0, kind: input, shape index: {}]
  %s1 = inlined_call_operand.vmem [shape: bf16[2,8,512], index: 1, kind: input, shape index: {}]
  %s2 = inlined_call_operand.hbm [shape: bf16[512,1024], index: 2, kind: input, shape index: {}]
  %s3 = inlined_call_operand.hbm [shape: bf16[512,1024], index: 3, kind: input, shape index: {}]
  %s4 = inlined_call_operand.hbm [shape: bf16[512,1024], index: 4, kind: input, shape index: {}]
  %s5 = inlined_call_operand.vmem [shape: f32[1,512], index: 5, kind: input, shape index: {}]
  %s6 = inlined_call_operand.vmem [shape: bf16[2,7,512], index: 6, kind: output, shape index: {}]
  %s7 = sld [smem:[#allocation0]]
  $region69: #{simplenet_forward.4} parent=0
    _
  %s9 = ssub.s32 1, %s7
  %s10 = scalar_select 0, %s9, %s7
  $region1: #{simplenet_forward.4} parent=0
    #allocation2 [shape = 'u8[1048576]{0}', space=vmem, size = 0x100000, scoped, tag = 'input window, operand 2, single buffered']
    #allocation3 [shape = 's32[2]{0}', space=sflag, size = 0x8, scoped, tag = 'scoped memory for simplenet_forward.4']
    #allocation4 [shape = 'u8[1048576]{0}', space=vmem, size = 0x100000, scoped, tag = 'input window, operand 3, single buffered']
    #allocation5 [shape = 's32[1]{0}', space=sflag, size = 0x4, scoped, tag = 'scoped memory for simplenet_forward.4']
    #allocation6 [shape = 'u8[1048576]{0}', space=vmem, size = 0x100000, scoped, tag = 'input window, operand 4, single buffered']
    %11 = vsyncpa [#allocation3], 0
    %12 = vsyncpa [#allocation5], 0
    loop: start=0, step=1, limit=4
    $region2: #{simplenet_forward.4} parent=1 // loop_pre_header
      _
    $region3: #{simplenet_forward.4} parent=1 // loop_header
      %s14 = sphi 0, %s18
      %p15 = scmp.ge.s32.totalorder %s14, 4
      %s24 = sphi 0, %s26
      %s27 = sphi 0, %s24
      %s28 = sphi 0, %s27
      %s44 = sphi 0, %s28
      %s50 = sphi 0, %s52
      %s53 = sphi 0, %s50
      %s54 = sphi 0, %s53
      %s70 = sphi 0, %s54
      %s74 = sphi 0, %s74
      %s76 = sphi 0, %s74
      %s77 = sphi 0, %s76
      %s91 = sphi 0, %s77
      %s95 = sphi 0, %s95
      %s97 = sphi 0, %s95
      %s98 = sphi 0, %s97
      %s112 = sphi 0, %s98
      %s116 = sphi 0, %s116
      %s118 = sphi 0, %s116
      %s119 = sphi 0, %s118
      %s133 = sphi 0, %s119
      %s137 = sphi 0, %s137
      %s139 = sphi 0, %s137
      %s140 = sphi 0, %s139
      %s154 = sphi 0, %s140
      %s160 = sphi 0, %s162
      %s163 = sphi 0, %s160
      %s164 = sphi 0, %s163
      %s180 = sphi 0, %s164
    $region4: #{simplenet_forward.4} parent=1 // loop_header_branch
      %17 = sbr.rel (%p15) target = $region8
    $region5: #{simplenet_forward.4} parent=1 // loop_body
      %s19 = ssub.s32 %s14, 1
      %s20 = ssub.s32 %s14, 2
      %s21 = sadd.s32 %s14, 1
      %s22 = ssub.s32 %s14, %s21
      %p23 = scmp.eq.s32.totalorder %s22, 0
      %s25 = sadd.s32 %s24, 1
      %s26 = scalar_select %p23, %s24, %s25
      %p29 = pneg %p23
      %p30 = scmp.eq.s32.totalorder %s14, 1
      %p31 = por %p29, %p30
      %p32 = scmp.ne.s32.totalorder %s24, %s27
      %p33 = scmp.eq.s32.totalorder %s14, 0
      %p34 = por %p32, %p33
      %p35 = scmp.ne.s32.totalorder %s24, %s27
      %p36 = scmp.eq.s32.totalorder %s19, 1
      %p37 = por %p35, %p36
      %p38 = scmp.ne.s32.totalorder %s27, %s28
      %p39 = scmp.eq.s32.totalorder %s19, 0
      %p40 = por %p38, %p39
      %p41 = scmp.ne.s32.totalorder %s27, %s28
      %p42 = scmp.eq.s32.totalorder %s20, 1
      %p43 = por %p41, %p42
      %p45 = scmp.ne.s32.totalorder %s28, %s44
      %p46 = scmp.eq.s32.totalorder %s20, 0
      %p47 = por %p45, %p46
      %s48 = ssub.s32 %s14, %s21
      %p49 = scmp.eq.s32.totalorder %s48, 0
      %s51 = sadd.s32 %s50, 1
      %s52 = scalar_select %p49, %s50, %s51
      %p55 = pneg %p49
      %p56 = scmp.eq.s32.totalorder %s14, 1
      %p57 = por %p55, %p56
      %p58 = scmp.ne.s32.totalorder %s50, %s53
      %p59 = scmp.eq.s32.totalorder %s14, 0
      %p60 = por %p58, %p59
      %p61 = scmp.ne.s32.totalorder %s50, %s53
      %p62 = scmp.eq.s32.totalorder %s19, 1
      %p63 = por %p61, %p62
      %p64 = scmp.ne.s32.totalorder %s53, %s54
      %p65 = scmp.eq.s32.totalorder %s19, 0
      %p66 = por %p64, %p65
      %p67 = scmp.ne.s32.totalorder %s53, %s54
      %p68 = scmp.eq.s32.totalorder %s20, 1
      %p69 = por %p67, %p68
      %p71 = scmp.ne.s32.totalorder %s54, %s70
      %p72 = scmp.eq.s32.totalorder %s20, 0
      %p73 = por %p71, %p72
      %s75 = sadd.s32 %s74, 1
      %p78 = scmp.eq.s32.totalorder %s14, 1
      %p79 = scmp.ne.s32.totalorder %s74, %s76
      %p80 = scmp.eq.s32.totalorder %s14, 0
      %p81 = por %p79, %p80
      %p82 = scmp.ne.s32.totalorder %s74, %s76
      %p83 = scmp.eq.s32.totalorder %s19, 1
      %p84 = por %p82, %p83
      %p85 = scmp.ne.s32.totalorder %s76, %s77
      %p86 = scmp.eq.s32.totalorder %s19, 0
      %p87 = por %p85, %p86
      %p88 = scmp.ne.s32.totalorder %s76, %s77
      %p89 = scmp.eq.s32.totalorder %s20, 1
      %p90 = por %p88, %p89
      %p92 = scmp.ne.s32.totalorder %s77, %s91
      %p93 = scmp.eq.s32.totalorder %s20, 0
      %p94 = por %p92, %p93
      %s96 = sadd.s32 %s95, 1
      %p99 = scmp.eq.s32.totalorder %s14, 1
      %p100 = scmp.ne.s32.totalorder %s95, %s97
      %p101 = scmp.eq.s32.totalorder %s14, 0
      %p102 = por %p100, %p101
      %p103 = scmp.ne.s32.totalorder %s95, %s97
      %p104 = scmp.eq.s32.totalorder %s19, 1
      %p105 = por %p103, %p104
      %p106 = scmp.ne.s32.totalorder %s97, %s98
      %p107 = scmp.eq.s32.totalorder %s19, 0
      %p108 = por %p106, %p107
      %p109 = scmp.ne.s32.totalorder %s97, %s98
      %p110 = scmp.eq.s32.totalorder %s20, 1
      %p111 = por %p109, %p110
      %p113 = scmp.ne.s32.totalorder %s98, %s112
      %p114 = scmp.eq.s32.totalorder %s20, 0
      %p115 = por %p113, %p114
      %s117 = sadd.s32 %s116, 1
      %p120 = scmp.eq.s32.totalorder %s14, 1
      %p121 = scmp.ne.s32.totalorder %s116, %s118
      %p122 = scmp.eq.s32.totalorder %s14, 0
      %p123 = por %p121, %p122
      %p124 = scmp.ne.s32.totalorder %s116, %s118
      %p125 = scmp.eq.s32.totalorder %s19, 1
      %p126 = por %p124, %p125
      %p127 = scmp.ne.s32.totalorder %s118, %s119
      %p128 = scmp.eq.s32.totalorder %s19, 0
      %p129 = por %p127, %p128
      %p130 = scmp.ne.s32.totalorder %s118, %s119
      %p131 = scmp.eq.s32.totalorder %s20, 1
      %p132 = por %p130, %p131
      %p134 = scmp.ne.s32.totalorder %s119, %s133
      %p135 = scmp.eq.s32.totalorder %s20, 0
      %p136 = por %p134, %p135
      %s138 = sadd.s32 %s137, 1
      %p141 = scmp.eq.s32.totalorder %s14, 1
      %p142 = scmp.ne.s32.totalorder %s137, %s139
      %p143 = scmp.eq.s32.totalorder %s14, 0
      %p144 = por %p142, %p143
      %p145 = scmp.ne.s32.totalorder %s137, %s139
      %p146 = scmp.eq.s32.totalorder %s19, 1
      %p147 = por %p145, %p146
      %p148 = scmp.ne.s32.totalorder %s139, %s140
      %p149 = scmp.eq.s32.totalorder %s19, 0
      %p150 = por %p148, %p149
      %p151 = scmp.ne.s32.totalorder %s139, %s140
      %p152 = scmp.eq.s32.totalorder %s20, 1
      %p153 = por %p151, %p152
      %p155 = scmp.ne.s32.totalorder %s140, %s154
      %p156 = scmp.eq.s32.totalorder %s20, 0
      %p157 = por %p155, %p156
      %s158 = ssub.s32 %s14, %s21
      %p159 = scmp.eq.s32.totalorder %s158, 0
      %s161 = sadd.s32 %s160, 1
      %s162 = scalar_select %p159, %s160, %s161
      %p165 = pneg %p159
      %p166 = scmp.eq.s32.totalorder %s14, 1
      %p167 = por %p165, %p166
      %p168 = scmp.ne.s32.totalorder %s160, %s163
      %p169 = scmp.eq.s32.totalorder %s14, 0
      %p170 = por %p168, %p169
      %p171 = scmp.ne.s32.totalorder %s160, %s163
      %p172 = scmp.eq.s32.totalorder %s19, 1
      %p173 = por %p171, %p172
      %p174 = scmp.ne.s32.totalorder %s163, %s164
      %p175 = scmp.eq.s32.totalorder %s19, 0
      %p176 = por %p174, %p175
      %p177 = scmp.ne.s32.totalorder %s163, %s164
      %p178 = scmp.eq.s32.totalorder %s20, 1
      %p179 = por %p177, %p178
      %p181 = scmp.ne.s32.totalorder %s164, %s180
      %p182 = scmp.eq.s32.totalorder %s20, 0
      %p183 = por %p181, %p182
      %p184 = scmp.le.s32.totalorder 1, %s14
      %p185 = scmp.lt.s32.totalorder %s14, 3
      %p186 = pnand %p184, %p185
      %p187 = pneg %p186
      // Predicated region
      $region9: #{simplenet_forward.4} parent=5 // pred_check
        _
      $region10: #{simplenet_forward.4} parent=5 // pred_check_branch
        %189 = sbr.rel (%p186) target = $region12
      $region11: #{simplenet_forward.4} parent=5 // pred_region
        %s190 = ssub.s32 %s14, 1
        // Predicated region
        $region13: #{simplenet_forward.4} parent=11 // pred_check
          %p191 = pneg %p87
        $region14: #{simplenet_forward.4} parent=11 // pred_check_branch
          %193 = sbr.rel (%p191) target = $region16
        $region15: #{simplenet_forward.4} parent=11 // pred_region
          %s195 = ssub.s32 32768, 32768
          %196 = vsyncadd [#allocation3], %s195
          %s197 = sshll.u32 [#allocation2], 4
          %s198 = int_to_ptr.vmem [resolvable:$true] %s197
          %203 = dma.hbm_to_vmem [thread:$0]  %s2, 32768, %s198, [#allocation3], 512, 512, 32
        $region16: #{simplenet_forward.4} parent=11 // pred_fallthru
          _
        // Predicated region
        $region17: #{simplenet_forward.4} parent=11 // pred_check
          %p204 = pneg %p108
        $region18: #{simplenet_forward.4} parent=11 // pred_check_branch
          %206 = sbr.rel (%p204) target = $region20
        $region19: #{simplenet_forward.4} parent=11 // pred_region
          %s208 = ssub.s32 32768, 32768
          %209 = vsyncadd [#allocation5], %s208
          %s210 = sshll.u32 [#allocation4], 4
          %s211 = int_to_ptr.vmem [resolvable:$true] %s210
          %216 = dma.hbm_to_vmem [thread:$0]  %s3, 32768, %s211, [#allocation5], 512, 512, 32
        $region20: #{simplenet_forward.4} parent=11 // pred_fallthru
          _
        // Predicated region
        $region21: #{simplenet_forward.4} parent=11 // pred_check
          %p217 = pneg %p129
        $region22: #{simplenet_forward.4} parent=11 // pred_check_branch
          %219 = sbr.rel (%p217) target = $region24
        $region23: #{simplenet_forward.4} parent=11 // pred_region
          %s221 = ssub.s32 32768, 32768
          %222 = vsyncadd [#allocation5], %s221
          %s223 = sshll.u32 [#allocation6], 4
          %s224 = int_to_ptr.vmem [resolvable:$true] %s223
          %229 = dma.hbm_to_vmem [thread:$0]  %s4, 32768, %s224, [#allocation5], 512, 512, 32
        $region24: #{simplenet_forward.4} parent=11 // pred_fallthru
          _
        // Predicated region
        $region25: #{simplenet_forward.4} parent=11 // pred_check
          %p230 = pneg %p150
        $region26: #{simplenet_forward.4} parent=11 // pred_check_branch
          %232 = sbr.rel (%p230) target = $region28
        $region27: #{simplenet_forward.4} parent=11 // pred_region
          _
        $region28: #{simplenet_forward.4} parent=11 // pred_fallthru
          _
      $region12: #{simplenet_forward.4} parent=5 // pred_fallthru
        _
      %p233 = scmp.lt.s32.totalorder %s14, 2
      // Predicated region
      $region29: #{simplenet_forward.4} parent=5 // pred_check
        %p234 = pneg %p233
      $region30: #{simplenet_forward.4} parent=5 // pred_check_branch
        %236 = sbr.rel (%p234) target = $region32
      $region31: #{simplenet_forward.4} parent=5 // pred_region
        // Predicated region
        $region33: #{simplenet_forward.4} parent=31 // pred_check
          %p237 = pneg %p34
        $region34: #{simplenet_forward.4} parent=31 // pred_check_branch
          %239 = sbr.rel (%p237) target = $region36
        $region35: #{simplenet_forward.4} parent=31 // pred_region
          %p240 = scmp.lt.s32.totalorder %s14, 1
          %s241 = scalar_select %p240, %s14, 1
          %s242 = smul.addr %s241, 4
          %s243 = smul.addr %s242, 4
          %s244 = scalar_lea.vmem %s0, %s243
        $region36: #{simplenet_forward.4} parent=31 // pred_fallthru
          _
        // Predicated region
        $region37: #{simplenet_forward.4} parent=31 // pred_check
          %p245 = pneg %p60
        $region38: #{simplenet_forward.4} parent=31 // pred_check_branch
          %247 = sbr.rel (%p245) target = $region40
        $region39: #{simplenet_forward.4} parent=31 // pred_region
          %p248 = scmp.lt.s32.totalorder %s14, 1
          %s249 = scalar_select %p248, %s14, 1
          %s250 = smul.addr %s249, 4
          %s251 = smul.addr %s250, 4
          %s252 = scalar_lea.vmem %s1, %s251
        $region40: #{simplenet_forward.4} parent=31 // pred_fallthru
          _
      $region32: #{simplenet_forward.4} parent=5 // pred_fallthru
        _
      %p253 = scmp.le.s32.totalorder 1, %s14
      %p254 = scmp.lt.s32.totalorder %s14, 3
      %p255 = pnand %p253, %p254
      %p256 = pneg %p255
      // Predicated region
      $region41: #{simplenet_forward.4} parent=5 // pred_check
        _
      $region42: #{simplenet_forward.4} parent=5 // pred_check_branch
        %258 = sbr.rel (%p255) target = $region44
      $region43: #{simplenet_forward.4} parent=5 // pred_region
        %s259 = ssub.s32 %s14, 1
        // Predicated region
        $region45: #{simplenet_forward.4} parent=43 // pred_check
          %p260 = pneg %p87
        $region46: #{simplenet_forward.4} parent=43 // pred_check_branch
          %262 = sbr.rel (%p260) target = $region48
        $region47: #{simplenet_forward.4} parent=43 // pred_region
          %263 = dma.done [#allocation3], 32768
        $region48: #{simplenet_forward.4} parent=43 // pred_fallthru
          _
        // Predicated region
        $region49: #{simplenet_forward.4} parent=43 // pred_check
          %p264 = pneg %p108
        $region50: #{simplenet_forward.4} parent=43 // pred_check_branch
          %266 = sbr.rel (%p264) target = $region52
        $region51: #{simplenet_forward.4} parent=43 // pred_region
          %267 = dma.done [#allocation5], 32768
        $region52: #{simplenet_forward.4} parent=43 // pred_fallthru
          _
        // Predicated region
        $region53: #{simplenet_forward.4} parent=43 // pred_check
          %p268 = pneg %p129
        $region54: #{simplenet_forward.4} parent=43 // pred_check_branch
          %270 = sbr.rel (%p268) target = $region56
        $region55: #{simplenet_forward.4} parent=43 // pred_region
          %271 = dma.done [#allocation5], 32768
        $region56: #{simplenet_forward.4} parent=43 // pred_fallthru
          _
        %p272 = scmp.lt.s32.totalorder %s19, 1
        %s273 = scalar_select %p272, %s19, 1
        %s274 = smul.addr %s273, 4
        %s275 = smul.addr %s274, 4
        %s276 = scalar_lea.vmem %s0, %s275
        %p277 = pneg %p40
        %p278 = pneg %p37
        %p279 = scmp.lt.s32.totalorder %s19, 1
        %s280 = scalar_select %p279, %s19, 1
        %s281 = smul.addr %s280, 4
        %s282 = smul.addr %s281, 4
        %s283 = scalar_lea.vmem %s1, %s282
        %p284 = pneg %p66
        %p285 = pneg %p63
        %p286 = pneg %p87
        %p287 = pneg %p84
        %p288 = pneg %p108
        %p289 = pneg %p105
        %p290 = pneg %p129
        %p291 = pneg %p126
        %p292 = pneg %p150
        %p293 = pneg %p147
        %p294 = pneg %p176
        %p295 = pneg %p173
        %p296 = scmp.lt.s32.totalorder %s19, 1
        %s297 = scalar_select %p296, %s19, 1
        %s298 = smul.addr %s297, 4
        %s299 = smul.addr %s298, 4
        %s300 = scalar_lea.vmem %s6, %s299
        %p301 = scmp.lt.s32.totalorder %s19, 1
        %s302 = scalar_select %p301, %s19, 1
        %s303 = smul.addr %s302, 4
        %s304 = smul.addr %s303, 4
        %s305 = scalar_lea.vmem %s0, %s304
        %p306 = scmp.lt.s32.totalorder %s19, 1
        %s307 = scalar_select %p306, %s19, 1
        %s308 = smul.addr %s307, 4
        %s309 = smul.addr %s308, 4
        %s310 = scalar_lea.vmem %s1, %s309
        %p311 = scmp.lt.s32.totalorder %s19, 1
        %s312 = scalar_select %p311, %s19, 1
        %s313 = smul.addr %s312, 4
        %s314 = smul.addr %s313, 4
        %s315 = scalar_lea.vmem %s6, %s314
        %v316 = vld [vmem:[%s305] sm:$0xff]
        %v317 = vld [vmem:[%s305 + $0x8] sm:$0xff]
        %v318 = vld [vmem:[%s310] sm:$0xff]
        %v319 = vld [vmem:[%s310 + $0x8] sm:$0xff]
        %v320 = vld [vmem:[#allocation2] sm:$0xff]
        %v321 = vld [vmem:[#allocation2 + $0x8] sm:$0xff]
        %v322 = vld [vmem:[#allocation2 + $0x10] sm:$0xff]
        %v323 = vld [vmem:[#allocation2 + $0x18] sm:$0xff]
        %v324 = vld [vmem:[#allocation2 + $0x20] sm:$0xff]
        %v325 = vld [vmem:[#allocation2 + $0x28] sm:$0xff]
        %v326 = vld [vmem:[#allocation2 + $0x30] sm:$0xff]
        %v327 = vld [vmem:[#allocation2 + $0x38] sm:$0xff]
        %v328 = vld [vmem:[#allocation2 + $0x40] sm:$0xff]
        %v329 = vld [vmem:[#allocation2 + $0x48] sm:$0xff]
        %v330 = vld [vmem:[#allocation2 + $0x50] sm:$0xff]
        %v331 = vld [vmem:[#allocation2 + $0x58] sm:$0xff]
        %v332 = vld [vmem:[#allocation2 + $0x60] sm:$0xff]
        %v333 = vld [vmem:[#allocation2 + $0x68] sm:$0xff]
        %v334 = vld [vmem:[#allocation2 + $0x70] sm:$0xff]
        %v335 = vld [vmem:[#allocation2 + $0x78] sm:$0xff]
        %v336 = vld [vmem:[#allocation2 + $0x80] sm:$0xff]
        %v337 = vld [vmem:[#allocation2 + $0x88] sm:$0xff]
        %v338 = vld [vmem:[#allocation2 + $0x90] sm:$0xff]
        %v339 = vld [vmem:[#allocation2 + $0x98] sm:$0xff]
        %v340 = vld [vmem:[#allocation2 + $0xa0] sm:$0xff]
        %v341 = vld [vmem:[#allocation2 + $0xa8] sm:$0xff]
        %v342 = vld [vmem:[#allocation2 + $0xb0] sm:$0xff]
        %v343 = vld [vmem:[#allocation2 + $0xb8] sm:$0xff]
        %v344 = vld [vmem:[#allocation2 + $0xc0] sm:$0xff]
        %v345 = vld [vmem:[#allocation2 + $0xc8] sm:$0xff]
        %v346 = vld [vmem:[#allocation2 + $0xd0] sm:$0xff]
        %v347 = vld [vmem:[#allocation2 + $0xd8] sm:$0xff]
        %v348 = vld [vmem:[#allocation2 + $0xe0] sm:$0xff]
        %v349 = vld [vmem:[#allocation2 + $0xe8] sm:$0xff]
        %v350 = vld [vmem:[#allocation2 + $0xf0] sm:$0xff]
        %v351 = vld [vmem:[#allocation2 + $0xf8] sm:$0xff]
        %v352 = vld [vmem:[#allocation2 + $0x100] sm:$0xff]
        %v353 = vld [vmem:[#allocation2 + $0x108] sm:$0xff]
        %v354 = vld [vmem:[#allocation2 + $0x110] sm:$0xff]
        %v355 = vld [vmem:[#allocation2 + $0x118] sm:$0xff]
        %v356 = vld [vmem:[#allocation2 + $0x120] sm:$0xff]
        %v357 = vld [vmem:[#allocation2 + $0x128] sm:$0xff]
        %v358 = vld [vmem:[#allocation2 + $0x130] sm:$0xff]
        %v359 = vld [vmem:[#allocation2 + $0x138] sm:$0xff]
        %v360 = vld [vmem:[#allocation2 + $0x140] sm:$0xff]
        %v361 = vld [vmem:[#allocation2 + $0x148] sm:$0xff]
        %v362 = vld [vmem:[#allocation2 + $0x150] sm:$0xff]
        %v363 = vld [vmem:[#allocation2 + $0x158] sm:$0xff]
        %v364 = vld [vmem:[#allocation2 + $0x160] sm:$0xff]
        %v365 = vld [vmem:[#allocation2 + $0x168] sm:$0xff]
        %v366 = vld [vmem:[#allocation2 + $0x170] sm:$0xff]
        %v367 = vld [vmem:[#allocation2 + $0x178] sm:$0xff]
        %v368 = vld [vmem:[#allocation2 + $0x180] sm:$0xff]
        %v369 = vld [vmem:[#allocation2 + $0x188] sm:$0xff]
        %v370 = vld [vmem:[#allocation2 + $0x190] sm:$0xff]
        %v371 = vld [vmem:[#allocation2 + $0x198] sm:$0xff]
        %v372 = vld [vmem:[#allocation2 + $0x1a0] sm:$0xff]
        %v373 = vld [vmem:[#allocation2 + $0x1a8] sm:$0xff]
        %v374 = vld [vmem:[#allocation2 + $0x1b0] sm:$0xff]
        %v375 = vld [vmem:[#allocation2 + $0x1b8] sm:$0xff]
        %v376 = vld [vmem:[#allocation2 + $0x1c0] sm:$0xff]
        %v377 = vld [vmem:[#allocation2 + $0x1c8] sm:$0xff]
        %v378 = vld [vmem:[#allocation2 + $0x1d0] sm:$0xff]
        %v379 = vld [vmem:[#allocation2 + $0x1d8] sm:$0xff]
        %v380 = vld [vmem:[#allocation2 + $0x1e0] sm:$0xff]
        %v381 = vld [vmem:[#allocation2 + $0x1e8] sm:$0xff]
        %v382 = vld [vmem:[#allocation2 + $0x1f0] sm:$0xff]
        %v383 = vld [vmem:[#allocation2 + $0x1f8] sm:$0xff]
        %v384 = vld [vmem:[#allocation2 + $0x200] sm:$0xff]
        %v385 = vld [vmem:[#allocation2 + $0x208] sm:$0xff]
        %v386 = vld [vmem:[#allocation2 + $0x210] sm:$0xff]
        %v387 = vld [vmem:[#allocation2 + $0x218] sm:$0xff]
        %v388 = vld [vmem:[#allocation2 + $0x220] sm:$0xff]
        %v389 = vld [vmem:[#allocation2 + $0x228] sm:$0xff]
        %v390 = vld [vmem:[#allocation2 + $0x230] sm:$0xff]
        %v391 = vld [vmem:[#allocation2 + $0x238] sm:$0xff]
        %v392 = vld [vmem:[#allocation2 + $0x240] sm:$0xff]
        %v393 = vld [vmem:[#allocation2 + $0x248] sm:$0xff]
        %v394 = vld [vmem:[#allocation2 + $0x250] sm:$0xff]
        %v395 = vld [vmem:[#allocation2 + $0x258] sm:$0xff]
        %v396 = vld [vmem:[#allocation2 + $0x260] sm:$0xff]
        %v397 = vld [vmem:[#allocation2 + $0x268] sm:$0xff]
        %v398 = vld [vmem:[#allocation2 + $0x270] sm:$0xff]
        %v399 = vld [vmem:[#allocation2 + $0x278] sm:$0xff]
        %v400 = vld [vmem:[#allocation2 + $0x280] sm:$0xff]
        %v401 = vld [vmem:[#allocation2 + $0x288] sm:$0xff]
        %v402 = vld [vmem:[#allocation2 + $0x290] sm:$0xff]
        %v403 = vld [vmem:[#allocation2 + $0x298] sm:$0xff]
        %v404 = vld [vmem:[#allocation2 + $0x2a0] sm:$0xff]
        %v405 = vld [vmem:[#allocation2 + $0x2a8] sm:$0xff]
        %v406 = vld [vmem:[#allocation2 + $0x2b0] sm:$0xff]
        %v407 = vld [vmem:[#allocation2 + $0x2b8] sm:$0xff]
        %v408 = vld [vmem:[#allocation2 + $0x2c0] sm:$0xff]
        %v409 = vld [vmem:[#allocation2 + $0x2c8] sm:$0xff]
        %v410 = vld [vmem:[#allocation2 + $0x2d0] sm:$0xff]
        %v411 = vld [vmem:[#allocation2 + $0x2d8] sm:$0xff]
        %v412 = vld [vmem:[#allocation2 + $0x2e0] sm:$0xff]
        %v413 = vld [vmem:[#allocation2 + $0x2e8] sm:$0xff]
        %v414 = vld [vmem:[#allocation2 + $0x2f0] sm:$0xff]
        %v415 = vld [vmem:[#allocation2 + $0x2f8] sm:$0xff]
        %v416 = vld [vmem:[#allocation2 + $0x300] sm:$0xff]
        %v417 = vld [vmem:[#allocation2 + $0x308] sm:$0xff]
        %v418 = vld [vmem:[#allocation2 + $0x310] sm:$0xff]
        %v419 = vld [vmem:[#allocation2 + $0x318] sm:$0xff]
        %v420 = vld [vmem:[#allocation2 + $0x320] sm:$0xff]
        %v421 = vld [vmem:[#allocation2 + $0x328] sm:$0xff]
        %v422 = vld [vmem:[#allocation2 + $0x330] sm:$0xff]
        %v423 = vld [vmem:[#allocation2 + $0x338] sm:$0xff]
        %v424 = vld [vmem:[#allocation2 + $0x340] sm:$0xff]
        %v425 = vld [vmem:[#allocation2 + $0x348] sm:$0xff]
        %v426 = vld [vmem:[#allocation2 + $0x350] sm:$0xff]
        %v427 = vld [vmem:[#allocation2 + $0x358] sm:$0xff]
        %v428 = vld [vmem:[#allocation2 + $0x360] sm:$0xff]
        %v429 = vld [vmem:[#allocation2 + $0x368] sm:$0xff]
        %v430 = vld [vmem:[#allocation2 + $0x370] sm:$0xff]
        %v431 = vld [vmem:[#allocation2 + $0x378] sm:$0xff]
        %v432 = vld [vmem:[#allocation2 + $0x380] sm:$0xff]
        %v433 = vld [vmem:[#allocation2 + $0x388] sm:$0xff]
        %v434 = vld [vmem:[#allocation2 + $0x390] sm:$0xff]
        %v435 = vld [vmem:[#allocation2 + $0x398] sm:$0xff]
        %v436 = vld [vmem:[#allocation2 + $0x3a0] sm:$0xff]
        %v437 = vld [vmem:[#allocation2 + $0x3a8] sm:$0xff]
        %v438 = vld [vmem:[#allocation2 + $0x3b0] sm:$0xff]
        %v439 = vld [vmem:[#allocation2 + $0x3b8] sm:$0xff]
        %v440 = vld [vmem:[#allocation2 + $0x3c0] sm:$0xff]
        %v441 = vld [vmem:[#allocation2 + $0x3c8] sm:$0xff]
        %v442 = vld [vmem:[#allocation2 + $0x3d0] sm:$0xff]
        %v443 = vld [vmem:[#allocation2 + $0x3d8] sm:$0xff]
        %v444 = vld [vmem:[#allocation2 + $0x3e0] sm:$0xff]
        %v445 = vld [vmem:[#allocation2 + $0x3e8] sm:$0xff]
        %v446 = vld [vmem:[#allocation2 + $0x3f0] sm:$0xff]
        %v447 = vld [vmem:[#allocation2 + $0x3f8] sm:$0xff]
        %v448 = vld [vmem:[#allocation2 + $0x400] sm:$0xff]
        %v449 = vld [vmem:[#allocation2 + $0x408] sm:$0xff]
        %v450 = vld [vmem:[#allocation2 + $0x410] sm:$0xff]
        %v451 = vld [vmem:[#allocation2 + $0x418] sm:$0xff]
        %v452 = vld [vmem:[#allocation2 + $0x420] sm:$0xff]
        %v453 = vld [vmem:[#allocation2 + $0x428] sm:$0xff]
        %v454 = vld [vmem:[#allocation2 + $0x430] sm:$0xff]
        %v455 = vld [vmem:[#allocation2 + $0x438] sm:$0xff]
        %v456 = vld [vmem:[#allocation2 + $0x440] sm:$0xff]
        %v457 = vld [vmem:[#allocation2 + $0x448] sm:$0xff]
        %v458 = vld [vmem:[#allocation2 + $0x450] sm:$0xff]
        %v459 = vld [vmem:[#allocation2 + $0x458] sm:$0xff]
        %v460 = vld [vmem:[#allocation2 + $0x460] sm:$0xff]
        %v461 = vld [vmem:[#allocation2 + $0x468] sm:$0xff]
        %v462 = vld [vmem:[#allocation2 + $0x470] sm:$0xff]
        %v463 = vld [vmem:[#allocation2 + $0x478] sm:$0xff]
        %v464 = vld [vmem:[#allocation2 + $0x480] sm:$0xff]
        %v465 = vld [vmem:[#allocation2 + $0x488] sm:$0xff]
        %v466 = vld [vmem:[#allocation2 + $0x490] sm:$0xff]
        %v467 = vld [vmem:[#allocation2 + $0x498] sm:$0xff]
        %v468 = vld [vmem:[#allocation2 + $0x4a0] sm:$0xff]
        %v469 = vld [vmem:[#allocation2 + $0x4a8] sm:$0xff]
        %v470 = vld [vmem:[#allocation2 + $0x4b0] sm:$0xff]
        %v471 = vld [vmem:[#allocation2 + $0x4b8] sm:$0xff]
        %v472 = vld [vmem:[#allocation2 + $0x4c0] sm:$0xff]
        %v473 = vld [vmem:[#allocation2 + $0x4c8] sm:$0xff]
        %v474 = vld [vmem:[#allocation2 + $0x4d0] sm:$0xff]
        %v475 = vld [vmem:[#allocation2 + $0x4d8] sm:$0xff]
        %v476 = vld [vmem:[#allocation2 + $0x4e0] sm:$0xff]
        %v477 = vld [vmem:[#allocation2 + $0x4e8] sm:$0xff]
        %v478 = vld [vmem:[#allocation2 + $0x4f0] sm:$0xff]
        %v479 = vld [vmem:[#allocation2 + $0x4f8] sm:$0xff]
        %v480 = vld [vmem:[#allocation2 + $0x500] sm:$0xff]
        %v481 = vld [vmem:[#allocation2 + $0x508] sm:$0xff]
        %v482 = vld [vmem:[#allocation2 + $0x510] sm:$0xff]
        %v483 = vld [vmem:[#allocation2 + $0x518] sm:$0xff]
        %v484 = vld [vmem:[#allocation2 + $0x520] sm:$0xff]
        %v485 = vld [vmem:[#allocation2 + $0x528] sm:$0xff]
        %v486 = vld [vmem:[#allocation2 + $0x530] sm:$0xff]
        %v487 = vld [vmem:[#allocation2 + $0x538] sm:$0xff]
        %v488 = vld [vmem:[#allocation2 + $0x540] sm:$0xff]
        %v489 = vld [vmem:[#allocation2 + $0x548] sm:$0xff]
        %v490 = vld [vmem:[#allocation2 + $0x550] sm:$0xff]
        %v491 = vld [vmem:[#allocation2 + $0x558] sm:$0xff]
        %v492 = vld [vmem:[#allocation2 + $0x560] sm:$0xff]
        %v493 = vld [vmem:[#allocation2 + $0x568] sm:$0xff]
        %v494 = vld [vmem:[#allocation2 + $0x570] sm:$0xff]
        %v495 = vld [vmem:[#allocation2 + $0x578] sm:$0xff]
        %v496 = vld [vmem:[#allocation2 + $0x580] sm:$0xff]
        %v497 = vld [vmem:[#allocation2 + $0x588] sm:$0xff]
        %v498 = vld [vmem:[#allocation2 + $0x590] sm:$0xff]
        %v499 = vld [vmem:[#allocation2 + $0x598] sm:$0xff]
        %v500 = vld [vmem:[#allocation2 + $0x5a0] sm:$0xff]
        %v501 = vld [vmem:[#allocation2 + $0x5a8] sm:$0xff]
        %v502 = vld [vmem:[#allocation2 + $0x5b0] sm:$0xff]
        %v503 = vld [vmem:[#allocation2 + $0x5b8] sm:$0xff]
        %v504 = vld [vmem:[#allocation2 + $0x5c0] sm:$0xff]
        %v505 = vld [vmem:[#allocation2 + $0x5c8] sm:$0xff]
        %v506 = vld [vmem:[#allocation2 + $0x5d0] sm:$0xff]
        %v507 = vld [vmem:[#allocation2 + $0x5d8] sm:$0xff]
        %v508 = vld [vmem:[#allocation2 + $0x5e0] sm:$0xff]
        %v509 = vld [vmem:[#allocation2 + $0x5e8] sm:$0xff]
        %v510 = vld [vmem:[#allocation2 + $0x5f0] sm:$0xff]
        %v511 = vld [vmem:[#allocation2 + $0x5f8] sm:$0xff]
        %v512 = vld [vmem:[#allocation2 + $0x600] sm:$0xff]
        %v513 = vld [vmem:[#allocation2 + $0x608] sm:$0xff]
        %v514 = vld [vmem:[#allocation2 + $0x610] sm:$0xff]
        %v515 = vld [vmem:[#allocation2 + $0x618] sm:$0xff]
        %v516 = vld [vmem:[#allocation2 + $0x620] sm:$0xff]
        %v517 = vld [vmem:[#allocation2 + $0x628] sm:$0xff]
        %v518 = vld [vmem:[#allocation2 + $0x630] sm:$0xff]
        %v519 = vld [vmem:[#allocation2 + $0x638] sm:$0xff]
        %v520 = vld [vmem:[#allocation2 + $0x640] sm:$0xff]
        %v521 = vld [vmem:[#allocation2 + $0x648] sm:$0xff]
        %v522 = vld [vmem:[#allocation2 + $0x650] sm:$0xff]
        %v523 = vld [vmem:[#allocation2 + $0x658] sm:$0xff]
        %v524 = vld [vmem:[#allocation2 + $0x660] sm:$0xff]
        %v525 = vld [vmem:[#allocation2 + $0x668] sm:$0xff]
        %v526 = vld [vmem:[#allocation2 + $0x670] sm:$0xff]
        %v527 = vld [vmem:[#allocation2 + $0x678] sm:$0xff]
        %v528 = vld [vmem:[#allocation2 + $0x680] sm:$0xff]
        %v529 = vld [vmem:[#allocation2 + $0x688] sm:$0xff]
        %v530 = vld [vmem:[#allocation2 + $0x690] sm:$0xff]
        %v531 = vld [vmem:[#allocation2 + $0x698] sm:$0xff]
        %v532 = vld [vmem:[#allocation2 + $0x6a0] sm:$0xff]
        %v533 = vld [vmem:[#allocation2 + $0x6a8] sm:$0xff]
        %v534 = vld [vmem:[#allocation2 + $0x6b0] sm:$0xff]
        %v535 = vld [vmem:[#allocation2 + $0x6b8] sm:$0xff]
        %v536 = vld [vmem:[#allocation2 + $0x6c0] sm:$0xff]
        %v537 = vld [vmem:[#allocation2 + $0x6c8] sm:$0xff]
        %v538 = vld [vmem:[#allocation2 + $0x6d0] sm:$0xff]
        %v539 = vld [vmem:[#allocation2 + $0x6d8] sm:$0xff]
        %v540 = vld [vmem:[#allocation2 + $0x6e0] sm:$0xff]
        %v541 = vld [vmem:[#allocation2 + $0x6e8] sm:$0xff]
        %v542 = vld [vmem:[#allocation2 + $0x6f0] sm:$0xff]
        %v543 = vld [vmem:[#allocation2 + $0x6f8] sm:$0xff]
        %v544 = vld [vmem:[#allocation2 + $0x700] sm:$0xff]
        %v545 = vld [vmem:[#allocation2 + $0x708] sm:$0xff]
        %v546 = vld [vmem:[#allocation2 + $0x710] sm:$0xff]
        %v547 = vld [vmem:[#allocation2 + $0x718] sm:$0xff]
        %v548 = vld [vmem:[#allocation2 + $0x720] sm:$0xff]
        %v549 = vld [vmem:[#allocation2 + $0x728] sm:$0xff]
        %v550 = vld [vmem:[#allocation2 + $0x730] sm:$0xff]
        %v551 = vld [vmem:[#allocation2 + $0x738] sm:$0xff]
        %v552 = vld [vmem:[#allocation2 + $0x740] sm:$0xff]
        %v553 = vld [vmem:[#allocation2 + $0x748] sm:$0xff]
        %v554 = vld [vmem:[#allocation2 + $0x750] sm:$0xff]
        %v555 = vld [vmem:[#allocation2 + $0x758] sm:$0xff]
        %v556 = vld [vmem:[#allocation2 + $0x760] sm:$0xff]
        %v557 = vld [vmem:[#allocation2 + $0x768] sm:$0xff]
        %v558 = vld [vmem:[#allocation2 + $0x770] sm:$0xff]
        %v559 = vld [vmem:[#allocation2 + $0x778] sm:$0xff]
        %v560 = vld [vmem:[#allocation2 + $0x780] sm:$0xff]
        %v561 = vld [vmem:[#allocation2 + $0x788] sm:$0xff]
        %v562 = vld [vmem:[#allocation2 + $0x790] sm:$0xff]
        %v563 = vld [vmem:[#allocation2 + $0x798] sm:$0xff]
        %v564 = vld [vmem:[#allocation2 + $0x7a0] sm:$0xff]
        %v565 = vld [vmem:[#allocation2 + $0x7a8] sm:$0xff]
        %v566 = vld [vmem:[#allocation2 + $0x7b0] sm:$0xff]
        %v567 = vld [vmem:[#allocation2 + $0x7b8] sm:$0xff]
        %v568 = vld [vmem:[#allocation2 + $0x7c0] sm:$0xff]
        %v569 = vld [vmem:[#allocation2 + $0x7c8] sm:$0xff]
        %v570 = vld [vmem:[#allocation2 + $0x7d0] sm:$0xff]
        %v571 = vld [vmem:[#allocation2 + $0x7d8] sm:$0xff]
        %v572 = vld [vmem:[#allocation2 + $0x7e0] sm:$0xff]
        %v573 = vld [vmem:[#allocation2 + $0x7e8] sm:$0xff]
        %v574 = vld [vmem:[#allocation2 + $0x7f0] sm:$0xff]
        %v575 = vld [vmem:[#allocation2 + $0x7f8] sm:$0xff]
        %v576 = vld [vmem:[#allocation4] sm:$0xff]
        %v577 = vld [vmem:[#allocation4 + $0x8] sm:$0xff]
        %v578 = vld [vmem:[#allocation4 + $0x10] sm:$0xff]
        %v579 = vld [vmem:[#allocation4 + $0x18] sm:$0xff]
        %v580 = vld [vmem:[#allocation4 + $0x20] sm:$0xff]
        %v581 = vld [vmem:[#allocation4 + $0x28] sm:$0xff]
        %v582 = vld [vmem:[#allocation4 + $0x30] sm:$0xff]
        %v583 = vld [vmem:[#allocation4 + $0x38] sm:$0xff]
        %v584 = vld [vmem:[#allocation4 + $0x40] sm:$0xff]
        %v585 = vld [vmem:[#allocation4 + $0x48] sm:$0xff]
        %v586 = vld [vmem:[#allocation4 + $0x50] sm:$0xff]
        %v587 = vld [vmem:[#allocation4 + $0x58] sm:$0xff]
        %v588 = vld [vmem:[#allocation4 + $0x60] sm:$0xff]
        %v589 = vld [vmem:[#allocation4 + $0x68] sm:$0xff]
        %v590 = vld [vmem:[#allocation4 + $0x70] sm:$0xff]
        %v591 = vld [vmem:[#allocation4 + $0x78] sm:$0xff]
        %v592 = vld [vmem:[#allocation4 + $0x80] sm:$0xff]
        %v593 = vld [vmem:[#allocation4 + $0x88] sm:$0xff]
        %v594 = vld [vmem:[#allocation4 + $0x90] sm:$0xff]
        %v595 = vld [vmem:[#allocation4 + $0x98] sm:$0xff]
        %v596 = vld [vmem:[#allocation4 + $0xa0] sm:$0xff]
        %v597 = vld [vmem:[#allocation4 + $0xa8] sm:$0xff]
        %v598 = vld [vmem:[#allocation4 + $0xb0] sm:$0xff]
        %v599 = vld [vmem:[#allocation4 + $0xb8] sm:$0xff]
        %v600 = vld [vmem:[#allocation4 + $0xc0] sm:$0xff]
        %v601 = vld [vmem:[#allocation4 + $0xc8] sm:$0xff]
        %v602 = vld [vmem:[#allocation4 + $0xd0] sm:$0xff]
        %v603 = vld [vmem:[#allocation4 + $0xd8] sm:$0xff]
        %v604 = vld [vmem:[#allocation4 + $0xe0] sm:$0xff]
        %v605 = vld [vmem:[#allocation4 + $0xe8] sm:$0xff]
        %v606 = vld [vmem:[#allocation4 + $0xf0] sm:$0xff]
        %v607 = vld [vmem:[#allocation4 + $0xf8] sm:$0xff]
        %v608 = vld [vmem:[#allocation4 + $0x100] sm:$0xff]
        %v609 = vld [vmem:[#allocation4 + $0x108] sm:$0xff]
        %v610 = vld [vmem:[#allocation4 + $0x110] sm:$0xff]
        %v611 = vld [vmem:[#allocation4 + $0x118] sm:$0xff]
        %v612 = vld [vmem:[#allocation4 + $0x120] sm:$0xff]
        %v613 = vld [vmem:[#allocation4 + $0x128] sm:$0xff]
        %v614 = vld [vmem:[#allocation4 + $0x130] sm:$0xff]
        %v615 = vld [vmem:[#allocation4 + $0x138] sm:$0xff]
        %v616 = vld [vmem:[#allocation4 + $0x140] sm:$0xff]
        %v617 = vld [vmem:[#allocation4 + $0x148] sm:$0xff]
        %v618 = vld [vmem:[#allocation4 + $0x150] sm:$0xff]
        %v619 = vld [vmem:[#allocation4 + $0x158] sm:$0xff]
        %v620 = vld [vmem:[#allocation4 + $0x160] sm:$0xff]
        %v621 = vld [vmem:[#allocation4 + $0x168] sm:$0xff]
        %v622 = vld [vmem:[#allocation4 + $0x170] sm:$0xff]
        %v623 = vld [vmem:[#allocation4 + $0x178] sm:$0xff]
        %v624 = vld [vmem:[#allocation4 + $0x180] sm:$0xff]
        %v625 = vld [vmem:[#allocation4 + $0x188] sm:$0xff]
        %v626 = vld [vmem:[#allocation4 + $0x190] sm:$0xff]
        %v627 = vld [vmem:[#allocation4 + $0x198] sm:$0xff]
        %v628 = vld [vmem:[#allocation4 + $0x1a0] sm:$0xff]
        %v629 = vld [vmem:[#allocation4 + $0x1a8] sm:$0xff]
        %v630 = vld [vmem:[#allocation4 + $0x1b0] sm:$0xff]
        %v631 = vld [vmem:[#allocation4 + $0x1b8] sm:$0xff]
        %v632 = vld [vmem:[#allocation4 + $0x1c0] sm:$0xff]
        %v633 = vld [vmem:[#allocation4 + $0x1c8] sm:$0xff]
        %v634 = vld [vmem:[#allocation4 + $0x1d0] sm:$0xff]
        %v635 = vld [vmem:[#allocation4 + $0x1d8] sm:$0xff]
        %v636 = vld [vmem:[#allocation4 + $0x1e0] sm:$0xff]
        %v637 = vld [vmem:[#allocation4 + $0x1e8] sm:$0xff]
        %v638 = vld [vmem:[#allocation4 + $0x1f0] sm:$0xff]
        %v639 = vld [vmem:[#allocation4 + $0x1f8] sm:$0xff]
        %v640 = vld [vmem:[#allocation4 + $0x200] sm:$0xff]
        %v641 = vld [vmem:[#allocation4 + $0x208] sm:$0xff]
        %v642 = vld [vmem:[#allocation4 + $0x210] sm:$0xff]
        %v643 = vld [vmem:[#allocation4 + $0x218] sm:$0xff]
        %v644 = vld [vmem:[#allocation4 + $0x220] sm:$0xff]
        %v645 = vld [vmem:[#allocation4 + $0x228] sm:$0xff]
        %v646 = vld [vmem:[#allocation4 + $0x230] sm:$0xff]
        %v647 = vld [vmem:[#allocation4 + $0x238] sm:$0xff]
        %v648 = vld [vmem:[#allocation4 + $0x240] sm:$0xff]
        %v649 = vld [vmem:[#allocation4 + $0x248] sm:$0xff]
        %v650 = vld [vmem:[#allocation4 + $0x250] sm:$0xff]
        %v651 = vld [vmem:[#allocation4 + $0x258] sm:$0xff]
        %v652 = vld [vmem:[#allocation4 + $0x260] sm:$0xff]
        %v653 = vld [vmem:[#allocation4 + $0x268] sm:$0xff]
        %v654 = vld [vmem:[#allocation4 + $0x270] sm:$0xff]
        %v655 = vld [vmem:[#allocation4 + $0x278] sm:$0xff]
        %v656 = vld [vmem:[#allocation4 + $0x280] sm:$0xff]
        %v657 = vld [vmem:[#allocation4 + $0x288] sm:$0xff]
        %v658 = vld [vmem:[#allocation4 + $0x290] sm:$0xff]
        %v659 = vld [vmem:[#allocation4 + $0x298] sm:$0xff]
        %v660 = vld [vmem:[#allocation4 + $0x2a0] sm:$0xff]
        %v661 = vld [vmem:[#allocation4 + $0x2a8] sm:$0xff]
        %v662 = vld [vmem:[#allocation4 + $0x2b0] sm:$0xff]
        %v663 = vld [vmem:[#allocation4 + $0x2b8] sm:$0xff]
        %v664 = vld [vmem:[#allocation4 + $0x2c0] sm:$0xff]
        %v665 = vld [vmem:[#allocation4 + $0x2c8] sm:$0xff]
        %v666 = vld [vmem:[#allocation4 + $0x2d0] sm:$0xff]
        %v667 = vld [vmem:[#allocation4 + $0x2d8] sm:$0xff]
        %v668 = vld [vmem:[#allocation4 + $0x2e0] sm:$0xff]
        %v669 = vld [vmem:[#allocation4 + $0x2e8] sm:$0xff]
        %v670 = vld [vmem:[#allocation4 + $0x2f0] sm:$0xff]
        %v671 = vld [vmem:[#allocation4 + $0x2f8] sm:$0xff]
        %v672 = vld [vmem:[#allocation4 + $0x300] sm:$0xff]
        %v673 = vld [vmem:[#allocation4 + $0x308] sm:$0xff]
        %v674 = vld [vmem:[#allocation4 + $0x310] sm:$0xff]
        %v675 = vld [vmem:[#allocation4 + $0x318] sm:$0xff]
        %v676 = vld [vmem:[#allocation4 + $0x320] sm:$0xff]
        %v677 = vld [vmem:[#allocation4 + $0x328] sm:$0xff]
        %v678 = vld [vmem:[#allocation4 + $0x330] sm:$0xff]
        %v679 = vld [vmem:[#allocation4 + $0x338] sm:$0xff]
        %v680 = vld [vmem:[#allocation4 + $0x340] sm:$0xff]
        %v681 = vld [vmem:[#allocation4 + $0x348] sm:$0xff]
        %v682 = vld [vmem:[#allocation4 + $0x350] sm:$0xff]
        %v683 = vld [vmem:[#allocation4 + $0x358] sm:$0xff]
        %v684 = vld [vmem:[#allocation4 + $0x360] sm:$0xff]
        %v685 = vld [vmem:[#allocation4 + $0x368] sm:$0xff]
        %v686 = vld [vmem:[#allocation4 + $0x370] sm:$0xff]
        %v687 = vld [vmem:[#allocation4 + $0x378] sm:$0xff]
        %v688 = vld [vmem:[#allocation4 + $0x380] sm:$0xff]
        %v689 = vld [vmem:[#allocation4 + $0x388] sm:$0xff]
        %v690 = vld [vmem:[#allocation4 + $0x390] sm:$0xff]
        %v691 = vld [vmem:[#allocation4 + $0x398] sm:$0xff]
        %v692 = vld [vmem:[#allocation4 + $0x3a0] sm:$0xff]
        %v693 = vld [vmem:[#allocation4 + $0x3a8] sm:$0xff]
        %v694 = vld [vmem:[#allocation4 + $0x3b0] sm:$0xff]
        %v695 = vld [vmem:[#allocation4 + $0x3b8] sm:$0xff]
        %v696 = vld [vmem:[#allocation4 + $0x3c0] sm:$0xff]
        %v697 = vld [vmem:[#allocation4 + $0x3c8] sm:$0xff]
        %v698 = vld [vmem:[#allocation4 + $0x3d0] sm:$0xff]
        %v699 = vld [vmem:[#allocation4 + $0x3d8] sm:$0xff]
        %v700 = vld [vmem:[#allocation4 + $0x3e0] sm:$0xff]
        %v701 = vld [vmem:[#allocation4 + $0x3e8] sm:$0xff]
        %v702 = vld [vmem:[#allocation4 + $0x3f0] sm:$0xff]
        %v703 = vld [vmem:[#allocation4 + $0x3f8] sm:$0xff]
        %v704 = vld [vmem:[#allocation4 + $0x400] sm:$0xff]
        %v705 = vld [vmem:[#allocation4 + $0x408] sm:$0xff]
        %v706 = vld [vmem:[#allocation4 + $0x410] sm:$0xff]
        %v707 = vld [vmem:[#allocation4 + $0x418] sm:$0xff]
        %v708 = vld [vmem:[#allocation4 + $0x420] sm:$0xff]
        %v709 = vld [vmem:[#allocation4 + $0x428] sm:$0xff]
        %v710 = vld [vmem:[#allocation4 + $0x430] sm:$0xff]
        %v711 = vld [vmem:[#allocation4 + $0x438] sm:$0xff]
        %v712 = vld [vmem:[#allocation4 + $0x440] sm:$0xff]
        %v713 = vld [vmem:[#allocation4 + $0x448] sm:$0xff]
        %v714 = vld [vmem:[#allocation4 + $0x450] sm:$0xff]
        %v715 = vld [vmem:[#allocation4 + $0x458] sm:$0xff]
        %v716 = vld [vmem:[#allocation4 + $0x460] sm:$0xff]
        %v717 = vld [vmem:[#allocation4 + $0x468] sm:$0xff]
        %v718 = vld [vmem:[#allocation4 + $0x470] sm:$0xff]
        %v719 = vld [vmem:[#allocation4 + $0x478] sm:$0xff]
        %v720 = vld [vmem:[#allocation4 + $0x480] sm:$0xff]
        %v721 = vld [vmem:[#allocation4 + $0x488] sm:$0xff]
        %v722 = vld [vmem:[#allocation4 + $0x490] sm:$0xff]
        %v723 = vld [vmem:[#allocation4 + $0x498] sm:$0xff]
        %v724 = vld [vmem:[#allocation4 + $0x4a0] sm:$0xff]
        %v725 = vld [vmem:[#allocation4 + $0x4a8] sm:$0xff]
        %v726 = vld [vmem:[#allocation4 + $0x4b0] sm:$0xff]
        %v727 = vld [vmem:[#allocation4 + $0x4b8] sm:$0xff]
        %v728 = vld [vmem:[#allocation4 + $0x4c0] sm:$0xff]
        %v729 = vld [vmem:[#allocation4 + $0x4c8] sm:$0xff]
        %v730 = vld [vmem:[#allocation4 + $0x4d0] sm:$0xff]
        %v731 = vld [vmem:[#allocation4 + $0x4d8] sm:$0xff]
        %v732 = vld [vmem:[#allocation4 + $0x4e0] sm:$0xff]
        %v733 = vld [vmem:[#allocation4 + $0x4e8] sm:$0xff]
        %v734 = vld [vmem:[#allocation4 + $0x4f0] sm:$0xff]
        %v735 = vld [vmem:[#allocation4 + $0x4f8] sm:$0xff]
        %v736 = vld [vmem:[#allocation4 + $0x500] sm:$0xff]
        %v737 = vld [vmem:[#allocation4 + $0x508] sm:$0xff]
        %v738 = vld [vmem:[#allocation4 + $0x510] sm:$0xff]
        %v739 = vld [vmem:[#allocation4 + $0x518] sm:$0xff]
        %v740 = vld [vmem:[#allocation4 + $0x520] sm:$0xff]
        %v741 = vld [vmem:[#allocation4 + $0x528] sm:$0xff]
        %v742 = vld [vmem:[#allocation4 + $0x530] sm:$0xff]
        %v743 = vld [vmem:[#allocation4 + $0x538] sm:$0xff]
        %v744 = vld [vmem:[#allocation4 + $0x540] sm:$0xff]
        %v745 = vld [vmem:[#allocation4 + $0x548] sm:$0xff]
        %v746 = vld [vmem:[#allocation4 + $0x550] sm:$0xff]
        %v747 = vld [vmem:[#allocation4 + $0x558] sm:$0xff]
        %v748 = vld [vmem:[#allocation4 + $0x560] sm:$0xff]
        %v749 = vld [vmem:[#allocation4 + $0x568] sm:$0xff]
        %v750 = vld [vmem:[#allocation4 + $0x570] sm:$0xff]
        %v751 = vld [vmem:[#allocation4 + $0x578] sm:$0xff]
        %v752 = vld [vmem:[#allocation4 + $0x580] sm:$0xff]
        %v753 = vld [vmem:[#allocation4 + $0x588] sm:$0xff]
        %v754 = vld [vmem:[#allocation4 + $0x590] sm:$0xff]
        %v755 = vld [vmem:[#allocation4 + $0x598] sm:$0xff]
        %v756 = vld [vmem:[#allocation4 + $0x5a0] sm:$0xff]
        %v757 = vld [vmem:[#allocation4 + $0x5a8] sm:$0xff]
        %v758 = vld [vmem:[#allocation4 + $0x5b0] sm:$0xff]
        %v759 = vld [vmem:[#allocation4 + $0x5b8] sm:$0xff]
        %v760 = vld [vmem:[#allocation4 + $0x5c0] sm:$0xff]
        %v761 = vld [vmem:[#allocation4 + $0x5c8] sm:$0xff]
        %v762 = vld [vmem:[#allocation4 + $0x5d0] sm:$0xff]
        %v763 = vld [vmem:[#allocation4 + $0x5d8] sm:$0xff]
        %v764 = vld [vmem:[#allocation4 + $0x5e0] sm:$0xff]
        %v765 = vld [vmem:[#allocation4 + $0x5e8] sm:$0xff]
        %v766 = vld [vmem:[#allocation4 + $0x5f0] sm:$0xff]
        %v767 = vld [vmem:[#allocation4 + $0x5f8] sm:$0xff]
        %v768 = vld [vmem:[#allocation4 + $0x600] sm:$0xff]
        %v769 = vld [vmem:[#allocation4 + $0x608] sm:$0xff]
        %v770 = vld [vmem:[#allocation4 + $0x610] sm:$0xff]
        %v771 = vld [vmem:[#allocation4 + $0x618] sm:$0xff]
        %v772 = vld [vmem:[#allocation4 + $0x620] sm:$0xff]
        %v773 = vld [vmem:[#allocation4 + $0x628] sm:$0xff]
        %v774 = vld [vmem:[#allocation4 + $0x630] sm:$0xff]
        %v775 = vld [vmem:[#allocation4 + $0x638] sm:$0xff]
        %v776 = vld [vmem:[#allocation4 + $0x640] sm:$0xff]
        %v777 = vld [vmem:[#allocation4 + $0x648] sm:$0xff]
        %v778 = vld [vmem:[#allocation4 + $0x650] sm:$0xff]
        %v779 = vld [vmem:[#allocation4 + $0x658] sm:$0xff]
        %v780 = vld [vmem:[#allocation4 + $0x660] sm:$0xff]
        %v781 = vld [vmem:[#allocation4 + $0x668] sm:$0xff]
        %v782 = vld [vmem:[#allocation4 + $0x670] sm:$0xff]
        %v783 = vld [vmem:[#allocation4 + $0x678] sm:$0xff]
        %v784 = vld [vmem:[#allocation4 + $0x680] sm:$0xff]
        %v785 = vld [vmem:[#allocation4 + $0x688] sm:$0xff]
        %v786 = vld [vmem:[#allocation4 + $0x690] sm:$0xff]
        %v787 = vld [vmem:[#allocation4 + $0x698] sm:$0xff]
        %v788 = vld [vmem:[#allocation4 + $0x6a0] sm:$0xff]
        %v789 = vld [vmem:[#allocation4 + $0x6a8] sm:$0xff]
        %v790 = vld [vmem:[#allocation4 + $0x6b0] sm:$0xff]
        %v791 = vld [vmem:[#allocation4 + $0x6b8] sm:$0xff]
        %v792 = vld [vmem:[#allocation4 + $0x6c0] sm:$0xff]
        %v793 = vld [vmem:[#allocation4 + $0x6c8] sm:$0xff]
        %v794 = vld [vmem:[#allocation4 + $0x6d0] sm:$0xff]
        %v795 = vld [vmem:[#allocation4 + $0x6d8] sm:$0xff]
        %v796 = vld [vmem:[#allocation4 + $0x6e0] sm:$0xff]
        %v797 = vld [vmem:[#allocation4 + $0x6e8] sm:$0xff]
        %v798 = vld [vmem:[#allocation4 + $0x6f0] sm:$0xff]
        %v799 = vld [vmem:[#allocation4 + $0x6f8] sm:$0xff]
        %v800 = vld [vmem:[#allocation4 + $0x700] sm:$0xff]
        %v801 = vld [vmem:[#allocation4 + $0x708] sm:$0xff]
        %v802 = vld [vmem:[#allocation4 + $0x710] sm:$0xff]
        %v803 = vld [vmem:[#allocation4 + $0x718] sm:$0xff]
        %v804 = vld [vmem:[#allocation4 + $0x720] sm:$0xff]
        %v805 = vld [vmem:[#allocation4 + $0x728] sm:$0xff]
        %v806 = vld [vmem:[#allocation4 + $0x730] sm:$0xff]
        %v807 = vld [vmem:[#allocation4 + $0x738] sm:$0xff]
        %v808 = vld [vmem:[#allocation4 + $0x740] sm:$0xff]
        %v809 = vld [vmem:[#allocation4 + $0x748] sm:$0xff]
        %v810 = vld [vmem:[#allocation4 + $0x750] sm:$0xff]
        %v811 = vld [vmem:[#allocation4 + $0x758] sm:$0xff]
        %v812 = vld [vmem:[#allocation4 + $0x760] sm:$0xff]
        %v813 = vld [vmem:[#allocation4 + $0x768] sm:$0xff]
        %v814 = vld [vmem:[#allocation4 + $0x770] sm:$0xff]
        %v815 = vld [vmem:[#allocation4 + $0x778] sm:$0xff]
        %v816 = vld [vmem:[#allocation4 + $0x780] sm:$0xff]
        %v817 = vld [vmem:[#allocation4 + $0x788] sm:$0xff]
        %v818 = vld [vmem:[#allocation4 + $0x790] sm:$0xff]
        %v819 = vld [vmem:[#allocation4 + $0x798] sm:$0xff]
        %v820 = vld [vmem:[#allocation4 + $0x7a0] sm:$0xff]
        %v821 = vld [vmem:[#allocation4 + $0x7a8] sm:$0xff]
        %v822 = vld [vmem:[#allocation4 + $0x7b0] sm:$0xff]
        %v823 = vld [vmem:[#allocation4 + $0x7b8] sm:$0xff]
        %v824 = vld [vmem:[#allocation4 + $0x7c0] sm:$0xff]
        %v825 = vld [vmem:[#allocation4 + $0x7c8] sm:$0xff]
        %v826 = vld [vmem:[#allocation4 + $0x7d0] sm:$0xff]
        %v827 = vld [vmem:[#allocation4 + $0x7d8] sm:$0xff]
        %v828 = vld [vmem:[#allocation4 + $0x7e0] sm:$0xff]
        %v829 = vld [vmem:[#allocation4 + $0x7e8] sm:$0xff]
        %v830 = vld [vmem:[#allocation4 + $0x7f0] sm:$0xff]
        %v831 = vld [vmem:[#allocation4 + $0x7f8] sm:$0xff]
        %v832 = vld [vmem:[#allocation6] sm:$0xff]
        %v833 = vld [vmem:[#allocation6 + $0x8] sm:$0xff]
        %v834 = vld [vmem:[#allocation6 + $0x10] sm:$0xff]
        %v835 = vld [vmem:[#allocation6 + $0x18] sm:$0xff]
        %v836 = vld [vmem:[#allocation6 + $0x20] sm:$0xff]
        %v837 = vld [vmem:[#allocation6 + $0x28] sm:$0xff]
        %v838 = vld [vmem:[#allocation6 + $0x30] sm:$0xff]
        %v839 = vld [vmem:[#allocation6 + $0x38] sm:$0xff]
        %v840 = vld [vmem:[#allocation6 + $0x40] sm:$0xff]
        %v841 = vld [vmem:[#allocation6 + $0x48] sm:$0xff]
        %v842 = vld [vmem:[#allocation6 + $0x50] sm:$0xff]
        %v843 = vld [vmem:[#allocation6 + $0x58] sm:$0xff]
        %v844 = vld [vmem:[#allocation6 + $0x60] sm:$0xff]
        %v845 = vld [vmem:[#allocation6 + $0x68] sm:$0xff]
        %v846 = vld [vmem:[#allocation6 + $0x70] sm:$0xff]
        %v847 = vld [vmem:[#allocation6 + $0x78] sm:$0xff]
        %v848 = vld [vmem:[#allocation6 + $0x80] sm:$0xff]
        %v849 = vld [vmem:[#allocation6 + $0x88] sm:$0xff]
        %v850 = vld [vmem:[#allocation6 + $0x90] sm:$0xff]
        %v851 = vld [vmem:[#allocation6 + $0x98] sm:$0xff]
        %v852 = vld [vmem:[#allocation6 + $0xa0] sm:$0xff]
        %v853 = vld [vmem:[#allocation6 + $0xa8] sm:$0xff]
        %v854 = vld [vmem:[#allocation6 + $0xb0] sm:$0xff]
        %v855 = vld [vmem:[#allocation6 + $0xb8] sm:$0xff]
        %v856 = vld [vmem:[#allocation6 + $0xc0] sm:$0xff]
        %v857 = vld [vmem:[#allocation6 + $0xc8] sm:$0xff]
        %v858 = vld [vmem:[#allocation6 + $0xd0] sm:$0xff]
        %v859 = vld [vmem:[#allocation6 + $0xd8] sm:$0xff]
        %v860 = vld [vmem:[#allocation6 + $0xe0] sm:$0xff]
        %v861 = vld [vmem:[#allocation6 + $0xe8] sm:$0xff]
        %v862 = vld [vmem:[#allocation6 + $0xf0] sm:$0xff]
        %v863 = vld [vmem:[#allocation6 + $0xf8] sm:$0xff]
        %v864 = vld [vmem:[#allocation6 + $0x100] sm:$0xff]
        %v865 = vld [vmem:[#allocation6 + $0x108] sm:$0xff]
        %v866 = vld [vmem:[#allocation6 + $0x110] sm:$0xff]
        %v867 = vld [vmem:[#allocation6 + $0x118] sm:$0xff]
        %v868 = vld [vmem:[#allocation6 + $0x120] sm:$0xff]
        %v869 = vld [vmem:[#allocation6 + $0x128] sm:$0xff]
        %v870 = vld [vmem:[#allocation6 + $0x130] sm:$0xff]
        %v871 = vld [vmem:[#allocation6 + $0x138] sm:$0xff]
        %v872 = vld [vmem:[#allocation6 + $0x140] sm:$0xff]
        %v873 = vld [vmem:[#allocation6 + $0x148] sm:$0xff]
        %v874 = vld [vmem:[#allocation6 + $0x150] sm:$0xff]
        %v875 = vld [vmem:[#allocation6 + $0x158] sm:$0xff]
        %v876 = vld [vmem:[#allocation6 + $0x160] sm:$0xff]
        %v877 = vld [vmem:[#allocation6 + $0x168] sm:$0xff]
        %v878 = vld [vmem:[#allocation6 + $0x170] sm:$0xff]
        %v879 = vld [vmem:[#allocation6 + $0x178] sm:$0xff]
        %v880 = vld [vmem:[#allocation6 + $0x180] sm:$0xff]
        %v881 = vld [vmem:[#allocation6 + $0x188] sm:$0xff]
        %v882 = vld [vmem:[#allocation6 + $0x190] sm:$0xff]
        %v883 = vld [vmem:[#allocation6 + $0x198] sm:$0xff]
        %v884 = vld [vmem:[#allocation6 + $0x1a0] sm:$0xff]
        %v885 = vld [vmem:[#allocation6 + $0x1a8] sm:$0xff]
        %v886 = vld [vmem:[#allocation6 + $0x1b0] sm:$0xff]
        %v887 = vld [vmem:[#allocation6 + $0x1b8] sm:$0xff]
        %v888 = vld [vmem:[#allocation6 + $0x1c0] sm:$0xff]
        %v889 = vld [vmem:[#allocation6 + $0x1c8] sm:$0xff]
        %v890 = vld [vmem:[#allocation6 + $0x1d0] sm:$0xff]
        %v891 = vld [vmem:[#allocation6 + $0x1d8] sm:$0xff]
        %v892 = vld [vmem:[#allocation6 + $0x1e0] sm:$0xff]
        %v893 = vld [vmem:[#allocation6 + $0x1e8] sm:$0xff]
        %v894 = vld [vmem:[#allocation6 + $0x1f0] sm:$0xff]
        %v895 = vld [vmem:[#allocation6 + $0x1f8] sm:$0xff]
        %v896 = vld [vmem:[#allocation6 + $0x200] sm:$0xff]
        %v897 = vld [vmem:[#allocation6 + $0x208] sm:$0xff]
        %v898 = vld [vmem:[#allocation6 + $0x210] sm:$0xff]
        %v899 = vld [vmem:[#allocation6 + $0x218] sm:$0xff]
        %v900 = vld [vmem:[#allocation6 + $0x220] sm:$0xff]
        %v901 = vld [vmem:[#allocation6 + $0x228] sm:$0xff]
        %v902 = vld [vmem:[#allocation6 + $0x230] sm:$0xff]
        %v903 = vld [vmem:[#allocation6 + $0x238] sm:$0xff]
        %v904 = vld [vmem:[#allocation6 + $0x240] sm:$0xff]
        %v905 = vld [vmem:[#allocation6 + $0x248] sm:$0xff]
        %v906 = vld [vmem:[#allocation6 + $0x250] sm:$0xff]
        %v907 = vld [vmem:[#allocation6 + $0x258] sm:$0xff]
        %v908 = vld [vmem:[#allocation6 + $0x260] sm:$0xff]
        %v909 = vld [vmem:[#allocation6 + $0x268] sm:$0xff]
        %v910 = vld [vmem:[#allocation6 + $0x270] sm:$0xff]
        %v911 = vld [vmem:[#allocation6 + $0x278] sm:$0xff]
        %v912 = vld [vmem:[#allocation6 + $0x280] sm:$0xff]
        %v913 = vld [vmem:[#allocation6 + $0x288] sm:$0xff]
        %v914 = vld [vmem:[#allocation6 + $0x290] sm:$0xff]
        %v915 = vld [vmem:[#allocation6 + $0x298] sm:$0xff]
        %v916 = vld [vmem:[#allocation6 + $0x2a0] sm:$0xff]
        %v917 = vld [vmem:[#allocation6 + $0x2a8] sm:$0xff]
        %v918 = vld [vmem:[#allocation6 + $0x2b0] sm:$0xff]
        %v919 = vld [vmem:[#allocation6 + $0x2b8] sm:$0xff]
        %v920 = vld [vmem:[#allocation6 + $0x2c0] sm:$0xff]
        %v921 = vld [vmem:[#allocation6 + $0x2c8] sm:$0xff]
        %v922 = vld [vmem:[#allocation6 + $0x2d0] sm:$0xff]
        %v923 = vld [vmem:[#allocation6 + $0x2d8] sm:$0xff]
        %v924 = vld [vmem:[#allocation6 + $0x2e0] sm:$0xff]
        %v925 = vld [vmem:[#allocation6 + $0x2e8] sm:$0xff]
        %v926 = vld [vmem:[#allocation6 + $0x2f0] sm:$0xff]
        %v927 = vld [vmem:[#allocation6 + $0x2f8] sm:$0xff]
        %v928 = vld [vmem:[#allocation6 + $0x300] sm:$0xff]
        %v929 = vld [vmem:[#allocation6 + $0x308] sm:$0xff]
        %v930 = vld [vmem:[#allocation6 + $0x310] sm:$0xff]
        %v931 = vld [vmem:[#allocation6 + $0x318] sm:$0xff]
        %v932 = vld [vmem:[#allocation6 + $0x320] sm:$0xff]
        %v933 = vld [vmem:[#allocation6 + $0x328] sm:$0xff]
        %v934 = vld [vmem:[#allocation6 + $0x330] sm:$0xff]
        %v935 = vld [vmem:[#allocation6 + $0x338] sm:$0xff]
        %v936 = vld [vmem:[#allocation6 + $0x340] sm:$0xff]
        %v937 = vld [vmem:[#allocation6 + $0x348] sm:$0xff]
        %v938 = vld [vmem:[#allocation6 + $0x350] sm:$0xff]
        %v939 = vld [vmem:[#allocation6 + $0x358] sm:$0xff]
        %v940 = vld [vmem:[#allocation6 + $0x360] sm:$0xff]
        %v941 = vld [vmem:[#allocation6 + $0x368] sm:$0xff]
        %v942 = vld [vmem:[#allocation6 + $0x370] sm:$0xff]
        %v943 = vld [vmem:[#allocation6 + $0x378] sm:$0xff]
        %v944 = vld [vmem:[#allocation6 + $0x380] sm:$0xff]
        %v945 = vld [vmem:[#allocation6 + $0x388] sm:$0xff]
        %v946 = vld [vmem:[#allocation6 + $0x390] sm:$0xff]
        %v947 = vld [vmem:[#allocation6 + $0x398] sm:$0xff]
        %v948 = vld [vmem:[#allocation6 + $0x3a0] sm:$0xff]
        %v949 = vld [vmem:[#allocation6 + $0x3a8] sm:$0xff]
        %v950 = vld [vmem:[#allocation6 + $0x3b0] sm:$0xff]
        %v951 = vld [vmem:[#allocation6 + $0x3b8] sm:$0xff]
        %v952 = vld [vmem:[#allocation6 + $0x3c0] sm:$0xff]
        %v953 = vld [vmem:[#allocation6 + $0x3c8] sm:$0xff]
        %v954 = vld [vmem:[#allocation6 + $0x3d0] sm:$0xff]
        %v955 = vld [vmem:[#allocation6 + $0x3d8] sm:$0xff]
        %v956 = vld [vmem:[#allocation6 + $0x3e0] sm:$0xff]
        %v957 = vld [vmem:[#allocation6 + $0x3e8] sm:$0xff]
        %v958 = vld [vmem:[#allocation6 + $0x3f0] sm:$0xff]
        %v959 = vld [vmem:[#allocation6 + $0x3f8] sm:$0xff]
        %v960 = vld [vmem:[#allocation6 + $0x400] sm:$0xff]
        %v961 = vld [vmem:[#allocation6 + $0x408] sm:$0xff]
        %v962 = vld [vmem:[#allocation6 + $0x410] sm:$0xff]
        %v963 = vld [vmem:[#allocation6 + $0x418] sm:$0xff]
        %v964 = vld [vmem:[#allocation6 + $0x420] sm:$0xff]
        %v965 = vld [vmem:[#allocation6 + $0x428] sm:$0xff]
        %v966 = vld [vmem:[#allocation6 + $0x430] sm:$0xff]
        %v967 = vld [vmem:[#allocation6 + $0x438] sm:$0xff]
        %v968 = vld [vmem:[#allocation6 + $0x440] sm:$0xff]
        %v969 = vld [vmem:[#allocation6 + $0x448] sm:$0xff]
        %v970 = vld [vmem:[#allocation6 + $0x450] sm:$0xff]
        %v971 = vld [vmem:[#allocation6 + $0x458] sm:$0xff]
        %v972 = vld [vmem:[#allocation6 + $0x460] sm:$0xff]
        %v973 = vld [vmem:[#allocation6 + $0x468] sm:$0xff]
        %v974 = vld [vmem:[#allocation6 + $0x470] sm:$0xff]
        %v975 = vld [vmem:[#allocation6 + $0x478] sm:$0xff]
        %v976 = vld [vmem:[#allocation6 + $0x480] sm:$0xff]
        %v977 = vld [vmem:[#allocation6 + $0x488] sm:$0xff]
        %v978 = vld [vmem:[#allocation6 + $0x490] sm:$0xff]
        %v979 = vld [vmem:[#allocation6 + $0x498] sm:$0xff]
        %v980 = vld [vmem:[#allocation6 + $0x4a0] sm:$0xff]
        %v981 = vld [vmem:[#allocation6 + $0x4a8] sm:$0xff]
        %v982 = vld [vmem:[#allocation6 + $0x4b0] sm:$0xff]
        %v983 = vld [vmem:[#allocation6 + $0x4b8] sm:$0xff]
        %v984 = vld [vmem:[#allocation6 + $0x4c0] sm:$0xff]
        %v985 = vld [vmem:[#allocation6 + $0x4c8] sm:$0xff]
        %v986 = vld [vmem:[#allocation6 + $0x4d0] sm:$0xff]
        %v987 = vld [vmem:[#allocation6 + $0x4d8] sm:$0xff]
        %v988 = vld [vmem:[#allocation6 + $0x4e0] sm:$0xff]
        %v989 = vld [vmem:[#allocation6 + $0x4e8] sm:$0xff]
        %v990 = vld [vmem:[#allocation6 + $0x4f0] sm:$0xff]
        %v991 = vld [vmem:[#allocation6 + $0x4f8] sm:$0xff]
        %v992 = vld [vmem:[#allocation6 + $0x500] sm:$0xff]
        %v993 = vld [vmem:[#allocation6 + $0x508] sm:$0xff]
        %v994 = vld [vmem:[#allocation6 + $0x510] sm:$0xff]
        %v995 = vld [vmem:[#allocation6 + $0x518] sm:$0xff]
        %v996 = vld [vmem:[#allocation6 + $0x520] sm:$0xff]
        %v997 = vld [vmem:[#allocation6 + $0x528] sm:$0xff]
        %v998 = vld [vmem:[#allocation6 + $0x530] sm:$0xff]
        %v999 = vld [vmem:[#allocation6 + $0x538] sm:$0xff]
        %v1000 = vld [vmem:[#allocation6 + $0x540] sm:$0xff]
        %v1001 = vld [vmem:[#allocation6 + $0x548] sm:$0xff]
        %v1002 = vld [vmem:[#allocation6 + $0x550] sm:$0xff]
        %v1003 = vld [vmem:[#allocation6 + $0x558] sm:$0xff]
        %v1004 = vld [vmem:[#allocation6 + $0x560] sm:$0xff]
        %v1005 = vld [vmem:[#allocation6 + $0x568] sm:$0xff]
        %v1006 = vld [vmem:[#allocation6 + $0x570] sm:$0xff]
        %v1007 = vld [vmem:[#allocation6 + $0x578] sm:$0xff]
        %v1008 = vld [vmem:[#allocation6 + $0x580] sm:$0xff]
        %v1009 = vld [vmem:[#allocation6 + $0x588] sm:$0xff]
        %v1010 = vld [vmem:[#allocation6 + $0x590] sm:$0xff]
        %v1011 = vld [vmem:[#allocation6 + $0x598] sm:$0xff]
        %v1012 = vld [vmem:[#allocation6 + $0x5a0] sm:$0xff]
        %v1013 = vld [vmem:[#allocation6 + $0x5a8] sm:$0xff]
        %v1014 = vld [vmem:[#allocation6 + $0x5b0] sm:$0xff]
        %v1015 = vld [vmem:[#allocation6 + $0x5b8] sm:$0xff]
        %v1016 = vld [vmem:[#allocation6 + $0x5c0] sm:$0xff]
        %v1017 = vld [vmem:[#allocation6 + $0x5c8] sm:$0xff]
        %v1018 = vld [vmem:[#allocation6 + $0x5d0] sm:$0xff]
        %v1019 = vld [vmem:[#allocation6 + $0x5d8] sm:$0xff]
        %v1020 = vld [vmem:[#allocation6 + $0x5e0] sm:$0xff]
        %v1021 = vld [vmem:[#allocation6 + $0x5e8] sm:$0xff]
        %v1022 = vld [vmem:[#allocation6 + $0x5f0] sm:$0xff]
        %v1023 = vld [vmem:[#allocation6 + $0x5f8] sm:$0xff]
        %v1024 = vld [vmem:[#allocation6 + $0x600] sm:$0xff]
        %v1025 = vld [vmem:[#allocation6 + $0x608] sm:$0xff]
        %v1026 = vld [vmem:[#allocation6 + $0x610] sm:$0xff]
        %v1027 = vld [vmem:[#allocation6 + $0x618] sm:$0xff]
        %v1028 = vld [vmem:[#allocation6 + $0x620] sm:$0xff]
        %v1029 = vld [vmem:[#allocation6 + $0x628] sm:$0xff]
        %v1030 = vld [vmem:[#allocation6 + $0x630] sm:$0xff]
        %v1031 = vld [vmem:[#allocation6 + $0x638] sm:$0xff]
        %v1032 = vld [vmem:[#allocation6 + $0x640] sm:$0xff]
        %v1033 = vld [vmem:[#allocation6 + $0x648] sm:$0xff]
        %v1034 = vld [vmem:[#allocation6 + $0x650] sm:$0xff]
        %v1035 = vld [vmem:[#allocation6 + $0x658] sm:$0xff]
        %v1036 = vld [vmem:[#allocation6 + $0x660] sm:$0xff]
        %v1037 = vld [vmem:[#allocation6 + $0x668] sm:$0xff]
        %v1038 = vld [vmem:[#allocation6 + $0x670] sm:$0xff]
        %v1039 = vld [vmem:[#allocation6 + $0x678] sm:$0xff]
        %v1040 = vld [vmem:[#allocation6 + $0x680] sm:$0xff]
        %v1041 = vld [vmem:[#allocation6 + $0x688] sm:$0xff]
        %v1042 = vld [vmem:[#allocation6 + $0x690] sm:$0xff]
        %v1043 = vld [vmem:[#allocation6 + $0x698] sm:$0xff]
        %v1044 = vld [vmem:[#allocation6 + $0x6a0] sm:$0xff]
        %v1045 = vld [vmem:[#allocation6 + $0x6a8] sm:$0xff]
        %v1046 = vld [vmem:[#allocation6 + $0x6b0] sm:$0xff]
        %v1047 = vld [vmem:[#allocation6 + $0x6b8] sm:$0xff]
        %v1048 = vld [vmem:[#allocation6 + $0x6c0] sm:$0xff]
        %v1049 = vld [vmem:[#allocation6 + $0x6c8] sm:$0xff]
        %v1050 = vld [vmem:[#allocation6 + $0x6d0] sm:$0xff]
        %v1051 = vld [vmem:[#allocation6 + $0x6d8] sm:$0xff]
        %v1052 = vld [vmem:[#allocation6 + $0x6e0] sm:$0xff]
        %v1053 = vld [vmem:[#allocation6 + $0x6e8] sm:$0xff]
        %v1054 = vld [vmem:[#allocation6 + $0x6f0] sm:$0xff]
        %v1055 = vld [vmem:[#allocation6 + $0x6f8] sm:$0xff]
        %v1056 = vld [vmem:[#allocation6 + $0x700] sm:$0xff]
        %v1057 = vld [vmem:[#allocation6 + $0x708] sm:$0xff]
        %v1058 = vld [vmem:[#allocation6 + $0x710] sm:$0xff]
        %v1059 = vld [vmem:[#allocation6 + $0x718] sm:$0xff]
        %v1060 = vld [vmem:[#allocation6 + $0x720] sm:$0xff]
        %v1061 = vld [vmem:[#allocation6 + $0x728] sm:$0xff]
        %v1062 = vld [vmem:[#allocation6 + $0x730] sm:$0xff]
        %v1063 = vld [vmem:[#allocation6 + $0x738] sm:$0xff]
        %v1064 = vld [vmem:[#allocation6 + $0x740] sm:$0xff]
        %v1065 = vld [vmem:[#allocation6 + $0x748] sm:$0xff]
        %v1066 = vld [vmem:[#allocation6 + $0x750] sm:$0xff]
        %v1067 = vld [vmem:[#allocation6 + $0x758] sm:$0xff]
        %v1068 = vld [vmem:[#allocation6 + $0x760] sm:$0xff]
        %v1069 = vld [vmem:[#allocation6 + $0x768] sm:$0xff]
        %v1070 = vld [vmem:[#allocation6 + $0x770] sm:$0xff]
        %v1071 = vld [vmem:[#allocation6 + $0x778] sm:$0xff]
        %v1072 = vld [vmem:[#allocation6 + $0x780] sm:$0xff]
        %v1073 = vld [vmem:[#allocation6 + $0x788] sm:$0xff]
        %v1074 = vld [vmem:[#allocation6 + $0x790] sm:$0xff]
        %v1075 = vld [vmem:[#allocation6 + $0x798] sm:$0xff]
        %v1076 = vld [vmem:[#allocation6 + $0x7a0] sm:$0xff]
        %v1077 = vld [vmem:[#allocation6 + $0x7a8] sm:$0xff]
        %v1078 = vld [vmem:[#allocation6 + $0x7b0] sm:$0xff]
        %v1079 = vld [vmem:[#allocation6 + $0x7b8] sm:$0xff]
        %v1080 = vld [vmem:[#allocation6 + $0x7c0] sm:$0xff]
        %v1081 = vld [vmem:[#allocation6 + $0x7c8] sm:$0xff]
        %v1082 = vld [vmem:[#allocation6 + $0x7d0] sm:$0xff]
        %v1083 = vld [vmem:[#allocation6 + $0x7d8] sm:$0xff]
        %v1084 = vld [vmem:[#allocation6 + $0x7e0] sm:$0xff]
        %v1085 = vld [vmem:[#allocation6 + $0x7e8] sm:$0xff]
        %v1086 = vld [vmem:[#allocation6 + $0x7f0] sm:$0xff]
        %v1087 = vld [vmem:[#allocation6 + $0x7f8] sm:$0xff]
        %v1090 = vunpack.c.l.b16 %v318
        %v1091 = vunpack.c.h.b16 %v318
        %v1092 = vunpack.c.l.b16 %v319
        %v1093 = vunpack.c.h.b16 %v319
        %v1094 = vpack.c.b16 %v1090, %v1090
        %v1095 = vpack.c.b16 %v1091, %v1091
        %v1096 = vpack.c.b16 %v1092, %v1092
        %v1097 = vpack.c.b16 %v1093, %v1093
        %v1358 = vunpack.c.l.b16 %v576
        %v1359 = vunpack.c.h.b16 %v576
        %v1360 = vunpack.c.l.b16 %v577
        %v1361 = vunpack.c.h.b16 %v577
        %v1362 = vunpack.c.l.b16 %v578
        %v1363 = vunpack.c.h.b16 %v578
        %v1364 = vunpack.c.l.b16 %v579
        %v1365 = vunpack.c.h.b16 %v579
        %v1366 = vunpack.c.l.b16 %v580
        %v1367 = vunpack.c.h.b16 %v580
        %v1368 = vunpack.c.l.b16 %v581
        %v1369 = vunpack.c.h.b16 %v581
        %v1370 = vunpack.c.l.b16 %v582
        %v1371 = vunpack.c.h.b16 %v582
        %v1372 = vunpack.c.l.b16 %v583
        %v1373 = vunpack.c.h.b16 %v583
        %v1374 = vunpack.c.l.b16 %v584
        %v1375 = vunpack.c.h.b16 %v584
        %v1376 = vunpack.c.l.b16 %v585
        %v1377 = vunpack.c.h.b16 %v585
        %v1378 = vunpack.c.l.b16 %v586
        %v1379 = vunpack.c.h.b16 %v586
        %v1380 = vunpack.c.l.b16 %v587
        %v1381 = vunpack.c.h.b16 %v587
        %v1382 = vunpack.c.l.b16 %v588
        %v1383 = vunpack.c.h.b16 %v588
        %v1384 = vunpack.c.l.b16 %v589
        %v1385 = vunpack.c.h.b16 %v589
        %v1386 = vunpack.c.l.b16 %v590
        %v1387 = vunpack.c.h.b16 %v590
        %v1388 = vunpack.c.l.b16 %v591
        %v1389 = vunpack.c.h.b16 %v591
        %v1390 = vunpack.c.l.b16 %v592
        %v1391 = vunpack.c.h.b16 %v592
        %v1392 = vunpack.c.l.b16 %v593
        %v1393 = vunpack.c.h.b16 %v593
        %v1394 = vunpack.c.l.b16 %v594
        %v1395 = vunpack.c.h.b16 %v594
        %v1396 = vunpack.c.l.b16 %v595
        %v1397 = vunpack.c.h.b16 %v595
        %v1398 = vunpack.c.l.b16 %v596
        %v1399 = vunpack.c.h.b16 %v596
        %v1400 = vunpack.c.l.b16 %v597
        %v1401 = vunpack.c.h.b16 %v597
        %v1402 = vunpack.c.l.b16 %v598
        %v1403 = vunpack.c.h.b16 %v598
        %v1404 = vunpack.c.l.b16 %v599
        %v1405 = vunpack.c.h.b16 %v599
        %v1406 = vunpack.c.l.b16 %v600
        %v1407 = vunpack.c.h.b16 %v600
        %v1408 = vunpack.c.l.b16 %v601
        %v1409 = vunpack.c.h.b16 %v601
        %v1410 = vunpack.c.l.b16 %v602
        %v1411 = vunpack.c.h.b16 %v602
        %v1412 = vunpack.c.l.b16 %v603
        %v1413 = vunpack.c.h.b16 %v603
        %v1414 = vunpack.c.l.b16 %v604
        %v1415 = vunpack.c.h.b16 %v604
        %v1416 = vunpack.c.l.b16 %v605
        %v1417 = vunpack.c.h.b16 %v605
        %v1418 = vunpack.c.l.b16 %v606
        %v1419 = vunpack.c.h.b16 %v606
        %v1420 = vunpack.c.l.b16 %v607
        %v1421 = vunpack.c.h.b16 %v607
        %v1422 = vunpack.c.l.b16 %v608
        %v1423 = vunpack.c.h.b16 %v608
        %v1424 = vunpack.c.l.b16 %v609
        %v1425 = vunpack.c.h.b16 %v609
        %v1426 = vunpack.c.l.b16 %v610
        %v1427 = vunpack.c.h.b16 %v610
        %v1428 = vunpack.c.l.b16 %v611
        %v1429 = vunpack.c.h.b16 %v611
        %v1430 = vunpack.c.l.b16 %v612
        %v1431 = vunpack.c.h.b16 %v612
        %v1432 = vunpack.c.l.b16 %v613
        %v1433 = vunpack.c.h.b16 %v613
        %v1434 = vunpack.c.l.b16 %v614
        %v1435 = vunpack.c.h.b16 %v614
        %v1436 = vunpack.c.l.b16 %v615
        %v1437 = vunpack.c.h.b16 %v615
        %v1438 = vunpack.c.l.b16 %v616
        %v1439 = vunpack.c.h.b16 %v616
        %v1440 = vunpack.c.l.b16 %v617
        %v1441 = vunpack.c.h.b16 %v617
        %v1442 = vunpack.c.l.b16 %v618
        %v1443 = vunpack.c.h.b16 %v618
        %v1444 = vunpack.c.l.b16 %v619
        %v1445 = vunpack.c.h.b16 %v619
        %v1446 = vunpack.c.l.b16 %v620
        %v1447 = vunpack.c.h.b16 %v620
        %v1448 = vunpack.c.l.b16 %v621
        %v1449 = vunpack.c.h.b16 %v621
        %v1450 = vunpack.c.l.b16 %v622
        %v1451 = vunpack.c.h.b16 %v622
        %v1452 = vunpack.c.l.b16 %v623
        %v1453 = vunpack.c.h.b16 %v623
        %v1454 = vunpack.c.l.b16 %v624
        %v1455 = vunpack.c.h.b16 %v624
        %v1456 = vunpack.c.l.b16 %v625
        %v1457 = vunpack.c.h.b16 %v625
        %v1458 = vunpack.c.l.b16 %v626
        %v1459 = vunpack.c.h.b16 %v626
        %v1460 = vunpack.c.l.b16 %v627
        %v1461 = vunpack.c.h.b16 %v627
        %v1462 = vunpack.c.l.b16 %v628
        %v1463 = vunpack.c.h.b16 %v628
        %v1464 = vunpack.c.l.b16 %v629
        %v1465 = vunpack.c.h.b16 %v629
        %v1466 = vunpack.c.l.b16 %v630
        %v1467 = vunpack.c.h.b16 %v630
        %v1468 = vunpack.c.l.b16 %v631
        %v1469 = vunpack.c.h.b16 %v631
        %v1470 = vunpack.c.l.b16 %v632
        %v1471 = vunpack.c.h.b16 %v632
        %v1472 = vunpack.c.l.b16 %v633
        %v1473 = vunpack.c.h.b16 %v633
        %v1474 = vunpack.c.l.b16 %v634
        %v1475 = vunpack.c.h.b16 %v634
        %v1476 = vunpack.c.l.b16 %v635
        %v1477 = vunpack.c.h.b16 %v635
        %v1478 = vunpack.c.l.b16 %v636
        %v1479 = vunpack.c.h.b16 %v636
        %v1480 = vunpack.c.l.b16 %v637
        %v1481 = vunpack.c.h.b16 %v637
        %v1482 = vunpack.c.l.b16 %v638
        %v1483 = vunpack.c.h.b16 %v638
        %v1484 = vunpack.c.l.b16 %v639
        %v1485 = vunpack.c.h.b16 %v639
        %v1486 = vunpack.c.l.b16 %v640
        %v1487 = vunpack.c.h.b16 %v640
        %v1488 = vunpack.c.l.b16 %v641
        %v1489 = vunpack.c.h.b16 %v641
        %v1490 = vunpack.c.l.b16 %v642
        %v1491 = vunpack.c.h.b16 %v642
        %v1492 = vunpack.c.l.b16 %v643
        %v1493 = vunpack.c.h.b16 %v643
        %v1494 = vunpack.c.l.b16 %v644
        %v1495 = vunpack.c.h.b16 %v644
        %v1496 = vunpack.c.l.b16 %v645
        %v1497 = vunpack.c.h.b16 %v645
        %v1498 = vunpack.c.l.b16 %v646
        %v1499 = vunpack.c.h.b16 %v646
        %v1500 = vunpack.c.l.b16 %v647
        %v1501 = vunpack.c.h.b16 %v647
        %v1502 = vunpack.c.l.b16 %v648
        %v1503 = vunpack.c.h.b16 %v648
        %v1504 = vunpack.c.l.b16 %v649
        %v1505 = vunpack.c.h.b16 %v649
        %v1506 = vunpack.c.l.b16 %v650
        %v1507 = vunpack.c.h.b16 %v650
        %v1508 = vunpack.c.l.b16 %v651
        %v1509 = vunpack.c.h.b16 %v651
        %v1510 = vunpack.c.l.b16 %v652
        %v1511 = vunpack.c.h.b16 %v652
        %v1512 = vunpack.c.l.b16 %v653
        %v1513 = vunpack.c.h.b16 %v653
        %v1514 = vunpack.c.l.b16 %v654
        %v1515 = vunpack.c.h.b16 %v654
        %v1516 = vunpack.c.l.b16 %v655
        %v1517 = vunpack.c.h.b16 %v655
        %v1518 = vunpack.c.l.b16 %v656
        %v1519 = vunpack.c.h.b16 %v656
        %v1520 = vunpack.c.l.b16 %v657
        %v1521 = vunpack.c.h.b16 %v657
        %v1522 = vunpack.c.l.b16 %v658
        %v1523 = vunpack.c.h.b16 %v658
        %v1524 = vunpack.c.l.b16 %v659
        %v1525 = vunpack.c.h.b16 %v659
        %v1526 = vunpack.c.l.b16 %v660
        %v1527 = vunpack.c.h.b16 %v660
        %v1528 = vunpack.c.l.b16 %v661
        %v1529 = vunpack.c.h.b16 %v661
        %v1530 = vunpack.c.l.b16 %v662
        %v1531 = vunpack.c.h.b16 %v662
        %v1532 = vunpack.c.l.b16 %v663
        %v1533 = vunpack.c.h.b16 %v663
        %v1534 = vunpack.c.l.b16 %v664
        %v1535 = vunpack.c.h.b16 %v664
        %v1536 = vunpack.c.l.b16 %v665
        %v1537 = vunpack.c.h.b16 %v665
        %v1538 = vunpack.c.l.b16 %v666
        %v1539 = vunpack.c.h.b16 %v666
        %v1540 = vunpack.c.l.b16 %v667
        %v1541 = vunpack.c.h.b16 %v667
        %v1542 = vunpack.c.l.b16 %v668
        %v1543 = vunpack.c.h.b16 %v668
        %v1544 = vunpack.c.l.b16 %v669
        %v1545 = vunpack.c.h.b16 %v669
        %v1546 = vunpack.c.l.b16 %v670
        %v1547 = vunpack.c.h.b16 %v670
        %v1548 = vunpack.c.l.b16 %v671
        %v1549 = vunpack.c.h.b16 %v671
        %v1550 = vunpack.c.l.b16 %v672
        %v1551 = vunpack.c.h.b16 %v672
        %v1552 = vunpack.c.l.b16 %v673
        %v1553 = vunpack.c.h.b16 %v673
        %v1554 = vunpack.c.l.b16 %v674
        %v1555 = vunpack.c.h.b16 %v674
        %v1556 = vunpack.c.l.b16 %v675
        %v1557 = vunpack.c.h.b16 %v675
        %v1558 = vunpack.c.l.b16 %v676
        %v1559 = vunpack.c.h.b16 %v676
        %v1560 = vunpack.c.l.b16 %v677
        %v1561 = vunpack.c.h.b16 %v677
        %v1562 = vunpack.c.l.b16 %v678
        %v1563 = vunpack.c.h.b16 %v678
        %v1564 = vunpack.c.l.b16 %v679
        %v1565 = vunpack.c.h.b16 %v679
        %v1566 = vunpack.c.l.b16 %v680
        %v1567 = vunpack.c.h.b16 %v680
        %v1568 = vunpack.c.l.b16 %v681
        %v1569 = vunpack.c.h.b16 %v681
        %v1570 = vunpack.c.l.b16 %v682
        %v1571 = vunpack.c.h.b16 %v682
        %v1572 = vunpack.c.l.b16 %v683
        %v1573 = vunpack.c.h.b16 %v683
        %v1574 = vunpack.c.l.b16 %v684
        %v1575 = vunpack.c.h.b16 %v684
        %v1576 = vunpack.c.l.b16 %v685
        %v1577 = vunpack.c.h.b16 %v685
        %v1578 = vunpack.c.l.b16 %v686
        %v1579 = vunpack.c.h.b16 %v686
        %v1580 = vunpack.c.l.b16 %v687
        %v1581 = vunpack.c.h.b16 %v687
        %v1582 = vunpack.c.l.b16 %v688
        %v1583 = vunpack.c.h.b16 %v688
        %v1584 = vunpack.c.l.b16 %v689
        %v1585 = vunpack.c.h.b16 %v689
        %v1586 = vunpack.c.l.b16 %v690
        %v1587 = vunpack.c.h.b16 %v690
        %v1588 = vunpack.c.l.b16 %v691
        %v1589 = vunpack.c.h.b16 %v691
        %v1590 = vunpack.c.l.b16 %v692
        %v1591 = vunpack.c.h.b16 %v692
        %v1592 = vunpack.c.l.b16 %v693
        %v1593 = vunpack.c.h.b16 %v693
        %v1594 = vunpack.c.l.b16 %v694
        %v1595 = vunpack.c.h.b16 %v694
        %v1596 = vunpack.c.l.b16 %v695
        %v1597 = vunpack.c.h.b16 %v695
        %v1598 = vunpack.c.l.b16 %v696
        %v1599 = vunpack.c.h.b16 %v696
        %v1600 = vunpack.c.l.b16 %v697
        %v1601 = vunpack.c.h.b16 %v697
        %v1602 = vunpack.c.l.b16 %v698
        %v1603 = vunpack.c.h.b16 %v698
        %v1604 = vunpack.c.l.b16 %v699
        %v1605 = vunpack.c.h.b16 %v699
        %v1606 = vunpack.c.l.b16 %v700
        %v1607 = vunpack.c.h.b16 %v700
        %v1608 = vunpack.c.l.b16 %v701
        %v1609 = vunpack.c.h.b16 %v701
        %v1610 = vunpack.c.l.b16 %v702
        %v1611 = vunpack.c.h.b16 %v702
        %v1612 = vunpack.c.l.b16 %v703
        %v1613 = vunpack.c.h.b16 %v703
        %v1614 = vunpack.c.l.b16 %v704
        %v1615 = vunpack.c.h.b16 %v704
        %v1616 = vunpack.c.l.b16 %v705
        %v1617 = vunpack.c.h.b16 %v705
        %v1618 = vunpack.c.l.b16 %v706
        %v1619 = vunpack.c.h.b16 %v706
        %v1620 = vunpack.c.l.b16 %v707
        %v1621 = vunpack.c.h.b16 %v707
        %v1622 = vunpack.c.l.b16 %v708
        %v1623 = vunpack.c.h.b16 %v708
        %v1624 = vunpack.c.l.b16 %v709
        %v1625 = vunpack.c.h.b16 %v709
        %v1626 = vunpack.c.l.b16 %v710
        %v1627 = vunpack.c.h.b16 %v710
        %v1628 = vunpack.c.l.b16 %v711
        %v1629 = vunpack.c.h.b16 %v711
        %v1630 = vunpack.c.l.b16 %v712
        %v1631 = vunpack.c.h.b16 %v712
        %v1632 = vunpack.c.l.b16 %v713
        %v1633 = vunpack.c.h.b16 %v713
        %v1634 = vunpack.c.l.b16 %v714
        %v1635 = vunpack.c.h.b16 %v714
        %v1636 = vunpack.c.l.b16 %v715
        %v1637 = vunpack.c.h.b16 %v715
        %v1638 = vunpack.c.l.b16 %v716
        %v1639 = vunpack.c.h.b16 %v716
        %v1640 = vunpack.c.l.b16 %v717
        %v1641 = vunpack.c.h.b16 %v717
        %v1642 = vunpack.c.l.b16 %v718
        %v1643 = vunpack.c.h.b16 %v718
        %v1644 = vunpack.c.l.b16 %v719
        %v1645 = vunpack.c.h.b16 %v719
        %v1646 = vunpack.c.l.b16 %v720
        %v1647 = vunpack.c.h.b16 %v720
        %v1648 = vunpack.c.l.b16 %v721
        %v1649 = vunpack.c.h.b16 %v721
        %v1650 = vunpack.c.l.b16 %v722
        %v1651 = vunpack.c.h.b16 %v722
        %v1652 = vunpack.c.l.b16 %v723
        %v1653 = vunpack.c.h.b16 %v723
        %v1654 = vunpack.c.l.b16 %v724
        %v1655 = vunpack.c.h.b16 %v724
        %v1656 = vunpack.c.l.b16 %v725
        %v1657 = vunpack.c.h.b16 %v725
        %v1658 = vunpack.c.l.b16 %v726
        %v1659 = vunpack.c.h.b16 %v726
        %v1660 = vunpack.c.l.b16 %v727
        %v1661 = vunpack.c.h.b16 %v727
        %v1662 = vunpack.c.l.b16 %v728
        %v1663 = vunpack.c.h.b16 %v728
        %v1664 = vunpack.c.l.b16 %v729
        %v1665 = vunpack.c.h.b16 %v729
        %v1666 = vunpack.c.l.b16 %v730
        %v1667 = vunpack.c.h.b16 %v730
        %v1668 = vunpack.c.l.b16 %v731
        %v1669 = vunpack.c.h.b16 %v731
        %v1670 = vunpack.c.l.b16 %v732
        %v1671 = vunpack.c.h.b16 %v732
        %v1672 = vunpack.c.l.b16 %v733
        %v1673 = vunpack.c.h.b16 %v733
        %v1674 = vunpack.c.l.b16 %v734
        %v1675 = vunpack.c.h.b16 %v734
        %v1676 = vunpack.c.l.b16 %v735
        %v1677 = vunpack.c.h.b16 %v735
        %v1678 = vunpack.c.l.b16 %v736
        %v1679 = vunpack.c.h.b16 %v736
        %v1680 = vunpack.c.l.b16 %v737
        %v1681 = vunpack.c.h.b16 %v737
        %v1682 = vunpack.c.l.b16 %v738
        %v1683 = vunpack.c.h.b16 %v738
        %v1684 = vunpack.c.l.b16 %v739
        %v1685 = vunpack.c.h.b16 %v739
        %v1686 = vunpack.c.l.b16 %v740
        %v1687 = vunpack.c.h.b16 %v740
        %v1688 = vunpack.c.l.b16 %v741
        %v1689 = vunpack.c.h.b16 %v741
        %v1690 = vunpack.c.l.b16 %v742
        %v1691 = vunpack.c.h.b16 %v742
        %v1692 = vunpack.c.l.b16 %v743
        %v1693 = vunpack.c.h.b16 %v743
        %v1694 = vunpack.c.l.b16 %v744
        %v1695 = vunpack.c.h.b16 %v744
        %v1696 = vunpack.c.l.b16 %v745
        %v1697 = vunpack.c.h.b16 %v745
        %v1698 = vunpack.c.l.b16 %v746
        %v1699 = vunpack.c.h.b16 %v746
        %v1700 = vunpack.c.l.b16 %v747
        %v1701 = vunpack.c.h.b16 %v747
        %v1702 = vunpack.c.l.b16 %v748
        %v1703 = vunpack.c.h.b16 %v748
        %v1704 = vunpack.c.l.b16 %v749
        %v1705 = vunpack.c.h.b16 %v749
        %v1706 = vunpack.c.l.b16 %v750
        %v1707 = vunpack.c.h.b16 %v750
        %v1708 = vunpack.c.l.b16 %v751
        %v1709 = vunpack.c.h.b16 %v751
        %v1710 = vunpack.c.l.b16 %v752
        %v1711 = vunpack.c.h.b16 %v752
        %v1712 = vunpack.c.l.b16 %v753
        %v1713 = vunpack.c.h.b16 %v753
        %v1714 = vunpack.c.l.b16 %v754
        %v1715 = vunpack.c.h.b16 %v754
        %v1716 = vunpack.c.l.b16 %v755
        %v1717 = vunpack.c.h.b16 %v755
        %v1718 = vunpack.c.l.b16 %v756
        %v1719 = vunpack.c.h.b16 %v756
        %v1720 = vunpack.c.l.b16 %v757
        %v1721 = vunpack.c.h.b16 %v757
        %v1722 = vunpack.c.l.b16 %v758
        %v1723 = vunpack.c.h.b16 %v758
        %v1724 = vunpack.c.l.b16 %v759
        %v1725 = vunpack.c.h.b16 %v759
        %v1726 = vunpack.c.l.b16 %v760
        %v1727 = vunpack.c.h.b16 %v760
        %v1728 = vunpack.c.l.b16 %v761
        %v1729 = vunpack.c.h.b16 %v761
        %v1730 = vunpack.c.l.b16 %v762
        %v1731 = vunpack.c.h.b16 %v762
        %v1732 = vunpack.c.l.b16 %v763
        %v1733 = vunpack.c.h.b16 %v763
        %v1734 = vunpack.c.l.b16 %v764
        %v1735 = vunpack.c.h.b16 %v764
        %v1736 = vunpack.c.l.b16 %v765
        %v1737 = vunpack.c.h.b16 %v765
        %v1738 = vunpack.c.l.b16 %v766
        %v1739 = vunpack.c.h.b16 %v766
        %v1740 = vunpack.c.l.b16 %v767
        %v1741 = vunpack.c.h.b16 %v767
        %v1742 = vunpack.c.l.b16 %v768
        %v1743 = vunpack.c.h.b16 %v768
        %v1744 = vunpack.c.l.b16 %v769
        %v1745 = vunpack.c.h.b16 %v769
        %v1746 = vunpack.c.l.b16 %v770
        %v1747 = vunpack.c.h.b16 %v770
        %v1748 = vunpack.c.l.b16 %v771
        %v1749 = vunpack.c.h.b16 %v771
        %v1750 = vunpack.c.l.b16 %v772
        %v1751 = vunpack.c.h.b16 %v772
        %v1752 = vunpack.c.l.b16 %v773
        %v1753 = vunpack.c.h.b16 %v773
        %v1754 = vunpack.c.l.b16 %v774
        %v1755 = vunpack.c.h.b16 %v774
        %v1756 = vunpack.c.l.b16 %v775
        %v1757 = vunpack.c.h.b16 %v775
        %v1758 = vunpack.c.l.b16 %v776
        %v1759 = vunpack.c.h.b16 %v776
        %v1760 = vunpack.c.l.b16 %v777
        %v1761 = vunpack.c.h.b16 %v777
        %v1762 = vunpack.c.l.b16 %v778
        %v1763 = vunpack.c.h.b16 %v778
        %v1764 = vunpack.c.l.b16 %v779
        %v1765 = vunpack.c.h.b16 %v779
        %v1766 = vunpack.c.l.b16 %v780
        %v1767 = vunpack.c.h.b16 %v780
        %v1768 = vunpack.c.l.b16 %v781
        %v1769 = vunpack.c.h.b16 %v781
        %v1770 = vunpack.c.l.b16 %v782
        %v1771 = vunpack.c.h.b16 %v782
        %v1772 = vunpack.c.l.b16 %v783
        %v1773 = vunpack.c.h.b16 %v783
        %v1774 = vunpack.c.l.b16 %v784
        %v1775 = vunpack.c.h.b16 %v784
        %v1776 = vunpack.c.l.b16 %v785
        %v1777 = vunpack.c.h.b16 %v785
        %v1778 = vunpack.c.l.b16 %v786
        %v1779 = vunpack.c.h.b16 %v786
        %v1780 = vunpack.c.l.b16 %v787
        %v1781 = vunpack.c.h.b16 %v787
        %v1782 = vunpack.c.l.b16 %v788
        %v1783 = vunpack.c.h.b16 %v788
        %v1784 = vunpack.c.l.b16 %v789
        %v1785 = vunpack.c.h.b16 %v789
        %v1786 = vunpack.c.l.b16 %v790
        %v1787 = vunpack.c.h.b16 %v790
        %v1788 = vunpack.c.l.b16 %v791
        %v1789 = vunpack.c.h.b16 %v791
        %v1790 = vunpack.c.l.b16 %v792
        %v1791 = vunpack.c.h.b16 %v792
        %v1792 = vunpack.c.l.b16 %v793
        %v1793 = vunpack.c.h.b16 %v793
        %v1794 = vunpack.c.l.b16 %v794
        %v1795 = vunpack.c.h.b16 %v794
        %v1796 = vunpack.c.l.b16 %v795
        %v1797 = vunpack.c.h.b16 %v795
        %v1798 = vunpack.c.l.b16 %v796
        %v1799 = vunpack.c.h.b16 %v796
        %v1800 = vunpack.c.l.b16 %v797
        %v1801 = vunpack.c.h.b16 %v797
        %v1802 = vunpack.c.l.b16 %v798
        %v1803 = vunpack.c.h.b16 %v798
        %v1804 = vunpack.c.l.b16 %v799
        %v1805 = vunpack.c.h.b16 %v799
        %v1806 = vunpack.c.l.b16 %v800
        %v1807 = vunpack.c.h.b16 %v800
        %v1808 = vunpack.c.l.b16 %v801
        %v1809 = vunpack.c.h.b16 %v801
        %v1810 = vunpack.c.l.b16 %v802
        %v1811 = vunpack.c.h.b16 %v802
        %v1812 = vunpack.c.l.b16 %v803
        %v1813 = vunpack.c.h.b16 %v803
        %v1814 = vunpack.c.l.b16 %v804
        %v1815 = vunpack.c.h.b16 %v804
        %v1816 = vunpack.c.l.b16 %v805
        %v1817 = vunpack.c.h.b16 %v805
        %v1818 = vunpack.c.l.b16 %v806
        %v1819 = vunpack.c.h.b16 %v806
        %v1820 = vunpack.c.l.b16 %v807
        %v1821 = vunpack.c.h.b16 %v807
        %v1822 = vunpack.c.l.b16 %v808
        %v1823 = vunpack.c.h.b16 %v808
        %v1824 = vunpack.c.l.b16 %v809
        %v1825 = vunpack.c.h.b16 %v809
        %v1826 = vunpack.c.l.b16 %v810
        %v1827 = vunpack.c.h.b16 %v810
        %v1828 = vunpack.c.l.b16 %v811
        %v1829 = vunpack.c.h.b16 %v811
        %v1830 = vunpack.c.l.b16 %v812
        %v1831 = vunpack.c.h.b16 %v812
        %v1832 = vunpack.c.l.b16 %v813
        %v1833 = vunpack.c.h.b16 %v813
        %v1834 = vunpack.c.l.b16 %v814
        %v1835 = vunpack.c.h.b16 %v814
        %v1836 = vunpack.c.l.b16 %v815
        %v1837 = vunpack.c.h.b16 %v815
        %v1838 = vunpack.c.l.b16 %v816
        %v1839 = vunpack.c.h.b16 %v816
        %v1840 = vunpack.c.l.b16 %v817
        %v1841 = vunpack.c.h.b16 %v817
        %v1842 = vunpack.c.l.b16 %v818
        %v1843 = vunpack.c.h.b16 %v818
        %v1844 = vunpack.c.l.b16 %v819
        %v1845 = vunpack.c.h.b16 %v819
        %v1846 = vunpack.c.l.b16 %v820
        %v1847 = vunpack.c.h.b16 %v820
        %v1848 = vunpack.c.l.b16 %v821
        %v1849 = vunpack.c.h.b16 %v821
        %v1850 = vunpack.c.l.b16 %v822
        %v1851 = vunpack.c.h.b16 %v822
        %v1852 = vunpack.c.l.b16 %v823
        %v1853 = vunpack.c.h.b16 %v823
        %v1854 = vunpack.c.l.b16 %v824
        %v1855 = vunpack.c.h.b16 %v824
        %v1856 = vunpack.c.l.b16 %v825
        %v1857 = vunpack.c.h.b16 %v825
        %v1858 = vunpack.c.l.b16 %v826
        %v1859 = vunpack.c.h.b16 %v826
        %v1860 = vunpack.c.l.b16 %v827
        %v1861 = vunpack.c.h.b16 %v827
        %v1862 = vunpack.c.l.b16 %v828
        %v1863 = vunpack.c.h.b16 %v828
        %v1864 = vunpack.c.l.b16 %v829
        %v1865 = vunpack.c.h.b16 %v829
        %v1866 = vunpack.c.l.b16 %v830
        %v1867 = vunpack.c.h.b16 %v830
        %v1868 = vunpack.c.l.b16 %v831
        %v1869 = vunpack.c.h.b16 %v831
        %v1870 = vpack.c.b16 %v1366, %v1358
        %v1871 = vpack.c.b16 %v1367, %v1359
        %v1872 = vpack.c.b16 %v1368, %v1360
        %v1873 = vpack.c.b16 %v1369, %v1361
        %v1874 = vpack.c.b16 %v1370, %v1362
        %v1875 = vpack.c.b16 %v1371, %v1363
        %v1876 = vpack.c.b16 %v1372, %v1364
        %v1877 = vpack.c.b16 %v1373, %v1365
        %v1878 = vpack.c.b16 %v1382, %v1374
        %v1879 = vpack.c.b16 %v1383, %v1375
        %v1880 = vpack.c.b16 %v1384, %v1376
        %v1881 = vpack.c.b16 %v1385, %v1377
        %v1882 = vpack.c.b16 %v1386, %v1378
        %v1883 = vpack.c.b16 %v1387, %v1379
        %v1884 = vpack.c.b16 %v1388, %v1380
        %v1885 = vpack.c.b16 %v1389, %v1381
        %v1886 = vpack.c.b16 %v1398, %v1390
        %v1887 = vpack.c.b16 %v1399, %v1391
        %v1888 = vpack.c.b16 %v1400, %v1392
        %v1889 = vpack.c.b16 %v1401, %v1393
        %v1890 = vpack.c.b16 %v1402, %v1394
        %v1891 = vpack.c.b16 %v1403, %v1395
        %v1892 = vpack.c.b16 %v1404, %v1396
        %v1893 = vpack.c.b16 %v1405, %v1397
        %v1894 = vpack.c.b16 %v1414, %v1406
        %v1895 = vpack.c.b16 %v1415, %v1407
        %v1896 = vpack.c.b16 %v1416, %v1408
        %v1897 = vpack.c.b16 %v1417, %v1409
        %v1898 = vpack.c.b16 %v1418, %v1410
        %v1899 = vpack.c.b16 %v1419, %v1411
        %v1900 = vpack.c.b16 %v1420, %v1412
        %v1901 = vpack.c.b16 %v1421, %v1413
        %v1902 = vpack.c.b16 %v1430, %v1422
        %v1903 = vpack.c.b16 %v1431, %v1423
        %v1904 = vpack.c.b16 %v1432, %v1424
        %v1905 = vpack.c.b16 %v1433, %v1425
        %v1906 = vpack.c.b16 %v1434, %v1426
        %v1907 = vpack.c.b16 %v1435, %v1427
        %v1908 = vpack.c.b16 %v1436, %v1428
        %v1909 = vpack.c.b16 %v1437, %v1429
        %v1910 = vpack.c.b16 %v1446, %v1438
        %v1911 = vpack.c.b16 %v1447, %v1439
        %v1912 = vpack.c.b16 %v1448, %v1440
        %v1913 = vpack.c.b16 %v1449, %v1441
        %v1914 = vpack.c.b16 %v1450, %v1442
        %v1915 = vpack.c.b16 %v1451, %v1443
        %v1916 = vpack.c.b16 %v1452, %v1444
        %v1917 = vpack.c.b16 %v1453, %v1445
        %v1918 = vpack.c.b16 %v1462, %v1454
        %v1919 = vpack.c.b16 %v1463, %v1455
        %v1920 = vpack.c.b16 %v1464, %v1456
        %v1921 = vpack.c.b16 %v1465, %v1457
        %v1922 = vpack.c.b16 %v1466, %v1458
        %v1923 = vpack.c.b16 %v1467, %v1459
        %v1924 = vpack.c.b16 %v1468, %v1460
        %v1925 = vpack.c.b16 %v1469, %v1461
        %v1926 = vpack.c.b16 %v1478, %v1470
        %v1927 = vpack.c.b16 %v1479, %v1471
        %v1928 = vpack.c.b16 %v1480, %v1472
        %v1929 = vpack.c.b16 %v1481, %v1473
        %v1930 = vpack.c.b16 %v1482, %v1474
        %v1931 = vpack.c.b16 %v1483, %v1475
        %v1932 = vpack.c.b16 %v1484, %v1476
        %v1933 = vpack.c.b16 %v1485, %v1477
        %v1934 = vpack.c.b16 %v1494, %v1486
        %v1935 = vpack.c.b16 %v1495, %v1487
        %v1936 = vpack.c.b16 %v1496, %v1488
        %v1937 = vpack.c.b16 %v1497, %v1489
        %v1938 = vpack.c.b16 %v1498, %v1490
        %v1939 = vpack.c.b16 %v1499, %v1491
        %v1940 = vpack.c.b16 %v1500, %v1492
        %v1941 = vpack.c.b16 %v1501, %v1493
        %v1942 = vpack.c.b16 %v1510, %v1502
        %v1943 = vpack.c.b16 %v1511, %v1503
        %v1944 = vpack.c.b16 %v1512, %v1504
        %v1945 = vpack.c.b16 %v1513, %v1505
        %v1946 = vpack.c.b16 %v1514, %v1506
        %v1947 = vpack.c.b16 %v1515, %v1507
        %v1948 = vpack.c.b16 %v1516, %v1508
        %v1949 = vpack.c.b16 %v1517, %v1509
        %v1950 = vpack.c.b16 %v1526, %v1518
        %v1951 = vpack.c.b16 %v1527, %v1519
        %v1952 = vpack.c.b16 %v1528, %v1520
        %v1953 = vpack.c.b16 %v1529, %v1521
        %v1954 = vpack.c.b16 %v1530, %v1522
        %v1955 = vpack.c.b16 %v1531, %v1523
        %v1956 = vpack.c.b16 %v1532, %v1524
        %v1957 = vpack.c.b16 %v1533, %v1525
        %v1958 = vpack.c.b16 %v1542, %v1534
        %v1959 = vpack.c.b16 %v1543, %v1535
        %v1960 = vpack.c.b16 %v1544, %v1536
        %v1961 = vpack.c.b16 %v1545, %v1537
        %v1962 = vpack.c.b16 %v1546, %v1538
        %v1963 = vpack.c.b16 %v1547, %v1539
        %v1964 = vpack.c.b16 %v1548, %v1540
        %v1965 = vpack.c.b16 %v1549, %v1541
        %v1966 = vpack.c.b16 %v1558, %v1550
        %v1967 = vpack.c.b16 %v1559, %v1551
        %v1968 = vpack.c.b16 %v1560, %v1552
        %v1969 = vpack.c.b16 %v1561, %v1553
        %v1970 = vpack.c.b16 %v1562, %v1554
        %v1971 = vpack.c.b16 %v1563, %v1555
        %v1972 = vpack.c.b16 %v1564, %v1556
        %v1973 = vpack.c.b16 %v1565, %v1557
        %v1974 = vpack.c.b16 %v1574, %v1566
        %v1975 = vpack.c.b16 %v1575, %v1567
        %v1976 = vpack.c.b16 %v1576, %v1568
        %v1977 = vpack.c.b16 %v1577, %v1569
        %v1978 = vpack.c.b16 %v1578, %v1570
        %v1979 = vpack.c.b16 %v1579, %v1571
        %v1980 = vpack.c.b16 %v1580, %v1572
        %v1981 = vpack.c.b16 %v1581, %v1573
        %v1982 = vpack.c.b16 %v1590, %v1582
        %v1983 = vpack.c.b16 %v1591, %v1583
        %v1984 = vpack.c.b16 %v1592, %v1584
        %v1985 = vpack.c.b16 %v1593, %v1585
        %v1986 = vpack.c.b16 %v1594, %v1586
        %v1987 = vpack.c.b16 %v1595, %v1587
        %v1988 = vpack.c.b16 %v1596, %v1588
        %v1989 = vpack.c.b16 %v1597, %v1589
        %v1990 = vpack.c.b16 %v1606, %v1598
        %v1991 = vpack.c.b16 %v1607, %v1599
        %v1992 = vpack.c.b16 %v1608, %v1600
        %v1993 = vpack.c.b16 %v1609, %v1601
        %v1994 = vpack.c.b16 %v1610, %v1602
        %v1995 = vpack.c.b16 %v1611, %v1603
        %v1996 = vpack.c.b16 %v1612, %v1604
        %v1997 = vpack.c.b16 %v1613, %v1605
        %v1998 = vpack.c.b16 %v1622, %v1614
        %v1999 = vpack.c.b16 %v1623, %v1615
        %v2000 = vpack.c.b16 %v1624, %v1616
        %v2001 = vpack.c.b16 %v1625, %v1617
        %v2002 = vpack.c.b16 %v1626, %v1618
        %v2003 = vpack.c.b16 %v1627, %v1619
        %v2004 = vpack.c.b16 %v1628, %v1620
        %v2005 = vpack.c.b16 %v1629, %v1621
        %v2006 = vpack.c.b16 %v1638, %v1630
        %v2007 = vpack.c.b16 %v1639, %v1631
        %v2008 = vpack.c.b16 %v1640, %v1632
        %v2009 = vpack.c.b16 %v1641, %v1633
        %v2010 = vpack.c.b16 %v1642, %v1634
        %v2011 = vpack.c.b16 %v1643, %v1635
        %v2012 = vpack.c.b16 %v1644, %v1636
        %v2013 = vpack.c.b16 %v1645, %v1637
        %v2014 = vpack.c.b16 %v1654, %v1646
        %v2015 = vpack.c.b16 %v1655, %v1647
        %v2016 = vpack.c.b16 %v1656, %v1648
        %v2017 = vpack.c.b16 %v1657, %v1649
        %v2018 = vpack.c.b16 %v1658, %v1650
        %v2019 = vpack.c.b16 %v1659, %v1651
        %v2020 = vpack.c.b16 %v1660, %v1652
        %v2021 = vpack.c.b16 %v1661, %v1653
        %v2022 = vpack.c.b16 %v1670, %v1662
        %v2023 = vpack.c.b16 %v1671, %v1663
        %v2024 = vpack.c.b16 %v1672, %v1664
        %v2025 = vpack.c.b16 %v1673, %v1665
        %v2026 = vpack.c.b16 %v1674, %v1666
        %v2027 = vpack.c.b16 %v1675, %v1667
        %v2028 = vpack.c.b16 %v1676, %v1668
        %v2029 = vpack.c.b16 %v1677, %v1669
        %v2030 = vpack.c.b16 %v1686, %v1678
        %v2031 = vpack.c.b16 %v1687, %v1679
        %v2032 = vpack.c.b16 %v1688, %v1680
        %v2033 = vpack.c.b16 %v1689, %v1681
        %v2034 = vpack.c.b16 %v1690, %v1682
        %v2035 = vpack.c.b16 %v1691, %v1683
        %v2036 = vpack.c.b16 %v1692, %v1684
        %v2037 = vpack.c.b16 %v1693, %v1685
        %v2038 = vpack.c.b16 %v1702, %v1694
        %v2039 = vpack.c.b16 %v1703, %v1695
        %v2040 = vpack.c.b16 %v1704, %v1696
        %v2041 = vpack.c.b16 %v1705, %v1697
        %v2042 = vpack.c.b16 %v1706, %v1698
        %v2043 = vpack.c.b16 %v1707, %v1699
        %v2044 = vpack.c.b16 %v1708, %v1700
        %v2045 = vpack.c.b16 %v1709, %v1701
        %v2046 = vpack.c.b16 %v1718, %v1710
        %v2047 = vpack.c.b16 %v1719, %v1711
        %v2048 = vpack.c.b16 %v1720, %v1712
        %v2049 = vpack.c.b16 %v1721, %v1713
        %v2050 = vpack.c.b16 %v1722, %v1714
        %v2051 = vpack.c.b16 %v1723, %v1715
        %v2052 = vpack.c.b16 %v1724, %v1716
        %v2053 = vpack.c.b16 %v1725, %v1717
        %v2054 = vpack.c.b16 %v1734, %v1726
        %v2055 = vpack.c.b16 %v1735, %v1727
        %v2056 = vpack.c.b16 %v1736, %v1728
        %v2057 = vpack.c.b16 %v1737, %v1729
        %v2058 = vpack.c.b16 %v1738, %v1730
        %v2059 = vpack.c.b16 %v1739, %v1731
        %v2060 = vpack.c.b16 %v1740, %v1732
        %v2061 = vpack.c.b16 %v1741, %v1733
        %v2062 = vpack.c.b16 %v1750, %v1742
        %v2063 = vpack.c.b16 %v1751, %v1743
        %v2064 = vpack.c.b16 %v1752, %v1744
        %v2065 = vpack.c.b16 %v1753, %v1745
        %v2066 = vpack.c.b16 %v1754, %v1746
        %v2067 = vpack.c.b16 %v1755, %v1747
        %v2068 = vpack.c.b16 %v1756, %v1748
        %v2069 = vpack.c.b16 %v1757, %v1749
        %v2070 = vpack.c.b16 %v1766, %v1758
        %v2071 = vpack.c.b16 %v1767, %v1759
        %v2072 = vpack.c.b16 %v1768, %v1760
        %v2073 = vpack.c.b16 %v1769, %v1761
        %v2074 = vpack.c.b16 %v1770, %v1762
        %v2075 = vpack.c.b16 %v1771, %v1763
        %v2076 = vpack.c.b16 %v1772, %v1764
        %v2077 = vpack.c.b16 %v1773, %v1765
        %v2078 = vpack.c.b16 %v1782, %v1774
        %v2079 = vpack.c.b16 %v1783, %v1775
        %v2080 = vpack.c.b16 %v1784, %v1776
        %v2081 = vpack.c.b16 %v1785, %v1777
        %v2082 = vpack.c.b16 %v1786, %v1778
        %v2083 = vpack.c.b16 %v1787, %v1779
        %v2084 = vpack.c.b16 %v1788, %v1780
        %v2085 = vpack.c.b16 %v1789, %v1781
        %v2086 = vpack.c.b16 %v1798, %v1790
        %v2087 = vpack.c.b16 %v1799, %v1791
        %v2088 = vpack.c.b16 %v1800, %v1792
        %v2089 = vpack.c.b16 %v1801, %v1793
        %v2090 = vpack.c.b16 %v1802, %v1794
        %v2091 = vpack.c.b16 %v1803, %v1795
        %v2092 = vpack.c.b16 %v1804, %v1796
        %v2093 = vpack.c.b16 %v1805, %v1797
        %v2094 = vpack.c.b16 %v1814, %v1806
        %v2095 = vpack.c.b16 %v1815, %v1807
        %v2096 = vpack.c.b16 %v1816, %v1808
        %v2097 = vpack.c.b16 %v1817, %v1809
        %v2098 = vpack.c.b16 %v1818, %v1810
        %v2099 = vpack.c.b16 %v1819, %v1811
        %v2100 = vpack.c.b16 %v1820, %v1812
        %v2101 = vpack.c.b16 %v1821, %v1813
        %v2102 = vpack.c.b16 %v1830, %v1822
        %v2103 = vpack.c.b16 %v1831, %v1823
        %v2104 = vpack.c.b16 %v1832, %v1824
        %v2105 = vpack.c.b16 %v1833, %v1825
        %v2106 = vpack.c.b16 %v1834, %v1826
        %v2107 = vpack.c.b16 %v1835, %v1827
        %v2108 = vpack.c.b16 %v1836, %v1828
        %v2109 = vpack.c.b16 %v1837, %v1829
        %v2110 = vpack.c.b16 %v1846, %v1838
        %v2111 = vpack.c.b16 %v1847, %v1839
        %v2112 = vpack.c.b16 %v1848, %v1840
        %v2113 = vpack.c.b16 %v1849, %v1841
        %v2114 = vpack.c.b16 %v1850, %v1842
        %v2115 = vpack.c.b16 %v1851, %v1843
        %v2116 = vpack.c.b16 %v1852, %v1844
        %v2117 = vpack.c.b16 %v1853, %v1845
        %v2118 = vpack.c.b16 %v1862, %v1854
        %v2119 = vpack.c.b16 %v1863, %v1855
        %v2120 = vpack.c.b16 %v1864, %v1856
        %v2121 = vpack.c.b16 %v1865, %v1857
        %v2122 = vpack.c.b16 %v1866, %v1858
        %v2123 = vpack.c.b16 %v1867, %v1859
        %v2124 = vpack.c.b16 %v1868, %v1860
        %v2125 = vpack.c.b16 %v1869, %v1861
        %2382 = vmatprep.subr.bf16.mxu0 %v1927
        %2383 = vmatpush1.bf16.msra.mxu0 %v1926
        %2384 = vmatprep.subr.bf16.mxu0 %v1919
        %2385 = vmatpush1.bf16.msra.mxu0 %v1918
        %2386 = vmatprep.subr.bf16.mxu0 %v1911
        %2387 = vmatpush1.bf16.msra.mxu0 %v1910
        %2388 = vmatprep.subr.bf16.mxu0 %v1903
        %2389 = vmatpush1.bf16.msra.mxu0 %v1902
        %2390 = vmatprep.subr.bf16.mxu0 %v1895
        %2391 = vmatpush1.bf16.msra.mxu0 %v1894
        %2392 = vmatprep.subr.bf16.mxu0 %v1887
        %2393 = vmatpush1.bf16.msra.mxu0 %v1886
        %2394 = vmatprep.subr.bf16.mxu0 %v1879
        %2395 = vmatpush1.bf16.msra.mxu0 %v1878
        %2396 = vmatprep.subr.bf16.mxu0 %v1871
        %2397 = vmatpush1.bf16.msra.mxu0 %v1870
        %2398 = vmatprep.subr.bf16.mxu0 %v1991
        %2399 = vmatpush2.bf16.msra.mxu0 %v1990
        %2400 = vmatprep.subr.bf16.mxu0 %v1983
        %2401 = vmatpush2.bf16.msra.mxu0 %v1982
        %2402 = vmatprep.subr.bf16.mxu0 %v1975
        %2403 = vmatpush2.bf16.msra.mxu0 %v1974
        %2404 = vmatprep.subr.bf16.mxu0 %v1967
        %2405 = vmatpush2.bf16.msra.mxu0 %v1966
        %2406 = vmatprep.subr.bf16.mxu0 %v1959
        %2407 = vmatpush2.bf16.msra.mxu0 %v1958
        %2408 = vmatprep.subr.bf16.mxu0 %v1951
        %2409 = vmatpush2.bf16.msra.mxu0 %v1950
        %2410 = vmatprep.subr.bf16.mxu0 %v1943
        %2411 = vmatpush2.bf16.msra.mxu0 %v1942
        %2412 = vmatprep.subr.bf16.mxu0 %v1935
        %2413 = vmatpush2.bf16.msra.mxu0 %v1934
        %2414 = vmatprep.mubr.bf16.mxu0 %v1095
        %2415 = vmatmul.mubr.bf16.gmra.mxu0 %v1094
        %v2416 = vpop.f32.mrf.mxu0
        %v2417 = vadd.f32 0.0, %v2416
        %v2418 = vpop.f32.mrf.mxu0
        %v2419 = vadd.f32 0.0, %v2418
        %v2420 = vpop.f32.mrf.mxu0
        %v2421 = vpop.f32.mrf.mxu0
        %2422 = vdwg.mxu0
        %2423 = vmatprep.subr.bf16.mxu0 %v2055
        %2424 = vmatpush1.bf16.msra.mxu0 %v2054
        %2425 = vmatprep.subr.bf16.mxu0 %v2047
        %2426 = vmatpush1.bf16.msra.mxu0 %v2046
        %2427 = vmatprep.subr.bf16.mxu0 %v2039
        %2428 = vmatpush1.bf16.msra.mxu0 %v2038
        %2429 = vmatprep.subr.bf16.mxu0 %v2031
        %2430 = vmatpush1.bf16.msra.mxu0 %v2030
        %2431 = vmatprep.subr.bf16.mxu0 %v2023
        %2432 = vmatpush1.bf16.msra.mxu0 %v2022
        %2433 = vmatprep.subr.bf16.mxu0 %v2015
        %2434 = vmatpush1.bf16.msra.mxu0 %v2014
        %2435 = vmatprep.subr.bf16.mxu0 %v2007
        %2436 = vmatpush1.bf16.msra.mxu0 %v2006
        %2437 = vmatprep.subr.bf16.mxu0 %v1999
        %2438 = vmatpush1.bf16.msra.mxu0 %v1998
        %2439 = vmatprep.subr.bf16.mxu0 %v2119
        %2440 = vmatpush2.bf16.msra.mxu0 %v2118
        %2441 = vmatprep.subr.bf16.mxu0 %v2111
        %2442 = vmatpush2.bf16.msra.mxu0 %v2110
        %2443 = vmatprep.subr.bf16.mxu0 %v2103
        %2444 = vmatpush2.bf16.msra.mxu0 %v2102
        %2445 = vmatprep.subr.bf16.mxu0 %v2095
        %2446 = vmatpush2.bf16.msra.mxu0 %v2094
        %2447 = vmatprep.subr.bf16.mxu0 %v2087
        %2448 = vmatpush2.bf16.msra.mxu0 %v2086
        %2449 = vmatprep.subr.bf16.mxu0 %v2079
        %2450 = vmatpush2.bf16.msra.mxu0 %v2078
        %2451 = vmatprep.subr.bf16.mxu0 %v2071
        %2452 = vmatpush2.bf16.msra.mxu0 %v2070
        %2453 = vmatprep.subr.bf16.mxu0 %v2063
        %2454 = vmatpush2.bf16.msra.mxu0 %v2062
        %2455 = vmatprep.mubr.bf16.mxu0 %v1097
        %2456 = vmatmul.mubr.bf16.gmra.mxu0 %v1096
        %v2457 = vpop.f32.mrf.mxu0
        %v2458 = vadd.f32 %v2417, %v2457
        %v2459 = vpop.f32.mrf.mxu0
        %v2460 = vadd.f32 %v2419, %v2459
        %v2461 = vpop.f32.mrf.mxu0
        %v2462 = vpop.f32.mrf.mxu0
        %2463 = vdwg.mxu0
        %2464 = vmatprep.subr.bf16.mxu0 %v1929
        %2465 = vmatpush1.bf16.msra.mxu0 %v1928
        %2466 = vmatprep.subr.bf16.mxu0 %v1921
        %2467 = vmatpush1.bf16.msra.mxu0 %v1920
        %2468 = vmatprep.subr.bf16.mxu0 %v1913
        %2469 = vmatpush1.bf16.msra.mxu0 %v1912
        %2470 = vmatprep.subr.bf16.mxu0 %v1905
        %2471 = vmatpush1.bf16.msra.mxu0 %v1904
        %2472 = vmatprep.subr.bf16.mxu0 %v1897
        %2473 = vmatpush1.bf16.msra.mxu0 %v1896
        %2474 = vmatprep.subr.bf16.mxu0 %v1889
        %2475 = vmatpush1.bf16.msra.mxu0 %v1888
        %2476 = vmatprep.subr.bf16.mxu0 %v1881
        %2477 = vmatpush1.bf16.msra.mxu0 %v1880
        %2478 = vmatprep.subr.bf16.mxu0 %v1873
        %2479 = vmatpush1.bf16.msra.mxu0 %v1872
        %2480 = vmatprep.subr.bf16.mxu0 %v1993
        %2481 = vmatpush2.bf16.msra.mxu0 %v1992
        %2482 = vmatprep.subr.bf16.mxu0 %v1985
        %2483 = vmatpush2.bf16.msra.mxu0 %v1984
        %2484 = vmatprep.subr.bf16.mxu0 %v1977
        %2485 = vmatpush2.bf16.msra.mxu0 %v1976
        %2486 = vmatprep.subr.bf16.mxu0 %v1969
        %2487 = vmatpush2.bf16.msra.mxu0 %v1968
        %2488 = vmatprep.subr.bf16.mxu0 %v1961
        %2489 = vmatpush2.bf16.msra.mxu0 %v1960
        %2490 = vmatprep.subr.bf16.mxu0 %v1953
        %2491 = vmatpush2.bf16.msra.mxu0 %v1952
        %2492 = vmatprep.subr.bf16.mxu0 %v1945
        %2493 = vmatpush2.bf16.msra.mxu0 %v1944
        %2494 = vmatprep.subr.bf16.mxu0 %v1937
        %2495 = vmatpush2.bf16.msra.mxu0 %v1936
        %2496 = vmatprep.mubr.bf16.mxu0 %v1095
        %2497 = vmatmul.mubr.bf16.gmra.mxu0 %v1094
        %v2498 = vpop.f32.mrf.mxu0
        %v2499 = vadd.f32 0.0, %v2498
        %v2500 = vpop.f32.mrf.mxu0
        %v2501 = vadd.f32 0.0, %v2500
        %v2502 = vpop.f32.mrf.mxu0
        %v2503 = vpop.f32.mrf.mxu0
        %2504 = vdwg.mxu0
        %2505 = vmatprep.subr.bf16.mxu0 %v2057
        %2506 = vmatpush1.bf16.msra.mxu0 %v2056
        %2507 = vmatprep.subr.bf16.mxu0 %v2049
        %2508 = vmatpush1.bf16.msra.mxu0 %v2048
        %2509 = vmatprep.subr.bf16.mxu0 %v2041
        %2510 = vmatpush1.bf16.msra.mxu0 %v2040
        %2511 = vmatprep.subr.bf16.mxu0 %v2033
        %2512 = vmatpush1.bf16.msra.mxu0 %v2032
        %2513 = vmatprep.subr.bf16.mxu0 %v2025
        %2514 = vmatpush1.bf16.msra.mxu0 %v2024
        %2515 = vmatprep.subr.bf16.mxu0 %v2017
        %2516 = vmatpush1.bf16.msra.mxu0 %v2016
        %2517 = vmatprep.subr.bf16.mxu0 %v2009
        %2518 = vmatpush1.bf16.msra.mxu0 %v2008
        %2519 = vmatprep.subr.bf16.mxu0 %v2001
        %2520 = vmatpush1.bf16.msra.mxu0 %v2000
        %2521 = vmatprep.subr.bf16.mxu0 %v2121
        %2522 = vmatpush2.bf16.msra.mxu0 %v2120
        %2523 = vmatprep.subr.bf16.mxu0 %v2113
        %2524 = vmatpush2.bf16.msra.mxu0 %v2112
        %2525 = vmatprep.subr.bf16.mxu0 %v2105
        %2526 = vmatpush2.bf16.msra.mxu0 %v2104
        %2527 = vmatprep.subr.bf16.mxu0 %v2097
        %2528 = vmatpush2.bf16.msra.mxu0 %v2096
        %2529 = vmatprep.subr.bf16.mxu0 %v2089
        %2530 = vmatpush2.bf16.msra.mxu0 %v2088
        %2531 = vmatprep.subr.bf16.mxu0 %v2081
        %2532 = vmatpush2.bf16.msra.mxu0 %v2080
        %2533 = vmatprep.subr.bf16.mxu0 %v2073
        %2534 = vmatpush2.bf16.msra.mxu0 %v2072
        %2535 = vmatprep.subr.bf16.mxu0 %v2065
        %2536 = vmatpush2.bf16.msra.mxu0 %v2064
        %2537 = vmatprep.mubr.bf16.mxu0 %v1097
        %2538 = vmatmul.mubr.bf16.gmra.mxu0 %v1096
        %v2539 = vpop.f32.mrf.mxu0
        %v2540 = vadd.f32 %v2499, %v2539
        %v2541 = vpop.f32.mrf.mxu0
        %v2542 = vadd.f32 %v2501, %v2541
        %v2543 = vpop.f32.mrf.mxu0
        %v2544 = vpop.f32.mrf.mxu0
        %2545 = vdwg.mxu0
        %2546 = vmatprep.subr.bf16.mxu0 %v1931
        %2547 = vmatpush1.bf16.msra.mxu0 %v1930
        %2548 = vmatprep.subr.bf16.mxu0 %v1923
        %2549 = vmatpush1.bf16.msra.mxu0 %v1922
        %2550 = vmatprep.subr.bf16.mxu0 %v1915
        %2551 = vmatpush1.bf16.msra.mxu0 %v1914
        %2552 = vmatprep.subr.bf16.mxu0 %v1907
        %2553 = vmatpush1.bf16.msra.mxu0 %v1906
        %2554 = vmatprep.subr.bf16.mxu0 %v1899
        %2555 = vmatpush1.bf16.msra.mxu0 %v1898
        %2556 = vmatprep.subr.bf16.mxu0 %v1891
        %2557 = vmatpush1.bf16.msra.mxu0 %v1890
        %2558 = vmatprep.subr.bf16.mxu0 %v1883
        %2559 = vmatpush1.bf16.msra.mxu0 %v1882
        %2560 = vmatprep.subr.bf16.mxu0 %v1875
        %2561 = vmatpush1.bf16.msra.mxu0 %v1874
        %2562 = vmatprep.subr.bf16.mxu0 %v1995
        %2563 = vmatpush2.bf16.msra.mxu0 %v1994
        %2564 = vmatprep.subr.bf16.mxu0 %v1987
        %2565 = vmatpush2.bf16.msra.mxu0 %v1986
        %2566 = vmatprep.subr.bf16.mxu0 %v1979
        %2567 = vmatpush2.bf16.msra.mxu0 %v1978
        %2568 = vmatprep.subr.bf16.mxu0 %v1971
        %2569 = vmatpush2.bf16.msra.mxu0 %v1970
        %2570 = vmatprep.subr.bf16.mxu0 %v1963
        %2571 = vmatpush2.bf16.msra.mxu0 %v1962
        %2572 = vmatprep.subr.bf16.mxu0 %v1955
        %2573 = vmatpush2.bf16.msra.mxu0 %v1954
        %2574 = vmatprep.subr.bf16.mxu0 %v1947
        %2575 = vmatpush2.bf16.msra.mxu0 %v1946
        %2576 = vmatprep.subr.bf16.mxu0 %v1939
        %2577 = vmatpush2.bf16.msra.mxu0 %v1938
        %2578 = vmatprep.mubr.bf16.mxu0 %v1095
        %2579 = vmatmul.mubr.bf16.gmra.mxu0 %v1094
        %v2580 = vpop.f32.mrf.mxu0
        %v2581 = vadd.f32 0.0, %v2580
        %v2582 = vpop.f32.mrf.mxu0
        %v2583 = vadd.f32 0.0, %v2582
        %v2584 = vpop.f32.mrf.mxu0
        %v2585 = vpop.f32.mrf.mxu0
        %2586 = vdwg.mxu0
        %2587 = vmatprep.subr.bf16.mxu0 %v2059
        %2588 = vmatpush1.bf16.msra.mxu0 %v2058
        %2589 = vmatprep.subr.bf16.mxu0 %v2051
        %2590 = vmatpush1.bf16.msra.mxu0 %v2050
        %2591 = vmatprep.subr.bf16.mxu0 %v2043
        %2592 = vmatpush1.bf16.msra.mxu0 %v2042
        %2593 = vmatprep.subr.bf16.mxu0 %v2035
        %2594 = vmatpush1.bf16.msra.mxu0 %v2034
        %2595 = vmatprep.subr.bf16.mxu0 %v2027
        %2596 = vmatpush1.bf16.msra.mxu0 %v2026
        %2597 = vmatprep.subr.bf16.mxu0 %v2019
        %2598 = vmatpush1.bf16.msra.mxu0 %v2018
        %2599 = vmatprep.subr.bf16.mxu0 %v2011
        %2600 = vmatpush1.bf16.msra.mxu0 %v2010
        %2601 = vmatprep.subr.bf16.mxu0 %v2003
        %2602 = vmatpush1.bf16.msra.mxu0 %v2002
        %2603 = vmatprep.subr.bf16.mxu0 %v2123
        %2604 = vmatpush2.bf16.msra.mxu0 %v2122
        %2605 = vmatprep.subr.bf16.mxu0 %v2115
        %2606 = vmatpush2.bf16.msra.mxu0 %v2114
        %2607 = vmatprep.subr.bf16.mxu0 %v2107
        %2608 = vmatpush2.bf16.msra.mxu0 %v2106
        %2609 = vmatprep.subr.bf16.mxu0 %v2099
        %2610 = vmatpush2.bf16.msra.mxu0 %v2098
        %2611 = vmatprep.subr.bf16.mxu0 %v2091
        %2612 = vmatpush2.bf16.msra.mxu0 %v2090
        %2613 = vmatprep.subr.bf16.mxu0 %v2083
        %2614 = vmatpush2.bf16.msra.mxu0 %v2082
        %2615 = vmatprep.subr.bf16.mxu0 %v2075
        %2616 = vmatpush2.bf16.msra.mxu0 %v2074
        %2617 = vmatprep.subr.bf16.mxu0 %v2067
        %2618 = vmatpush2.bf16.msra.mxu0 %v2066
        %2619 = vmatprep.mubr.bf16.mxu0 %v1097
        %2620 = vmatmul.mubr.bf16.gmra.mxu0 %v1096
        %v2621 = vpop.f32.mrf.mxu0
        %v2622 = vadd.f32 %v2581, %v2621
        %v2623 = vpop.f32.mrf.mxu0
        %v2624 = vadd.f32 %v2583, %v2623
        %v2625 = vpop.f32.mrf.mxu0
        %v2626 = vpop.f32.mrf.mxu0
        %2627 = vdwg.mxu0
        %2628 = vmatprep.subr.bf16.mxu0 %v1933
        %2629 = vmatpush1.bf16.msra.mxu0 %v1932
        %2630 = vmatprep.subr.bf16.mxu0 %v1925
        %2631 = vmatpush1.bf16.msra.mxu0 %v1924
        %2632 = vmatprep.subr.bf16.mxu0 %v1917
        %2633 = vmatpush1.bf16.msra.mxu0 %v1916
        %2634 = vmatprep.subr.bf16.mxu0 %v1909
        %2635 = vmatpush1.bf16.msra.mxu0 %v1908
        %2636 = vmatprep.subr.bf16.mxu0 %v1901
        %2637 = vmatpush1.bf16.msra.mxu0 %v1900
        %2638 = vmatprep.subr.bf16.mxu0 %v1893
        %2639 = vmatpush1.bf16.msra.mxu0 %v1892
        %2640 = vmatprep.subr.bf16.mxu0 %v1885
        %2641 = vmatpush1.bf16.msra.mxu0 %v1884
        %2642 = vmatprep.subr.bf16.mxu0 %v1877
        %2643 = vmatpush1.bf16.msra.mxu0 %v1876
        %2644 = vmatprep.subr.bf16.mxu0 %v1997
        %2645 = vmatpush2.bf16.msra.mxu0 %v1996
        %2646 = vmatprep.subr.bf16.mxu0 %v1989
        %2647 = vmatpush2.bf16.msra.mxu0 %v1988
        %2648 = vmatprep.subr.bf16.mxu0 %v1981
        %2649 = vmatpush2.bf16.msra.mxu0 %v1980
        %2650 = vmatprep.subr.bf16.mxu0 %v1973
        %2651 = vmatpush2.bf16.msra.mxu0 %v1972
        %2652 = vmatprep.subr.bf16.mxu0 %v1965
        %2653 = vmatpush2.bf16.msra.mxu0 %v1964
        %2654 = vmatprep.subr.bf16.mxu0 %v1957
        %2655 = vmatpush2.bf16.msra.mxu0 %v1956
        %2656 = vmatprep.subr.bf16.mxu0 %v1949
        %2657 = vmatpush2.bf16.msra.mxu0 %v1948
        %2658 = vmatprep.subr.bf16.mxu0 %v1941
        %2659 = vmatpush2.bf16.msra.mxu0 %v1940
        %2660 = vmatprep.mubr.bf16.mxu0 %v1095
        %2661 = vmatmul.mubr.bf16.gmra.mxu0 %v1094
        %v2662 = vpop.f32.mrf.mxu0
        %v2663 = vadd.f32 0.0, %v2662
        %v2664 = vpop.f32.mrf.mxu0
        %v2665 = vadd.f32 0.0, %v2664
        %v2666 = vpop.f32.mrf.mxu0
        %v2667 = vpop.f32.mrf.mxu0
        %2668 = vdwg.mxu0
        %2669 = vmatprep.subr.bf16.mxu0 %v2061
        %2670 = vmatpush1.bf16.msra.mxu0 %v2060
        %2671 = vmatprep.subr.bf16.mxu0 %v2053
        %2672 = vmatpush1.bf16.msra.mxu0 %v2052
        %2673 = vmatprep.subr.bf16.mxu0 %v2045
        %2674 = vmatpush1.bf16.msra.mxu0 %v2044
        %2675 = vmatprep.subr.bf16.mxu0 %v2037
        %2676 = vmatpush1.bf16.msra.mxu0 %v2036
        %2677 = vmatprep.subr.bf16.mxu0 %v2029
        %2678 = vmatpush1.bf16.msra.mxu0 %v2028
        %2679 = vmatprep.subr.bf16.mxu0 %v2021
        %2680 = vmatpush1.bf16.msra.mxu0 %v2020
        %2681 = vmatprep.subr.bf16.mxu0 %v2013
        %2682 = vmatpush1.bf16.msra.mxu0 %v2012
        %2683 = vmatprep.subr.bf16.mxu0 %v2005
        %2684 = vmatpush1.bf16.msra.mxu0 %v2004
        %2685 = vmatprep.subr.bf16.mxu0 %v2125
        %2686 = vmatpush2.bf16.msra.mxu0 %v2124
        %2687 = vmatprep.subr.bf16.mxu0 %v2117
        %2688 = vmatpush2.bf16.msra.mxu0 %v2116
        %2689 = vmatprep.subr.bf16.mxu0 %v2109
        %2690 = vmatpush2.bf16.msra.mxu0 %v2108
        %2691 = vmatprep.subr.bf16.mxu0 %v2101
        %2692 = vmatpush2.bf16.msra.mxu0 %v2100
        %2693 = vmatprep.subr.bf16.mxu0 %v2093
        %2694 = vmatpush2.bf16.msra.mxu0 %v2092
        %2695 = vmatprep.subr.bf16.mxu0 %v2085
        %2696 = vmatpush2.bf16.msra.mxu0 %v2084
        %2697 = vmatprep.subr.bf16.mxu0 %v2077
        %2698 = vmatpush2.bf16.msra.mxu0 %v2076
        %2699 = vmatprep.subr.bf16.mxu0 %v2069
        %2700 = vmatpush2.bf16.msra.mxu0 %v2068
        %2701 = vmatprep.mubr.bf16.mxu0 %v1097
        %2702 = vmatmul.mubr.bf16.gmra.mxu0 %v1096
        %v2703 = vpop.f32.mrf.mxu0
        %v2704 = vadd.f32 %v2663, %v2703
        %v2705 = vpop.f32.mrf.mxu0
        %v2706 = vadd.f32 %v2665, %v2705
        %v2707 = vpop.f32.mrf.mxu0
        %v2708 = vpop.f32.mrf.mxu0
        %2709 = vdwg.mxu0
        %v2712 = vunpack.c.l.b16 %v316
        %v2713 = vunpack.c.h.b16 %v316
        %v2714 = vunpack.c.l.b16 %v317
        %v2715 = vunpack.c.h.b16 %v317
        %v2716 = vpack.c.b16 %v2712, %v2712
        %v2717 = vpack.c.b16 %v2713, %v2713
        %v2718 = vpack.c.b16 %v2714, %v2714
        %v2719 = vpack.c.b16 %v2715, %v2715
        %v2980 = vunpack.c.l.b16 %v320
        %v2981 = vunpack.c.h.b16 %v320
        %v2982 = vunpack.c.l.b16 %v321
        %v2983 = vunpack.c.h.b16 %v321
        %v2984 = vunpack.c.l.b16 %v322
        %v2985 = vunpack.c.h.b16 %v322
        %v2986 = vunpack.c.l.b16 %v323
        %v2987 = vunpack.c.h.b16 %v323
        %v2988 = vunpack.c.l.b16 %v324
        %v2989 = vunpack.c.h.b16 %v324
        %v2990 = vunpack.c.l.b16 %v325
        %v2991 = vunpack.c.h.b16 %v325
        %v2992 = vunpack.c.l.b16 %v326
        %v2993 = vunpack.c.h.b16 %v326
        %v2994 = vunpack.c.l.b16 %v327
        %v2995 = vunpack.c.h.b16 %v327
        %v2996 = vunpack.c.l.b16 %v328
        %v2997 = vunpack.c.h.b16 %v328
        %v2998 = vunpack.c.l.b16 %v329
        %v2999 = vunpack.c.h.b16 %v329
        %v3000 = vunpack.c.l.b16 %v330
        %v3001 = vunpack.c.h.b16 %v330
        %v3002 = vunpack.c.l.b16 %v331
        %v3003 = vunpack.c.h.b16 %v331
        %v3004 = vunpack.c.l.b16 %v332
        %v3005 = vunpack.c.h.b16 %v332
        %v3006 = vunpack.c.l.b16 %v333
        %v3007 = vunpack.c.h.b16 %v333
        %v3008 = vunpack.c.l.b16 %v334
        %v3009 = vunpack.c.h.b16 %v334
        %v3010 = vunpack.c.l.b16 %v335
        %v3011 = vunpack.c.h.b16 %v335
        %v3012 = vunpack.c.l.b16 %v336
        %v3013 = vunpack.c.h.b16 %v336
        %v3014 = vunpack.c.l.b16 %v337
        %v3015 = vunpack.c.h.b16 %v337
        %v3016 = vunpack.c.l.b16 %v338
        %v3017 = vunpack.c.h.b16 %v338
        %v3018 = vunpack.c.l.b16 %v339
        %v3019 = vunpack.c.h.b16 %v339
        %v3020 = vunpack.c.l.b16 %v340
        %v3021 = vunpack.c.h.b16 %v340
        %v3022 = vunpack.c.l.b16 %v341
        %v3023 = vunpack.c.h.b16 %v341
        %v3024 = vunpack.c.l.b16 %v342
        %v3025 = vunpack.c.h.b16 %v342
        %v3026 = vunpack.c.l.b16 %v343
        %v3027 = vunpack.c.h.b16 %v343
        %v3028 = vunpack.c.l.b16 %v344
        %v3029 = vunpack.c.h.b16 %v344
        %v3030 = vunpack.c.l.b16 %v345
        %v3031 = vunpack.c.h.b16 %v345
        %v3032 = vunpack.c.l.b16 %v346
        %v3033 = vunpack.c.h.b16 %v346
        %v3034 = vunpack.c.l.b16 %v347
        %v3035 = vunpack.c.h.b16 %v347
        %v3036 = vunpack.c.l.b16 %v348
        %v3037 = vunpack.c.h.b16 %v348
        %v3038 = vunpack.c.l.b16 %v349
        %v3039 = vunpack.c.h.b16 %v349
        %v3040 = vunpack.c.l.b16 %v350
        %v3041 = vunpack.c.h.b16 %v350
        %v3042 = vunpack.c.l.b16 %v351
        %v3043 = vunpack.c.h.b16 %v351
        %v3044 = vunpack.c.l.b16 %v352
        %v3045 = vunpack.c.h.b16 %v352
        %v3046 = vunpack.c.l.b16 %v353
        %v3047 = vunpack.c.h.b16 %v353
        %v3048 = vunpack.c.l.b16 %v354
        %v3049 = vunpack.c.h.b16 %v354
        %v3050 = vunpack.c.l.b16 %v355
        %v3051 = vunpack.c.h.b16 %v355
        %v3052 = vunpack.c.l.b16 %v356
        %v3053 = vunpack.c.h.b16 %v356
        %v3054 = vunpack.c.l.b16 %v357
        %v3055 = vunpack.c.h.b16 %v357
        %v3056 = vunpack.c.l.b16 %v358
        %v3057 = vunpack.c.h.b16 %v358
        %v3058 = vunpack.c.l.b16 %v359
        %v3059 = vunpack.c.h.b16 %v359
        %v3060 = vunpack.c.l.b16 %v360
        %v3061 = vunpack.c.h.b16 %v360
        %v3062 = vunpack.c.l.b16 %v361
        %v3063 = vunpack.c.h.b16 %v361
        %v3064 = vunpack.c.l.b16 %v362
        %v3065 = vunpack.c.h.b16 %v362
        %v3066 = vunpack.c.l.b16 %v363
        %v3067 = vunpack.c.h.b16 %v363
        %v3068 = vunpack.c.l.b16 %v364
        %v3069 = vunpack.c.h.b16 %v364
        %v3070 = vunpack.c.l.b16 %v365
        %v3071 = vunpack.c.h.b16 %v365
        %v3072 = vunpack.c.l.b16 %v366
        %v3073 = vunpack.c.h.b16 %v366
        %v3074 = vunpack.c.l.b16 %v367
        %v3075 = vunpack.c.h.b16 %v367
        %v3076 = vunpack.c.l.b16 %v368
        %v3077 = vunpack.c.h.b16 %v368
        %v3078 = vunpack.c.l.b16 %v369
        %v3079 = vunpack.c.h.b16 %v369
        %v3080 = vunpack.c.l.b16 %v370
        %v3081 = vunpack.c.h.b16 %v370
        %v3082 = vunpack.c.l.b16 %v371
        %v3083 = vunpack.c.h.b16 %v371
        %v3084 = vunpack.c.l.b16 %v372
        %v3085 = vunpack.c.h.b16 %v372
        %v3086 = vunpack.c.l.b16 %v373
        %v3087 = vunpack.c.h.b16 %v373
        %v3088 = vunpack.c.l.b16 %v374
        %v3089 = vunpack.c.h.b16 %v374
        %v3090 = vunpack.c.l.b16 %v375
        %v3091 = vunpack.c.h.b16 %v375
        %v3092 = vunpack.c.l.b16 %v376
        %v3093 = vunpack.c.h.b16 %v376
        %v3094 = vunpack.c.l.b16 %v377
        %v3095 = vunpack.c.h.b16 %v377
        %v3096 = vunpack.c.l.b16 %v378
        %v3097 = vunpack.c.h.b16 %v378
        %v3098 = vunpack.c.l.b16 %v379
        %v3099 = vunpack.c.h.b16 %v379
        %v3100 = vunpack.c.l.b16 %v380
        %v3101 = vunpack.c.h.b16 %v380
        %v3102 = vunpack.c.l.b16 %v381
        %v3103 = vunpack.c.h.b16 %v381
        %v3104 = vunpack.c.l.b16 %v382
        %v3105 = vunpack.c.h.b16 %v382
        %v3106 = vunpack.c.l.b16 %v383
        %v3107 = vunpack.c.h.b16 %v383
        %v3108 = vunpack.c.l.b16 %v384
        %v3109 = vunpack.c.h.b16 %v384
        %v3110 = vunpack.c.l.b16 %v385
        %v3111 = vunpack.c.h.b16 %v385
        %v3112 = vunpack.c.l.b16 %v386
        %v3113 = vunpack.c.h.b16 %v386
        %v3114 = vunpack.c.l.b16 %v387
        %v3115 = vunpack.c.h.b16 %v387
        %v3116 = vunpack.c.l.b16 %v388
        %v3117 = vunpack.c.h.b16 %v388
        %v3118 = vunpack.c.l.b16 %v389
        %v3119 = vunpack.c.h.b16 %v389
        %v3120 = vunpack.c.l.b16 %v390
        %v3121 = vunpack.c.h.b16 %v390
        %v3122 = vunpack.c.l.b16 %v391
        %v3123 = vunpack.c.h.b16 %v391
        %v3124 = vunpack.c.l.b16 %v392
        %v3125 = vunpack.c.h.b16 %v392
        %v3126 = vunpack.c.l.b16 %v393
        %v3127 = vunpack.c.h.b16 %v393
        %v3128 = vunpack.c.l.b16 %v394
        %v3129 = vunpack.c.h.b16 %v394
        %v3130 = vunpack.c.l.b16 %v395
        %v3131 = vunpack.c.h.b16 %v395
        %v3132 = vunpack.c.l.b16 %v396
        %v3133 = vunpack.c.h.b16 %v396
        %v3134 = vunpack.c.l.b16 %v397
        %v3135 = vunpack.c.h.b16 %v397
        %v3136 = vunpack.c.l.b16 %v398
        %v3137 = vunpack.c.h.b16 %v398
        %v3138 = vunpack.c.l.b16 %v399
        %v3139 = vunpack.c.h.b16 %v399
        %v3140 = vunpack.c.l.b16 %v400
        %v3141 = vunpack.c.h.b16 %v400
        %v3142 = vunpack.c.l.b16 %v401
        %v3143 = vunpack.c.h.b16 %v401
        %v3144 = vunpack.c.l.b16 %v402
        %v3145 = vunpack.c.h.b16 %v402
        %v3146 = vunpack.c.l.b16 %v403
        %v3147 = vunpack.c.h.b16 %v403
        %v3148 = vunpack.c.l.b16 %v404
        %v3149 = vunpack.c.h.b16 %v404
        %v3150 = vunpack.c.l.b16 %v405
        %v3151 = vunpack.c.h.b16 %v405
        %v3152 = vunpack.c.l.b16 %v406
        %v3153 = vunpack.c.h.b16 %v406
        %v3154 = vunpack.c.l.b16 %v407
        %v3155 = vunpack.c.h.b16 %v407
        %v3156 = vunpack.c.l.b16 %v408
        %v3157 = vunpack.c.h.b16 %v408
        %v3158 = vunpack.c.l.b16 %v409
        %v3159 = vunpack.c.h.b16 %v409
        %v3160 = vunpack.c.l.b16 %v410
        %v3161 = vunpack.c.h.b16 %v410
        %v3162 = vunpack.c.l.b16 %v411
        %v3163 = vunpack.c.h.b16 %v411
        %v3164 = vunpack.c.l.b16 %v412
        %v3165 = vunpack.c.h.b16 %v412
        %v3166 = vunpack.c.l.b16 %v413
        %v3167 = vunpack.c.h.b16 %v413
        %v3168 = vunpack.c.l.b16 %v414
        %v3169 = vunpack.c.h.b16 %v414
        %v3170 = vunpack.c.l.b16 %v415
        %v3171 = vunpack.c.h.b16 %v415
        %v3172 = vunpack.c.l.b16 %v416
        %v3173 = vunpack.c.h.b16 %v416
        %v3174 = vunpack.c.l.b16 %v417
        %v3175 = vunpack.c.h.b16 %v417
        %v3176 = vunpack.c.l.b16 %v418
        %v3177 = vunpack.c.h.b16 %v418
        %v3178 = vunpack.c.l.b16 %v419
        %v3179 = vunpack.c.h.b16 %v419
        %v3180 = vunpack.c.l.b16 %v420
        %v3181 = vunpack.c.h.b16 %v420
        %v3182 = vunpack.c.l.b16 %v421
        %v3183 = vunpack.c.h.b16 %v421
        %v3184 = vunpack.c.l.b16 %v422
        %v3185 = vunpack.c.h.b16 %v422
        %v3186 = vunpack.c.l.b16 %v423
        %v3187 = vunpack.c.h.b16 %v423
        %v3188 = vunpack.c.l.b16 %v424
        %v3189 = vunpack.c.h.b16 %v424
        %v3190 = vunpack.c.l.b16 %v425
        %v3191 = vunpack.c.h.b16 %v425
        %v3192 = vunpack.c.l.b16 %v426
        %v3193 = vunpack.c.h.b16 %v426
        %v3194 = vunpack.c.l.b16 %v427
        %v3195 = vunpack.c.h.b16 %v427
        %v3196 = vunpack.c.l.b16 %v428
        %v3197 = vunpack.c.h.b16 %v428
        %v3198 = vunpack.c.l.b16 %v429
        %v3199 = vunpack.c.h.b16 %v429
        %v3200 = vunpack.c.l.b16 %v430
        %v3201 = vunpack.c.h.b16 %v430
        %v3202 = vunpack.c.l.b16 %v431
        %v3203 = vunpack.c.h.b16 %v431
        %v3204 = vunpack.c.l.b16 %v432
        %v3205 = vunpack.c.h.b16 %v432
        %v3206 = vunpack.c.l.b16 %v433
        %v3207 = vunpack.c.h.b16 %v433
        %v3208 = vunpack.c.l.b16 %v434
        %v3209 = vunpack.c.h.b16 %v434
        %v3210 = vunpack.c.l.b16 %v435
        %v3211 = vunpack.c.h.b16 %v435
        %v3212 = vunpack.c.l.b16 %v436
        %v3213 = vunpack.c.h.b16 %v436
        %v3214 = vunpack.c.l.b16 %v437
        %v3215 = vunpack.c.h.b16 %v437
        %v3216 = vunpack.c.l.b16 %v438
        %v3217 = vunpack.c.h.b16 %v438
        %v3218 = vunpack.c.l.b16 %v439
        %v3219 = vunpack.c.h.b16 %v439
        %v3220 = vunpack.c.l.b16 %v440
        %v3221 = vunpack.c.h.b16 %v440
        %v3222 = vunpack.c.l.b16 %v441
        %v3223 = vunpack.c.h.b16 %v441
        %v3224 = vunpack.c.l.b16 %v442
        %v3225 = vunpack.c.h.b16 %v442
        %v3226 = vunpack.c.l.b16 %v443
        %v3227 = vunpack.c.h.b16 %v443
        %v3228 = vunpack.c.l.b16 %v444
        %v3229 = vunpack.c.h.b16 %v444
        %v3230 = vunpack.c.l.b16 %v445
        %v3231 = vunpack.c.h.b16 %v445
        %v3232 = vunpack.c.l.b16 %v446
        %v3233 = vunpack.c.h.b16 %v446
        %v3234 = vunpack.c.l.b16 %v447
        %v3235 = vunpack.c.h.b16 %v447
        %v3236 = vunpack.c.l.b16 %v448
        %v3237 = vunpack.c.h.b16 %v448
        %v3238 = vunpack.c.l.b16 %v449
        %v3239 = vunpack.c.h.b16 %v449
        %v3240 = vunpack.c.l.b16 %v450
        %v3241 = vunpack.c.h.b16 %v450
        %v3242 = vunpack.c.l.b16 %v451
        %v3243 = vunpack.c.h.b16 %v451
        %v3244 = vunpack.c.l.b16 %v452
        %v3245 = vunpack.c.h.b16 %v452
        %v3246 = vunpack.c.l.b16 %v453
        %v3247 = vunpack.c.h.b16 %v453
        %v3248 = vunpack.c.l.b16 %v454
        %v3249 = vunpack.c.h.b16 %v454
        %v3250 = vunpack.c.l.b16 %v455
        %v3251 = vunpack.c.h.b16 %v455
        %v3252 = vunpack.c.l.b16 %v456
        %v3253 = vunpack.c.h.b16 %v456
        %v3254 = vunpack.c.l.b16 %v457
        %v3255 = vunpack.c.h.b16 %v457
        %v3256 = vunpack.c.l.b16 %v458
        %v3257 = vunpack.c.h.b16 %v458
        %v3258 = vunpack.c.l.b16 %v459
        %v3259 = vunpack.c.h.b16 %v459
        %v3260 = vunpack.c.l.b16 %v460
        %v3261 = vunpack.c.h.b16 %v460
        %v3262 = vunpack.c.l.b16 %v461
        %v3263 = vunpack.c.h.b16 %v461
        %v3264 = vunpack.c.l.b16 %v462
        %v3265 = vunpack.c.h.b16 %v462
        %v3266 = vunpack.c.l.b16 %v463
        %v3267 = vunpack.c.h.b16 %v463
        %v3268 = vunpack.c.l.b16 %v464
        %v3269 = vunpack.c.h.b16 %v464
        %v3270 = vunpack.c.l.b16 %v465
        %v3271 = vunpack.c.h.b16 %v465
        %v3272 = vunpack.c.l.b16 %v466
        %v3273 = vunpack.c.h.b16 %v466
        %v3274 = vunpack.c.l.b16 %v467
        %v3275 = vunpack.c.h.b16 %v467
        %v3276 = vunpack.c.l.b16 %v468
        %v3277 = vunpack.c.h.b16 %v468
        %v3278 = vunpack.c.l.b16 %v469
        %v3279 = vunpack.c.h.b16 %v469
        %v3280 = vunpack.c.l.b16 %v470
        %v3281 = vunpack.c.h.b16 %v470
        %v3282 = vunpack.c.l.b16 %v471
        %v3283 = vunpack.c.h.b16 %v471
        %v3284 = vunpack.c.l.b16 %v472
        %v3285 = vunpack.c.h.b16 %v472
        %v3286 = vunpack.c.l.b16 %v473
        %v3287 = vunpack.c.h.b16 %v473
        %v3288 = vunpack.c.l.b16 %v474
        %v3289 = vunpack.c.h.b16 %v474
        %v3290 = vunpack.c.l.b16 %v475
        %v3291 = vunpack.c.h.b16 %v475
        %v3292 = vunpack.c.l.b16 %v476
        %v3293 = vunpack.c.h.b16 %v476
        %v3294 = vunpack.c.l.b16 %v477
        %v3295 = vunpack.c.h.b16 %v477
        %v3296 = vunpack.c.l.b16 %v478
        %v3297 = vunpack.c.h.b16 %v478
        %v3298 = vunpack.c.l.b16 %v479
        %v3299 = vunpack.c.h.b16 %v479
        %v3300 = vunpack.c.l.b16 %v480
        %v3301 = vunpack.c.h.b16 %v480
        %v3302 = vunpack.c.l.b16 %v481
        %v3303 = vunpack.c.h.b16 %v481
        %v3304 = vunpack.c.l.b16 %v482
        %v3305 = vunpack.c.h.b16 %v482
        %v3306 = vunpack.c.l.b16 %v483
        %v3307 = vunpack.c.h.b16 %v483
        %v3308 = vunpack.c.l.b16 %v484
        %v3309 = vunpack.c.h.b16 %v484
        %v3310 = vunpack.c.l.b16 %v485
        %v3311 = vunpack.c.h.b16 %v485
        %v3312 = vunpack.c.l.b16 %v486
        %v3313 = vunpack.c.h.b16 %v486
        %v3314 = vunpack.c.l.b16 %v487
        %v3315 = vunpack.c.h.b16 %v487
        %v3316 = vunpack.c.l.b16 %v488
        %v3317 = vunpack.c.h.b16 %v488
        %v3318 = vunpack.c.l.b16 %v489
        %v3319 = vunpack.c.h.b16 %v489
        %v3320 = vunpack.c.l.b16 %v490
        %v3321 = vunpack.c.h.b16 %v490
        %v3322 = vunpack.c.l.b16 %v491
        %v3323 = vunpack.c.h.b16 %v491
        %v3324 = vunpack.c.l.b16 %v492
        %v3325 = vunpack.c.h.b16 %v492
        %v3326 = vunpack.c.l.b16 %v493
        %v3327 = vunpack.c.h.b16 %v493
        %v3328 = vunpack.c.l.b16 %v494
        %v3329 = vunpack.c.h.b16 %v494
        %v3330 = vunpack.c.l.b16 %v495
        %v3331 = vunpack.c.h.b16 %v495
        %v3332 = vunpack.c.l.b16 %v496
        %v3333 = vunpack.c.h.b16 %v496
        %v3334 = vunpack.c.l.b16 %v497
        %v3335 = vunpack.c.h.b16 %v497
        %v3336 = vunpack.c.l.b16 %v498
        %v3337 = vunpack.c.h.b16 %v498
        %v3338 = vunpack.c.l.b16 %v499
        %v3339 = vunpack.c.h.b16 %v499
        %v3340 = vunpack.c.l.b16 %v500
        %v3341 = vunpack.c.h.b16 %v500
        %v3342 = vunpack.c.l.b16 %v501
        %v3343 = vunpack.c.h.b16 %v501
        %v3344 = vunpack.c.l.b16 %v502
        %v3345 = vunpack.c.h.b16 %v502
        %v3346 = vunpack.c.l.b16 %v503
        %v3347 = vunpack.c.h.b16 %v503
        %v3348 = vunpack.c.l.b16 %v504
        %v3349 = vunpack.c.h.b16 %v504
        %v3350 = vunpack.c.l.b16 %v505
        %v3351 = vunpack.c.h.b16 %v505
        %v3352 = vunpack.c.l.b16 %v506
        %v3353 = vunpack.c.h.b16 %v506
        %v3354 = vunpack.c.l.b16 %v507
        %v3355 = vunpack.c.h.b16 %v507
        %v3356 = vunpack.c.l.b16 %v508
        %v3357 = vunpack.c.h.b16 %v508
        %v3358 = vunpack.c.l.b16 %v509
        %v3359 = vunpack.c.h.b16 %v509
        %v3360 = vunpack.c.l.b16 %v510
        %v3361 = vunpack.c.h.b16 %v510
        %v3362 = vunpack.c.l.b16 %v511
        %v3363 = vunpack.c.h.b16 %v511
        %v3364 = vunpack.c.l.b16 %v512
        %v3365 = vunpack.c.h.b16 %v512
        %v3366 = vunpack.c.l.b16 %v513
        %v3367 = vunpack.c.h.b16 %v513
        %v3368 = vunpack.c.l.b16 %v514
        %v3369 = vunpack.c.h.b16 %v514
        %v3370 = vunpack.c.l.b16 %v515
        %v3371 = vunpack.c.h.b16 %v515
        %v3372 = vunpack.c.l.b16 %v516
        %v3373 = vunpack.c.h.b16 %v516
        %v3374 = vunpack.c.l.b16 %v517
        %v3375 = vunpack.c.h.b16 %v517
        %v3376 = vunpack.c.l.b16 %v518
        %v3377 = vunpack.c.h.b16 %v518
        %v3378 = vunpack.c.l.b16 %v519
        %v3379 = vunpack.c.h.b16 %v519
        %v3380 = vunpack.c.l.b16 %v520
        %v3381 = vunpack.c.h.b16 %v520
        %v3382 = vunpack.c.l.b16 %v521
        %v3383 = vunpack.c.h.b16 %v521
        %v3384 = vunpack.c.l.b16 %v522
        %v3385 = vunpack.c.h.b16 %v522
        %v3386 = vunpack.c.l.b16 %v523
        %v3387 = vunpack.c.h.b16 %v523
        %v3388 = vunpack.c.l.b16 %v524
        %v3389 = vunpack.c.h.b16 %v524
        %v3390 = vunpack.c.l.b16 %v525
        %v3391 = vunpack.c.h.b16 %v525
        %v3392 = vunpack.c.l.b16 %v526
        %v3393 = vunpack.c.h.b16 %v526
        %v3394 = vunpack.c.l.b16 %v527
        %v3395 = vunpack.c.h.b16 %v527
        %v3396 = vunpack.c.l.b16 %v528
        %v3397 = vunpack.c.h.b16 %v528
        %v3398 = vunpack.c.l.b16 %v529
        %v3399 = vunpack.c.h.b16 %v529
        %v3400 = vunpack.c.l.b16 %v530
        %v3401 = vunpack.c.h.b16 %v530
        %v3402 = vunpack.c.l.b16 %v531
        %v3403 = vunpack.c.h.b16 %v531
        %v3404 = vunpack.c.l.b16 %v532
        %v3405 = vunpack.c.h.b16 %v532
        %v3406 = vunpack.c.l.b16 %v533
        %v3407 = vunpack.c.h.b16 %v533
        %v3408 = vunpack.c.l.b16 %v534
        %v3409 = vunpack.c.h.b16 %v534
        %v3410 = vunpack.c.l.b16 %v535
        %v3411 = vunpack.c.h.b16 %v535
        %v3412 = vunpack.c.l.b16 %v536
        %v3413 = vunpack.c.h.b16 %v536
        %v3414 = vunpack.c.l.b16 %v537
        %v3415 = vunpack.c.h.b16 %v537
        %v3416 = vunpack.c.l.b16 %v538
        %v3417 = vunpack.c.h.b16 %v538
        %v3418 = vunpack.c.l.b16 %v539
        %v3419 = vunpack.c.h.b16 %v539
        %v3420 = vunpack.c.l.b16 %v540
        %v3421 = vunpack.c.h.b16 %v540
        %v3422 = vunpack.c.l.b16 %v541
        %v3423 = vunpack.c.h.b16 %v541
        %v3424 = vunpack.c.l.b16 %v542
        %v3425 = vunpack.c.h.b16 %v542
        %v3426 = vunpack.c.l.b16 %v543
        %v3427 = vunpack.c.h.b16 %v543
        %v3428 = vunpack.c.l.b16 %v544
        %v3429 = vunpack.c.h.b16 %v544
        %v3430 = vunpack.c.l.b16 %v545
        %v3431 = vunpack.c.h.b16 %v545
        %v3432 = vunpack.c.l.b16 %v546
        %v3433 = vunpack.c.h.b16 %v546
        %v3434 = vunpack.c.l.b16 %v547
        %v3435 = vunpack.c.h.b16 %v547
        %v3436 = vunpack.c.l.b16 %v548
        %v3437 = vunpack.c.h.b16 %v548
        %v3438 = vunpack.c.l.b16 %v549
        %v3439 = vunpack.c.h.b16 %v549
        %v3440 = vunpack.c.l.b16 %v550
        %v3441 = vunpack.c.h.b16 %v550
        %v3442 = vunpack.c.l.b16 %v551
        %v3443 = vunpack.c.h.b16 %v551
        %v3444 = vunpack.c.l.b16 %v552
        %v3445 = vunpack.c.h.b16 %v552
        %v3446 = vunpack.c.l.b16 %v553
        %v3447 = vunpack.c.h.b16 %v553
        %v3448 = vunpack.c.l.b16 %v554
        %v3449 = vunpack.c.h.b16 %v554
        %v3450 = vunpack.c.l.b16 %v555
        %v3451 = vunpack.c.h.b16 %v555
        %v3452 = vunpack.c.l.b16 %v556
        %v3453 = vunpack.c.h.b16 %v556
        %v3454 = vunpack.c.l.b16 %v557
        %v3455 = vunpack.c.h.b16 %v557
        %v3456 = vunpack.c.l.b16 %v558
        %v3457 = vunpack.c.h.b16 %v558
        %v3458 = vunpack.c.l.b16 %v559
        %v3459 = vunpack.c.h.b16 %v559
        %v3460 = vunpack.c.l.b16 %v560
        %v3461 = vunpack.c.h.b16 %v560
        %v3462 = vunpack.c.l.b16 %v561
        %v3463 = vunpack.c.h.b16 %v561
        %v3464 = vunpack.c.l.b16 %v562
        %v3465 = vunpack.c.h.b16 %v562
        %v3466 = vunpack.c.l.b16 %v563
        %v3467 = vunpack.c.h.b16 %v563
        %v3468 = vunpack.c.l.b16 %v564
        %v3469 = vunpack.c.h.b16 %v564
        %v3470 = vunpack.c.l.b16 %v565
        %v3471 = vunpack.c.h.b16 %v565
        %v3472 = vunpack.c.l.b16 %v566
        %v3473 = vunpack.c.h.b16 %v566
        %v3474 = vunpack.c.l.b16 %v567
        %v3475 = vunpack.c.h.b16 %v567
        %v3476 = vunpack.c.l.b16 %v568
        %v3477 = vunpack.c.h.b16 %v568
        %v3478 = vunpack.c.l.b16 %v569
        %v3479 = vunpack.c.h.b16 %v569
        %v3480 = vunpack.c.l.b16 %v570
        %v3481 = vunpack.c.h.b16 %v570
        %v3482 = vunpack.c.l.b16 %v571
        %v3483 = vunpack.c.h.b16 %v571
        %v3484 = vunpack.c.l.b16 %v572
        %v3485 = vunpack.c.h.b16 %v572
        %v3486 = vunpack.c.l.b16 %v573
        %v3487 = vunpack.c.h.b16 %v573
        %v3488 = vunpack.c.l.b16 %v574
        %v3489 = vunpack.c.h.b16 %v574
        %v3490 = vunpack.c.l.b16 %v575
        %v3491 = vunpack.c.h.b16 %v575
        %v3492 = vpack.c.b16 %v2988, %v2980
        %v3493 = vpack.c.b16 %v2989, %v2981
        %v3494 = vpack.c.b16 %v2990, %v2982
        %v3495 = vpack.c.b16 %v2991, %v2983
        %v3496 = vpack.c.b16 %v2992, %v2984
        %v3497 = vpack.c.b16 %v2993, %v2985
        %v3498 = vpack.c.b16 %v2994, %v2986
        %v3499 = vpack.c.b16 %v2995, %v2987
        %v3500 = vpack.c.b16 %v3004, %v2996
        %v3501 = vpack.c.b16 %v3005, %v2997
        %v3502 = vpack.c.b16 %v3006, %v2998
        %v3503 = vpack.c.b16 %v3007, %v2999
        %v3504 = vpack.c.b16 %v3008, %v3000
        %v3505 = vpack.c.b16 %v3009, %v3001
        %v3506 = vpack.c.b16 %v3010, %v3002
        %v3507 = vpack.c.b16 %v3011, %v3003
        %v3508 = vpack.c.b16 %v3020, %v3012
        %v3509 = vpack.c.b16 %v3021, %v3013
        %v3510 = vpack.c.b16 %v3022, %v3014
        %v3511 = vpack.c.b16 %v3023, %v3015
        %v3512 = vpack.c.b16 %v3024, %v3016
        %v3513 = vpack.c.b16 %v3025, %v3017
        %v3514 = vpack.c.b16 %v3026, %v3018
        %v3515 = vpack.c.b16 %v3027, %v3019
        %v3516 = vpack.c.b16 %v3036, %v3028
        %v3517 = vpack.c.b16 %v3037, %v3029
        %v3518 = vpack.c.b16 %v3038, %v3030
        %v3519 = vpack.c.b16 %v3039, %v3031
        %v3520 = vpack.c.b16 %v3040, %v3032
        %v3521 = vpack.c.b16 %v3041, %v3033
        %v3522 = vpack.c.b16 %v3042, %v3034
        %v3523 = vpack.c.b16 %v3043, %v3035
        %v3524 = vpack.c.b16 %v3052, %v3044
        %v3525 = vpack.c.b16 %v3053, %v3045
        %v3526 = vpack.c.b16 %v3054, %v3046
        %v3527 = vpack.c.b16 %v3055, %v3047
        %v3528 = vpack.c.b16 %v3056, %v3048
        %v3529 = vpack.c.b16 %v3057, %v3049
        %v3530 = vpack.c.b16 %v3058, %v3050
        %v3531 = vpack.c.b16 %v3059, %v3051
        %v3532 = vpack.c.b16 %v3068, %v3060
        %v3533 = vpack.c.b16 %v3069, %v3061
        %v3534 = vpack.c.b16 %v3070, %v3062
        %v3535 = vpack.c.b16 %v3071, %v3063
        %v3536 = vpack.c.b16 %v3072, %v3064
        %v3537 = vpack.c.b16 %v3073, %v3065
        %v3538 = vpack.c.b16 %v3074, %v3066
        %v3539 = vpack.c.b16 %v3075, %v3067
        %v3540 = vpack.c.b16 %v3084, %v3076
        %v3541 = vpack.c.b16 %v3085, %v3077
        %v3542 = vpack.c.b16 %v3086, %v3078
        %v3543 = vpack.c.b16 %v3087, %v3079
        %v3544 = vpack.c.b16 %v3088, %v3080
        %v3545 = vpack.c.b16 %v3089, %v3081
        %v3546 = vpack.c.b16 %v3090, %v3082
        %v3547 = vpack.c.b16 %v3091, %v3083
        %v3548 = vpack.c.b16 %v3100, %v3092
        %v3549 = vpack.c.b16 %v3101, %v3093
        %v3550 = vpack.c.b16 %v3102, %v3094
        %v3551 = vpack.c.b16 %v3103, %v3095
        %v3552 = vpack.c.b16 %v3104, %v3096
        %v3553 = vpack.c.b16 %v3105, %v3097
        %v3554 = vpack.c.b16 %v3106, %v3098
        %v3555 = vpack.c.b16 %v3107, %v3099
        %v3556 = vpack.c.b16 %v3116, %v3108
        %v3557 = vpack.c.b16 %v3117, %v3109
        %v3558 = vpack.c.b16 %v3118, %v3110
        %v3559 = vpack.c.b16 %v3119, %v3111
        %v3560 = vpack.c.b16 %v3120, %v3112
        %v3561 = vpack.c.b16 %v3121, %v3113
        %v3562 = vpack.c.b16 %v3122, %v3114
        %v3563 = vpack.c.b16 %v3123, %v3115
        %v3564 = vpack.c.b16 %v3132, %v3124
        %v3565 = vpack.c.b16 %v3133, %v3125
        %v3566 = vpack.c.b16 %v3134, %v3126
        %v3567 = vpack.c.b16 %v3135, %v3127
        %v3568 = vpack.c.b16 %v3136, %v3128
        %v3569 = vpack.c.b16 %v3137, %v3129
        %v3570 = vpack.c.b16 %v3138, %v3130
        %v3571 = vpack.c.b16 %v3139, %v3131
        %v3572 = vpack.c.b16 %v3148, %v3140
        %v3573 = vpack.c.b16 %v3149, %v3141
        %v3574 = vpack.c.b16 %v3150, %v3142
        %v3575 = vpack.c.b16 %v3151, %v3143
        %v3576 = vpack.c.b16 %v3152, %v3144
        %v3577 = vpack.c.b16 %v3153, %v3145
        %v3578 = vpack.c.b16 %v3154, %v3146
        %v3579 = vpack.c.b16 %v3155, %v3147
        %v3580 = vpack.c.b16 %v3164, %v3156
        %v3581 = vpack.c.b16 %v3165, %v3157
        %v3582 = vpack.c.b16 %v3166, %v3158
        %v3583 = vpack.c.b16 %v3167, %v3159
        %v3584 = vpack.c.b16 %v3168, %v3160
        %v3585 = vpack.c.b16 %v3169, %v3161
        %v3586 = vpack.c.b16 %v3170, %v3162
        %v3587 = vpack.c.b16 %v3171, %v3163
        %v3588 = vpack.c.b16 %v3180, %v3172
        %v3589 = vpack.c.b16 %v3181, %v3173
        %v3590 = vpack.c.b16 %v3182, %v3174
        %v3591 = vpack.c.b16 %v3183, %v3175
        %v3592 = vpack.c.b16 %v3184, %v3176
        %v3593 = vpack.c.b16 %v3185, %v3177
        %v3594 = vpack.c.b16 %v3186, %v3178
        %v3595 = vpack.c.b16 %v3187, %v3179
        %v3596 = vpack.c.b16 %v3196, %v3188
        %v3597 = vpack.c.b16 %v3197, %v3189
        %v3598 = vpack.c.b16 %v3198, %v3190
        %v3599 = vpack.c.b16 %v3199, %v3191
        %v3600 = vpack.c.b16 %v3200, %v3192
        %v3601 = vpack.c.b16 %v3201, %v3193
        %v3602 = vpack.c.b16 %v3202, %v3194
        %v3603 = vpack.c.b16 %v3203, %v3195
        %v3604 = vpack.c.b16 %v3212, %v3204
        %v3605 = vpack.c.b16 %v3213, %v3205
        %v3606 = vpack.c.b16 %v3214, %v3206
        %v3607 = vpack.c.b16 %v3215, %v3207
        %v3608 = vpack.c.b16 %v3216, %v3208
        %v3609 = vpack.c.b16 %v3217, %v3209
        %v3610 = vpack.c.b16 %v3218, %v3210
        %v3611 = vpack.c.b16 %v3219, %v3211
        %v3612 = vpack.c.b16 %v3228, %v3220
        %v3613 = vpack.c.b16 %v3229, %v3221
        %v3614 = vpack.c.b16 %v3230, %v3222
        %v3615 = vpack.c.b16 %v3231, %v3223
        %v3616 = vpack.c.b16 %v3232, %v3224
        %v3617 = vpack.c.b16 %v3233, %v3225
        %v3618 = vpack.c.b16 %v3234, %v3226
        %v3619 = vpack.c.b16 %v3235, %v3227
        %v3620 = vpack.c.b16 %v3244, %v3236
        %v3621 = vpack.c.b16 %v3245, %v3237
        %v3622 = vpack.c.b16 %v3246, %v3238
        %v3623 = vpack.c.b16 %v3247, %v3239
        %v3624 = vpack.c.b16 %v3248, %v3240
        %v3625 = vpack.c.b16 %v3249, %v3241
        %v3626 = vpack.c.b16 %v3250, %v3242
        %v3627 = vpack.c.b16 %v3251, %v3243
        %v3628 = vpack.c.b16 %v3260, %v3252
        %v3629 = vpack.c.b16 %v3261, %v3253
        %v3630 = vpack.c.b16 %v3262, %v3254
        %v3631 = vpack.c.b16 %v3263, %v3255
        %v3632 = vpack.c.b16 %v3264, %v3256
        %v3633 = vpack.c.b16 %v3265, %v3257
        %v3634 = vpack.c.b16 %v3266, %v3258
        %v3635 = vpack.c.b16 %v3267, %v3259
        %v3636 = vpack.c.b16 %v3276, %v3268
        %v3637 = vpack.c.b16 %v3277, %v3269
        %v3638 = vpack.c.b16 %v3278, %v3270
        %v3639 = vpack.c.b16 %v3279, %v3271
        %v3640 = vpack.c.b16 %v3280, %v3272
        %v3641 = vpack.c.b16 %v3281, %v3273
        %v3642 = vpack.c.b16 %v3282, %v3274
        %v3643 = vpack.c.b16 %v3283, %v3275
        %v3644 = vpack.c.b16 %v3292, %v3284
        %v3645 = vpack.c.b16 %v3293, %v3285
        %v3646 = vpack.c.b16 %v3294, %v3286
        %v3647 = vpack.c.b16 %v3295, %v3287
        %v3648 = vpack.c.b16 %v3296, %v3288
        %v3649 = vpack.c.b16 %v3297, %v3289
        %v3650 = vpack.c.b16 %v3298, %v3290
        %v3651 = vpack.c.b16 %v3299, %v3291
        %v3652 = vpack.c.b16 %v3308, %v3300
        %v3653 = vpack.c.b16 %v3309, %v3301
        %v3654 = vpack.c.b16 %v3310, %v3302
        %v3655 = vpack.c.b16 %v3311, %v3303
        %v3656 = vpack.c.b16 %v3312, %v3304
        %v3657 = vpack.c.b16 %v3313, %v3305
        %v3658 = vpack.c.b16 %v3314, %v3306
        %v3659 = vpack.c.b16 %v3315, %v3307
        %v3660 = vpack.c.b16 %v3324, %v3316
        %v3661 = vpack.c.b16 %v3325, %v3317
        %v3662 = vpack.c.b16 %v3326, %v3318
        %v3663 = vpack.c.b16 %v3327, %v3319
        %v3664 = vpack.c.b16 %v3328, %v3320
        %v3665 = vpack.c.b16 %v3329, %v3321
        %v3666 = vpack.c.b16 %v3330, %v3322
        %v3667 = vpack.c.b16 %v3331, %v3323
        %v3668 = vpack.c.b16 %v3340, %v3332
        %v3669 = vpack.c.b16 %v3341, %v3333
        %v3670 = vpack.c.b16 %v3342, %v3334
        %v3671 = vpack.c.b16 %v3343, %v3335
        %v3672 = vpack.c.b16 %v3344, %v3336
        %v3673 = vpack.c.b16 %v3345, %v3337
        %v3674 = vpack.c.b16 %v3346, %v3338
        %v3675 = vpack.c.b16 %v3347, %v3339
        %v3676 = vpack.c.b16 %v3356, %v3348
        %v3677 = vpack.c.b16 %v3357, %v3349
        %v3678 = vpack.c.b16 %v3358, %v3350
        %v3679 = vpack.c.b16 %v3359, %v3351
        %v3680 = vpack.c.b16 %v3360, %v3352
        %v3681 = vpack.c.b16 %v3361, %v3353
        %v3682 = vpack.c.b16 %v3362, %v3354
        %v3683 = vpack.c.b16 %v3363, %v3355
        %v3684 = vpack.c.b16 %v3372, %v3364
        %v3685 = vpack.c.b16 %v3373, %v3365
        %v3686 = vpack.c.b16 %v3374, %v3366
        %v3687 = vpack.c.b16 %v3375, %v3367
        %v3688 = vpack.c.b16 %v3376, %v3368
        %v3689 = vpack.c.b16 %v3377, %v3369
        %v3690 = vpack.c.b16 %v3378, %v3370
        %v3691 = vpack.c.b16 %v3379, %v3371
        %v3692 = vpack.c.b16 %v3388, %v3380
        %v3693 = vpack.c.b16 %v3389, %v3381
        %v3694 = vpack.c.b16 %v3390, %v3382
        %v3695 = vpack.c.b16 %v3391, %v3383
        %v3696 = vpack.c.b16 %v3392, %v3384
        %v3697 = vpack.c.b16 %v3393, %v3385
        %v3698 = vpack.c.b16 %v3394, %v3386
        %v3699 = vpack.c.b16 %v3395, %v3387
        %v3700 = vpack.c.b16 %v3404, %v3396
        %v3701 = vpack.c.b16 %v3405, %v3397
        %v3702 = vpack.c.b16 %v3406, %v3398
        %v3703 = vpack.c.b16 %v3407, %v3399
        %v3704 = vpack.c.b16 %v3408, %v3400
        %v3705 = vpack.c.b16 %v3409, %v3401
        %v3706 = vpack.c.b16 %v3410, %v3402
        %v3707 = vpack.c.b16 %v3411, %v3403
        %v3708 = vpack.c.b16 %v3420, %v3412
        %v3709 = vpack.c.b16 %v3421, %v3413
        %v3710 = vpack.c.b16 %v3422, %v3414
        %v3711 = vpack.c.b16 %v3423, %v3415
        %v3712 = vpack.c.b16 %v3424, %v3416
        %v3713 = vpack.c.b16 %v3425, %v3417
        %v3714 = vpack.c.b16 %v3426, %v3418
        %v3715 = vpack.c.b16 %v3427, %v3419
        %v3716 = vpack.c.b16 %v3436, %v3428
        %v3717 = vpack.c.b16 %v3437, %v3429
        %v3718 = vpack.c.b16 %v3438, %v3430
        %v3719 = vpack.c.b16 %v3439, %v3431
        %v3720 = vpack.c.b16 %v3440, %v3432
        %v3721 = vpack.c.b16 %v3441, %v3433
        %v3722 = vpack.c.b16 %v3442, %v3434
        %v3723 = vpack.c.b16 %v3443, %v3435
        %v3724 = vpack.c.b16 %v3452, %v3444
        %v3725 = vpack.c.b16 %v3453, %v3445
        %v3726 = vpack.c.b16 %v3454, %v3446
        %v3727 = vpack.c.b16 %v3455, %v3447
        %v3728 = vpack.c.b16 %v3456, %v3448
        %v3729 = vpack.c.b16 %v3457, %v3449
        %v3730 = vpack.c.b16 %v3458, %v3450
        %v3731 = vpack.c.b16 %v3459, %v3451
        %v3732 = vpack.c.b16 %v3468, %v3460
        %v3733 = vpack.c.b16 %v3469, %v3461
        %v3734 = vpack.c.b16 %v3470, %v3462
        %v3735 = vpack.c.b16 %v3471, %v3463
        %v3736 = vpack.c.b16 %v3472, %v3464
        %v3737 = vpack.c.b16 %v3473, %v3465
        %v3738 = vpack.c.b16 %v3474, %v3466
        %v3739 = vpack.c.b16 %v3475, %v3467
        %v3740 = vpack.c.b16 %v3484, %v3476
        %v3741 = vpack.c.b16 %v3485, %v3477
        %v3742 = vpack.c.b16 %v3486, %v3478
        %v3743 = vpack.c.b16 %v3487, %v3479
        %v3744 = vpack.c.b16 %v3488, %v3480
        %v3745 = vpack.c.b16 %v3489, %v3481
        %v3746 = vpack.c.b16 %v3490, %v3482
        %v3747 = vpack.c.b16 %v3491, %v3483
        %4004 = vmatprep.subr.bf16.mxu0 %v3549
        %4005 = vmatpush1.bf16.msra.mxu0 %v3548
        %4006 = vmatprep.subr.bf16.mxu0 %v3541
        %4007 = vmatpush1.bf16.msra.mxu0 %v3540
        %4008 = vmatprep.subr.bf16.mxu0 %v3533
        %4009 = vmatpush1.bf16.msra.mxu0 %v3532
        %4010 = vmatprep.subr.bf16.mxu0 %v3525
        %4011 = vmatpush1.bf16.msra.mxu0 %v3524
        %4012 = vmatprep.subr.bf16.mxu0 %v3517
        %4013 = vmatpush1.bf16.msra.mxu0 %v3516
        %4014 = vmatprep.subr.bf16.mxu0 %v3509
        %4015 = vmatpush1.bf16.msra.mxu0 %v3508
        %4016 = vmatprep.subr.bf16.mxu0 %v3501
        %4017 = vmatpush1.bf16.msra.mxu0 %v3500
        %4018 = vmatprep.subr.bf16.mxu0 %v3493
        %4019 = vmatpush1.bf16.msra.mxu0 %v3492
        %4020 = vmatprep.subr.bf16.mxu0 %v3613
        %4021 = vmatpush2.bf16.msra.mxu0 %v3612
        %4022 = vmatprep.subr.bf16.mxu0 %v3605
        %4023 = vmatpush2.bf16.msra.mxu0 %v3604
        %4024 = vmatprep.subr.bf16.mxu0 %v3597
        %4025 = vmatpush2.bf16.msra.mxu0 %v3596
        %4026 = vmatprep.subr.bf16.mxu0 %v3589
        %4027 = vmatpush2.bf16.msra.mxu0 %v3588
        %4028 = vmatprep.subr.bf16.mxu0 %v3581
        %4029 = vmatpush2.bf16.msra.mxu0 %v3580
        %4030 = vmatprep.subr.bf16.mxu0 %v3573
        %4031 = vmatpush2.bf16.msra.mxu0 %v3572
        %4032 = vmatprep.subr.bf16.mxu0 %v3565
        %4033 = vmatpush2.bf16.msra.mxu0 %v3564
        %4034 = vmatprep.subr.bf16.mxu0 %v3557
        %4035 = vmatpush2.bf16.msra.mxu0 %v3556
        %4036 = vmatprep.mubr.bf16.mxu0 %v2717
        %4037 = vmatmul.mubr.bf16.gmra.mxu0 %v2716
        %v4038 = vpop.f32.mrf.mxu0
        %v4039 = vadd.f32 %v2458, %v4038
        %v4040 = vpop.f32.mrf.mxu0
        %v4041 = vadd.f32 %v2460, %v4040
        %v4042 = vpop.f32.mrf.mxu0
        %v4043 = vpop.f32.mrf.mxu0
        %4044 = vdwg.mxu0
        %4045 = vmatprep.subr.bf16.mxu0 %v3677
        %4046 = vmatpush1.bf16.msra.mxu0 %v3676
        %4047 = vmatprep.subr.bf16.mxu0 %v3669
        %4048 = vmatpush1.bf16.msra.mxu0 %v3668
        %4049 = vmatprep.subr.bf16.mxu0 %v3661
        %4050 = vmatpush1.bf16.msra.mxu0 %v3660
        %4051 = vmatprep.subr.bf16.mxu0 %v3653
        %4052 = vmatpush1.bf16.msra.mxu0 %v3652
        %4053 = vmatprep.subr.bf16.mxu0 %v3645
        %4054 = vmatpush1.bf16.msra.mxu0 %v3644
        %4055 = vmatprep.subr.bf16.mxu0 %v3637
        %4056 = vmatpush1.bf16.msra.mxu0 %v3636
        %4057 = vmatprep.subr.bf16.mxu0 %v3629
        %4058 = vmatpush1.bf16.msra.mxu0 %v3628
        %4059 = vmatprep.subr.bf16.mxu0 %v3621
        %4060 = vmatpush1.bf16.msra.mxu0 %v3620
        %4061 = vmatprep.subr.bf16.mxu0 %v3741
        %4062 = vmatpush2.bf16.msra.mxu0 %v3740
        %4063 = vmatprep.subr.bf16.mxu0 %v3733
        %4064 = vmatpush2.bf16.msra.mxu0 %v3732
        %4065 = vmatprep.subr.bf16.mxu0 %v3725
        %4066 = vmatpush2.bf16.msra.mxu0 %v3724
        %4067 = vmatprep.subr.bf16.mxu0 %v3717
        %4068 = vmatpush2.bf16.msra.mxu0 %v3716
        %4069 = vmatprep.subr.bf16.mxu0 %v3709
        %4070 = vmatpush2.bf16.msra.mxu0 %v3708
        %4071 = vmatprep.subr.bf16.mxu0 %v3701
        %4072 = vmatpush2.bf16.msra.mxu0 %v3700
        %4073 = vmatprep.subr.bf16.mxu0 %v3693
        %4074 = vmatpush2.bf16.msra.mxu0 %v3692
        %4075 = vmatprep.subr.bf16.mxu0 %v3685
        %4076 = vmatpush2.bf16.msra.mxu0 %v3684
        %4077 = vmatprep.mubr.bf16.mxu0 %v2719
        %4078 = vmatmul.mubr.bf16.gmra.mxu0 %v2718
        %v4079 = vpop.f32.mrf.mxu0
        %v4080 = vadd.f32 %v4039, %v4079
        %v4081 = vpop.f32.mrf.mxu0
        %v4082 = vadd.f32 %v4041, %v4081
        %v4083 = vpop.f32.mrf.mxu0
        %v4084 = vpop.f32.mrf.mxu0
        %4085 = vdwg.mxu0
        %4086 = vmatprep.subr.bf16.mxu0 %v3551
        %4087 = vmatpush1.bf16.msra.mxu0 %v3550
        %4088 = vmatprep.subr.bf16.mxu0 %v3543
        %4089 = vmatpush1.bf16.msra.mxu0 %v3542
        %4090 = vmatprep.subr.bf16.mxu0 %v3535
        %4091 = vmatpush1.bf16.msra.mxu0 %v3534
        %4092 = vmatprep.subr.bf16.mxu0 %v3527
        %4093 = vmatpush1.bf16.msra.mxu0 %v3526
        %4094 = vmatprep.subr.bf16.mxu0 %v3519
        %4095 = vmatpush1.bf16.msra.mxu0 %v3518
        %4096 = vmatprep.subr.bf16.mxu0 %v3511
        %4097 = vmatpush1.bf16.msra.mxu0 %v3510
        %4098 = vmatprep.subr.bf16.mxu0 %v3503
        %4099 = vmatpush1.bf16.msra.mxu0 %v3502
        %4100 = vmatprep.subr.bf16.mxu0 %v3495
        %4101 = vmatpush1.bf16.msra.mxu0 %v3494
        %4102 = vmatprep.subr.bf16.mxu0 %v3615
        %4103 = vmatpush2.bf16.msra.mxu0 %v3614
        %4104 = vmatprep.subr.bf16.mxu0 %v3607
        %4105 = vmatpush2.bf16.msra.mxu0 %v3606
        %4106 = vmatprep.subr.bf16.mxu0 %v3599
        %4107 = vmatpush2.bf16.msra.mxu0 %v3598
        %4108 = vmatprep.subr.bf16.mxu0 %v3591
        %4109 = vmatpush2.bf16.msra.mxu0 %v3590
        %4110 = vmatprep.subr.bf16.mxu0 %v3583
        %4111 = vmatpush2.bf16.msra.mxu0 %v3582
        %4112 = vmatprep.subr.bf16.mxu0 %v3575
        %4113 = vmatpush2.bf16.msra.mxu0 %v3574
        %4114 = vmatprep.subr.bf16.mxu0 %v3567
        %4115 = vmatpush2.bf16.msra.mxu0 %v3566
        %4116 = vmatprep.subr.bf16.mxu0 %v3559
        %4117 = vmatpush2.bf16.msra.mxu0 %v3558
        %4118 = vmatprep.mubr.bf16.mxu0 %v2717
        %4119 = vmatmul.mubr.bf16.gmra.mxu0 %v2716
        %v4120 = vpop.f32.mrf.mxu0
        %v4121 = vadd.f32 %v2540, %v4120
        %v4122 = vpop.f32.mrf.mxu0
        %v4123 = vadd.f32 %v2542, %v4122
        %v4124 = vpop.f32.mrf.mxu0
        %v4125 = vpop.f32.mrf.mxu0
        %4126 = vdwg.mxu0
        %4127 = vmatprep.subr.bf16.mxu0 %v3679
        %4128 = vmatpush1.bf16.msra.mxu0 %v3678
        %4129 = vmatprep.subr.bf16.mxu0 %v3671
        %4130 = vmatpush1.bf16.msra.mxu0 %v3670
        %4131 = vmatprep.subr.bf16.mxu0 %v3663
        %4132 = vmatpush1.bf16.msra.mxu0 %v3662
        %4133 = vmatprep.subr.bf16.mxu0 %v3655
        %4134 = vmatpush1.bf16.msra.mxu0 %v3654
        %4135 = vmatprep.subr.bf16.mxu0 %v3647
        %4136 = vmatpush1.bf16.msra.mxu0 %v3646
        %4137 = vmatprep.subr.bf16.mxu0 %v3639
        %4138 = vmatpush1.bf16.msra.mxu0 %v3638
        %4139 = vmatprep.subr.bf16.mxu0 %v3631
        %4140 = vmatpush1.bf16.msra.mxu0 %v3630
        %4141 = vmatprep.subr.bf16.mxu0 %v3623
        %4142 = vmatpush1.bf16.msra.mxu0 %v3622
        %4143 = vmatprep.subr.bf16.mxu0 %v3743
        %4144 = vmatpush2.bf16.msra.mxu0 %v3742
        %4145 = vmatprep.subr.bf16.mxu0 %v3735
        %4146 = vmatpush2.bf16.msra.mxu0 %v3734
        %4147 = vmatprep.subr.bf16.mxu0 %v3727
        %4148 = vmatpush2.bf16.msra.mxu0 %v3726
        %4149 = vmatprep.subr.bf16.mxu0 %v3719
        %4150 = vmatpush2.bf16.msra.mxu0 %v3718
        %4151 = vmatprep.subr.bf16.mxu0 %v3711
        %4152 = vmatpush2.bf16.msra.mxu0 %v3710
        %4153 = vmatprep.subr.bf16.mxu0 %v3703
        %4154 = vmatpush2.bf16.msra.mxu0 %v3702
        %4155 = vmatprep.subr.bf16.mxu0 %v3695
        %4156 = vmatpush2.bf16.msra.mxu0 %v3694
        %4157 = vmatprep.subr.bf16.mxu0 %v3687
        %4158 = vmatpush2.bf16.msra.mxu0 %v3686
        %4159 = vmatprep.mubr.bf16.mxu0 %v2719
        %4160 = vmatmul.mubr.bf16.gmra.mxu0 %v2718
        %v4161 = vpop.f32.mrf.mxu0
        %v4162 = vadd.f32 %v4121, %v4161
        %v4163 = vpop.f32.mrf.mxu0
        %v4164 = vadd.f32 %v4123, %v4163
        %v4165 = vpop.f32.mrf.mxu0
        %v4166 = vpop.f32.mrf.mxu0
        %4167 = vdwg.mxu0
        %4168 = vmatprep.subr.bf16.mxu0 %v3553
        %4169 = vmatpush1.bf16.msra.mxu0 %v3552
        %4170 = vmatprep.subr.bf16.mxu0 %v3545
        %4171 = vmatpush1.bf16.msra.mxu0 %v3544
        %4172 = vmatprep.subr.bf16.mxu0 %v3537
        %4173 = vmatpush1.bf16.msra.mxu0 %v3536
        %4174 = vmatprep.subr.bf16.mxu0 %v3529
        %4175 = vmatpush1.bf16.msra.mxu0 %v3528
        %4176 = vmatprep.subr.bf16.mxu0 %v3521
        %4177 = vmatpush1.bf16.msra.mxu0 %v3520
        %4178 = vmatprep.subr.bf16.mxu0 %v3513
        %4179 = vmatpush1.bf16.msra.mxu0 %v3512
        %4180 = vmatprep.subr.bf16.mxu0 %v3505
        %4181 = vmatpush1.bf16.msra.mxu0 %v3504
        %4182 = vmatprep.subr.bf16.mxu0 %v3497
        %4183 = vmatpush1.bf16.msra.mxu0 %v3496
        %4184 = vmatprep.subr.bf16.mxu0 %v3617
        %4185 = vmatpush2.bf16.msra.mxu0 %v3616
        %4186 = vmatprep.subr.bf16.mxu0 %v3609
        %4187 = vmatpush2.bf16.msra.mxu0 %v3608
        %4188 = vmatprep.subr.bf16.mxu0 %v3601
        %4189 = vmatpush2.bf16.msra.mxu0 %v3600
        %4190 = vmatprep.subr.bf16.mxu0 %v3593
        %4191 = vmatpush2.bf16.msra.mxu0 %v3592
        %4192 = vmatprep.subr.bf16.mxu0 %v3585
        %4193 = vmatpush2.bf16.msra.mxu0 %v3584
        %4194 = vmatprep.subr.bf16.mxu0 %v3577
        %4195 = vmatpush2.bf16.msra.mxu0 %v3576
        %4196 = vmatprep.subr.bf16.mxu0 %v3569
        %4197 = vmatpush2.bf16.msra.mxu0 %v3568
        %4198 = vmatprep.subr.bf16.mxu0 %v3561
        %4199 = vmatpush2.bf16.msra.mxu0 %v3560
        %4200 = vmatprep.mubr.bf16.mxu0 %v2717
        %4201 = vmatmul.mubr.bf16.gmra.mxu0 %v2716
        %v4202 = vpop.f32.mrf.mxu0
        %v4203 = vadd.f32 %v2622, %v4202
        %v4204 = vpop.f32.mrf.mxu0
        %v4205 = vadd.f32 %v2624, %v4204
        %v4206 = vpop.f32.mrf.mxu0
        %v4207 = vpop.f32.mrf.mxu0
        %4208 = vdwg.mxu0
        %4209 = vmatprep.subr.bf16.mxu0 %v3681
        %4210 = vmatpush1.bf16.msra.mxu0 %v3680
        %4211 = vmatprep.subr.bf16.mxu0 %v3673
        %4212 = vmatpush1.bf16.msra.mxu0 %v3672
        %4213 = vmatprep.subr.bf16.mxu0 %v3665
        %4214 = vmatpush1.bf16.msra.mxu0 %v3664
        %4215 = vmatprep.subr.bf16.mxu0 %v3657
        %4216 = vmatpush1.bf16.msra.mxu0 %v3656
        %4217 = vmatprep.subr.bf16.mxu0 %v3649
        %4218 = vmatpush1.bf16.msra.mxu0 %v3648
        %4219 = vmatprep.subr.bf16.mxu0 %v3641
        %4220 = vmatpush1.bf16.msra.mxu0 %v3640
        %4221 = vmatprep.subr.bf16.mxu0 %v3633
        %4222 = vmatpush1.bf16.msra.mxu0 %v3632
        %4223 = vmatprep.subr.bf16.mxu0 %v3625
        %4224 = vmatpush1.bf16.msra.mxu0 %v3624
        %4225 = vmatprep.subr.bf16.mxu0 %v3745
        %4226 = vmatpush2.bf16.msra.mxu0 %v3744
        %4227 = vmatprep.subr.bf16.mxu0 %v3737
        %4228 = vmatpush2.bf16.msra.mxu0 %v3736
        %4229 = vmatprep.subr.bf16.mxu0 %v3729
        %4230 = vmatpush2.bf16.msra.mxu0 %v3728
        %4231 = vmatprep.subr.bf16.mxu0 %v3721
        %4232 = vmatpush2.bf16.msra.mxu0 %v3720
        %4233 = vmatprep.subr.bf16.mxu0 %v3713
        %4234 = vmatpush2.bf16.msra.mxu0 %v3712
        %4235 = vmatprep.subr.bf16.mxu0 %v3705
        %4236 = vmatpush2.bf16.msra.mxu0 %v3704
        %4237 = vmatprep.subr.bf16.mxu0 %v3697
        %4238 = vmatpush2.bf16.msra.mxu0 %v3696
        %4239 = vmatprep.subr.bf16.mxu0 %v3689
        %4240 = vmatpush2.bf16.msra.mxu0 %v3688
        %4241 = vmatprep.mubr.bf16.mxu0 %v2719
        %4242 = vmatmul.mubr.bf16.gmra.mxu0 %v2718
        %v4243 = vpop.f32.mrf.mxu0
        %v4244 = vadd.f32 %v4203, %v4243
        %v4245 = vpop.f32.mrf.mxu0
        %v4246 = vadd.f32 %v4205, %v4245
        %v4247 = vpop.f32.mrf.mxu0
        %v4248 = vpop.f32.mrf.mxu0
        %4249 = vdwg.mxu0
        %4250 = vmatprep.subr.bf16.mxu0 %v3555
        %4251 = vmatpush1.bf16.msra.mxu0 %v3554
        %4252 = vmatprep.subr.bf16.mxu0 %v3547
        %4253 = vmatpush1.bf16.msra.mxu0 %v3546
        %4254 = vmatprep.subr.bf16.mxu0 %v3539
        %4255 = vmatpush1.bf16.msra.mxu0 %v3538
        %4256 = vmatprep.subr.bf16.mxu0 %v3531
        %4257 = vmatpush1.bf16.msra.mxu0 %v3530
        %4258 = vmatprep.subr.bf16.mxu0 %v3523
        %4259 = vmatpush1.bf16.msra.mxu0 %v3522
        %4260 = vmatprep.subr.bf16.mxu0 %v3515
        %4261 = vmatpush1.bf16.msra.mxu0 %v3514
        %4262 = vmatprep.subr.bf16.mxu0 %v3507
        %4263 = vmatpush1.bf16.msra.mxu0 %v3506
        %4264 = vmatprep.subr.bf16.mxu0 %v3499
        %4265 = vmatpush1.bf16.msra.mxu0 %v3498
        %4266 = vmatprep.subr.bf16.mxu0 %v3619
        %4267 = vmatpush2.bf16.msra.mxu0 %v3618
        %4268 = vmatprep.subr.bf16.mxu0 %v3611
        %4269 = vmatpush2.bf16.msra.mxu0 %v3610
        %4270 = vmatprep.subr.bf16.mxu0 %v3603
        %4271 = vmatpush2.bf16.msra.mxu0 %v3602
        %4272 = vmatprep.subr.bf16.mxu0 %v3595
        %4273 = vmatpush2.bf16.msra.mxu0 %v3594
        %4274 = vmatprep.subr.bf16.mxu0 %v3587
        %4275 = vmatpush2.bf16.msra.mxu0 %v3586
        %4276 = vmatprep.subr.bf16.mxu0 %v3579
        %4277 = vmatpush2.bf16.msra.mxu0 %v3578
        %4278 = vmatprep.subr.bf16.mxu0 %v3571
        %4279 = vmatpush2.bf16.msra.mxu0 %v3570
        %4280 = vmatprep.subr.bf16.mxu0 %v3563
        %4281 = vmatpush2.bf16.msra.mxu0 %v3562
        %4282 = vmatprep.mubr.bf16.mxu0 %v2717
        %4283 = vmatmul.mubr.bf16.gmra.mxu0 %v2716
        %v4284 = vpop.f32.mrf.mxu0
        %v4285 = vadd.f32 %v2704, %v4284
        %v4286 = vpop.f32.mrf.mxu0
        %v4287 = vadd.f32 %v2706, %v4286
        %v4288 = vpop.f32.mrf.mxu0
        %v4289 = vpop.f32.mrf.mxu0
        %4290 = vdwg.mxu0
        %4291 = vmatprep.subr.bf16.mxu0 %v3683
        %4292 = vmatpush1.bf16.msra.mxu0 %v3682
        %4293 = vmatprep.subr.bf16.mxu0 %v3675
        %4294 = vmatpush1.bf16.msra.mxu0 %v3674
        %4295 = vmatprep.subr.bf16.mxu0 %v3667
        %4296 = vmatpush1.bf16.msra.mxu0 %v3666
        %4297 = vmatprep.subr.bf16.mxu0 %v3659
        %4298 = vmatpush1.bf16.msra.mxu0 %v3658
        %4299 = vmatprep.subr.bf16.mxu0 %v3651
        %4300 = vmatpush1.bf16.msra.mxu0 %v3650
        %4301 = vmatprep.subr.bf16.mxu0 %v3643
        %4302 = vmatpush1.bf16.msra.mxu0 %v3642
        %4303 = vmatprep.subr.bf16.mxu0 %v3635
        %4304 = vmatpush1.bf16.msra.mxu0 %v3634
        %4305 = vmatprep.subr.bf16.mxu0 %v3627
        %4306 = vmatpush1.bf16.msra.mxu0 %v3626
        %4307 = vmatprep.subr.bf16.mxu0 %v3747
        %4308 = vmatpush2.bf16.msra.mxu0 %v3746
        %4309 = vmatprep.subr.bf16.mxu0 %v3739
        %4310 = vmatpush2.bf16.msra.mxu0 %v3738
        %4311 = vmatprep.subr.bf16.mxu0 %v3731
        %4312 = vmatpush2.bf16.msra.mxu0 %v3730
        %4313 = vmatprep.subr.bf16.mxu0 %v3723
        %4314 = vmatpush2.bf16.msra.mxu0 %v3722
        %4315 = vmatprep.subr.bf16.mxu0 %v3715
        %4316 = vmatpush2.bf16.msra.mxu0 %v3714
        %4317 = vmatprep.subr.bf16.mxu0 %v3707
        %4318 = vmatpush2.bf16.msra.mxu0 %v3706
        %4319 = vmatprep.subr.bf16.mxu0 %v3699
        %4320 = vmatpush2.bf16.msra.mxu0 %v3698
        %4321 = vmatprep.subr.bf16.mxu0 %v3691
        %4322 = vmatpush2.bf16.msra.mxu0 %v3690
        %4323 = vmatprep.mubr.bf16.mxu0 %v2719
        %4324 = vmatmul.mubr.bf16.gmra.mxu0 %v2718
        %v4325 = vpop.f32.mrf.mxu0
        %v4326 = vadd.f32 %v4285, %v4325
        %v4327 = vpop.f32.mrf.mxu0
        %v4328 = vadd.f32 %v4287, %v4327
        %v4329 = vpop.f32.mrf.mxu0
        %v4330 = vpop.f32.mrf.mxu0
        %4331 = vdwg.mxu0
        %v4333 = vshrl.u32 %v2716, 16
        %v4335 = vshll.u32 %v2716, 16
        %v4337 = vrot.slane %v4335, 1
        %v4338 = vor.u32 %v4333, %v4337
        %v4340 = vshrl.u32 %v2717, 16
        %v4342 = vshll.u32 %v2717, 16
        %v4344 = vrot.slane %v4342, 1
        %v4345 = vor.u32 %v4340, %v4344
        %v4347 = vshrl.u32 %v2718, 16
        %v4349 = vshll.u32 %v2718, 16
        %v4351 = vrot.slane %v4349, 1
        %v4352 = vor.u32 %v4347, %v4351
        %v4354 = vshrl.u32 %v2719, 16
        %v4356 = vshll.u32 %v2719, 16
        %v4358 = vrot.slane %v4356, 1
        %v4359 = vor.u32 %v4354, %v4358
        %v4620 = vunpack.c.l.b16 %v832
        %v4621 = vunpack.c.h.b16 %v832
        %v4622 = vunpack.c.l.b16 %v833
        %v4623 = vunpack.c.h.b16 %v833
        %v4624 = vunpack.c.l.b16 %v834
        %v4625 = vunpack.c.h.b16 %v834
        %v4626 = vunpack.c.l.b16 %v835
        %v4627 = vunpack.c.h.b16 %v835
        %v4628 = vunpack.c.l.b16 %v836
        %v4629 = vunpack.c.h.b16 %v836
        %v4630 = vunpack.c.l.b16 %v837
        %v4631 = vunpack.c.h.b16 %v837
        %v4632 = vunpack.c.l.b16 %v838
        %v4633 = vunpack.c.h.b16 %v838
        %v4634 = vunpack.c.l.b16 %v839
        %v4635 = vunpack.c.h.b16 %v839
        %v4636 = vunpack.c.l.b16 %v840
        %v4637 = vunpack.c.h.b16 %v840
        %v4638 = vunpack.c.l.b16 %v841
        %v4639 = vunpack.c.h.b16 %v841
        %v4640 = vunpack.c.l.b16 %v842
        %v4641 = vunpack.c.h.b16 %v842
        %v4642 = vunpack.c.l.b16 %v843
        %v4643 = vunpack.c.h.b16 %v843
        %v4644 = vunpack.c.l.b16 %v844
        %v4645 = vunpack.c.h.b16 %v844
        %v4646 = vunpack.c.l.b16 %v845
        %v4647 = vunpack.c.h.b16 %v845
        %v4648 = vunpack.c.l.b16 %v846
        %v4649 = vunpack.c.h.b16 %v846
        %v4650 = vunpack.c.l.b16 %v847
        %v4651 = vunpack.c.h.b16 %v847
        %v4652 = vunpack.c.l.b16 %v848
        %v4653 = vunpack.c.h.b16 %v848
        %v4654 = vunpack.c.l.b16 %v849
        %v4655 = vunpack.c.h.b16 %v849
        %v4656 = vunpack.c.l.b16 %v850
        %v4657 = vunpack.c.h.b16 %v850
        %v4658 = vunpack.c.l.b16 %v851
        %v4659 = vunpack.c.h.b16 %v851
        %v4660 = vunpack.c.l.b16 %v852
        %v4661 = vunpack.c.h.b16 %v852
        %v4662 = vunpack.c.l.b16 %v853
        %v4663 = vunpack.c.h.b16 %v853
        %v4664 = vunpack.c.l.b16 %v854
        %v4665 = vunpack.c.h.b16 %v854
        %v4666 = vunpack.c.l.b16 %v855
        %v4667 = vunpack.c.h.b16 %v855
        %v4668 = vunpack.c.l.b16 %v856
        %v4669 = vunpack.c.h.b16 %v856
        %v4670 = vunpack.c.l.b16 %v857
        %v4671 = vunpack.c.h.b16 %v857
        %v4672 = vunpack.c.l.b16 %v858
        %v4673 = vunpack.c.h.b16 %v858
        %v4674 = vunpack.c.l.b16 %v859
        %v4675 = vunpack.c.h.b16 %v859
        %v4676 = vunpack.c.l.b16 %v860
        %v4677 = vunpack.c.h.b16 %v860
        %v4678 = vunpack.c.l.b16 %v861
        %v4679 = vunpack.c.h.b16 %v861
        %v4680 = vunpack.c.l.b16 %v862
        %v4681 = vunpack.c.h.b16 %v862
        %v4682 = vunpack.c.l.b16 %v863
        %v4683 = vunpack.c.h.b16 %v863
        %v4684 = vunpack.c.l.b16 %v864
        %v4685 = vunpack.c.h.b16 %v864
        %v4686 = vunpack.c.l.b16 %v865
        %v4687 = vunpack.c.h.b16 %v865
        %v4688 = vunpack.c.l.b16 %v866
        %v4689 = vunpack.c.h.b16 %v866
        %v4690 = vunpack.c.l.b16 %v867
        %v4691 = vunpack.c.h.b16 %v867
        %v4692 = vunpack.c.l.b16 %v868
        %v4693 = vunpack.c.h.b16 %v868
        %v4694 = vunpack.c.l.b16 %v869
        %v4695 = vunpack.c.h.b16 %v869
        %v4696 = vunpack.c.l.b16 %v870
        %v4697 = vunpack.c.h.b16 %v870
        %v4698 = vunpack.c.l.b16 %v871
        %v4699 = vunpack.c.h.b16 %v871
        %v4700 = vunpack.c.l.b16 %v872
        %v4701 = vunpack.c.h.b16 %v872
        %v4702 = vunpack.c.l.b16 %v873
        %v4703 = vunpack.c.h.b16 %v873
        %v4704 = vunpack.c.l.b16 %v874
        %v4705 = vunpack.c.h.b16 %v874
        %v4706 = vunpack.c.l.b16 %v875
        %v4707 = vunpack.c.h.b16 %v875
        %v4708 = vunpack.c.l.b16 %v876
        %v4709 = vunpack.c.h.b16 %v876
        %v4710 = vunpack.c.l.b16 %v877
        %v4711 = vunpack.c.h.b16 %v877
        %v4712 = vunpack.c.l.b16 %v878
        %v4713 = vunpack.c.h.b16 %v878
        %v4714 = vunpack.c.l.b16 %v879
        %v4715 = vunpack.c.h.b16 %v879
        %v4716 = vunpack.c.l.b16 %v880
        %v4717 = vunpack.c.h.b16 %v880
        %v4718 = vunpack.c.l.b16 %v881
        %v4719 = vunpack.c.h.b16 %v881
        %v4720 = vunpack.c.l.b16 %v882
        %v4721 = vunpack.c.h.b16 %v882
        %v4722 = vunpack.c.l.b16 %v883
        %v4723 = vunpack.c.h.b16 %v883
        %v4724 = vunpack.c.l.b16 %v884
        %v4725 = vunpack.c.h.b16 %v884
        %v4726 = vunpack.c.l.b16 %v885
        %v4727 = vunpack.c.h.b16 %v885
        %v4728 = vunpack.c.l.b16 %v886
        %v4729 = vunpack.c.h.b16 %v886
        %v4730 = vunpack.c.l.b16 %v887
        %v4731 = vunpack.c.h.b16 %v887
        %v4732 = vunpack.c.l.b16 %v888
        %v4733 = vunpack.c.h.b16 %v888
        %v4734 = vunpack.c.l.b16 %v889
        %v4735 = vunpack.c.h.b16 %v889
        %v4736 = vunpack.c.l.b16 %v890
        %v4737 = vunpack.c.h.b16 %v890
        %v4738 = vunpack.c.l.b16 %v891
        %v4739 = vunpack.c.h.b16 %v891
        %v4740 = vunpack.c.l.b16 %v892
        %v4741 = vunpack.c.h.b16 %v892
        %v4742 = vunpack.c.l.b16 %v893
        %v4743 = vunpack.c.h.b16 %v893
        %v4744 = vunpack.c.l.b16 %v894
        %v4745 = vunpack.c.h.b16 %v894
        %v4746 = vunpack.c.l.b16 %v895
        %v4747 = vunpack.c.h.b16 %v895
        %v4748 = vunpack.c.l.b16 %v896
        %v4749 = vunpack.c.h.b16 %v896
        %v4750 = vunpack.c.l.b16 %v897
        %v4751 = vunpack.c.h.b16 %v897
        %v4752 = vunpack.c.l.b16 %v898
        %v4753 = vunpack.c.h.b16 %v898
        %v4754 = vunpack.c.l.b16 %v899
        %v4755 = vunpack.c.h.b16 %v899
        %v4756 = vunpack.c.l.b16 %v900
        %v4757 = vunpack.c.h.b16 %v900
        %v4758 = vunpack.c.l.b16 %v901
        %v4759 = vunpack.c.h.b16 %v901
        %v4760 = vunpack.c.l.b16 %v902
        %v4761 = vunpack.c.h.b16 %v902
        %v4762 = vunpack.c.l.b16 %v903
        %v4763 = vunpack.c.h.b16 %v903
        %v4764 = vunpack.c.l.b16 %v904
        %v4765 = vunpack.c.h.b16 %v904
        %v4766 = vunpack.c.l.b16 %v905
        %v4767 = vunpack.c.h.b16 %v905
        %v4768 = vunpack.c.l.b16 %v906
        %v4769 = vunpack.c.h.b16 %v906
        %v4770 = vunpack.c.l.b16 %v907
        %v4771 = vunpack.c.h.b16 %v907
        %v4772 = vunpack.c.l.b16 %v908
        %v4773 = vunpack.c.h.b16 %v908
        %v4774 = vunpack.c.l.b16 %v909
        %v4775 = vunpack.c.h.b16 %v909
        %v4776 = vunpack.c.l.b16 %v910
        %v4777 = vunpack.c.h.b16 %v910
        %v4778 = vunpack.c.l.b16 %v911
        %v4779 = vunpack.c.h.b16 %v911
        %v4780 = vunpack.c.l.b16 %v912
        %v4781 = vunpack.c.h.b16 %v912
        %v4782 = vunpack.c.l.b16 %v913
        %v4783 = vunpack.c.h.b16 %v913
        %v4784 = vunpack.c.l.b16 %v914
        %v4785 = vunpack.c.h.b16 %v914
        %v4786 = vunpack.c.l.b16 %v915
        %v4787 = vunpack.c.h.b16 %v915
        %v4788 = vunpack.c.l.b16 %v916
        %v4789 = vunpack.c.h.b16 %v916
        %v4790 = vunpack.c.l.b16 %v917
        %v4791 = vunpack.c.h.b16 %v917
        %v4792 = vunpack.c.l.b16 %v918
        %v4793 = vunpack.c.h.b16 %v918
        %v4794 = vunpack.c.l.b16 %v919
        %v4795 = vunpack.c.h.b16 %v919
        %v4796 = vunpack.c.l.b16 %v920
        %v4797 = vunpack.c.h.b16 %v920
        %v4798 = vunpack.c.l.b16 %v921
        %v4799 = vunpack.c.h.b16 %v921
        %v4800 = vunpack.c.l.b16 %v922
        %v4801 = vunpack.c.h.b16 %v922
        %v4802 = vunpack.c.l.b16 %v923
        %v4803 = vunpack.c.h.b16 %v923
        %v4804 = vunpack.c.l.b16 %v924
        %v4805 = vunpack.c.h.b16 %v924
        %v4806 = vunpack.c.l.b16 %v925
        %v4807 = vunpack.c.h.b16 %v925
        %v4808 = vunpack.c.l.b16 %v926
        %v4809 = vunpack.c.h.b16 %v926
        %v4810 = vunpack.c.l.b16 %v927
        %v4811 = vunpack.c.h.b16 %v927
        %v4812 = vunpack.c.l.b16 %v928
        %v4813 = vunpack.c.h.b16 %v928
        %v4814 = vunpack.c.l.b16 %v929
        %v4815 = vunpack.c.h.b16 %v929
        %v4816 = vunpack.c.l.b16 %v930
        %v4817 = vunpack.c.h.b16 %v930
        %v4818 = vunpack.c.l.b16 %v931
        %v4819 = vunpack.c.h.b16 %v931
        %v4820 = vunpack.c.l.b16 %v932
        %v4821 = vunpack.c.h.b16 %v932
        %v4822 = vunpack.c.l.b16 %v933
        %v4823 = vunpack.c.h.b16 %v933
        %v4824 = vunpack.c.l.b16 %v934
        %v4825 = vunpack.c.h.b16 %v934
        %v4826 = vunpack.c.l.b16 %v935
        %v4827 = vunpack.c.h.b16 %v935
        %v4828 = vunpack.c.l.b16 %v936
        %v4829 = vunpack.c.h.b16 %v936
        %v4830 = vunpack.c.l.b16 %v937
        %v4831 = vunpack.c.h.b16 %v937
        %v4832 = vunpack.c.l.b16 %v938
        %v4833 = vunpack.c.h.b16 %v938
        %v4834 = vunpack.c.l.b16 %v939
        %v4835 = vunpack.c.h.b16 %v939
        %v4836 = vunpack.c.l.b16 %v940
        %v4837 = vunpack.c.h.b16 %v940
        %v4838 = vunpack.c.l.b16 %v941
        %v4839 = vunpack.c.h.b16 %v941
        %v4840 = vunpack.c.l.b16 %v942
        %v4841 = vunpack.c.h.b16 %v942
        %v4842 = vunpack.c.l.b16 %v943
        %v4843 = vunpack.c.h.b16 %v943
        %v4844 = vunpack.c.l.b16 %v944
        %v4845 = vunpack.c.h.b16 %v944
        %v4846 = vunpack.c.l.b16 %v945
        %v4847 = vunpack.c.h.b16 %v945
        %v4848 = vunpack.c.l.b16 %v946
        %v4849 = vunpack.c.h.b16 %v946
        %v4850 = vunpack.c.l.b16 %v947
        %v4851 = vunpack.c.h.b16 %v947
        %v4852 = vunpack.c.l.b16 %v948
        %v4853 = vunpack.c.h.b16 %v948
        %v4854 = vunpack.c.l.b16 %v949
        %v4855 = vunpack.c.h.b16 %v949
        %v4856 = vunpack.c.l.b16 %v950
        %v4857 = vunpack.c.h.b16 %v950
        %v4858 = vunpack.c.l.b16 %v951
        %v4859 = vunpack.c.h.b16 %v951
        %v4860 = vunpack.c.l.b16 %v952
        %v4861 = vunpack.c.h.b16 %v952
        %v4862 = vunpack.c.l.b16 %v953
        %v4863 = vunpack.c.h.b16 %v953
        %v4864 = vunpack.c.l.b16 %v954
        %v4865 = vunpack.c.h.b16 %v954
        %v4866 = vunpack.c.l.b16 %v955
        %v4867 = vunpack.c.h.b16 %v955
        %v4868 = vunpack.c.l.b16 %v956
        %v4869 = vunpack.c.h.b16 %v956
        %v4870 = vunpack.c.l.b16 %v957
        %v4871 = vunpack.c.h.b16 %v957
        %v4872 = vunpack.c.l.b16 %v958
        %v4873 = vunpack.c.h.b16 %v958
        %v4874 = vunpack.c.l.b16 %v959
        %v4875 = vunpack.c.h.b16 %v959
        %v4876 = vunpack.c.l.b16 %v960
        %v4877 = vunpack.c.h.b16 %v960
        %v4878 = vunpack.c.l.b16 %v961
        %v4879 = vunpack.c.h.b16 %v961
        %v4880 = vunpack.c.l.b16 %v962
        %v4881 = vunpack.c.h.b16 %v962
        %v4882 = vunpack.c.l.b16 %v963
        %v4883 = vunpack.c.h.b16 %v963
        %v4884 = vunpack.c.l.b16 %v964
        %v4885 = vunpack.c.h.b16 %v964
        %v4886 = vunpack.c.l.b16 %v965
        %v4887 = vunpack.c.h.b16 %v965
        %v4888 = vunpack.c.l.b16 %v966
        %v4889 = vunpack.c.h.b16 %v966
        %v4890 = vunpack.c.l.b16 %v967
        %v4891 = vunpack.c.h.b16 %v967
        %v4892 = vunpack.c.l.b16 %v968
        %v4893 = vunpack.c.h.b16 %v968
        %v4894 = vunpack.c.l.b16 %v969
        %v4895 = vunpack.c.h.b16 %v969
        %v4896 = vunpack.c.l.b16 %v970
        %v4897 = vunpack.c.h.b16 %v970
        %v4898 = vunpack.c.l.b16 %v971
        %v4899 = vunpack.c.h.b16 %v971
        %v4900 = vunpack.c.l.b16 %v972
        %v4901 = vunpack.c.h.b16 %v972
        %v4902 = vunpack.c.l.b16 %v973
        %v4903 = vunpack.c.h.b16 %v973
        %v4904 = vunpack.c.l.b16 %v974
        %v4905 = vunpack.c.h.b16 %v974
        %v4906 = vunpack.c.l.b16 %v975
        %v4907 = vunpack.c.h.b16 %v975
        %v4908 = vunpack.c.l.b16 %v976
        %v4909 = vunpack.c.h.b16 %v976
        %v4910 = vunpack.c.l.b16 %v977
        %v4911 = vunpack.c.h.b16 %v977
        %v4912 = vunpack.c.l.b16 %v978
        %v4913 = vunpack.c.h.b16 %v978
        %v4914 = vunpack.c.l.b16 %v979
        %v4915 = vunpack.c.h.b16 %v979
        %v4916 = vunpack.c.l.b16 %v980
        %v4917 = vunpack.c.h.b16 %v980
        %v4918 = vunpack.c.l.b16 %v981
        %v4919 = vunpack.c.h.b16 %v981
        %v4920 = vunpack.c.l.b16 %v982
        %v4921 = vunpack.c.h.b16 %v982
        %v4922 = vunpack.c.l.b16 %v983
        %v4923 = vunpack.c.h.b16 %v983
        %v4924 = vunpack.c.l.b16 %v984
        %v4925 = vunpack.c.h.b16 %v984
        %v4926 = vunpack.c.l.b16 %v985
        %v4927 = vunpack.c.h.b16 %v985
        %v4928 = vunpack.c.l.b16 %v986
        %v4929 = vunpack.c.h.b16 %v986
        %v4930 = vunpack.c.l.b16 %v987
        %v4931 = vunpack.c.h.b16 %v987
        %v4932 = vunpack.c.l.b16 %v988
        %v4933 = vunpack.c.h.b16 %v988
        %v4934 = vunpack.c.l.b16 %v989
        %v4935 = vunpack.c.h.b16 %v989
        %v4936 = vunpack.c.l.b16 %v990
        %v4937 = vunpack.c.h.b16 %v990
        %v4938 = vunpack.c.l.b16 %v991
        %v4939 = vunpack.c.h.b16 %v991
        %v4940 = vunpack.c.l.b16 %v992
        %v4941 = vunpack.c.h.b16 %v992
        %v4942 = vunpack.c.l.b16 %v993
        %v4943 = vunpack.c.h.b16 %v993
        %v4944 = vunpack.c.l.b16 %v994
        %v4945 = vunpack.c.h.b16 %v994
        %v4946 = vunpack.c.l.b16 %v995
        %v4947 = vunpack.c.h.b16 %v995
        %v4948 = vunpack.c.l.b16 %v996
        %v4949 = vunpack.c.h.b16 %v996
        %v4950 = vunpack.c.l.b16 %v997
        %v4951 = vunpack.c.h.b16 %v997
        %v4952 = vunpack.c.l.b16 %v998
        %v4953 = vunpack.c.h.b16 %v998
        %v4954 = vunpack.c.l.b16 %v999
        %v4955 = vunpack.c.h.b16 %v999
        %v4956 = vunpack.c.l.b16 %v1000
        %v4957 = vunpack.c.h.b16 %v1000
        %v4958 = vunpack.c.l.b16 %v1001
        %v4959 = vunpack.c.h.b16 %v1001
        %v4960 = vunpack.c.l.b16 %v1002
        %v4961 = vunpack.c.h.b16 %v1002
        %v4962 = vunpack.c.l.b16 %v1003
        %v4963 = vunpack.c.h.b16 %v1003
        %v4964 = vunpack.c.l.b16 %v1004
        %v4965 = vunpack.c.h.b16 %v1004
        %v4966 = vunpack.c.l.b16 %v1005
        %v4967 = vunpack.c.h.b16 %v1005
        %v4968 = vunpack.c.l.b16 %v1006
        %v4969 = vunpack.c.h.b16 %v1006
        %v4970 = vunpack.c.l.b16 %v1007
        %v4971 = vunpack.c.h.b16 %v1007
        %v4972 = vunpack.c.l.b16 %v1008
        %v4973 = vunpack.c.h.b16 %v1008
        %v4974 = vunpack.c.l.b16 %v1009
        %v4975 = vunpack.c.h.b16 %v1009
        %v4976 = vunpack.c.l.b16 %v1010
        %v4977 = vunpack.c.h.b16 %v1010
        %v4978 = vunpack.c.l.b16 %v1011
        %v4979 = vunpack.c.h.b16 %v1011
        %v4980 = vunpack.c.l.b16 %v1012
        %v4981 = vunpack.c.h.b16 %v1012
        %v4982 = vunpack.c.l.b16 %v1013
        %v4983 = vunpack.c.h.b16 %v1013
        %v4984 = vunpack.c.l.b16 %v1014
        %v4985 = vunpack.c.h.b16 %v1014
        %v4986 = vunpack.c.l.b16 %v1015
        %v4987 = vunpack.c.h.b16 %v1015
        %v4988 = vunpack.c.l.b16 %v1016
        %v4989 = vunpack.c.h.b16 %v1016
        %v4990 = vunpack.c.l.b16 %v1017
        %v4991 = vunpack.c.h.b16 %v1017
        %v4992 = vunpack.c.l.b16 %v1018
        %v4993 = vunpack.c.h.b16 %v1018
        %v4994 = vunpack.c.l.b16 %v1019
        %v4995 = vunpack.c.h.b16 %v1019
        %v4996 = vunpack.c.l.b16 %v1020
        %v4997 = vunpack.c.h.b16 %v1020
        %v4998 = vunpack.c.l.b16 %v1021
        %v4999 = vunpack.c.h.b16 %v1021
        %v5000 = vunpack.c.l.b16 %v1022
        %v5001 = vunpack.c.h.b16 %v1022
        %v5002 = vunpack.c.l.b16 %v1023
        %v5003 = vunpack.c.h.b16 %v1023
        %v5004 = vunpack.c.l.b16 %v1024
        %v5005 = vunpack.c.h.b16 %v1024
        %v5006 = vunpack.c.l.b16 %v1025
        %v5007 = vunpack.c.h.b16 %v1025
        %v5008 = vunpack.c.l.b16 %v1026
        %v5009 = vunpack.c.h.b16 %v1026
        %v5010 = vunpack.c.l.b16 %v1027
        %v5011 = vunpack.c.h.b16 %v1027
        %v5012 = vunpack.c.l.b16 %v1028
        %v5013 = vunpack.c.h.b16 %v1028
        %v5014 = vunpack.c.l.b16 %v1029
        %v5015 = vunpack.c.h.b16 %v1029
        %v5016 = vunpack.c.l.b16 %v1030
        %v5017 = vunpack.c.h.b16 %v1030
        %v5018 = vunpack.c.l.b16 %v1031
        %v5019 = vunpack.c.h.b16 %v1031
        %v5020 = vunpack.c.l.b16 %v1032
        %v5021 = vunpack.c.h.b16 %v1032
        %v5022 = vunpack.c.l.b16 %v1033
        %v5023 = vunpack.c.h.b16 %v1033
        %v5024 = vunpack.c.l.b16 %v1034
        %v5025 = vunpack.c.h.b16 %v1034
        %v5026 = vunpack.c.l.b16 %v1035
        %v5027 = vunpack.c.h.b16 %v1035
        %v5028 = vunpack.c.l.b16 %v1036
        %v5029 = vunpack.c.h.b16 %v1036
        %v5030 = vunpack.c.l.b16 %v1037
        %v5031 = vunpack.c.h.b16 %v1037
        %v5032 = vunpack.c.l.b16 %v1038
        %v5033 = vunpack.c.h.b16 %v1038
        %v5034 = vunpack.c.l.b16 %v1039
        %v5035 = vunpack.c.h.b16 %v1039
        %v5036 = vunpack.c.l.b16 %v1040
        %v5037 = vunpack.c.h.b16 %v1040
        %v5038 = vunpack.c.l.b16 %v1041
        %v5039 = vunpack.c.h.b16 %v1041
        %v5040 = vunpack.c.l.b16 %v1042
        %v5041 = vunpack.c.h.b16 %v1042
        %v5042 = vunpack.c.l.b16 %v1043
        %v5043 = vunpack.c.h.b16 %v1043
        %v5044 = vunpack.c.l.b16 %v1044
        %v5045 = vunpack.c.h.b16 %v1044
        %v5046 = vunpack.c.l.b16 %v1045
        %v5047 = vunpack.c.h.b16 %v1045
        %v5048 = vunpack.c.l.b16 %v1046
        %v5049 = vunpack.c.h.b16 %v1046
        %v5050 = vunpack.c.l.b16 %v1047
        %v5051 = vunpack.c.h.b16 %v1047
        %v5052 = vunpack.c.l.b16 %v1048
        %v5053 = vunpack.c.h.b16 %v1048
        %v5054 = vunpack.c.l.b16 %v1049
        %v5055 = vunpack.c.h.b16 %v1049
        %v5056 = vunpack.c.l.b16 %v1050
        %v5057 = vunpack.c.h.b16 %v1050
        %v5058 = vunpack.c.l.b16 %v1051
        %v5059 = vunpack.c.h.b16 %v1051
        %v5060 = vunpack.c.l.b16 %v1052
        %v5061 = vunpack.c.h.b16 %v1052
        %v5062 = vunpack.c.l.b16 %v1053
        %v5063 = vunpack.c.h.b16 %v1053
        %v5064 = vunpack.c.l.b16 %v1054
        %v5065 = vunpack.c.h.b16 %v1054
        %v5066 = vunpack.c.l.b16 %v1055
        %v5067 = vunpack.c.h.b16 %v1055
        %v5068 = vunpack.c.l.b16 %v1056
        %v5069 = vunpack.c.h.b16 %v1056
        %v5070 = vunpack.c.l.b16 %v1057
        %v5071 = vunpack.c.h.b16 %v1057
        %v5072 = vunpack.c.l.b16 %v1058
        %v5073 = vunpack.c.h.b16 %v1058
        %v5074 = vunpack.c.l.b16 %v1059
        %v5075 = vunpack.c.h.b16 %v1059
        %v5076 = vunpack.c.l.b16 %v1060
        %v5077 = vunpack.c.h.b16 %v1060
        %v5078 = vunpack.c.l.b16 %v1061
        %v5079 = vunpack.c.h.b16 %v1061
        %v5080 = vunpack.c.l.b16 %v1062
        %v5081 = vunpack.c.h.b16 %v1062
        %v5082 = vunpack.c.l.b16 %v1063
        %v5083 = vunpack.c.h.b16 %v1063
        %v5084 = vunpack.c.l.b16 %v1064
        %v5085 = vunpack.c.h.b16 %v1064
        %v5086 = vunpack.c.l.b16 %v1065
        %v5087 = vunpack.c.h.b16 %v1065
        %v5088 = vunpack.c.l.b16 %v1066
        %v5089 = vunpack.c.h.b16 %v1066
        %v5090 = vunpack.c.l.b16 %v1067
        %v5091 = vunpack.c.h.b16 %v1067
        %v5092 = vunpack.c.l.b16 %v1068
        %v5093 = vunpack.c.h.b16 %v1068
        %v5094 = vunpack.c.l.b16 %v1069
        %v5095 = vunpack.c.h.b16 %v1069
        %v5096 = vunpack.c.l.b16 %v1070
        %v5097 = vunpack.c.h.b16 %v1070
        %v5098 = vunpack.c.l.b16 %v1071
        %v5099 = vunpack.c.h.b16 %v1071
        %v5100 = vunpack.c.l.b16 %v1072
        %v5101 = vunpack.c.h.b16 %v1072
        %v5102 = vunpack.c.l.b16 %v1073
        %v5103 = vunpack.c.h.b16 %v1073
        %v5104 = vunpack.c.l.b16 %v1074
        %v5105 = vunpack.c.h.b16 %v1074
        %v5106 = vunpack.c.l.b16 %v1075
        %v5107 = vunpack.c.h.b16 %v1075
        %v5108 = vunpack.c.l.b16 %v1076
        %v5109 = vunpack.c.h.b16 %v1076
        %v5110 = vunpack.c.l.b16 %v1077
        %v5111 = vunpack.c.h.b16 %v1077
        %v5112 = vunpack.c.l.b16 %v1078
        %v5113 = vunpack.c.h.b16 %v1078
        %v5114 = vunpack.c.l.b16 %v1079
        %v5115 = vunpack.c.h.b16 %v1079
        %v5116 = vunpack.c.l.b16 %v1080
        %v5117 = vunpack.c.h.b16 %v1080
        %v5118 = vunpack.c.l.b16 %v1081
        %v5119 = vunpack.c.h.b16 %v1081
        %v5120 = vunpack.c.l.b16 %v1082
        %v5121 = vunpack.c.h.b16 %v1082
        %v5122 = vunpack.c.l.b16 %v1083
        %v5123 = vunpack.c.h.b16 %v1083
        %v5124 = vunpack.c.l.b16 %v1084
        %v5125 = vunpack.c.h.b16 %v1084
        %v5126 = vunpack.c.l.b16 %v1085
        %v5127 = vunpack.c.h.b16 %v1085
        %v5128 = vunpack.c.l.b16 %v1086
        %v5129 = vunpack.c.h.b16 %v1086
        %v5130 = vunpack.c.l.b16 %v1087
        %v5131 = vunpack.c.h.b16 %v1087
        %v5132 = vpack.c.b16 %v4628, %v4620
        %v5133 = vpack.c.b16 %v4629, %v4621
        %v5134 = vpack.c.b16 %v4630, %v4622
        %v5135 = vpack.c.b16 %v4631, %v4623
        %v5136 = vpack.c.b16 %v4632, %v4624
        %v5137 = vpack.c.b16 %v4633, %v4625
        %v5138 = vpack.c.b16 %v4634, %v4626
        %v5139 = vpack.c.b16 %v4635, %v4627
        %v5140 = vpack.c.b16 %v4644, %v4636
        %v5141 = vpack.c.b16 %v4645, %v4637
        %v5142 = vpack.c.b16 %v4646, %v4638
        %v5143 = vpack.c.b16 %v4647, %v4639
        %v5144 = vpack.c.b16 %v4648, %v4640
        %v5145 = vpack.c.b16 %v4649, %v4641
        %v5146 = vpack.c.b16 %v4650, %v4642
        %v5147 = vpack.c.b16 %v4651, %v4643
        %v5148 = vpack.c.b16 %v4660, %v4652
        %v5149 = vpack.c.b16 %v4661, %v4653
        %v5150 = vpack.c.b16 %v4662, %v4654
        %v5151 = vpack.c.b16 %v4663, %v4655
        %v5152 = vpack.c.b16 %v4664, %v4656
        %v5153 = vpack.c.b16 %v4665, %v4657
        %v5154 = vpack.c.b16 %v4666, %v4658
        %v5155 = vpack.c.b16 %v4667, %v4659
        %v5156 = vpack.c.b16 %v4676, %v4668
        %v5157 = vpack.c.b16 %v4677, %v4669
        %v5158 = vpack.c.b16 %v4678, %v4670
        %v5159 = vpack.c.b16 %v4679, %v4671
        %v5160 = vpack.c.b16 %v4680, %v4672
        %v5161 = vpack.c.b16 %v4681, %v4673
        %v5162 = vpack.c.b16 %v4682, %v4674
        %v5163 = vpack.c.b16 %v4683, %v4675
        %v5164 = vpack.c.b16 %v4692, %v4684
        %v5165 = vpack.c.b16 %v4693, %v4685
        %v5166 = vpack.c.b16 %v4694, %v4686
        %v5167 = vpack.c.b16 %v4695, %v4687
        %v5168 = vpack.c.b16 %v4696, %v4688
        %v5169 = vpack.c.b16 %v4697, %v4689
        %v5170 = vpack.c.b16 %v4698, %v4690
        %v5171 = vpack.c.b16 %v4699, %v4691
        %v5172 = vpack.c.b16 %v4708, %v4700
        %v5173 = vpack.c.b16 %v4709, %v4701
        %v5174 = vpack.c.b16 %v4710, %v4702
        %v5175 = vpack.c.b16 %v4711, %v4703
        %v5176 = vpack.c.b16 %v4712, %v4704
        %v5177 = vpack.c.b16 %v4713, %v4705
        %v5178 = vpack.c.b16 %v4714, %v4706
        %v5179 = vpack.c.b16 %v4715, %v4707
        %v5180 = vpack.c.b16 %v4724, %v4716
        %v5181 = vpack.c.b16 %v4725, %v4717
        %v5182 = vpack.c.b16 %v4726, %v4718
        %v5183 = vpack.c.b16 %v4727, %v4719
        %v5184 = vpack.c.b16 %v4728, %v4720
        %v5185 = vpack.c.b16 %v4729, %v4721
        %v5186 = vpack.c.b16 %v4730, %v4722
        %v5187 = vpack.c.b16 %v4731, %v4723
        %v5188 = vpack.c.b16 %v4740, %v4732
        %v5189 = vpack.c.b16 %v4741, %v4733
        %v5190 = vpack.c.b16 %v4742, %v4734
        %v5191 = vpack.c.b16 %v4743, %v4735
        %v5192 = vpack.c.b16 %v4744, %v4736
        %v5193 = vpack.c.b16 %v4745, %v4737
        %v5194 = vpack.c.b16 %v4746, %v4738
        %v5195 = vpack.c.b16 %v4747, %v4739
        %v5196 = vpack.c.b16 %v4756, %v4748
        %v5197 = vpack.c.b16 %v4757, %v4749
        %v5198 = vpack.c.b16 %v4758, %v4750
        %v5199 = vpack.c.b16 %v4759, %v4751
        %v5200 = vpack.c.b16 %v4760, %v4752
        %v5201 = vpack.c.b16 %v4761, %v4753
        %v5202 = vpack.c.b16 %v4762, %v4754
        %v5203 = vpack.c.b16 %v4763, %v4755
        %v5204 = vpack.c.b16 %v4772, %v4764
        %v5205 = vpack.c.b16 %v4773, %v4765
        %v5206 = vpack.c.b16 %v4774, %v4766
        %v5207 = vpack.c.b16 %v4775, %v4767
        %v5208 = vpack.c.b16 %v4776, %v4768
        %v5209 = vpack.c.b16 %v4777, %v4769
        %v5210 = vpack.c.b16 %v4778, %v4770
        %v5211 = vpack.c.b16 %v4779, %v4771
        %v5212 = vpack.c.b16 %v4788, %v4780
        %v5213 = vpack.c.b16 %v4789, %v4781
        %v5214 = vpack.c.b16 %v4790, %v4782
        %v5215 = vpack.c.b16 %v4791, %v4783
        %v5216 = vpack.c.b16 %v4792, %v4784
        %v5217 = vpack.c.b16 %v4793, %v4785
        %v5218 = vpack.c.b16 %v4794, %v4786
        %v5219 = vpack.c.b16 %v4795, %v4787
        %v5220 = vpack.c.b16 %v4804, %v4796
        %v5221 = vpack.c.b16 %v4805, %v4797
        %v5222 = vpack.c.b16 %v4806, %v4798
        %v5223 = vpack.c.b16 %v4807, %v4799
        %v5224 = vpack.c.b16 %v4808, %v4800
        %v5225 = vpack.c.b16 %v4809, %v4801
        %v5226 = vpack.c.b16 %v4810, %v4802
        %v5227 = vpack.c.b16 %v4811, %v4803
        %v5228 = vpack.c.b16 %v4820, %v4812
        %v5229 = vpack.c.b16 %v4821, %v4813
        %v5230 = vpack.c.b16 %v4822, %v4814
        %v5231 = vpack.c.b16 %v4823, %v4815
        %v5232 = vpack.c.b16 %v4824, %v4816
        %v5233 = vpack.c.b16 %v4825, %v4817
        %v5234 = vpack.c.b16 %v4826, %v4818
        %v5235 = vpack.c.b16 %v4827, %v4819
        %v5236 = vpack.c.b16 %v4836, %v4828
        %v5237 = vpack.c.b16 %v4837, %v4829
        %v5238 = vpack.c.b16 %v4838, %v4830
        %v5239 = vpack.c.b16 %v4839, %v4831
        %v5240 = vpack.c.b16 %v4840, %v4832
        %v5241 = vpack.c.b16 %v4841, %v4833
        %v5242 = vpack.c.b16 %v4842, %v4834
        %v5243 = vpack.c.b16 %v4843, %v4835
        %v5244 = vpack.c.b16 %v4852, %v4844
        %v5245 = vpack.c.b16 %v4853, %v4845
        %v5246 = vpack.c.b16 %v4854, %v4846
        %v5247 = vpack.c.b16 %v4855, %v4847
        %v5248 = vpack.c.b16 %v4856, %v4848
        %v5249 = vpack.c.b16 %v4857, %v4849
        %v5250 = vpack.c.b16 %v4858, %v4850
        %v5251 = vpack.c.b16 %v4859, %v4851
        %v5252 = vpack.c.b16 %v4868, %v4860
        %v5253 = vpack.c.b16 %v4869, %v4861
        %v5254 = vpack.c.b16 %v4870, %v4862
        %v5255 = vpack.c.b16 %v4871, %v4863
        %v5256 = vpack.c.b16 %v4872, %v4864
        %v5257 = vpack.c.b16 %v4873, %v4865
        %v5258 = vpack.c.b16 %v4874, %v4866
        %v5259 = vpack.c.b16 %v4875, %v4867
        %v5260 = vpack.c.b16 %v4884, %v4876
        %v5261 = vpack.c.b16 %v4885, %v4877
        %v5262 = vpack.c.b16 %v4886, %v4878
        %v5263 = vpack.c.b16 %v4887, %v4879
        %v5264 = vpack.c.b16 %v4888, %v4880
        %v5265 = vpack.c.b16 %v4889, %v4881
        %v5266 = vpack.c.b16 %v4890, %v4882
        %v5267 = vpack.c.b16 %v4891, %v4883
        %v5268 = vpack.c.b16 %v4900, %v4892
        %v5269 = vpack.c.b16 %v4901, %v4893
        %v5270 = vpack.c.b16 %v4902, %v4894
        %v5271 = vpack.c.b16 %v4903, %v4895
        %v5272 = vpack.c.b16 %v4904, %v4896
        %v5273 = vpack.c.b16 %v4905, %v4897
        %v5274 = vpack.c.b16 %v4906, %v4898
        %v5275 = vpack.c.b16 %v4907, %v4899
        %v5276 = vpack.c.b16 %v4916, %v4908
        %v5277 = vpack.c.b16 %v4917, %v4909
        %v5278 = vpack.c.b16 %v4918, %v4910
        %v5279 = vpack.c.b16 %v4919, %v4911
        %v5280 = vpack.c.b16 %v4920, %v4912
        %v5281 = vpack.c.b16 %v4921, %v4913
        %v5282 = vpack.c.b16 %v4922, %v4914
        %v5283 = vpack.c.b16 %v4923, %v4915
        %v5284 = vpack.c.b16 %v4932, %v4924
        %v5285 = vpack.c.b16 %v4933, %v4925
        %v5286 = vpack.c.b16 %v4934, %v4926
        %v5287 = vpack.c.b16 %v4935, %v4927
        %v5288 = vpack.c.b16 %v4936, %v4928
        %v5289 = vpack.c.b16 %v4937, %v4929
        %v5290 = vpack.c.b16 %v4938, %v4930
        %v5291 = vpack.c.b16 %v4939, %v4931
        %v5292 = vpack.c.b16 %v4948, %v4940
        %v5293 = vpack.c.b16 %v4949, %v4941
        %v5294 = vpack.c.b16 %v4950, %v4942
        %v5295 = vpack.c.b16 %v4951, %v4943
        %v5296 = vpack.c.b16 %v4952, %v4944
        %v5297 = vpack.c.b16 %v4953, %v4945
        %v5298 = vpack.c.b16 %v4954, %v4946
        %v5299 = vpack.c.b16 %v4955, %v4947
        %v5300 = vpack.c.b16 %v4964, %v4956
        %v5301 = vpack.c.b16 %v4965, %v4957
        %v5302 = vpack.c.b16 %v4966, %v4958
        %v5303 = vpack.c.b16 %v4967, %v4959
        %v5304 = vpack.c.b16 %v4968, %v4960
        %v5305 = vpack.c.b16 %v4969, %v4961
        %v5306 = vpack.c.b16 %v4970, %v4962
        %v5307 = vpack.c.b16 %v4971, %v4963
        %v5308 = vpack.c.b16 %v4980, %v4972
        %v5309 = vpack.c.b16 %v4981, %v4973
        %v5310 = vpack.c.b16 %v4982, %v4974
        %v5311 = vpack.c.b16 %v4983, %v4975
        %v5312 = vpack.c.b16 %v4984, %v4976
        %v5313 = vpack.c.b16 %v4985, %v4977
        %v5314 = vpack.c.b16 %v4986, %v4978
        %v5315 = vpack.c.b16 %v4987, %v4979
        %v5316 = vpack.c.b16 %v4996, %v4988
        %v5317 = vpack.c.b16 %v4997, %v4989
        %v5318 = vpack.c.b16 %v4998, %v4990
        %v5319 = vpack.c.b16 %v4999, %v4991
        %v5320 = vpack.c.b16 %v5000, %v4992
        %v5321 = vpack.c.b16 %v5001, %v4993
        %v5322 = vpack.c.b16 %v5002, %v4994
        %v5323 = vpack.c.b16 %v5003, %v4995
        %v5324 = vpack.c.b16 %v5012, %v5004
        %v5325 = vpack.c.b16 %v5013, %v5005
        %v5326 = vpack.c.b16 %v5014, %v5006
        %v5327 = vpack.c.b16 %v5015, %v5007
        %v5328 = vpack.c.b16 %v5016, %v5008
        %v5329 = vpack.c.b16 %v5017, %v5009
        %v5330 = vpack.c.b16 %v5018, %v5010
        %v5331 = vpack.c.b16 %v5019, %v5011
        %v5332 = vpack.c.b16 %v5028, %v5020
        %v5333 = vpack.c.b16 %v5029, %v5021
        %v5334 = vpack.c.b16 %v5030, %v5022
        %v5335 = vpack.c.b16 %v5031, %v5023
        %v5336 = vpack.c.b16 %v5032, %v5024
        %v5337 = vpack.c.b16 %v5033, %v5025
        %v5338 = vpack.c.b16 %v5034, %v5026
        %v5339 = vpack.c.b16 %v5035, %v5027
        %v5340 = vpack.c.b16 %v5044, %v5036
        %v5341 = vpack.c.b16 %v5045, %v5037
        %v5342 = vpack.c.b16 %v5046, %v5038
        %v5343 = vpack.c.b16 %v5047, %v5039
        %v5344 = vpack.c.b16 %v5048, %v5040
        %v5345 = vpack.c.b16 %v5049, %v5041
        %v5346 = vpack.c.b16 %v5050, %v5042
        %v5347 = vpack.c.b16 %v5051, %v5043
        %v5348 = vpack.c.b16 %v5060, %v5052
        %v5349 = vpack.c.b16 %v5061, %v5053
        %v5350 = vpack.c.b16 %v5062, %v5054
        %v5351 = vpack.c.b16 %v5063, %v5055
        %v5352 = vpack.c.b16 %v5064, %v5056
        %v5353 = vpack.c.b16 %v5065, %v5057
        %v5354 = vpack.c.b16 %v5066, %v5058
        %v5355 = vpack.c.b16 %v5067, %v5059
        %v5356 = vpack.c.b16 %v5076, %v5068
        %v5357 = vpack.c.b16 %v5077, %v5069
        %v5358 = vpack.c.b16 %v5078, %v5070
        %v5359 = vpack.c.b16 %v5079, %v5071
        %v5360 = vpack.c.b16 %v5080, %v5072
        %v5361 = vpack.c.b16 %v5081, %v5073
        %v5362 = vpack.c.b16 %v5082, %v5074
        %v5363 = vpack.c.b16 %v5083, %v5075
        %v5364 = vpack.c.b16 %v5092, %v5084
        %v5365 = vpack.c.b16 %v5093, %v5085
        %v5366 = vpack.c.b16 %v5094, %v5086
        %v5367 = vpack.c.b16 %v5095, %v5087
        %v5368 = vpack.c.b16 %v5096, %v5088
        %v5369 = vpack.c.b16 %v5097, %v5089
        %v5370 = vpack.c.b16 %v5098, %v5090
        %v5371 = vpack.c.b16 %v5099, %v5091
        %v5372 = vpack.c.b16 %v5108, %v5100
        %v5373 = vpack.c.b16 %v5109, %v5101
        %v5374 = vpack.c.b16 %v5110, %v5102
        %v5375 = vpack.c.b16 %v5111, %v5103
        %v5376 = vpack.c.b16 %v5112, %v5104
        %v5377 = vpack.c.b16 %v5113, %v5105
        %v5378 = vpack.c.b16 %v5114, %v5106
        %v5379 = vpack.c.b16 %v5115, %v5107
        %v5380 = vpack.c.b16 %v5124, %v5116
        %v5381 = vpack.c.b16 %v5125, %v5117
        %v5382 = vpack.c.b16 %v5126, %v5118
        %v5383 = vpack.c.b16 %v5127, %v5119
        %v5384 = vpack.c.b16 %v5128, %v5120
        %v5385 = vpack.c.b16 %v5129, %v5121
        %v5386 = vpack.c.b16 %v5130, %v5122
        %v5387 = vpack.c.b16 %v5131, %v5123
        %5644 = vmatprep.subr.bf16.mxu0 %v5189
        %5645 = vmatpush1.bf16.msra.mxu0 %v5188
        %5646 = vmatprep.subr.bf16.mxu0 %v5181
        %5647 = vmatpush1.bf16.msra.mxu0 %v5180
        %5648 = vmatprep.subr.bf16.mxu0 %v5173
        %5649 = vmatpush1.bf16.msra.mxu0 %v5172
        %5650 = vmatprep.subr.bf16.mxu0 %v5165
        %5651 = vmatpush1.bf16.msra.mxu0 %v5164
        %5652 = vmatprep.subr.bf16.mxu0 %v5157
        %5653 = vmatpush1.bf16.msra.mxu0 %v5156
        %5654 = vmatprep.subr.bf16.mxu0 %v5149
        %5655 = vmatpush1.bf16.msra.mxu0 %v5148
        %5656 = vmatprep.subr.bf16.mxu0 %v5141
        %5657 = vmatpush1.bf16.msra.mxu0 %v5140
        %5658 = vmatprep.subr.bf16.mxu0 %v5133
        %5659 = vmatpush1.bf16.msra.mxu0 %v5132
        %5660 = vmatprep.subr.bf16.mxu0 %v5253
        %5661 = vmatpush2.bf16.msra.mxu0 %v5252
        %5662 = vmatprep.subr.bf16.mxu0 %v5245
        %5663 = vmatpush2.bf16.msra.mxu0 %v5244
        %5664 = vmatprep.subr.bf16.mxu0 %v5237
        %5665 = vmatpush2.bf16.msra.mxu0 %v5236
        %5666 = vmatprep.subr.bf16.mxu0 %v5229
        %5667 = vmatpush2.bf16.msra.mxu0 %v5228
        %5668 = vmatprep.subr.bf16.mxu0 %v5221
        %5669 = vmatpush2.bf16.msra.mxu0 %v5220
        %5670 = vmatprep.subr.bf16.mxu0 %v5213
        %5671 = vmatpush2.bf16.msra.mxu0 %v5212
        %5672 = vmatprep.subr.bf16.mxu0 %v5205
        %5673 = vmatpush2.bf16.msra.mxu0 %v5204
        %5674 = vmatprep.subr.bf16.mxu0 %v5197
        %5675 = vmatpush2.bf16.msra.mxu0 %v5196
        %5676 = vmatprep.mubr.bf16.mxu0 %v4345
        %5677 = vmatmul.mubr.bf16.gmra.mxu0 %v4338
        %v5678 = vpop.f32.mrf.mxu0
        %v5679 = vadd.f32 0.0, %v5678
        %v5680 = vpop.f32.mrf.mxu0
        %v5681 = vadd.f32 0.0, %v5680
        %v5682 = vpop.f32.mrf.mxu0
        %v5683 = vpop.f32.mrf.mxu0
        %5684 = vdwg.mxu0
        %5685 = vmatprep.subr.bf16.mxu0 %v5317
        %5686 = vmatpush1.bf16.msra.mxu0 %v5316
        %5687 = vmatprep.subr.bf16.mxu0 %v5309
        %5688 = vmatpush1.bf16.msra.mxu0 %v5308
        %5689 = vmatprep.subr.bf16.mxu0 %v5301
        %5690 = vmatpush1.bf16.msra.mxu0 %v5300
        %5691 = vmatprep.subr.bf16.mxu0 %v5293
        %5692 = vmatpush1.bf16.msra.mxu0 %v5292
        %5693 = vmatprep.subr.bf16.mxu0 %v5285
        %5694 = vmatpush1.bf16.msra.mxu0 %v5284
        %5695 = vmatprep.subr.bf16.mxu0 %v5277
        %5696 = vmatpush1.bf16.msra.mxu0 %v5276
        %5697 = vmatprep.subr.bf16.mxu0 %v5269
        %5698 = vmatpush1.bf16.msra.mxu0 %v5268
        %5699 = vmatprep.subr.bf16.mxu0 %v5261
        %5700 = vmatpush1.bf16.msra.mxu0 %v5260
        %5701 = vmatprep.subr.bf16.mxu0 %v5381
        %5702 = vmatpush2.bf16.msra.mxu0 %v5380
        %5703 = vmatprep.subr.bf16.mxu0 %v5373
        %5704 = vmatpush2.bf16.msra.mxu0 %v5372
        %5705 = vmatprep.subr.bf16.mxu0 %v5365
        %5706 = vmatpush2.bf16.msra.mxu0 %v5364
        %5707 = vmatprep.subr.bf16.mxu0 %v5357
        %5708 = vmatpush2.bf16.msra.mxu0 %v5356
        %5709 = vmatprep.subr.bf16.mxu0 %v5349
        %5710 = vmatpush2.bf16.msra.mxu0 %v5348
        %5711 = vmatprep.subr.bf16.mxu0 %v5341
        %5712 = vmatpush2.bf16.msra.mxu0 %v5340
        %5713 = vmatprep.subr.bf16.mxu0 %v5333
        %5714 = vmatpush2.bf16.msra.mxu0 %v5332
        %5715 = vmatprep.subr.bf16.mxu0 %v5325
        %5716 = vmatpush2.bf16.msra.mxu0 %v5324
        %5717 = vmatprep.mubr.bf16.mxu0 %v4359
        %5718 = vmatmul.mubr.bf16.gmra.mxu0 %v4352
        %v5719 = vpop.f32.mrf.mxu0
        %v5720 = vadd.f32 %v5679, %v5719
        %v5721 = vpop.f32.mrf.mxu0
        %v5722 = vadd.f32 %v5681, %v5721
        %v5723 = vpop.f32.mrf.mxu0
        %v5724 = vpop.f32.mrf.mxu0
        %5725 = vdwg.mxu0
        %5726 = vmatprep.subr.bf16.mxu0 %v5191
        %5727 = vmatpush1.bf16.msra.mxu0 %v5190
        %5728 = vmatprep.subr.bf16.mxu0 %v5183
        %5729 = vmatpush1.bf16.msra.mxu0 %v5182
        %5730 = vmatprep.subr.bf16.mxu0 %v5175
        %5731 = vmatpush1.bf16.msra.mxu0 %v5174
        %5732 = vmatprep.subr.bf16.mxu0 %v5167
        %5733 = vmatpush1.bf16.msra.mxu0 %v5166
        %5734 = vmatprep.subr.bf16.mxu0 %v5159
        %5735 = vmatpush1.bf16.msra.mxu0 %v5158
        %5736 = vmatprep.subr.bf16.mxu0 %v5151
        %5737 = vmatpush1.bf16.msra.mxu0 %v5150
        %5738 = vmatprep.subr.bf16.mxu0 %v5143
        %5739 = vmatpush1.bf16.msra.mxu0 %v5142
        %5740 = vmatprep.subr.bf16.mxu0 %v5135
        %5741 = vmatpush1.bf16.msra.mxu0 %v5134
        %5742 = vmatprep.subr.bf16.mxu0 %v5255
        %5743 = vmatpush2.bf16.msra.mxu0 %v5254
        %5744 = vmatprep.subr.bf16.mxu0 %v5247
        %5745 = vmatpush2.bf16.msra.mxu0 %v5246
        %5746 = vmatprep.subr.bf16.mxu0 %v5239
        %5747 = vmatpush2.bf16.msra.mxu0 %v5238
        %5748 = vmatprep.subr.bf16.mxu0 %v5231
        %5749 = vmatpush2.bf16.msra.mxu0 %v5230
        %5750 = vmatprep.subr.bf16.mxu0 %v5223
        %5751 = vmatpush2.bf16.msra.mxu0 %v5222
        %5752 = vmatprep.subr.bf16.mxu0 %v5215
        %5753 = vmatpush2.bf16.msra.mxu0 %v5214
        %5754 = vmatprep.subr.bf16.mxu0 %v5207
        %5755 = vmatpush2.bf16.msra.mxu0 %v5206
        %5756 = vmatprep.subr.bf16.mxu0 %v5199
        %5757 = vmatpush2.bf16.msra.mxu0 %v5198
        %5758 = vmatprep.mubr.bf16.mxu0 %v4345
        %5759 = vmatmul.mubr.bf16.gmra.mxu0 %v4338
        %v5760 = vpop.f32.mrf.mxu0
        %v5761 = vadd.f32 0.0, %v5760
        %v5762 = vpop.f32.mrf.mxu0
        %v5763 = vadd.f32 0.0, %v5762
        %v5764 = vpop.f32.mrf.mxu0
        %v5765 = vpop.f32.mrf.mxu0
        %5766 = vdwg.mxu0
        %5767 = vmatprep.subr.bf16.mxu0 %v5319
        %5768 = vmatpush1.bf16.msra.mxu0 %v5318
        %5769 = vmatprep.subr.bf16.mxu0 %v5311
        %5770 = vmatpush1.bf16.msra.mxu0 %v5310
        %5771 = vmatprep.subr.bf16.mxu0 %v5303
        %5772 = vmatpush1.bf16.msra.mxu0 %v5302
        %5773 = vmatprep.subr.bf16.mxu0 %v5295
        %5774 = vmatpush1.bf16.msra.mxu0 %v5294
        %5775 = vmatprep.subr.bf16.mxu0 %v5287
        %5776 = vmatpush1.bf16.msra.mxu0 %v5286
        %5777 = vmatprep.subr.bf16.mxu0 %v5279
        %5778 = vmatpush1.bf16.msra.mxu0 %v5278
        %5779 = vmatprep.subr.bf16.mxu0 %v5271
        %5780 = vmatpush1.bf16.msra.mxu0 %v5270
        %5781 = vmatprep.subr.bf16.mxu0 %v5263
        %5782 = vmatpush1.bf16.msra.mxu0 %v5262
        %5783 = vmatprep.subr.bf16.mxu0 %v5383
        %5784 = vmatpush2.bf16.msra.mxu0 %v5382
        %5785 = vmatprep.subr.bf16.mxu0 %v5375
        %5786 = vmatpush2.bf16.msra.mxu0 %v5374
        %5787 = vmatprep.subr.bf16.mxu0 %v5367
        %5788 = vmatpush2.bf16.msra.mxu0 %v5366
        %5789 = vmatprep.subr.bf16.mxu0 %v5359
        %5790 = vmatpush2.bf16.msra.mxu0 %v5358
        %5791 = vmatprep.subr.bf16.mxu0 %v5351
        %5792 = vmatpush2.bf16.msra.mxu0 %v5350
        %5793 = vmatprep.subr.bf16.mxu0 %v5343
        %5794 = vmatpush2.bf16.msra.mxu0 %v5342
        %5795 = vmatprep.subr.bf16.mxu0 %v5335
        %5796 = vmatpush2.bf16.msra.mxu0 %v5334
        %5797 = vmatprep.subr.bf16.mxu0 %v5327
        %5798 = vmatpush2.bf16.msra.mxu0 %v5326
        %5799 = vmatprep.mubr.bf16.mxu0 %v4359
        %5800 = vmatmul.mubr.bf16.gmra.mxu0 %v4352
        %v5801 = vpop.f32.mrf.mxu0
        %v5802 = vadd.f32 %v5761, %v5801
        %v5803 = vpop.f32.mrf.mxu0
        %v5804 = vadd.f32 %v5763, %v5803
        %v5805 = vpop.f32.mrf.mxu0
        %v5806 = vpop.f32.mrf.mxu0
        %5807 = vdwg.mxu0
        %5808 = vmatprep.subr.bf16.mxu0 %v5193
        %5809 = vmatpush1.bf16.msra.mxu0 %v5192
        %5810 = vmatprep.subr.bf16.mxu0 %v5185
        %5811 = vmatpush1.bf16.msra.mxu0 %v5184
        %5812 = vmatprep.subr.bf16.mxu0 %v5177
        %5813 = vmatpush1.bf16.msra.mxu0 %v5176
        %5814 = vmatprep.subr.bf16.mxu0 %v5169
        %5815 = vmatpush1.bf16.msra.mxu0 %v5168
        %5816 = vmatprep.subr.bf16.mxu0 %v5161
        %5817 = vmatpush1.bf16.msra.mxu0 %v5160
        %5818 = vmatprep.subr.bf16.mxu0 %v5153
        %5819 = vmatpush1.bf16.msra.mxu0 %v5152
        %5820 = vmatprep.subr.bf16.mxu0 %v5145
        %5821 = vmatpush1.bf16.msra.mxu0 %v5144
        %5822 = vmatprep.subr.bf16.mxu0 %v5137
        %5823 = vmatpush1.bf16.msra.mxu0 %v5136
        %5824 = vmatprep.subr.bf16.mxu0 %v5257
        %5825 = vmatpush2.bf16.msra.mxu0 %v5256
        %5826 = vmatprep.subr.bf16.mxu0 %v5249
        %5827 = vmatpush2.bf16.msra.mxu0 %v5248
        %5828 = vmatprep.subr.bf16.mxu0 %v5241
        %5829 = vmatpush2.bf16.msra.mxu0 %v5240
        %5830 = vmatprep.subr.bf16.mxu0 %v5233
        %5831 = vmatpush2.bf16.msra.mxu0 %v5232
        %5832 = vmatprep.subr.bf16.mxu0 %v5225
        %5833 = vmatpush2.bf16.msra.mxu0 %v5224
        %5834 = vmatprep.subr.bf16.mxu0 %v5217
        %5835 = vmatpush2.bf16.msra.mxu0 %v5216
        %5836 = vmatprep.subr.bf16.mxu0 %v5209
        %5837 = vmatpush2.bf16.msra.mxu0 %v5208
        %5838 = vmatprep.subr.bf16.mxu0 %v5201
        %5839 = vmatpush2.bf16.msra.mxu0 %v5200
        %5840 = vmatprep.mubr.bf16.mxu0 %v4345
        %5841 = vmatmul.mubr.bf16.gmra.mxu0 %v4338
        %v5842 = vpop.f32.mrf.mxu0
        %v5843 = vadd.f32 0.0, %v5842
        %v5844 = vpop.f32.mrf.mxu0
        %v5845 = vadd.f32 0.0, %v5844
        %v5846 = vpop.f32.mrf.mxu0
        %v5847 = vpop.f32.mrf.mxu0
        %5848 = vdwg.mxu0
        %5849 = vmatprep.subr.bf16.mxu0 %v5321
        %5850 = vmatpush1.bf16.msra.mxu0 %v5320
        %5851 = vmatprep.subr.bf16.mxu0 %v5313
        %5852 = vmatpush1.bf16.msra.mxu0 %v5312
        %5853 = vmatprep.subr.bf16.mxu0 %v5305
        %5854 = vmatpush1.bf16.msra.mxu0 %v5304
        %5855 = vmatprep.subr.bf16.mxu0 %v5297
        %5856 = vmatpush1.bf16.msra.mxu0 %v5296
        %5857 = vmatprep.subr.bf16.mxu0 %v5289
        %5858 = vmatpush1.bf16.msra.mxu0 %v5288
        %5859 = vmatprep.subr.bf16.mxu0 %v5281
        %5860 = vmatpush1.bf16.msra.mxu0 %v5280
        %5861 = vmatprep.subr.bf16.mxu0 %v5273
        %5862 = vmatpush1.bf16.msra.mxu0 %v5272
        %5863 = vmatprep.subr.bf16.mxu0 %v5265
        %5864 = vmatpush1.bf16.msra.mxu0 %v5264
        %5865 = vmatprep.subr.bf16.mxu0 %v5385
        %5866 = vmatpush2.bf16.msra.mxu0 %v5384
        %5867 = vmatprep.subr.bf16.mxu0 %v5377
        %5868 = vmatpush2.bf16.msra.mxu0 %v5376
        %5869 = vmatprep.subr.bf16.mxu0 %v5369
        %5870 = vmatpush2.bf16.msra.mxu0 %v5368
        %5871 = vmatprep.subr.bf16.mxu0 %v5361
        %5872 = vmatpush2.bf16.msra.mxu0 %v5360
        %5873 = vmatprep.subr.bf16.mxu0 %v5353
        %5874 = vmatpush2.bf16.msra.mxu0 %v5352
        %5875 = vmatprep.subr.bf16.mxu0 %v5345
        %5876 = vmatpush2.bf16.msra.mxu0 %v5344
        %5877 = vmatprep.subr.bf16.mxu0 %v5337
        %5878 = vmatpush2.bf16.msra.mxu0 %v5336
        %5879 = vmatprep.subr.bf16.mxu0 %v5329
        %5880 = vmatpush2.bf16.msra.mxu0 %v5328
        %5881 = vmatprep.mubr.bf16.mxu0 %v4359
        %5882 = vmatmul.mubr.bf16.gmra.mxu0 %v4352
        %v5883 = vpop.f32.mrf.mxu0
        %v5884 = vadd.f32 %v5843, %v5883
        %v5885 = vpop.f32.mrf.mxu0
        %v5886 = vadd.f32 %v5845, %v5885
        %v5887 = vpop.f32.mrf.mxu0
        %v5888 = vpop.f32.mrf.mxu0
        %5889 = vdwg.mxu0
        %5890 = vmatprep.subr.bf16.mxu0 %v5195
        %5891 = vmatpush1.bf16.msra.mxu0 %v5194
        %5892 = vmatprep.subr.bf16.mxu0 %v5187
        %5893 = vmatpush1.bf16.msra.mxu0 %v5186
        %5894 = vmatprep.subr.bf16.mxu0 %v5179
        %5895 = vmatpush1.bf16.msra.mxu0 %v5178
        %5896 = vmatprep.subr.bf16.mxu0 %v5171
        %5897 = vmatpush1.bf16.msra.mxu0 %v5170
        %5898 = vmatprep.subr.bf16.mxu0 %v5163
        %5899 = vmatpush1.bf16.msra.mxu0 %v5162
        %5900 = vmatprep.subr.bf16.mxu0 %v5155
        %5901 = vmatpush1.bf16.msra.mxu0 %v5154
        %5902 = vmatprep.subr.bf16.mxu0 %v5147
        %5903 = vmatpush1.bf16.msra.mxu0 %v5146
        %5904 = vmatprep.subr.bf16.mxu0 %v5139
        %5905 = vmatpush1.bf16.msra.mxu0 %v5138
        %5906 = vmatprep.subr.bf16.mxu0 %v5259
        %5907 = vmatpush2.bf16.msra.mxu0 %v5258
        %5908 = vmatprep.subr.bf16.mxu0 %v5251
        %5909 = vmatpush2.bf16.msra.mxu0 %v5250
        %5910 = vmatprep.subr.bf16.mxu0 %v5243
        %5911 = vmatpush2.bf16.msra.mxu0 %v5242
        %5912 = vmatprep.subr.bf16.mxu0 %v5235
        %5913 = vmatpush2.bf16.msra.mxu0 %v5234
        %5914 = vmatprep.subr.bf16.mxu0 %v5227
        %5915 = vmatpush2.bf16.msra.mxu0 %v5226
        %5916 = vmatprep.subr.bf16.mxu0 %v5219
        %5917 = vmatpush2.bf16.msra.mxu0 %v5218
        %5918 = vmatprep.subr.bf16.mxu0 %v5211
        %5919 = vmatpush2.bf16.msra.mxu0 %v5210
        %5920 = vmatprep.subr.bf16.mxu0 %v5203
        %5921 = vmatpush2.bf16.msra.mxu0 %v5202
        %5922 = vmatprep.mubr.bf16.mxu0 %v4345
        %5923 = vmatmul.mubr.bf16.gmra.mxu0 %v4338
        %v5924 = vpop.f32.mrf.mxu0
        %v5925 = vadd.f32 0.0, %v5924
        %v5926 = vpop.f32.mrf.mxu0
        %v5927 = vadd.f32 0.0, %v5926
        %v5928 = vpop.f32.mrf.mxu0
        %v5929 = vpop.f32.mrf.mxu0
        %5930 = vdwg.mxu0
        %5931 = vmatprep.subr.bf16.mxu0 %v5323
        %5932 = vmatpush1.bf16.msra.mxu0 %v5322
        %5933 = vmatprep.subr.bf16.mxu0 %v5315
        %5934 = vmatpush1.bf16.msra.mxu0 %v5314
        %5935 = vmatprep.subr.bf16.mxu0 %v5307
        %5936 = vmatpush1.bf16.msra.mxu0 %v5306
        %5937 = vmatprep.subr.bf16.mxu0 %v5299
        %5938 = vmatpush1.bf16.msra.mxu0 %v5298
        %5939 = vmatprep.subr.bf16.mxu0 %v5291
        %5940 = vmatpush1.bf16.msra.mxu0 %v5290
        %5941 = vmatprep.subr.bf16.mxu0 %v5283
        %5942 = vmatpush1.bf16.msra.mxu0 %v5282
        %5943 = vmatprep.subr.bf16.mxu0 %v5275
        %5944 = vmatpush1.bf16.msra.mxu0 %v5274
        %5945 = vmatprep.subr.bf16.mxu0 %v5267
        %5946 = vmatpush1.bf16.msra.mxu0 %v5266
        %5947 = vmatprep.subr.bf16.mxu0 %v5387
        %5948 = vmatpush2.bf16.msra.mxu0 %v5386
        %5949 = vmatprep.subr.bf16.mxu0 %v5379
        %5950 = vmatpush2.bf16.msra.mxu0 %v5378
        %5951 = vmatprep.subr.bf16.mxu0 %v5371
        %5952 = vmatpush2.bf16.msra.mxu0 %v5370
        %5953 = vmatprep.subr.bf16.mxu0 %v5363
        %5954 = vmatpush2.bf16.msra.mxu0 %v5362
        %5955 = vmatprep.subr.bf16.mxu0 %v5355
        %5956 = vmatpush2.bf16.msra.mxu0 %v5354
        %5957 = vmatprep.subr.bf16.mxu0 %v5347
        %5958 = vmatpush2.bf16.msra.mxu0 %v5346
        %5959 = vmatprep.subr.bf16.mxu0 %v5339
        %5960 = vmatpush2.bf16.msra.mxu0 %v5338
        %5961 = vmatprep.subr.bf16.mxu0 %v5331
        %5962 = vmatpush2.bf16.msra.mxu0 %v5330
        %5963 = vmatprep.mubr.bf16.mxu0 %v4359
        %5964 = vmatmul.mubr.bf16.gmra.mxu0 %v4352
        %v5965 = vpop.f32.mrf.mxu0
        %v5966 = vadd.f32 %v5925, %v5965
        %v5967 = vpop.f32.mrf.mxu0
        %v5968 = vadd.f32 %v5927, %v5967
        %v5969 = vpop.f32.mrf.mxu0
        %v5970 = vpop.f32.mrf.mxu0
        %5971 = vdwg.mxu0
        %v5972 = vadd.f32 %v4080, %v5720
        %v5973 = vadd.f32 %v4082, %v5722
        %v5974 = vadd.f32 %v4162, %v5802
        %v5975 = vadd.f32 %v4164, %v5804
        %v5976 = vadd.f32 %v4244, %v5884
        %v5977 = vadd.f32 %v4246, %v5886
        %v5978 = vadd.f32 %v4326, %v5966
        %v5979 = vadd.f32 %v4328, %v5968
        %5980 = vmatprep.subr.bf16.mxu0 %v1927
        %5981 = vmatpush1.bf16.msra.mxu0 %v1926
        %5982 = vmatprep.subr.bf16.mxu0 %v1919
        %5983 = vmatpush1.bf16.msra.mxu0 %v1918
        %5984 = vmatprep.subr.bf16.mxu0 %v1911
        %5985 = vmatpush1.bf16.msra.mxu0 %v1910
        %5986 = vmatprep.subr.bf16.mxu0 %v1903
        %5987 = vmatpush1.bf16.msra.mxu0 %v1902
        %5988 = vmatprep.subr.bf16.mxu0 %v1895
        %5989 = vmatpush1.bf16.msra.mxu0 %v1894
        %5990 = vmatprep.subr.bf16.mxu0 %v1887
        %5991 = vmatpush1.bf16.msra.mxu0 %v1886
        %5992 = vmatprep.subr.bf16.mxu0 %v1879
        %5993 = vmatpush1.bf16.msra.mxu0 %v1878
        %5994 = vmatprep.subr.bf16.mxu0 %v1871
        %5995 = vmatpush1.bf16.msra.mxu0 %v1870
        %5996 = vmatprep.subr.bf16.mxu0 %v1991
        %5997 = vmatpush2.bf16.msra.mxu0 %v1990
        %5998 = vmatprep.subr.bf16.mxu0 %v1983
        %5999 = vmatpush2.bf16.msra.mxu0 %v1982
        %6000 = vmatprep.subr.bf16.mxu0 %v1975
        %6001 = vmatpush2.bf16.msra.mxu0 %v1974
        %6002 = vmatprep.subr.bf16.mxu0 %v1967
        %6003 = vmatpush2.bf16.msra.mxu0 %v1966
        %6004 = vmatprep.subr.bf16.mxu0 %v1959
        %6005 = vmatpush2.bf16.msra.mxu0 %v1958
        %6006 = vmatprep.subr.bf16.mxu0 %v1951
        %6007 = vmatpush2.bf16.msra.mxu0 %v1950
        %6008 = vmatprep.subr.bf16.mxu0 %v1943
        %6009 = vmatpush2.bf16.msra.mxu0 %v1942
        %6010 = vmatprep.subr.bf16.mxu0 %v1935
        %6011 = vmatpush2.bf16.msra.mxu0 %v1934
        %6012 = vmatprep.mubr.bf16.mxu0 %v4345
        %6013 = vmatmul.mubr.bf16.gmra.mxu0 %v4338
        %v6014 = vpop.f32.mrf.mxu0
        %v6015 = vadd.f32 0.0, %v6014
        %v6016 = vpop.f32.mrf.mxu0
        %v6017 = vadd.f32 0.0, %v6016
        %v6018 = vpop.f32.mrf.mxu0
        %v6019 = vpop.f32.mrf.mxu0
        %6020 = vdwg.mxu0
        %6021 = vmatprep.subr.bf16.mxu0 %v2055
        %6022 = vmatpush1.bf16.msra.mxu0 %v2054
        %6023 = vmatprep.subr.bf16.mxu0 %v2047
        %6024 = vmatpush1.bf16.msra.mxu0 %v2046
        %6025 = vmatprep.subr.bf16.mxu0 %v2039
        %6026 = vmatpush1.bf16.msra.mxu0 %v2038
        %6027 = vmatprep.subr.bf16.mxu0 %v2031
        %6028 = vmatpush1.bf16.msra.mxu0 %v2030
        %6029 = vmatprep.subr.bf16.mxu0 %v2023
        %6030 = vmatpush1.bf16.msra.mxu0 %v2022
        %6031 = vmatprep.subr.bf16.mxu0 %v2015
        %6032 = vmatpush1.bf16.msra.mxu0 %v2014
        %6033 = vmatprep.subr.bf16.mxu0 %v2007
        %6034 = vmatpush1.bf16.msra.mxu0 %v2006
        %6035 = vmatprep.subr.bf16.mxu0 %v1999
        %6036 = vmatpush1.bf16.msra.mxu0 %v1998
        %6037 = vmatprep.subr.bf16.mxu0 %v2119
        %6038 = vmatpush2.bf16.msra.mxu0 %v2118
        %6039 = vmatprep.subr.bf16.mxu0 %v2111
        %6040 = vmatpush2.bf16.msra.mxu0 %v2110
        %6041 = vmatprep.subr.bf16.mxu0 %v2103
        %6042 = vmatpush2.bf16.msra.mxu0 %v2102
        %6043 = vmatprep.subr.bf16.mxu0 %v2095
        %6044 = vmatpush2.bf16.msra.mxu0 %v2094
        %6045 = vmatprep.subr.bf16.mxu0 %v2087
        %6046 = vmatpush2.bf16.msra.mxu0 %v2086
        %6047 = vmatprep.subr.bf16.mxu0 %v2079
        %6048 = vmatpush2.bf16.msra.mxu0 %v2078
        %6049 = vmatprep.subr.bf16.mxu0 %v2071
        %6050 = vmatpush2.bf16.msra.mxu0 %v2070
        %6051 = vmatprep.subr.bf16.mxu0 %v2063
        %6052 = vmatpush2.bf16.msra.mxu0 %v2062
        %6053 = vmatprep.mubr.bf16.mxu0 %v4359
        %6054 = vmatmul.mubr.bf16.gmra.mxu0 %v4352
        %v6055 = vpop.f32.mrf.mxu0
        %v6056 = vadd.f32 %v6015, %v6055
        %v6057 = vpop.f32.mrf.mxu0
        %v6058 = vadd.f32 %v6017, %v6057
        %v6059 = vpop.f32.mrf.mxu0
        %v6060 = vpop.f32.mrf.mxu0
        %6061 = vdwg.mxu0
        %6062 = vmatprep.subr.bf16.mxu0 %v1929
        %6063 = vmatpush1.bf16.msra.mxu0 %v1928
        %6064 = vmatprep.subr.bf16.mxu0 %v1921
        %6065 = vmatpush1.bf16.msra.mxu0 %v1920
        %6066 = vmatprep.subr.bf16.mxu0 %v1913
        %6067 = vmatpush1.bf16.msra.mxu0 %v1912
        %6068 = vmatprep.subr.bf16.mxu0 %v1905
        %6069 = vmatpush1.bf16.msra.mxu0 %v1904
        %6070 = vmatprep.subr.bf16.mxu0 %v1897
        %6071 = vmatpush1.bf16.msra.mxu0 %v1896
        %6072 = vmatprep.subr.bf16.mxu0 %v1889
        %6073 = vmatpush1.bf16.msra.mxu0 %v1888
        %6074 = vmatprep.subr.bf16.mxu0 %v1881
        %6075 = vmatpush1.bf16.msra.mxu0 %v1880
        %6076 = vmatprep.subr.bf16.mxu0 %v1873
        %6077 = vmatpush1.bf16.msra.mxu0 %v1872
        %6078 = vmatprep.subr.bf16.mxu0 %v1993
        %6079 = vmatpush2.bf16.msra.mxu0 %v1992
        %6080 = vmatprep.subr.bf16.mxu0 %v1985
        %6081 = vmatpush2.bf16.msra.mxu0 %v1984
        %6082 = vmatprep.subr.bf16.mxu0 %v1977
        %6083 = vmatpush2.bf16.msra.mxu0 %v1976
        %6084 = vmatprep.subr.bf16.mxu0 %v1969
        %6085 = vmatpush2.bf16.msra.mxu0 %v1968
        %6086 = vmatprep.subr.bf16.mxu0 %v1961
        %6087 = vmatpush2.bf16.msra.mxu0 %v1960
        %6088 = vmatprep.subr.bf16.mxu0 %v1953
        %6089 = vmatpush2.bf16.msra.mxu0 %v1952
        %6090 = vmatprep.subr.bf16.mxu0 %v1945
        %6091 = vmatpush2.bf16.msra.mxu0 %v1944
        %6092 = vmatprep.subr.bf16.mxu0 %v1937
        %6093 = vmatpush2.bf16.msra.mxu0 %v1936
        %6094 = vmatprep.mubr.bf16.mxu0 %v4345
        %6095 = vmatmul.mubr.bf16.gmra.mxu0 %v4338
        %v6096 = vpop.f32.mrf.mxu0
        %v6097 = vadd.f32 0.0, %v6096
        %v6098 = vpop.f32.mrf.mxu0
        %v6099 = vadd.f32 0.0, %v6098
        %v6100 = vpop.f32.mrf.mxu0
        %v6101 = vpop.f32.mrf.mxu0
        %6102 = vdwg.mxu0
        %6103 = vmatprep.subr.bf16.mxu0 %v2057
        %6104 = vmatpush1.bf16.msra.mxu0 %v2056
        %6105 = vmatprep.subr.bf16.mxu0 %v2049
        %6106 = vmatpush1.bf16.msra.mxu0 %v2048
        %6107 = vmatprep.subr.bf16.mxu0 %v2041
        %6108 = vmatpush1.bf16.msra.mxu0 %v2040
        %6109 = vmatprep.subr.bf16.mxu0 %v2033
        %6110 = vmatpush1.bf16.msra.mxu0 %v2032
        %6111 = vmatprep.subr.bf16.mxu0 %v2025
        %6112 = vmatpush1.bf16.msra.mxu0 %v2024
        %6113 = vmatprep.subr.bf16.mxu0 %v2017
        %6114 = vmatpush1.bf16.msra.mxu0 %v2016
        %6115 = vmatprep.subr.bf16.mxu0 %v2009
        %6116 = vmatpush1.bf16.msra.mxu0 %v2008
        %6117 = vmatprep.subr.bf16.mxu0 %v2001
        %6118 = vmatpush1.bf16.msra.mxu0 %v2000
        %6119 = vmatprep.subr.bf16.mxu0 %v2121
        %6120 = vmatpush2.bf16.msra.mxu0 %v2120
        %6121 = vmatprep.subr.bf16.mxu0 %v2113
        %6122 = vmatpush2.bf16.msra.mxu0 %v2112
        %6123 = vmatprep.subr.bf16.mxu0 %v2105
        %6124 = vmatpush2.bf16.msra.mxu0 %v2104
        %6125 = vmatprep.subr.bf16.mxu0 %v2097
        %6126 = vmatpush2.bf16.msra.mxu0 %v2096
        %6127 = vmatprep.subr.bf16.mxu0 %v2089
        %6128 = vmatpush2.bf16.msra.mxu0 %v2088
        %6129 = vmatprep.subr.bf16.mxu0 %v2081
        %6130 = vmatpush2.bf16.msra.mxu0 %v2080
        %6131 = vmatprep.subr.bf16.mxu0 %v2073
        %6132 = vmatpush2.bf16.msra.mxu0 %v2072
        %6133 = vmatprep.subr.bf16.mxu0 %v2065
        %6134 = vmatpush2.bf16.msra.mxu0 %v2064
        %6135 = vmatprep.mubr.bf16.mxu0 %v4359
        %6136 = vmatmul.mubr.bf16.gmra.mxu0 %v4352
        %v6137 = vpop.f32.mrf.mxu0
        %v6138 = vadd.f32 %v6097, %v6137
        %v6139 = vpop.f32.mrf.mxu0
        %v6140 = vadd.f32 %v6099, %v6139
        %v6141 = vpop.f32.mrf.mxu0
        %v6142 = vpop.f32.mrf.mxu0
        %6143 = vdwg.mxu0
        %6144 = vmatprep.subr.bf16.mxu0 %v1931
        %6145 = vmatpush1.bf16.msra.mxu0 %v1930
        %6146 = vmatprep.subr.bf16.mxu0 %v1923
        %6147 = vmatpush1.bf16.msra.mxu0 %v1922
        %6148 = vmatprep.subr.bf16.mxu0 %v1915
        %6149 = vmatpush1.bf16.msra.mxu0 %v1914
        %6150 = vmatprep.subr.bf16.mxu0 %v1907
        %6151 = vmatpush1.bf16.msra.mxu0 %v1906
        %6152 = vmatprep.subr.bf16.mxu0 %v1899
        %6153 = vmatpush1.bf16.msra.mxu0 %v1898
        %6154 = vmatprep.subr.bf16.mxu0 %v1891
        %6155 = vmatpush1.bf16.msra.mxu0 %v1890
        %6156 = vmatprep.subr.bf16.mxu0 %v1883
        %6157 = vmatpush1.bf16.msra.mxu0 %v1882
        %6158 = vmatprep.subr.bf16.mxu0 %v1875
        %6159 = vmatpush1.bf16.msra.mxu0 %v1874
        %6160 = vmatprep.subr.bf16.mxu0 %v1995
        %6161 = vmatpush2.bf16.msra.mxu0 %v1994
        %6162 = vmatprep.subr.bf16.mxu0 %v1987
        %6163 = vmatpush2.bf16.msra.mxu0 %v1986
        %6164 = vmatprep.subr.bf16.mxu0 %v1979
        %6165 = vmatpush2.bf16.msra.mxu0 %v1978
        %6166 = vmatprep.subr.bf16.mxu0 %v1971
        %6167 = vmatpush2.bf16.msra.mxu0 %v1970
        %6168 = vmatprep.subr.bf16.mxu0 %v1963
        %6169 = vmatpush2.bf16.msra.mxu0 %v1962
        %6170 = vmatprep.subr.bf16.mxu0 %v1955
        %6171 = vmatpush2.bf16.msra.mxu0 %v1954
        %6172 = vmatprep.subr.bf16.mxu0 %v1947
        %6173 = vmatpush2.bf16.msra.mxu0 %v1946
        %6174 = vmatprep.subr.bf16.mxu0 %v1939
        %6175 = vmatpush2.bf16.msra.mxu0 %v1938
        %6176 = vmatprep.mubr.bf16.mxu0 %v4345
        %6177 = vmatmul.mubr.bf16.gmra.mxu0 %v4338
        %v6178 = vpop.f32.mrf.mxu0
        %v6179 = vadd.f32 0.0, %v6178
        %v6180 = vpop.f32.mrf.mxu0
        %v6181 = vadd.f32 0.0, %v6180
        %v6182 = vpop.f32.mrf.mxu0
        %v6183 = vpop.f32.mrf.mxu0
        %6184 = vdwg.mxu0
        %6185 = vmatprep.subr.bf16.mxu0 %v2059
        %6186 = vmatpush1.bf16.msra.mxu0 %v2058
        %6187 = vmatprep.subr.bf16.mxu0 %v2051
        %6188 = vmatpush1.bf16.msra.mxu0 %v2050
        %6189 = vmatprep.subr.bf16.mxu0 %v2043
        %6190 = vmatpush1.bf16.msra.mxu0 %v2042
        %6191 = vmatprep.subr.bf16.mxu0 %v2035
        %6192 = vmatpush1.bf16.msra.mxu0 %v2034
        %6193 = vmatprep.subr.bf16.mxu0 %v2027
        %6194 = vmatpush1.bf16.msra.mxu0 %v2026
        %6195 = vmatprep.subr.bf16.mxu0 %v2019
        %6196 = vmatpush1.bf16.msra.mxu0 %v2018
        %6197 = vmatprep.subr.bf16.mxu0 %v2011
        %6198 = vmatpush1.bf16.msra.mxu0 %v2010
        %6199 = vmatprep.subr.bf16.mxu0 %v2003
        %6200 = vmatpush1.bf16.msra.mxu0 %v2002
        %6201 = vmatprep.subr.bf16.mxu0 %v2123
        %6202 = vmatpush2.bf16.msra.mxu0 %v2122
        %6203 = vmatprep.subr.bf16.mxu0 %v2115
        %6204 = vmatpush2.bf16.msra.mxu0 %v2114
        %6205 = vmatprep.subr.bf16.mxu0 %v2107
        %6206 = vmatpush2.bf16.msra.mxu0 %v2106
        %6207 = vmatprep.subr.bf16.mxu0 %v2099
        %6208 = vmatpush2.bf16.msra.mxu0 %v2098
        %6209 = vmatprep.subr.bf16.mxu0 %v2091
        %6210 = vmatpush2.bf16.msra.mxu0 %v2090
        %6211 = vmatprep.subr.bf16.mxu0 %v2083
        %6212 = vmatpush2.bf16.msra.mxu0 %v2082
        %6213 = vmatprep.subr.bf16.mxu0 %v2075
        %6214 = vmatpush2.bf16.msra.mxu0 %v2074
        %6215 = vmatprep.subr.bf16.mxu0 %v2067
        %6216 = vmatpush2.bf16.msra.mxu0 %v2066
        %6217 = vmatprep.mubr.bf16.mxu0 %v4359
        %6218 = vmatmul.mubr.bf16.gmra.mxu0 %v4352
        %v6219 = vpop.f32.mrf.mxu0
        %v6220 = vadd.f32 %v6179, %v6219
        %v6221 = vpop.f32.mrf.mxu0
        %v6222 = vadd.f32 %v6181, %v6221
        %v6223 = vpop.f32.mrf.mxu0
        %v6224 = vpop.f32.mrf.mxu0
        %6225 = vdwg.mxu0
        %6226 = vmatprep.subr.bf16.mxu0 %v1933
        %6227 = vmatpush1.bf16.msra.mxu0 %v1932
        %6228 = vmatprep.subr.bf16.mxu0 %v1925
        %6229 = vmatpush1.bf16.msra.mxu0 %v1924
        %6230 = vmatprep.subr.bf16.mxu0 %v1917
        %6231 = vmatpush1.bf16.msra.mxu0 %v1916
        %6232 = vmatprep.subr.bf16.mxu0 %v1909
        %6233 = vmatpush1.bf16.msra.mxu0 %v1908
        %6234 = vmatprep.subr.bf16.mxu0 %v1901
        %6235 = vmatpush1.bf16.msra.mxu0 %v1900
        %6236 = vmatprep.subr.bf16.mxu0 %v1893
        %6237 = vmatpush1.bf16.msra.mxu0 %v1892
        %6238 = vmatprep.subr.bf16.mxu0 %v1885
        %6239 = vmatpush1.bf16.msra.mxu0 %v1884
        %6240 = vmatprep.subr.bf16.mxu0 %v1877
        %6241 = vmatpush1.bf16.msra.mxu0 %v1876
        %6242 = vmatprep.subr.bf16.mxu0 %v1997
        %6243 = vmatpush2.bf16.msra.mxu0 %v1996
        %6244 = vmatprep.subr.bf16.mxu0 %v1989
        %6245 = vmatpush2.bf16.msra.mxu0 %v1988
        %6246 = vmatprep.subr.bf16.mxu0 %v1981
        %6247 = vmatpush2.bf16.msra.mxu0 %v1980
        %6248 = vmatprep.subr.bf16.mxu0 %v1973
        %6249 = vmatpush2.bf16.msra.mxu0 %v1972
        %6250 = vmatprep.subr.bf16.mxu0 %v1965
        %6251 = vmatpush2.bf16.msra.mxu0 %v1964
        %6252 = vmatprep.subr.bf16.mxu0 %v1957
        %6253 = vmatpush2.bf16.msra.mxu0 %v1956
        %6254 = vmatprep.subr.bf16.mxu0 %v1949
        %6255 = vmatpush2.bf16.msra.mxu0 %v1948
        %6256 = vmatprep.subr.bf16.mxu0 %v1941
        %6257 = vmatpush2.bf16.msra.mxu0 %v1940
        %6258 = vmatprep.mubr.bf16.mxu0 %v4345
        %6259 = vmatmul.mubr.bf16.gmra.mxu0 %v4338
        %v6260 = vpop.f32.mrf.mxu0
        %v6261 = vadd.f32 0.0, %v6260
        %v6262 = vpop.f32.mrf.mxu0
        %v6263 = vadd.f32 0.0, %v6262
        %v6264 = vpop.f32.mrf.mxu0
        %v6265 = vpop.f32.mrf.mxu0
        %6266 = vdwg.mxu0
        %6267 = vmatprep.subr.bf16.mxu0 %v2061
        %6268 = vmatpush1.bf16.msra.mxu0 %v2060
        %6269 = vmatprep.subr.bf16.mxu0 %v2053
        %6270 = vmatpush1.bf16.msra.mxu0 %v2052
        %6271 = vmatprep.subr.bf16.mxu0 %v2045
        %6272 = vmatpush1.bf16.msra.mxu0 %v2044
        %6273 = vmatprep.subr.bf16.mxu0 %v2037
        %6274 = vmatpush1.bf16.msra.mxu0 %v2036
        %6275 = vmatprep.subr.bf16.mxu0 %v2029
        %6276 = vmatpush1.bf16.msra.mxu0 %v2028
        %6277 = vmatprep.subr.bf16.mxu0 %v2021
        %6278 = vmatpush1.bf16.msra.mxu0 %v2020
        %6279 = vmatprep.subr.bf16.mxu0 %v2013
        %6280 = vmatpush1.bf16.msra.mxu0 %v2012
        %6281 = vmatprep.subr.bf16.mxu0 %v2005
        %6282 = vmatpush1.bf16.msra.mxu0 %v2004
        %6283 = vmatprep.subr.bf16.mxu0 %v2125
        %6284 = vmatpush2.bf16.msra.mxu0 %v2124
        %6285 = vmatprep.subr.bf16.mxu0 %v2117
        %6286 = vmatpush2.bf16.msra.mxu0 %v2116
        %6287 = vmatprep.subr.bf16.mxu0 %v2109
        %6288 = vmatpush2.bf16.msra.mxu0 %v2108
        %6289 = vmatprep.subr.bf16.mxu0 %v2101
        %6290 = vmatpush2.bf16.msra.mxu0 %v2100
        %6291 = vmatprep.subr.bf16.mxu0 %v2093
        %6292 = vmatpush2.bf16.msra.mxu0 %v2092
        %6293 = vmatprep.subr.bf16.mxu0 %v2085
        %6294 = vmatpush2.bf16.msra.mxu0 %v2084
        %6295 = vmatprep.subr.bf16.mxu0 %v2077
        %6296 = vmatpush2.bf16.msra.mxu0 %v2076
        %6297 = vmatprep.subr.bf16.mxu0 %v2069
        %6298 = vmatpush2.bf16.msra.mxu0 %v2068
        %6299 = vmatprep.mubr.bf16.mxu0 %v4359
        %6300 = vmatmul.mubr.bf16.gmra.mxu0 %v4352
        %v6301 = vpop.f32.mrf.mxu0
        %v6302 = vadd.f32 %v6261, %v6301
        %v6303 = vpop.f32.mrf.mxu0
        %v6304 = vadd.f32 %v6263, %v6303
        %v6305 = vpop.f32.mrf.mxu0
        %v6306 = vpop.f32.mrf.mxu0
        %6307 = vdwg.mxu0
        %6308 = vmatprep.subr.bf16.mxu0 %v3549
        %6309 = vmatpush1.bf16.msra.mxu0 %v3548
        %6310 = vmatprep.subr.bf16.mxu0 %v3541
        %6311 = vmatpush1.bf16.msra.mxu0 %v3540
        %6312 = vmatprep.subr.bf16.mxu0 %v3533
        %6313 = vmatpush1.bf16.msra.mxu0 %v3532
        %6314 = vmatprep.subr.bf16.mxu0 %v3525
        %6315 = vmatpush1.bf16.msra.mxu0 %v3524
        %6316 = vmatprep.subr.bf16.mxu0 %v3517
        %6317 = vmatpush1.bf16.msra.mxu0 %v3516
        %6318 = vmatprep.subr.bf16.mxu0 %v3509
        %6319 = vmatpush1.bf16.msra.mxu0 %v3508
        %6320 = vmatprep.subr.bf16.mxu0 %v3501
        %6321 = vmatpush1.bf16.msra.mxu0 %v3500
        %6322 = vmatprep.subr.bf16.mxu0 %v3493
        %6323 = vmatpush1.bf16.msra.mxu0 %v3492
        %6324 = vmatprep.subr.bf16.mxu0 %v3613
        %6325 = vmatpush2.bf16.msra.mxu0 %v3612
        %6326 = vmatprep.subr.bf16.mxu0 %v3605
        %6327 = vmatpush2.bf16.msra.mxu0 %v3604
        %6328 = vmatprep.subr.bf16.mxu0 %v3597
        %6329 = vmatpush2.bf16.msra.mxu0 %v3596
        %6330 = vmatprep.subr.bf16.mxu0 %v3589
        %6331 = vmatpush2.bf16.msra.mxu0 %v3588
        %6332 = vmatprep.subr.bf16.mxu0 %v3581
        %6333 = vmatpush2.bf16.msra.mxu0 %v3580
        %6334 = vmatprep.subr.bf16.mxu0 %v3573
        %6335 = vmatpush2.bf16.msra.mxu0 %v3572
        %6336 = vmatprep.subr.bf16.mxu0 %v3565
        %6337 = vmatpush2.bf16.msra.mxu0 %v3564
        %6338 = vmatprep.subr.bf16.mxu0 %v3557
        %6339 = vmatpush2.bf16.msra.mxu0 %v3556
        %6340 = vmatprep.mubr.bf16.mxu0 %v1095
        %6341 = vmatmul.mubr.bf16.gmra.mxu0 %v1094
        %v6342 = vpop.f32.mrf.mxu0
        %v6343 = vadd.f32 %v6056, %v6342
        %v6344 = vpop.f32.mrf.mxu0
        %v6345 = vadd.f32 %v6058, %v6344
        %v6346 = vpop.f32.mrf.mxu0
        %v6347 = vpop.f32.mrf.mxu0
        %6348 = vdwg.mxu0
        %6349 = vmatprep.subr.bf16.mxu0 %v3677
        %6350 = vmatpush1.bf16.msra.mxu0 %v3676
        %6351 = vmatprep.subr.bf16.mxu0 %v3669
        %6352 = vmatpush1.bf16.msra.mxu0 %v3668
        %6353 = vmatprep.subr.bf16.mxu0 %v3661
        %6354 = vmatpush1.bf16.msra.mxu0 %v3660
        %6355 = vmatprep.subr.bf16.mxu0 %v3653
        %6356 = vmatpush1.bf16.msra.mxu0 %v3652
        %6357 = vmatprep.subr.bf16.mxu0 %v3645
        %6358 = vmatpush1.bf16.msra.mxu0 %v3644
        %6359 = vmatprep.subr.bf16.mxu0 %v3637
        %6360 = vmatpush1.bf16.msra.mxu0 %v3636
        %6361 = vmatprep.subr.bf16.mxu0 %v3629
        %6362 = vmatpush1.bf16.msra.mxu0 %v3628
        %6363 = vmatprep.subr.bf16.mxu0 %v3621
        %6364 = vmatpush1.bf16.msra.mxu0 %v3620
        %6365 = vmatprep.subr.bf16.mxu0 %v3741
        %6366 = vmatpush2.bf16.msra.mxu0 %v3740
        %6367 = vmatprep.subr.bf16.mxu0 %v3733
        %6368 = vmatpush2.bf16.msra.mxu0 %v3732
        %6369 = vmatprep.subr.bf16.mxu0 %v3725
        %6370 = vmatpush2.bf16.msra.mxu0 %v3724
        %6371 = vmatprep.subr.bf16.mxu0 %v3717
        %6372 = vmatpush2.bf16.msra.mxu0 %v3716
        %6373 = vmatprep.subr.bf16.mxu0 %v3709
        %6374 = vmatpush2.bf16.msra.mxu0 %v3708
        %6375 = vmatprep.subr.bf16.mxu0 %v3701
        %6376 = vmatpush2.bf16.msra.mxu0 %v3700
        %6377 = vmatprep.subr.bf16.mxu0 %v3693
        %6378 = vmatpush2.bf16.msra.mxu0 %v3692
        %6379 = vmatprep.subr.bf16.mxu0 %v3685
        %6380 = vmatpush2.bf16.msra.mxu0 %v3684
        %6381 = vmatprep.mubr.bf16.mxu0 %v1097
        %6382 = vmatmul.mubr.bf16.gmra.mxu0 %v1096
        %v6383 = vpop.f32.mrf.mxu0
        %v6384 = vadd.f32 %v6343, %v6383
        %v6385 = vpop.f32.mrf.mxu0
        %v6386 = vadd.f32 %v6345, %v6385
        %v6387 = vpop.f32.mrf.mxu0
        %v6388 = vpop.f32.mrf.mxu0
        %6389 = vdwg.mxu0
        %6390 = vmatprep.subr.bf16.mxu0 %v3551
        %6391 = vmatpush1.bf16.msra.mxu0 %v3550
        %6392 = vmatprep.subr.bf16.mxu0 %v3543
        %6393 = vmatpush1.bf16.msra.mxu0 %v3542
        %6394 = vmatprep.subr.bf16.mxu0 %v3535
        %6395 = vmatpush1.bf16.msra.mxu0 %v3534
        %6396 = vmatprep.subr.bf16.mxu0 %v3527
        %6397 = vmatpush1.bf16.msra.mxu0 %v3526
        %6398 = vmatprep.subr.bf16.mxu0 %v3519
        %6399 = vmatpush1.bf16.msra.mxu0 %v3518
        %6400 = vmatprep.subr.bf16.mxu0 %v3511
        %6401 = vmatpush1.bf16.msra.mxu0 %v3510
        %6402 = vmatprep.subr.bf16.mxu0 %v3503
        %6403 = vmatpush1.bf16.msra.mxu0 %v3502
        %6404 = vmatprep.subr.bf16.mxu0 %v3495
        %6405 = vmatpush1.bf16.msra.mxu0 %v3494
        %6406 = vmatprep.subr.bf16.mxu0 %v3615
        %6407 = vmatpush2.bf16.msra.mxu0 %v3614
        %6408 = vmatprep.subr.bf16.mxu0 %v3607
        %6409 = vmatpush2.bf16.msra.mxu0 %v3606
        %6410 = vmatprep.subr.bf16.mxu0 %v3599
        %6411 = vmatpush2.bf16.msra.mxu0 %v3598
        %6412 = vmatprep.subr.bf16.mxu0 %v3591
        %6413 = vmatpush2.bf16.msra.mxu0 %v3590
        %6414 = vmatprep.subr.bf16.mxu0 %v3583
        %6415 = vmatpush2.bf16.msra.mxu0 %v3582
        %6416 = vmatprep.subr.bf16.mxu0 %v3575
        %6417 = vmatpush2.bf16.msra.mxu0 %v3574
        %6418 = vmatprep.subr.bf16.mxu0 %v3567
        %6419 = vmatpush2.bf16.msra.mxu0 %v3566
        %6420 = vmatprep.subr.bf16.mxu0 %v3559
        %6421 = vmatpush2.bf16.msra.mxu0 %v3558
        %6422 = vmatprep.mubr.bf16.mxu0 %v1095
        %6423 = vmatmul.mubr.bf16.gmra.mxu0 %v1094
        %v6424 = vpop.f32.mrf.mxu0
        %v6425 = vadd.f32 %v6138, %v6424
        %v6426 = vpop.f32.mrf.mxu0
        %v6427 = vadd.f32 %v6140, %v6426
        %v6428 = vpop.f32.mrf.mxu0
        %v6429 = vpop.f32.mrf.mxu0
        %6430 = vdwg.mxu0
        %6431 = vmatprep.subr.bf16.mxu0 %v3679
        %6432 = vmatpush1.bf16.msra.mxu0 %v3678
        %6433 = vmatprep.subr.bf16.mxu0 %v3671
        %6434 = vmatpush1.bf16.msra.mxu0 %v3670
        %6435 = vmatprep.subr.bf16.mxu0 %v3663
        %6436 = vmatpush1.bf16.msra.mxu0 %v3662
        %6437 = vmatprep.subr.bf16.mxu0 %v3655
        %6438 = vmatpush1.bf16.msra.mxu0 %v3654
        %6439 = vmatprep.subr.bf16.mxu0 %v3647
        %6440 = vmatpush1.bf16.msra.mxu0 %v3646
        %6441 = vmatprep.subr.bf16.mxu0 %v3639
        %6442 = vmatpush1.bf16.msra.mxu0 %v3638
        %6443 = vmatprep.subr.bf16.mxu0 %v3631
        %6444 = vmatpush1.bf16.msra.mxu0 %v3630
        %6445 = vmatprep.subr.bf16.mxu0 %v3623
        %6446 = vmatpush1.bf16.msra.mxu0 %v3622
        %6447 = vmatprep.subr.bf16.mxu0 %v3743
        %6448 = vmatpush2.bf16.msra.mxu0 %v3742
        %6449 = vmatprep.subr.bf16.mxu0 %v3735
        %6450 = vmatpush2.bf16.msra.mxu0 %v3734
        %6451 = vmatprep.subr.bf16.mxu0 %v3727
        %6452 = vmatpush2.bf16.msra.mxu0 %v3726
        %6453 = vmatprep.subr.bf16.mxu0 %v3719
        %6454 = vmatpush2.bf16.msra.mxu0 %v3718
        %6455 = vmatprep.subr.bf16.mxu0 %v3711
        %6456 = vmatpush2.bf16.msra.mxu0 %v3710
        %6457 = vmatprep.subr.bf16.mxu0 %v3703
        %6458 = vmatpush2.bf16.msra.mxu0 %v3702
        %6459 = vmatprep.subr.bf16.mxu0 %v3695
        %6460 = vmatpush2.bf16.msra.mxu0 %v3694
        %6461 = vmatprep.subr.bf16.mxu0 %v3687
        %6462 = vmatpush2.bf16.msra.mxu0 %v3686
        %6463 = vmatprep.mubr.bf16.mxu0 %v1097
        %6464 = vmatmul.mubr.bf16.gmra.mxu0 %v1096
        %v6465 = vpop.f32.mrf.mxu0
        %v6466 = vadd.f32 %v6425, %v6465
        %v6467 = vpop.f32.mrf.mxu0
        %v6468 = vadd.f32 %v6427, %v6467
        %v6469 = vpop.f32.mrf.mxu0
        %v6470 = vpop.f32.mrf.mxu0
        %6471 = vdwg.mxu0
        %6472 = vmatprep.subr.bf16.mxu0 %v3553
        %6473 = vmatpush1.bf16.msra.mxu0 %v3552
        %6474 = vmatprep.subr.bf16.mxu0 %v3545
        %6475 = vmatpush1.bf16.msra.mxu0 %v3544
        %6476 = vmatprep.subr.bf16.mxu0 %v3537
        %6477 = vmatpush1.bf16.msra.mxu0 %v3536
        %6478 = vmatprep.subr.bf16.mxu0 %v3529
        %6479 = vmatpush1.bf16.msra.mxu0 %v3528
        %6480 = vmatprep.subr.bf16.mxu0 %v3521
        %6481 = vmatpush1.bf16.msra.mxu0 %v3520
        %6482 = vmatprep.subr.bf16.mxu0 %v3513
        %6483 = vmatpush1.bf16.msra.mxu0 %v3512
        %6484 = vmatprep.subr.bf16.mxu0 %v3505
        %6485 = vmatpush1.bf16.msra.mxu0 %v3504
        %6486 = vmatprep.subr.bf16.mxu0 %v3497
        %6487 = vmatpush1.bf16.msra.mxu0 %v3496
        %6488 = vmatprep.subr.bf16.mxu0 %v3617
        %6489 = vmatpush2.bf16.msra.mxu0 %v3616
        %6490 = vmatprep.subr.bf16.mxu0 %v3609
        %6491 = vmatpush2.bf16.msra.mxu0 %v3608
        %6492 = vmatprep.subr.bf16.mxu0 %v3601
        %6493 = vmatpush2.bf16.msra.mxu0 %v3600
        %6494 = vmatprep.subr.bf16.mxu0 %v3593
        %6495 = vmatpush2.bf16.msra.mxu0 %v3592
        %6496 = vmatprep.subr.bf16.mxu0 %v3585
        %6497 = vmatpush2.bf16.msra.mxu0 %v3584
        %6498 = vmatprep.subr.bf16.mxu0 %v3577
        %6499 = vmatpush2.bf16.msra.mxu0 %v3576
        %6500 = vmatprep.subr.bf16.mxu0 %v3569
        %6501 = vmatpush2.bf16.msra.mxu0 %v3568
        %6502 = vmatprep.subr.bf16.mxu0 %v3561
        %6503 = vmatpush2.bf16.msra.mxu0 %v3560
        %6504 = vmatprep.mubr.bf16.mxu0 %v1095
        %6505 = vmatmul.mubr.bf16.gmra.mxu0 %v1094
        %v6506 = vpop.f32.mrf.mxu0
        %v6507 = vadd.f32 %v6220, %v6506
        %v6508 = vpop.f32.mrf.mxu0
        %v6509 = vadd.f32 %v6222, %v6508
        %v6510 = vpop.f32.mrf.mxu0
        %v6511 = vpop.f32.mrf.mxu0
        %6512 = vdwg.mxu0
        %6513 = vmatprep.subr.bf16.mxu0 %v3681
        %6514 = vmatpush1.bf16.msra.mxu0 %v3680
        %6515 = vmatprep.subr.bf16.mxu0 %v3673
        %6516 = vmatpush1.bf16.msra.mxu0 %v3672
        %6517 = vmatprep.subr.bf16.mxu0 %v3665
        %6518 = vmatpush1.bf16.msra.mxu0 %v3664
        %6519 = vmatprep.subr.bf16.mxu0 %v3657
        %6520 = vmatpush1.bf16.msra.mxu0 %v3656
        %6521 = vmatprep.subr.bf16.mxu0 %v3649
        %6522 = vmatpush1.bf16.msra.mxu0 %v3648
        %6523 = vmatprep.subr.bf16.mxu0 %v3641
        %6524 = vmatpush1.bf16.msra.mxu0 %v3640
        %6525 = vmatprep.subr.bf16.mxu0 %v3633
        %6526 = vmatpush1.bf16.msra.mxu0 %v3632
        %6527 = vmatprep.subr.bf16.mxu0 %v3625
        %6528 = vmatpush1.bf16.msra.mxu0 %v3624
        %6529 = vmatprep.subr.bf16.mxu0 %v3745
        %6530 = vmatpush2.bf16.msra.mxu0 %v3744
        %6531 = vmatprep.subr.bf16.mxu0 %v3737
        %6532 = vmatpush2.bf16.msra.mxu0 %v3736
        %6533 = vmatprep.subr.bf16.mxu0 %v3729
        %6534 = vmatpush2.bf16.msra.mxu0 %v3728
        %6535 = vmatprep.subr.bf16.mxu0 %v3721
        %6536 = vmatpush2.bf16.msra.mxu0 %v3720
        %6537 = vmatprep.subr.bf16.mxu0 %v3713
        %6538 = vmatpush2.bf16.msra.mxu0 %v3712
        %6539 = vmatprep.subr.bf16.mxu0 %v3705
        %6540 = vmatpush2.bf16.msra.mxu0 %v3704
        %6541 = vmatprep.subr.bf16.mxu0 %v3697
        %6542 = vmatpush2.bf16.msra.mxu0 %v3696
        %6543 = vmatprep.subr.bf16.mxu0 %v3689
        %6544 = vmatpush2.bf16.msra.mxu0 %v3688
        %6545 = vmatprep.mubr.bf16.mxu0 %v1097
        %6546 = vmatmul.mubr.bf16.gmra.mxu0 %v1096
        %v6547 = vpop.f32.mrf.mxu0
        %v6548 = vadd.f32 %v6507, %v6547
        %v6549 = vpop.f32.mrf.mxu0
        %v6550 = vadd.f32 %v6509, %v6549
        %v6551 = vpop.f32.mrf.mxu0
        %v6552 = vpop.f32.mrf.mxu0
        %6553 = vdwg.mxu0
        %6554 = vmatprep.subr.bf16.mxu0 %v3555
        %6555 = vmatpush1.bf16.msra.mxu0 %v3554
        %6556 = vmatprep.subr.bf16.mxu0 %v3547
        %6557 = vmatpush1.bf16.msra.mxu0 %v3546
        %6558 = vmatprep.subr.bf16.mxu0 %v3539
        %6559 = vmatpush1.bf16.msra.mxu0 %v3538
        %6560 = vmatprep.subr.bf16.mxu0 %v3531
        %6561 = vmatpush1.bf16.msra.mxu0 %v3530
        %6562 = vmatprep.subr.bf16.mxu0 %v3523
        %6563 = vmatpush1.bf16.msra.mxu0 %v3522
        %6564 = vmatprep.subr.bf16.mxu0 %v3515
        %6565 = vmatpush1.bf16.msra.mxu0 %v3514
        %6566 = vmatprep.subr.bf16.mxu0 %v3507
        %6567 = vmatpush1.bf16.msra.mxu0 %v3506
        %6568 = vmatprep.subr.bf16.mxu0 %v3499
        %6569 = vmatpush1.bf16.msra.mxu0 %v3498
        %6570 = vmatprep.subr.bf16.mxu0 %v3619
        %6571 = vmatpush2.bf16.msra.mxu0 %v3618
        %6572 = vmatprep.subr.bf16.mxu0 %v3611
        %6573 = vmatpush2.bf16.msra.mxu0 %v3610
        %6574 = vmatprep.subr.bf16.mxu0 %v3603
        %6575 = vmatpush2.bf16.msra.mxu0 %v3602
        %6576 = vmatprep.subr.bf16.mxu0 %v3595
        %6577 = vmatpush2.bf16.msra.mxu0 %v3594
        %6578 = vmatprep.subr.bf16.mxu0 %v3587
        %6579 = vmatpush2.bf16.msra.mxu0 %v3586
        %6580 = vmatprep.subr.bf16.mxu0 %v3579
        %6581 = vmatpush2.bf16.msra.mxu0 %v3578
        %6582 = vmatprep.subr.bf16.mxu0 %v3571
        %6583 = vmatpush2.bf16.msra.mxu0 %v3570
        %6584 = vmatprep.subr.bf16.mxu0 %v3563
        %6585 = vmatpush2.bf16.msra.mxu0 %v3562
        %6586 = vmatprep.mubr.bf16.mxu0 %v1095
        %6587 = vmatmul.mubr.bf16.gmra.mxu0 %v1094
        %v6588 = vpop.f32.mrf.mxu0
        %v6589 = vadd.f32 %v6302, %v6588
        %v6590 = vpop.f32.mrf.mxu0
        %v6591 = vadd.f32 %v6304, %v6590
        %v6592 = vpop.f32.mrf.mxu0
        %v6593 = vpop.f32.mrf.mxu0
        %6594 = vdwg.mxu0
        %6595 = vmatprep.subr.bf16.mxu0 %v3683
        %6596 = vmatpush1.bf16.msra.mxu0 %v3682
        %6597 = vmatprep.subr.bf16.mxu0 %v3675
        %6598 = vmatpush1.bf16.msra.mxu0 %v3674
        %6599 = vmatprep.subr.bf16.mxu0 %v3667
        %6600 = vmatpush1.bf16.msra.mxu0 %v3666
        %6601 = vmatprep.subr.bf16.mxu0 %v3659
        %6602 = vmatpush1.bf16.msra.mxu0 %v3658
        %6603 = vmatprep.subr.bf16.mxu0 %v3651
        %6604 = vmatpush1.bf16.msra.mxu0 %v3650
        %6605 = vmatprep.subr.bf16.mxu0 %v3643
        %6606 = vmatpush1.bf16.msra.mxu0 %v3642
        %6607 = vmatprep.subr.bf16.mxu0 %v3635
        %6608 = vmatpush1.bf16.msra.mxu0 %v3634
        %6609 = vmatprep.subr.bf16.mxu0 %v3627
        %6610 = vmatpush1.bf16.msra.mxu0 %v3626
        %6611 = vmatprep.subr.bf16.mxu0 %v3747
        %6612 = vmatpush2.bf16.msra.mxu0 %v3746
        %6613 = vmatprep.subr.bf16.mxu0 %v3739
        %6614 = vmatpush2.bf16.msra.mxu0 %v3738
        %6615 = vmatprep.subr.bf16.mxu0 %v3731
        %6616 = vmatpush2.bf16.msra.mxu0 %v3730
        %6617 = vmatprep.subr.bf16.mxu0 %v3723
        %6618 = vmatpush2.bf16.msra.mxu0 %v3722
        %6619 = vmatprep.subr.bf16.mxu0 %v3715
        %6620 = vmatpush2.bf16.msra.mxu0 %v3714
        %6621 = vmatprep.subr.bf16.mxu0 %v3707
        %6622 = vmatpush2.bf16.msra.mxu0 %v3706
        %6623 = vmatprep.subr.bf16.mxu0 %v3699
        %6624 = vmatpush2.bf16.msra.mxu0 %v3698
        %6625 = vmatprep.subr.bf16.mxu0 %v3691
        %6626 = vmatpush2.bf16.msra.mxu0 %v3690
        %6627 = vmatprep.mubr.bf16.mxu0 %v1097
        %6628 = vmatmul.mubr.bf16.gmra.mxu0 %v1096
        %v6629 = vpop.f32.mrf.mxu0
        %v6630 = vadd.f32 %v6589, %v6629
        %v6631 = vpop.f32.mrf.mxu0
        %v6632 = vadd.f32 %v6591, %v6631
        %v6633 = vpop.f32.mrf.mxu0
        %v6634 = vpop.f32.mrf.mxu0
        %6635 = vdwg.mxu0
        %v6637 = vshrl.u32 %v1094, 16
        %v6639 = vshll.u32 %v1094, 16
        %v6641 = vrot.slane %v6639, 1
        %v6642 = vor.u32 %v6637, %v6641
        %v6644 = vshrl.u32 %v1095, 16
        %v6646 = vshll.u32 %v1095, 16
        %v6648 = vrot.slane %v6646, 1
        %v6649 = vor.u32 %v6644, %v6648
        %v6651 = vshrl.u32 %v1096, 16
        %v6653 = vshll.u32 %v1096, 16
        %v6655 = vrot.slane %v6653, 1
        %v6656 = vor.u32 %v6651, %v6655
        %v6658 = vshrl.u32 %v1097, 16
        %v6660 = vshll.u32 %v1097, 16
        %v6662 = vrot.slane %v6660, 1
        %v6663 = vor.u32 %v6658, %v6662
        %6668 = vmatprep.subr.bf16.mxu0 %v5189
        %6669 = vmatpush1.bf16.msra.mxu0 %v5188
        %6670 = vmatprep.subr.bf16.mxu0 %v5181
        %6671 = vmatpush1.bf16.msra.mxu0 %v5180
        %6672 = vmatprep.subr.bf16.mxu0 %v5173
        %6673 = vmatpush1.bf16.msra.mxu0 %v5172
        %6674 = vmatprep.subr.bf16.mxu0 %v5165
        %6675 = vmatpush1.bf16.msra.mxu0 %v5164
        %6676 = vmatprep.subr.bf16.mxu0 %v5157
        %6677 = vmatpush1.bf16.msra.mxu0 %v5156
        %6678 = vmatprep.subr.bf16.mxu0 %v5149
        %6679 = vmatpush1.bf16.msra.mxu0 %v5148
        %6680 = vmatprep.subr.bf16.mxu0 %v5141
        %6681 = vmatpush1.bf16.msra.mxu0 %v5140
        %6682 = vmatprep.subr.bf16.mxu0 %v5133
        %6683 = vmatpush1.bf16.msra.mxu0 %v5132
        %6684 = vmatprep.subr.bf16.mxu0 %v5253
        %6685 = vmatpush2.bf16.msra.mxu0 %v5252
        %6686 = vmatprep.subr.bf16.mxu0 %v5245
        %6687 = vmatpush2.bf16.msra.mxu0 %v5244
        %6688 = vmatprep.subr.bf16.mxu0 %v5237
        %6689 = vmatpush2.bf16.msra.mxu0 %v5236
        %6690 = vmatprep.subr.bf16.mxu0 %v5229
        %6691 = vmatpush2.bf16.msra.mxu0 %v5228
        %6692 = vmatprep.subr.bf16.mxu0 %v5221
        %6693 = vmatpush2.bf16.msra.mxu0 %v5220
        %6694 = vmatprep.subr.bf16.mxu0 %v5213
        %6695 = vmatpush2.bf16.msra.mxu0 %v5212
        %6696 = vmatprep.subr.bf16.mxu0 %v5205
        %6697 = vmatpush2.bf16.msra.mxu0 %v5204
        %6698 = vmatprep.subr.bf16.mxu0 %v5197
        %6699 = vmatpush2.bf16.msra.mxu0 %v5196
        %6700 = vmatprep.mubr.bf16.mxu0 %v6649
        %6701 = vmatmul.mubr.bf16.gmra.mxu0 %v6642
        %v6702 = vpop.f32.mrf.mxu0
        %v6703 = vadd.f32 0.0, %v6702
        %v6704 = vpop.f32.mrf.mxu0
        %v6705 = vadd.f32 0.0, %v6704
        %v6706 = vpop.f32.mrf.mxu0
        %v6707 = vpop.f32.mrf.mxu0
        %6708 = vdwg.mxu0
        %6709 = vmatprep.subr.bf16.mxu0 %v5317
        %6710 = vmatpush1.bf16.msra.mxu0 %v5316
        %6711 = vmatprep.subr.bf16.mxu0 %v5309
        %6712 = vmatpush1.bf16.msra.mxu0 %v5308
        %6713 = vmatprep.subr.bf16.mxu0 %v5301
        %6714 = vmatpush1.bf16.msra.mxu0 %v5300
        %6715 = vmatprep.subr.bf16.mxu0 %v5293
        %6716 = vmatpush1.bf16.msra.mxu0 %v5292
        %6717 = vmatprep.subr.bf16.mxu0 %v5285
        %6718 = vmatpush1.bf16.msra.mxu0 %v5284
        %6719 = vmatprep.subr.bf16.mxu0 %v5277
        %6720 = vmatpush1.bf16.msra.mxu0 %v5276
        %6721 = vmatprep.subr.bf16.mxu0 %v5269
        %6722 = vmatpush1.bf16.msra.mxu0 %v5268
        %6723 = vmatprep.subr.bf16.mxu0 %v5261
        %6724 = vmatpush1.bf16.msra.mxu0 %v5260
        %6725 = vmatprep.subr.bf16.mxu0 %v5381
        %6726 = vmatpush2.bf16.msra.mxu0 %v5380
        %6727 = vmatprep.subr.bf16.mxu0 %v5373
        %6728 = vmatpush2.bf16.msra.mxu0 %v5372
        %6729 = vmatprep.subr.bf16.mxu0 %v5365
        %6730 = vmatpush2.bf16.msra.mxu0 %v5364
        %6731 = vmatprep.subr.bf16.mxu0 %v5357
        %6732 = vmatpush2.bf16.msra.mxu0 %v5356
        %6733 = vmatprep.subr.bf16.mxu0 %v5349
        %6734 = vmatpush2.bf16.msra.mxu0 %v5348
        %6735 = vmatprep.subr.bf16.mxu0 %v5341
        %6736 = vmatpush2.bf16.msra.mxu0 %v5340
        %6737 = vmatprep.subr.bf16.mxu0 %v5333
        %6738 = vmatpush2.bf16.msra.mxu0 %v5332
        %6739 = vmatprep.subr.bf16.mxu0 %v5325
        %6740 = vmatpush2.bf16.msra.mxu0 %v5324
        %6741 = vmatprep.mubr.bf16.mxu0 %v6663
        %6742 = vmatmul.mubr.bf16.gmra.mxu0 %v6656
        %v6743 = vpop.f32.mrf.mxu0
        %v6744 = vadd.f32 %v6703, %v6743
        %v6745 = vpop.f32.mrf.mxu0
        %v6746 = vadd.f32 %v6705, %v6745
        %v6747 = vpop.f32.mrf.mxu0
        %v6748 = vpop.f32.mrf.mxu0
        %6749 = vdwg.mxu0
        %6750 = vmatprep.subr.bf16.mxu0 %v5191
        %6751 = vmatpush1.bf16.msra.mxu0 %v5190
        %6752 = vmatprep.subr.bf16.mxu0 %v5183
        %6753 = vmatpush1.bf16.msra.mxu0 %v5182
        %6754 = vmatprep.subr.bf16.mxu0 %v5175
        %6755 = vmatpush1.bf16.msra.mxu0 %v5174
        %6756 = vmatprep.subr.bf16.mxu0 %v5167
        %6757 = vmatpush1.bf16.msra.mxu0 %v5166
        %6758 = vmatprep.subr.bf16.mxu0 %v5159
        %6759 = vmatpush1.bf16.msra.mxu0 %v5158
        %6760 = vmatprep.subr.bf16.mxu0 %v5151
        %6761 = vmatpush1.bf16.msra.mxu0 %v5150
        %6762 = vmatprep.subr.bf16.mxu0 %v5143
        %6763 = vmatpush1.bf16.msra.mxu0 %v5142
        %6764 = vmatprep.subr.bf16.mxu0 %v5135
        %6765 = vmatpush1.bf16.msra.mxu0 %v5134
        %6766 = vmatprep.subr.bf16.mxu0 %v5255
        %6767 = vmatpush2.bf16.msra.mxu0 %v5254
        %6768 = vmatprep.subr.bf16.mxu0 %v5247
        %6769 = vmatpush2.bf16.msra.mxu0 %v5246
        %6770 = vmatprep.subr.bf16.mxu0 %v5239
        %6771 = vmatpush2.bf16.msra.mxu0 %v5238
        %6772 = vmatprep.subr.bf16.mxu0 %v5231
        %6773 = vmatpush2.bf16.msra.mxu0 %v5230
        %6774 = vmatprep.subr.bf16.mxu0 %v5223
        %6775 = vmatpush2.bf16.msra.mxu0 %v5222
        %6776 = vmatprep.subr.bf16.mxu0 %v5215
        %6777 = vmatpush2.bf16.msra.mxu0 %v5214
        %6778 = vmatprep.subr.bf16.mxu0 %v5207
        %6779 = vmatpush2.bf16.msra.mxu0 %v5206
        %6780 = vmatprep.subr.bf16.mxu0 %v5199
        %6781 = vmatpush2.bf16.msra.mxu0 %v5198
        %6782 = vmatprep.mubr.bf16.mxu0 %v6649
        %6783 = vmatmul.mubr.bf16.gmra.mxu0 %v6642
        %v6784 = vpop.f32.mrf.mxu0
        %v6785 = vadd.f32 0.0, %v6784
        %v6786 = vpop.f32.mrf.mxu0
        %v6787 = vadd.f32 0.0, %v6786
        %v6788 = vpop.f32.mrf.mxu0
        %v6789 = vpop.f32.mrf.mxu0
        %6790 = vdwg.mxu0
        %6791 = vmatprep.subr.bf16.mxu0 %v5319
        %6792 = vmatpush1.bf16.msra.mxu0 %v5318
        %6793 = vmatprep.subr.bf16.mxu0 %v5311
        %6794 = vmatpush1.bf16.msra.mxu0 %v5310
        %6795 = vmatprep.subr.bf16.mxu0 %v5303
        %6796 = vmatpush1.bf16.msra.mxu0 %v5302
        %6797 = vmatprep.subr.bf16.mxu0 %v5295
        %6798 = vmatpush1.bf16.msra.mxu0 %v5294
        %6799 = vmatprep.subr.bf16.mxu0 %v5287
        %6800 = vmatpush1.bf16.msra.mxu0 %v5286
        %6801 = vmatprep.subr.bf16.mxu0 %v5279
        %6802 = vmatpush1.bf16.msra.mxu0 %v5278
        %6803 = vmatprep.subr.bf16.mxu0 %v5271
        %6804 = vmatpush1.bf16.msra.mxu0 %v5270
        %6805 = vmatprep.subr.bf16.mxu0 %v5263
        %6806 = vmatpush1.bf16.msra.mxu0 %v5262
        %6807 = vmatprep.subr.bf16.mxu0 %v5383
        %6808 = vmatpush2.bf16.msra.mxu0 %v5382
        %6809 = vmatprep.subr.bf16.mxu0 %v5375
        %6810 = vmatpush2.bf16.msra.mxu0 %v5374
        %6811 = vmatprep.subr.bf16.mxu0 %v5367
        %6812 = vmatpush2.bf16.msra.mxu0 %v5366
        %6813 = vmatprep.subr.bf16.mxu0 %v5359
        %6814 = vmatpush2.bf16.msra.mxu0 %v5358
        %6815 = vmatprep.subr.bf16.mxu0 %v5351
        %6816 = vmatpush2.bf16.msra.mxu0 %v5350
        %6817 = vmatprep.subr.bf16.mxu0 %v5343
        %6818 = vmatpush2.bf16.msra.mxu0 %v5342
        %6819 = vmatprep.subr.bf16.mxu0 %v5335
        %6820 = vmatpush2.bf16.msra.mxu0 %v5334
        %6821 = vmatprep.subr.bf16.mxu0 %v5327
        %6822 = vmatpush2.bf16.msra.mxu0 %v5326
        %6823 = vmatprep.mubr.bf16.mxu0 %v6663
        %6824 = vmatmul.mubr.bf16.gmra.mxu0 %v6656
        %v6825 = vpop.f32.mrf.mxu0
        %v6826 = vadd.f32 %v6785, %v6825
        %v6827 = vpop.f32.mrf.mxu0
        %v6828 = vadd.f32 %v6787, %v6827
        %v6829 = vpop.f32.mrf.mxu0
        %v6830 = vpop.f32.mrf.mxu0
        %6831 = vdwg.mxu0
        %6832 = vmatprep.subr.bf16.mxu0 %v5193
        %6833 = vmatpush1.bf16.msra.mxu0 %v5192
        %6834 = vmatprep.subr.bf16.mxu0 %v5185
        %6835 = vmatpush1.bf16.msra.mxu0 %v5184
        %6836 = vmatprep.subr.bf16.mxu0 %v5177
        %6837 = vmatpush1.bf16.msra.mxu0 %v5176
        %6838 = vmatprep.subr.bf16.mxu0 %v5169
        %6839 = vmatpush1.bf16.msra.mxu0 %v5168
        %6840 = vmatprep.subr.bf16.mxu0 %v5161
        %6841 = vmatpush1.bf16.msra.mxu0 %v5160
        %6842 = vmatprep.subr.bf16.mxu0 %v5153
        %6843 = vmatpush1.bf16.msra.mxu0 %v5152
        %6844 = vmatprep.subr.bf16.mxu0 %v5145
        %6845 = vmatpush1.bf16.msra.mxu0 %v5144
        %6846 = vmatprep.subr.bf16.mxu0 %v5137
        %6847 = vmatpush1.bf16.msra.mxu0 %v5136
        %6848 = vmatprep.subr.bf16.mxu0 %v5257
        %6849 = vmatpush2.bf16.msra.mxu0 %v5256
        %6850 = vmatprep.subr.bf16.mxu0 %v5249
        %6851 = vmatpush2.bf16.msra.mxu0 %v5248
        %6852 = vmatprep.subr.bf16.mxu0 %v5241
        %6853 = vmatpush2.bf16.msra.mxu0 %v5240
        %6854 = vmatprep.subr.bf16.mxu0 %v5233
        %6855 = vmatpush2.bf16.msra.mxu0 %v5232
        %6856 = vmatprep.subr.bf16.mxu0 %v5225
        %6857 = vmatpush2.bf16.msra.mxu0 %v5224
        %6858 = vmatprep.subr.bf16.mxu0 %v5217
        %6859 = vmatpush2.bf16.msra.mxu0 %v5216
        %6860 = vmatprep.subr.bf16.mxu0 %v5209
        %6861 = vmatpush2.bf16.msra.mxu0 %v5208
        %6862 = vmatprep.subr.bf16.mxu0 %v5201
        %6863 = vmatpush2.bf16.msra.mxu0 %v5200
        %6864 = vmatprep.mubr.bf16.mxu0 %v6649
        %6865 = vmatmul.mubr.bf16.gmra.mxu0 %v6642
        %v6866 = vpop.f32.mrf.mxu0
        %v6867 = vadd.f32 0.0, %v6866
        %v6868 = vpop.f32.mrf.mxu0
        %v6869 = vadd.f32 0.0, %v6868
        %v6870 = vpop.f32.mrf.mxu0
        %v6871 = vpop.f32.mrf.mxu0
        %6872 = vdwg.mxu0
        %6873 = vmatprep.subr.bf16.mxu0 %v5321
        %6874 = vmatpush1.bf16.msra.mxu0 %v5320
        %6875 = vmatprep.subr.bf16.mxu0 %v5313
        %6876 = vmatpush1.bf16.msra.mxu0 %v5312
        %6877 = vmatprep.subr.bf16.mxu0 %v5305
        %6878 = vmatpush1.bf16.msra.mxu0 %v5304
        %6879 = vmatprep.subr.bf16.mxu0 %v5297
        %6880 = vmatpush1.bf16.msra.mxu0 %v5296
        %6881 = vmatprep.subr.bf16.mxu0 %v5289
        %6882 = vmatpush1.bf16.msra.mxu0 %v5288
        %6883 = vmatprep.subr.bf16.mxu0 %v5281
        %6884 = vmatpush1.bf16.msra.mxu0 %v5280
        %6885 = vmatprep.subr.bf16.mxu0 %v5273
        %6886 = vmatpush1.bf16.msra.mxu0 %v5272
        %6887 = vmatprep.subr.bf16.mxu0 %v5265
        %6888 = vmatpush1.bf16.msra.mxu0 %v5264
        %6889 = vmatprep.subr.bf16.mxu0 %v5385
        %6890 = vmatpush2.bf16.msra.mxu0 %v5384
        %6891 = vmatprep.subr.bf16.mxu0 %v5377
        %6892 = vmatpush2.bf16.msra.mxu0 %v5376
        %6893 = vmatprep.subr.bf16.mxu0 %v5369
        %6894 = vmatpush2.bf16.msra.mxu0 %v5368
        %6895 = vmatprep.subr.bf16.mxu0 %v5361
        %6896 = vmatpush2.bf16.msra.mxu0 %v5360
        %6897 = vmatprep.subr.bf16.mxu0 %v5353
        %6898 = vmatpush2.bf16.msra.mxu0 %v5352
        %6899 = vmatprep.subr.bf16.mxu0 %v5345
        %6900 = vmatpush2.bf16.msra.mxu0 %v5344
        %6901 = vmatprep.subr.bf16.mxu0 %v5337
        %6902 = vmatpush2.bf16.msra.mxu0 %v5336
        %6903 = vmatprep.subr.bf16.mxu0 %v5329
        %6904 = vmatpush2.bf16.msra.mxu0 %v5328
        %6905 = vmatprep.mubr.bf16.mxu0 %v6663
        %6906 = vmatmul.mubr.bf16.gmra.mxu0 %v6656
        %v6907 = vpop.f32.mrf.mxu0
        %v6908 = vadd.f32 %v6867, %v6907
        %v6909 = vpop.f32.mrf.mxu0
        %v6910 = vadd.f32 %v6869, %v6909
        %v6911 = vpop.f32.mrf.mxu0
        %v6912 = vpop.f32.mrf.mxu0
        %6913 = vdwg.mxu0
        %6914 = vmatprep.subr.bf16.mxu0 %v5195
        %6915 = vmatpush1.bf16.msra.mxu0 %v5194
        %6916 = vmatprep.subr.bf16.mxu0 %v5187
        %6917 = vmatpush1.bf16.msra.mxu0 %v5186
        %6918 = vmatprep.subr.bf16.mxu0 %v5179
        %6919 = vmatpush1.bf16.msra.mxu0 %v5178
        %6920 = vmatprep.subr.bf16.mxu0 %v5171
        %6921 = vmatpush1.bf16.msra.mxu0 %v5170
        %6922 = vmatprep.subr.bf16.mxu0 %v5163
        %6923 = vmatpush1.bf16.msra.mxu0 %v5162
        %6924 = vmatprep.subr.bf16.mxu0 %v5155
        %6925 = vmatpush1.bf16.msra.mxu0 %v5154
        %6926 = vmatprep.subr.bf16.mxu0 %v5147
        %6927 = vmatpush1.bf16.msra.mxu0 %v5146
        %6928 = vmatprep.subr.bf16.mxu0 %v5139
        %6929 = vmatpush1.bf16.msra.mxu0 %v5138
        %6930 = vmatprep.subr.bf16.mxu0 %v5259
        %6931 = vmatpush2.bf16.msra.mxu0 %v5258
        %6932 = vmatprep.subr.bf16.mxu0 %v5251
        %6933 = vmatpush2.bf16.msra.mxu0 %v5250
        %6934 = vmatprep.subr.bf16.mxu0 %v5243
        %6935 = vmatpush2.bf16.msra.mxu0 %v5242
        %6936 = vmatprep.subr.bf16.mxu0 %v5235
        %6937 = vmatpush2.bf16.msra.mxu0 %v5234
        %6938 = vmatprep.subr.bf16.mxu0 %v5227
        %6939 = vmatpush2.bf16.msra.mxu0 %v5226
        %6940 = vmatprep.subr.bf16.mxu0 %v5219
        %6941 = vmatpush2.bf16.msra.mxu0 %v5218
        %6942 = vmatprep.subr.bf16.mxu0 %v5211
        %6943 = vmatpush2.bf16.msra.mxu0 %v5210
        %6944 = vmatprep.subr.bf16.mxu0 %v5203
        %6945 = vmatpush2.bf16.msra.mxu0 %v5202
        %6946 = vmatprep.mubr.bf16.mxu0 %v6649
        %6947 = vmatmul.mubr.bf16.gmra.mxu0 %v6642
        %v6948 = vpop.f32.mrf.mxu0
        %v6949 = vadd.f32 0.0, %v6948
        %v6950 = vpop.f32.mrf.mxu0
        %v6951 = vadd.f32 0.0, %v6950
        %v6952 = vpop.f32.mrf.mxu0
        %v6953 = vpop.f32.mrf.mxu0
        %6954 = vdwg.mxu0
        %6955 = vmatprep.subr.bf16.mxu0 %v5323
        %6956 = vmatpush1.bf16.msra.mxu0 %v5322
        %6957 = vmatprep.subr.bf16.mxu0 %v5315
        %6958 = vmatpush1.bf16.msra.mxu0 %v5314
        %6959 = vmatprep.subr.bf16.mxu0 %v5307
        %6960 = vmatpush1.bf16.msra.mxu0 %v5306
        %6961 = vmatprep.subr.bf16.mxu0 %v5299
        %6962 = vmatpush1.bf16.msra.mxu0 %v5298
        %6963 = vmatprep.subr.bf16.mxu0 %v5291
        %6964 = vmatpush1.bf16.msra.mxu0 %v5290
        %6965 = vmatprep.subr.bf16.mxu0 %v5283
        %6966 = vmatpush1.bf16.msra.mxu0 %v5282
        %6967 = vmatprep.subr.bf16.mxu0 %v5275
        %6968 = vmatpush1.bf16.msra.mxu0 %v5274
        %6969 = vmatprep.subr.bf16.mxu0 %v5267
        %6970 = vmatpush1.bf16.msra.mxu0 %v5266
        %6971 = vmatprep.subr.bf16.mxu0 %v5387
        %6972 = vmatpush2.bf16.msra.mxu0 %v5386
        %6973 = vmatprep.subr.bf16.mxu0 %v5379
        %6974 = vmatpush2.bf16.msra.mxu0 %v5378
        %6975 = vmatprep.subr.bf16.mxu0 %v5371
        %6976 = vmatpush2.bf16.msra.mxu0 %v5370
        %6977 = vmatprep.subr.bf16.mxu0 %v5363
        %6978 = vmatpush2.bf16.msra.mxu0 %v5362
        %6979 = vmatprep.subr.bf16.mxu0 %v5355
        %6980 = vmatpush2.bf16.msra.mxu0 %v5354
        %6981 = vmatprep.subr.bf16.mxu0 %v5347
        %6982 = vmatpush2.bf16.msra.mxu0 %v5346
        %6983 = vmatprep.subr.bf16.mxu0 %v5339
        %6984 = vmatpush2.bf16.msra.mxu0 %v5338
        %6985 = vmatprep.subr.bf16.mxu0 %v5331
        %6986 = vmatpush2.bf16.msra.mxu0 %v5330
        %6987 = vmatprep.mubr.bf16.mxu0 %v6663
        %6988 = vmatmul.mubr.bf16.gmra.mxu0 %v6656
        %v6989 = vpop.f32.mrf.mxu0
        %v6990 = vadd.f32 %v6949, %v6989
        %v6991 = vpop.f32.mrf.mxu0
        %v6992 = vadd.f32 %v6951, %v6991
        %v6993 = vpop.f32.mrf.mxu0
        %v6994 = vpop.f32.mrf.mxu0
        %6995 = vdwg.mxu0
        %v6996 = vadd.f32 %v6384, %v6744
        %v6997 = vadd.f32 %v6386, %v6746
        %v6998 = vadd.f32 %v6466, %v6826
        %v6999 = vadd.f32 %v6468, %v6828
        %v7000 = vadd.f32 %v6548, %v6908
        %v7001 = vadd.f32 %v6550, %v6910
        %v7002 = vadd.f32 %v6630, %v6990
        %v7003 = vadd.f32 %v6632, %v6992
        %v7004 = vmax.f32 %v5972, %v6996
        %v7005 = vmax.f32 %v5973, %v6997
        %v7006 = vmax.f32 %v5974, %v6998
        %v7007 = vmax.f32 %v5975, %v6999
        %v7008 = vmax.f32 %v5976, %v7000
        %v7009 = vmax.f32 %v5977, %v7001
        %v7010 = vmax.f32 %v5978, %v7002
        %v7011 = vmax.f32 %v5979, %v7003
        %v7012 = vmax.f32 %v7004, %v7008
        %v7013 = vmax.f32 %v7005, %v7009
        %v7014 = vmax.f32 %v7006, %v7010
        %v7015 = vmax.f32 %v7007, %v7011
        %v7016 = vld [vmem:[%s5] sm:$0xf]
        %v7018 = vlaneseq
        %v7019 = vshrl.u32 %v7018, 7
        %v7020 = vsub.s32 0, %v7019
        %v7021 = vrot.slane %v7016, %v7020
        %v7022 = vlaneseq
        %v7023 = vshrl.u32 %v7022, 7
        %v7024 = vsub.s32 1, %v7023
        %v7025 = vrot.slane %v7016, %v7024
        %v7026 = vlaneseq
        %v7027 = vshrl.u32 %v7026, 7
        %v7028 = vsub.s32 2, %v7027
        %v7029 = vrot.slane %v7016, %v7028
        %v7030 = vlaneseq
        %v7031 = vshrl.u32 %v7030, 7
        %v7032 = vsub.s32 3, %v7031
        %v7033 = vrot.slane %v7016, %v7032
        %v7038 = vadd.f32 %v7012, %v7021
        %v7039 = vadd.f32 %v7013, %v7025
        %v7040 = vadd.f32 %v7014, %v7029
        %v7041 = vadd.f32 %v7015, %v7033
        %v7042 = vmax.f32 %v7038, 0.0
        %v7043 = vmax.f32 %v7039, 0.0
        %v7044 = vmax.f32 %v7040, 0.0
        %v7045 = vmax.f32 %v7041, 0.0
        %v7046 = vpack.c.bf16 %v7042, %v7042
        %v7047 = vpack.c.bf16 %v7043, %v7043
        %v7048 = vpack.c.bf16 %v7044, %v7044
        %v7049 = vpack.c.bf16 %v7045, %v7045
        %v7054 = vunpack.c.l.b16 %v7046
        %v7055 = vunpack.c.l.b16 %v7047
        %v7056 = vunpack.c.l.b16 %v7048
        %v7057 = vunpack.c.l.b16 %v7049
        %v7058 = vpack.c.b16 %v7055, %v7054
        %v7059 = vpack.c.b16 %v7057, %v7056
        %vm7062 = vcmask 1043456
        %vm7063 = vsmask.f32 3328
        %vm7064 = vmand %vm7062, %vm7063
        %vm7065 = vcmask 1047556
        %vm7066 = vsmask.f32 7424
        %vm7067 = vmand %vm7065, %vm7066
        %vm7068 = vmor %vm7067, %vm7064
        %v7069 = vld [vmem:[%s315] sm:$0xff]
        %v7070 = vsel %vm7068, %v7058, %v7069
        %7071 = vst [vmem:[%s315] sm:$0xff] %v7070
        %v7072 = vld [vmem:[%s315 + $0x8] sm:$0xff]
        %v7073 = vsel %vm7068, %v7059, %v7072
        %7074 = vst [vmem:[%s315 + $0x8] sm:$0xff] %v7073
        %p7075 = scmp.lt.s32.totalorder %s19, 1
        %s7076 = scalar_select %p7075, %s19, 1
        %s7077 = smul.addr %s7076, 4
        %s7078 = smul.addr %s7077, 4
        %s7079 = scalar_lea.vmem %s6, %s7078
        // Predicated region
        $region57: #{simplenet_forward.4} parent=43 // pred_check
          %p7080 = pneg %p173
        $region58: #{simplenet_forward.4} parent=43 // pred_check_branch
          %7082 = sbr.rel (%p7080) target = $region60
        $region59: #{simplenet_forward.4} parent=43 // pred_region
          _
        $region60: #{simplenet_forward.4} parent=43 // pred_fallthru
          _
      $region44: #{simplenet_forward.4} parent=5 // pred_fallthru
        _
      %p7083 = scmp.le.s32.totalorder 2, %s14
      // Predicated region
      $region61: #{simplenet_forward.4} parent=5 // pred_check
        %p7084 = pneg %p7083
      $region62: #{simplenet_forward.4} parent=5 // pred_check_branch
        %7086 = sbr.rel (%p7084) target = $region64
      $region63: #{simplenet_forward.4} parent=5 // pred_region
        %s7087 = ssub.s32 %s14, 2
        // Predicated region
        $region65: #{simplenet_forward.4} parent=63 // pred_check
          %p7088 = pneg %p179
        $region66: #{simplenet_forward.4} parent=63 // pred_check_branch
          %7090 = sbr.rel (%p7088) target = $region68
        $region67: #{simplenet_forward.4} parent=63 // pred_region
          %p7091 = scmp.lt.s32.totalorder %s20, 1
          %s7092 = scalar_select %p7091, %s20, 1
          %s7093 = smul.addr %s7092, 4
          %s7094 = smul.addr %s7093, 4
          %s7095 = scalar_lea.vmem %s6, %s7094
        $region68: #{simplenet_forward.4} parent=63 // pred_fallthru
          _
      $region64: #{simplenet_forward.4} parent=5 // pred_fallthru
        _
    $region6: #{simplenet_forward.4} parent=1 // loop_footer
      %s18 = sadd.s32 1, %s14
    $region7: #{simplenet_forward.4} parent=1 // loop_footer_branch
      %13 = sbr.rel target = $region3
    $region8: #{simplenet_forward.4} parent=1 // loop_exit
      _
    %7096 = vsyncpa [#allocation3], 1
    %s7097 = scalar_lea.sflag [#allocation3], 1
    %7098 = vsyncpa %s7097, 1
    %7099 = vsyncpa [#allocation5], 1

</llo_original>
